<compile_context>
chip_gen: v6e
topology: v6e:2x2x1
jax: 0.10.0
libtpu: 0.0.40
codegen_flags: <defaults>
</compile_context>

<pallas_src>
import functools

import jax
import jax.numpy as jnp
from jax import lax
from jax.experimental import pallas as pl
from jax.experimental.pallas import tpu as pltpu

# --- module hyperparameters (from bigram.py) -------------------------------
BLOCK_SIZE = 32          # max sequence length
N_EMBED    = 64          # C
NUM_HEADS  = 4
HEAD_SIZE  = 16          # num_heads * head_size == n_embed
DROPOUT_P  = 0.2         # TODO(synk): dropout implemented in eval mode (identity);
                         #             training-mode stochastic dropout is not applied.


def _mha_kernel(x_ref, wqkv_ref, wproj_ref, bproj_ref, o_ref, *, num_heads, head_size):
    """One block of `block_b` batch elements per grid step.

    x_ref     : (Bb, T, C)       bf16  VMEM
    wqkv_ref  : (C, 3*nh*H)      bf16  VMEM (columns = [K heads | Q heads | V heads])
    wproj_ref : (C, C)           bf16  VMEM (rows head-major: head0's H rows first, ...)
    bproj_ref : (1, C)           f32   VMEM
    o_ref     : (Bb, T, C)             VMEM
    """
    Bb, T, C = x_ref.shape
    nh, H = num_heads, head_size

    # --- fused QKV projection: one MXU matmul for all heads, all of k/q/v ---
    x2 = x_ref[...].reshape(Bb * T, C)                                     # bf16
    qkv = jnp.dot(x2, wqkv_ref[...], preferred_element_type=jnp.float32)  # (Bb*T, 3*nh*H) f32

    # --- move heads to the (cheap) outer axis so all per-head attention math
    #     is batched: one score matmul, one softmax, one PV matmul.
    def split_heads(col0):
        parts = [qkv[:, col0 + h * H: col0 + (h + 1) * H].reshape(Bb, T, H)
                 for h in range(nh)]
        return jnp.concatenate(parts, axis=0).astype(jnp.bfloat16)        # (nh*Bb, T, H)

    k = split_heads(0)
    q = split_heads(nh * H)
    v = split_heads(2 * nh * H)

    # --- causal mask built in-kernel (no (T, T) HBM->VMEM DMA) ---
    rows = lax.broadcasted_iota(jnp.int32, (T, T), 0)
    cols = lax.broadcasted_iota(jnp.int32, (T, T), 1)
    causal = (cols <= rows)[None, :, :]                                    # (1, T, T)

    # scores for all heads at once; the 1/sqrt(C) scale is folded into W_q.
    s = jnp.einsum('bqd,bkd->bqk', q, k,
                   preferred_element_type=jnp.float32)                    # (nh*Bb, T, T)
    s = jnp.where(causal, s, -jnp.inf)

    # Numerically-stable softmax in f32 (EUP exp + approx reciprocal).
    # NOTE: NaN-safe only because the causal diagonal guarantees >=1 unmasked
    # entry per row; fully-masked (padded) rows would produce NaN.
    s = s - jnp.max(s, axis=-1, keepdims=True)
    p = jnp.exp(s)
    # TODO(synk): use approx=False (or an explicit divide) if reused for training.
    p = p * pl.reciprocal(jnp.sum(p, axis=-1, keepdims=True), approx=True)
    # TODO(synk): attention-weight dropout omitted (eval-mode identity)

    o = jnp.einsum('bqk,bkd->bqd', p.astype(jnp.bfloat16), v,
                   preferred_element_type=jnp.float32)                    # (nh*Bb, T, H)

    # --- output projection (with bias) fused as per-head accumulation:
    #     replaces the lane-dim concat + one (Bb*T,C)x(C,C) matmul with nh
    #     sublane-aligned (Bb*T,H)x(H,C) matmuls accumulated in f32.
    out = bproj_ref[...]                                                   # (1, C) f32
    for h in range(nh):
        o_h = o[h * Bb:(h + 1) * Bb].reshape(Bb * T, H).astype(jnp.bfloat16)
        w_h = wproj_ref[h * H:(h + 1) * H, :]                              # (H, C) bf16
        out = out + jnp.dot(o_h, w_h, preferred_element_type=jnp.float32)  # (Bb*T, C)
    # TODO(synk): output dropout omitted (eval-mode identity)

    o_ref[...] = out.reshape(Bb, T, C).astype(o_ref.dtype)


def prepare_mha_params(w_key, w_query, w_value, w_proj, b_proj):
    """One-time parameter preprocessing -- keep out of the per-call hot path.

    w_key/w_query/w_value : (nh, C, H) pre-transposed per-head weights
    w_proj : (C, C); b_proj : (C,)
    """
    nh, C, H = w_key.shape
    # NOTE: bigram.py scales scores by C**-0.5 (not head_size**-0.5); folded
    # into the query weights once here.
    scale = jnp.float32(C) ** -0.5
    wk_all = jnp.transpose(w_key, (1, 0, 2)).reshape(C, nh * H)
    wq_all = jnp.transpose(w_query * scale, (1, 0, 2)).reshape(C, nh * H)
    wv_all = jnp.transpose(w_value, (1, 0, 2)).reshape(C, nh * H)
    w_qkv = jnp.concatenate([wk_all, wq_all, wv_all], axis=1).astype(jnp.bfloat16)
    return {
        "w_qkv": w_qkv,                                   # (C, 3*nh*H) bf16
        "w_proj": w_proj.astype(jnp.bfloat16),            # (C, C) bf16
        "b_proj": b_proj.reshape(1, C).astype(jnp.float32),
        "num_heads": nh,
        "head_size": H,
    }


def multi_head_attention(x, params, *, block_b=None):
    """x: (B, T, C); params from prepare_mha_params  ->  out: (B, T, C)"""
    B, T, C = x.shape
    nh, H = params["num_heads"], params["head_size"]
    assert nh * H == C == N_EMBED and T <= BLOCK_SIZE

    # Single grid step by default: the kernel is latency-bound (~10 MFLOP),
    # so extra steps on 1-TC chips (v5e/v6e) are pure ~0.35 us/step overhead.
    # On v7x, pass block_b=B//2 to benchmark 2-TC 'parallel' sharding.
    if block_b is None:
        block_b = B
    assert B % block_b == 0
    grid = (B // block_b,)

    # bf16 input halves the x DMA; the MXU consumed bf16 operands anyway.
    x_bf = x.astype(jnp.bfloat16)
    w_qkv, w_proj, b_proj = params["w_qkv"], params["w_proj"], params["b_proj"]

    flops = int(B * (2 * T * C * (3 * nh * H)          # fused QKV projection
                     + nh * 2 * T * T * H              # q @ k^T
                     + nh * 2 * T * T * H              # p @ v
                     + 2 * T * (nh * H) * C))          # output projection
    transcendentals = int(B * nh * T * T)              # exp in softmax
    bytes_accessed = int(x_bf.size * 2 + w_qkv.size * 2 + w_proj.size * 2
                         + b_proj.size * 4 + B * T * C * x.dtype.itemsize)

    kernel = functools.partial(_mha_kernel, num_heads=nh, head_size=H)

    # VMEM note (scaling rule): if B or T grow, size block_b so
    # 2 (double-buffer) * 2 (in+out) * block_b*T*C*bytes + resident weights
    # stays under the scoped VMEM limit (32 MiB default; 64 MiB total on v7x),
    # and set vmem_limit_bytes accordingly.  Today's footprint is <200 KiB.
    return pl.pallas_call(
        kernel,
        out_shape=jax.ShapeDtypeStruct((B, T, C), x.dtype),
        grid_spec=pltpu.PrefetchScalarGridSpec(
            num_scalar_prefetch=0,
            grid=grid,
            in_specs=[
                pl.BlockSpec((block_b, T, C), lambda b: (b, 0, 0)),   # x block
                pl.BlockSpec((C, 3 * nh * H), lambda b: (0, 0)),      # fused Wqkv (resident)
                pl.BlockSpec((C, C),          lambda b: (0, 0)),      # W_proj   (resident)
                pl.BlockSpec((1, C),          lambda b: (0, 0)),      # b_proj   (resident)
            ],
            out_specs=pl.BlockSpec((block_b, T, C), lambda b: (b, 0, 0)),
        ),
        compiler_params=pltpu.CompilerParams(
            dimension_semantics=("parallel",),
        ),
        cost_estimate=pl.CostEstimate(flops=flops,
                                      transcendentals=transcendentals,
                                      bytes_accessed=bytes_accessed),
    )(x_bf, w_qkv, w_proj, b_proj)


def _reference(x, w_key, w_query, w_value, w_proj, b_proj):
    """Pure-JAX f32 reference matching the PyTorch forward (eval mode)."""
    B, T, C = x.shape
    tril = jnp.tril(jnp.ones((T, T), dtype=jnp.float32))
    outs = []
    for h in range(w_key.shape[0]):
        k = x @ w_key[h]
        q = x @ w_query[h]
        v = x @ w_value[h]
        w = (q @ jnp.swapaxes(k, -2, -1)) * (C ** -0.5)
        w = jnp.where(tril == 0, -jnp.inf, w)
        w = jax.nn.softmax(w, axis=-1)
        outs.append(w @ v)
    out = jnp.concatenate(outs, axis=-1)
    return out @ w_proj + b_proj


if __name__ == "__main__":
    key = jax.random.PRNGKey(0)
    kx, kk, kq, kv, kp, kb = jax.random.split(key, 6)

    B, T, C = 8, BLOCK_SIZE, N_EMBED
    nh, H = NUM_HEADS, HEAD_SIZE

    x = jax.random.normal(kx, (B, T, C), dtype=jnp.float32)

    # nn.Linear-style uniform(-1/sqrt(fan_in), 1/sqrt(fan_in)); weights stored
    # pre-transposed as (C, H) per head so the kernel computes x @ W directly.
    bound = 1.0 / (C ** 0.5)
    w_key   = jax.random.uniform(kk, (nh, C, H), jnp.float32, -bound, bound)
    w_query = jax.random.uniform(kq, (nh, C, H), jnp.float32, -bound, bound)
    w_value = jax.random.uniform(kv, (nh, C, H), jnp.float32, -bound, bound)
    w_proj  = jax.random.uniform(kp, (C, C), jnp.float32, -bound, bound)
    b_proj  = jax.random.uniform(kb, (C,), jnp.float32, -bound, bound)

    # One-time parameter prep (hoisted out of the hot path).
    params = prepare_mha_params(w_key, w_query, w_value, w_proj, b_proj)

    out = multi_head_attention(x, params)
    out = jax.block_until_ready(out)

    ref = _reference(x, w_key, w_query, w_value, w_proj, b_proj)
    assert out.shape == (B, T, C)
    max_err = float(jnp.max(jnp.abs(out - ref)))
    # bf16 MXU operands + approx reciprocal => relaxed tolerance vs f32 reference
    assert jnp.allclose(out, ref, atol=2e-2, rtol=2e-2), f"mismatch vs reference (max err {max_err})"

    print("KERNEL_OK")
</pallas_src>

<mosaic_0001>
module attributes {stable_mosaic.version = 11 : i64} {
  func.func @_mha_kernel(%arg0: i32, %arg1: memref<8x32x64xbf16, #tpu.memory_space<vmem>>, %arg2: memref<64x192xbf16, #tpu.memory_space<vmem>>, %arg3: memref<64x64xbf16, #tpu.memory_space<vmem>>, %arg4: memref<1x64xf32, #tpu.memory_space<vmem>>, %arg5: memref<8x32x64xf32, #tpu.memory_space<vmem>>) attributes {dimension_semantics = [#tpu.dimension_semantics<parallel>], iteration_bounds = array<i64: 1>, scalar_prefetch = 0 : i64, scratch_operands = 0 : i64, tpu.core_type = #tpu.core_type<tc>, window_params = [{transform_indices = @transform_0, window_bounds = array<i64: 8, 32, 64>}, {pipeline_mode = #tpu.pipeline_mode<synchronous>, transform_indices = @transform_1, window_bounds = array<i64: 64, 192>}, {pipeline_mode = #tpu.pipeline_mode<synchronous>, transform_indices = @transform_2, window_bounds = array<i64: 64, 64>}, {pipeline_mode = #tpu.pipeline_mode<synchronous>, transform_indices = @transform_3, window_bounds = array<i64: 1, 64>}, {transform_indices = @transform_4, window_bounds = array<i64: 8, 32, 64>}]} {
    %c0 = arith.constant 0 : index
    %c0_0 = arith.constant 0 : index
    %c0_1 = arith.constant 0 : index
    %0 = vector.load %arg1[%c0, %c0_0, %c0_1] : memref<8x32x64xbf16, #tpu.memory_space<vmem>>, vector<8x32x64xbf16>
    %1 = vector.shape_cast %0 : vector<8x32x64xbf16> to vector<256x64xbf16>
    %c0_2 = arith.constant 0 : index
    %c0_3 = arith.constant 0 : index
    %2 = vector.load %arg2[%c0_2, %c0_3] : memref<64x192xbf16, #tpu.memory_space<vmem>>, vector<64x192xbf16>
    %cst = arith.constant dense<0.000000e+00> : vector<256x192xf32>
    %3 = tpu.matmul %1, %2, %cst {dimension_numbers = #tpu.dot_dimension_numbers<[1], [0], [0], [1], [0, 0, 1, 1], [], []>} : vector<256x64xbf16>, vector<64x192xbf16>, vector<256x192xf32> -> vector<256x192xf32>
    %4 = vector.extract_strided_slice %3 {offsets = [0, 0], sizes = [256, 16], strides = [1, 1]} : vector<256x192xf32> to vector<256x16xf32>
    %5 = vector.shape_cast %4 : vector<256x16xf32> to vector<8x32x16xf32>
    %6 = vector.extract_strided_slice %3 {offsets = [0, 16], sizes = [256, 16], strides = [1, 1]} : vector<256x192xf32> to vector<256x16xf32>
    %7 = vector.shape_cast %6 : vector<256x16xf32> to vector<8x32x16xf32>
    %8 = vector.extract_strided_slice %3 {offsets = [0, 32], sizes = [256, 16], strides = [1, 1]} : vector<256x192xf32> to vector<256x16xf32>
    %9 = vector.shape_cast %8 : vector<256x16xf32> to vector<8x32x16xf32>
    %10 = vector.extract_strided_slice %3 {offsets = [0, 48], sizes = [256, 16], strides = [1, 1]} : vector<256x192xf32> to vector<256x16xf32>
    %11 = vector.shape_cast %10 : vector<256x16xf32> to vector<8x32x16xf32>
    %12 = tpu.concatenate %5, %7, %9, %11 in 0 : vector<8x32x16xf32>, vector<8x32x16xf32>, vector<8x32x16xf32>, vector<8x32x16xf32> -> vector<32x32x16xf32>
    %13 = arith.truncf %12 : vector<32x32x16xf32> to vector<32x32x16xbf16>
    %14 = vector.extract_strided_slice %3 {offsets = [0, 64], sizes = [256, 16], strides = [1, 1]} : vector<256x192xf32> to vector<256x16xf32>
    %15 = vector.shape_cast %14 : vector<256x16xf32> to vector<8x32x16xf32>
    %16 = vector.extract_strided_slice %3 {offsets = [0, 80], sizes = [256, 16], strides = [1, 1]} : vector<256x192xf32> to vector<256x16xf32>
    %17 = vector.shape_cast %16 : vector<256x16xf32> to vector<8x32x16xf32>
    %18 = vector.extract_strided_slice %3 {offsets = [0, 96], sizes = [256, 16], strides = [1, 1]} : vector<256x192xf32> to vector<256x16xf32>
    %19 = vector.shape_cast %18 : vector<256x16xf32> to vector<8x32x16xf32>
    %20 = vector.extract_strided_slice %3 {offsets = [0, 112], sizes = [256, 16], strides = [1, 1]} : vector<256x192xf32> to vector<256x16xf32>
    %21 = vector.shape_cast %20 : vector<256x16xf32> to vector<8x32x16xf32>
    %22 = tpu.concatenate %15, %17, %19, %21 in 0 : vector<8x32x16xf32>, vector<8x32x16xf32>, vector<8x32x16xf32>, vector<8x32x16xf32> -> vector<32x32x16xf32>
    %23 = arith.truncf %22 : vector<32x32x16xf32> to vector<32x32x16xbf16>
    %24 = vector.extract_strided_slice %3 {offsets = [0, 128], sizes = [256, 16], strides = [1, 1]} : vector<256x192xf32> to vector<256x16xf32>
    %25 = vector.shape_cast %24 : vector<256x16xf32> to vector<8x32x16xf32>
    %26 = vector.extract_strided_slice %3 {offsets = [0, 144], sizes = [256, 16], strides = [1, 1]} : vector<256x192xf32> to vector<256x16xf32>
    %27 = vector.shape_cast %26 : vector<256x16xf32> to vector<8x32x16xf32>
    %28 = vector.extract_strided_slice %3 {offsets = [0, 160], sizes = [256, 16], strides = [1, 1]} : vector<256x192xf32> to vector<256x16xf32>
    %29 = vector.shape_cast %28 : vector<256x16xf32> to vector<8x32x16xf32>
    %30 = vector.extract_strided_slice %3 {offsets = [0, 176], sizes = [256, 16], strides = [1, 1]} : vector<256x192xf32> to vector<256x16xf32>
    %31 = vector.shape_cast %30 : vector<256x16xf32> to vector<8x32x16xf32>
    %32 = tpu.concatenate %25, %27, %29, %31 in 0 : vector<8x32x16xf32>, vector<8x32x16xf32>, vector<8x32x16xf32>, vector<8x32x16xf32> -> vector<32x32x16xf32>
    %33 = arith.truncf %32 : vector<32x32x16xf32> to vector<32x32x16xbf16>
    %34 = tpu.iota {dimensions = array<i32: 0>} : vector<32x32xi32>
    %35 = tpu.iota {dimensions = array<i32: 1>} : vector<32x32xi32>
    %36 = arith.cmpi sle, %35, %34 : vector<32x32xi32>
    %37 = vector.shape_cast %36 : vector<32x32xi1> to vector<1x32x32xi1>
    "tpu.trace_start"() <{level = 10 : i32, message = "bqd,bkd->bqk"}> : () -> ()
    %cst_4 = arith.constant dense<0.000000e+00> : vector<32x32x32xf32>
    %38 = tpu.matmul %23, %13, %cst_4 {dimension_numbers = #tpu.dot_dimension_numbers<[2], [2], [1], [1], [0, 0, 0, 1, 1, 1], [0], [0]>} : vector<32x32x16xbf16>, vector<32x32x16xbf16>, vector<32x32x32xf32> -> vector<32x32x32xf32>
    %cst_5 = arith.constant 0xFF800000 : f32
    "tpu.trace_stop"() : () -> ()
    %39 = vector.shape_cast %37 : vector<1x32x32xi1> to vector<1x32x32xi1>
    %40 = vector.broadcast %39 : vector<1x32x32xi1> to vector<32x32x32xi1>
    %41 = vector.broadcast %cst_5 : f32 to vector<32x32x32xf32>
    %42 = arith.select %40, %38, %41 : vector<32x32x32xi1>, vector<32x32x32xf32>
    %cst_6 = arith.constant dense<0xFF800000> : vector<32x32xf32>
    %43 = vector.multi_reduction <maximumf>, %42, %cst_6 [2] : vector<32x32x32xf32> to vector<32x32xf32>
    %44 = vector.shape_cast %43 : vector<32x32xf32> to vector<32x32x1xf32>
    %45 = vector.broadcast %44 : vector<32x32x1xf32> to vector<32x32x32xf32>
    %46 = arith.subf %42, %45 : vector<32x32x32xf32>
    %47 = math.exp %46 : vector<32x32x32xf32>
    %cst_7 = arith.constant dense<0.000000e+00> : vector<32x32xf32>
    %48 = vector.multi_reduction <add>, %47, %cst_7 [2] : vector<32x32x32xf32> to vector<32x32xf32>
    %49 = vector.shape_cast %48 : vector<32x32xf32> to vector<32x32x1xf32>
    %50 = tpu.reciprocal %49 {approx = true} : vector<32x32x1xf32> -> vector<32x32x1xf32>
    %51 = vector.broadcast %50 : vector<32x32x1xf32> to vector<32x32x32xf32>
    %52 = arith.mulf %47, %51 : vector<32x32x32xf32>
    %53 = arith.truncf %52 : vector<32x32x32xf32> to vector<32x32x32xbf16>
    "tpu.trace_start"() <{level = 10 : i32, message = "bqk,bkd->bqd"}> : () -> ()
    %cst_8 = arith.constant dense<0.000000e+00> : vector<32x32x16xf32>
    %54 = tpu.matmul %53, %33, %cst_8 {dimension_numbers = #tpu.dot_dimension_numbers<[2], [1], [1], [2], [0, 0, 0, 1, 1, 2], [0], [0]>} : vector<32x32x32xbf16>, vector<32x32x16xbf16>, vector<32x32x16xf32> -> vector<32x32x16xf32>
    "tpu.trace_stop"() : () -> ()
    %c0_9 = arith.constant 0 : index
    %c0_10 = arith.constant 0 : index
    %55 = vector.load %arg4[%c0_9, %c0_10] : memref<1x64xf32, #tpu.memory_space<vmem>>, vector<1x64xf32>
    %56 = vector.extract_strided_slice %54 {offsets = [0, 0, 0], sizes = [8, 32, 16], strides = [1, 1, 1]} : vector<32x32x16xf32> to vector<8x32x16xf32>
    %57 = vector.shape_cast %56 : vector<8x32x16xf32> to vector<256x16xf32>
    %58 = arith.truncf %57 : vector<256x16xf32> to vector<256x16xbf16>
    %c0_11 = arith.constant 0 : index
    %c0_12 = arith.constant 0 : index
    %59 = vector.load %arg3[%c0_11, %c0_12] : memref<64x64xbf16, #tpu.memory_space<vmem>>, vector<16x64xbf16>
    %cst_13 = arith.constant dense<0.000000e+00> : vector<256x64xf32>
    %60 = tpu.matmul %58, %59, %cst_13 {dimension_numbers = #tpu.dot_dimension_numbers<[1], [0], [0], [1], [0, 0, 1, 1], [], []>} : vector<256x16xbf16>, vector<16x64xbf16>, vector<256x64xf32> -> vector<256x64xf32>
    %61 = vector.broadcast %55 : vector<1x64xf32> to vector<256x64xf32>
    %62 = arith.addf %61, %60 : vector<256x64xf32>
    %63 = vector.extract_strided_slice %54 {offsets = [8, 0, 0], sizes = [8, 32, 16], strides = [1, 1, 1]} : vector<32x32x16xf32> to vector<8x32x16xf32>
    %64 = vector.shape_cast %63 : vector<8x32x16xf32> to vector<256x16xf32>
    %65 = arith.truncf %64 : vector<256x16xf32> to vector<256x16xbf16>
    %c16 = arith.constant 16 : index
    %c0_14 = arith.constant 0 : index
    %66 = vector.load %arg3[%c16, %c0_14] : memref<64x64xbf16, #tpu.memory_space<vmem>>, vector<16x64xbf16>
    %cst_15 = arith.constant dense<0.000000e+00> : vector<256x64xf32>
    %67 = tpu.matmul %65, %66, %cst_15 {dimension_numbers = #tpu.dot_dimension_numbers<[1], [0], [0], [1], [0, 0, 1, 1], [], []>} : vector<256x16xbf16>, vector<16x64xbf16>, vector<256x64xf32> -> vector<256x64xf32>
    %68 = arith.addf %62, %67 : vector<256x64xf32>
    %69 = vector.extract_strided_slice %54 {offsets = [16, 0, 0], sizes = [8, 32, 16], strides = [1, 1, 1]} : vector<32x32x16xf32> to vector<8x32x16xf32>
    %70 = vector.shape_cast %69 : vector<8x32x16xf32> to vector<256x16xf32>
    %71 = arith.truncf %70 : vector<256x16xf32> to vector<256x16xbf16>
    %c32 = arith.constant 32 : index
    %c0_16 = arith.constant 0 : index
    %72 = vector.load %arg3[%c32, %c0_16] : memref<64x64xbf16, #tpu.memory_space<vmem>>, vector<16x64xbf16>
    %cst_17 = arith.constant dense<0.000000e+00> : vector<256x64xf32>
    %73 = tpu.matmul %71, %72, %cst_17 {dimension_numbers = #tpu.dot_dimension_numbers<[1], [0], [0], [1], [0, 0, 1, 1], [], []>} : vector<256x16xbf16>, vector<16x64xbf16>, vector<256x64xf32> -> vector<256x64xf32>
    %74 = arith.addf %68, %73 : vector<256x64xf32>
    %75 = vector.extract_strided_slice %54 {offsets = [24, 0, 0], sizes = [8, 32, 16], strides = [1, 1, 1]} : vector<32x32x16xf32> to vector<8x32x16xf32>
    %76 = vector.shape_cast %75 : vector<8x32x16xf32> to vector<256x16xf32>
    %77 = arith.truncf %76 : vector<256x16xf32> to vector<256x16xbf16>
    %c48 = arith.constant 48 : index
    %c0_18 = arith.constant 0 : index
    %78 = vector.load %arg3[%c48, %c0_18] : memref<64x64xbf16, #tpu.memory_space<vmem>>, vector<16x64xbf16>
    %cst_19 = arith.constant dense<0.000000e+00> : vector<256x64xf32>
    %79 = tpu.matmul %77, %78, %cst_19 {dimension_numbers = #tpu.dot_dimension_numbers<[1], [0], [0], [1], [0, 0, 1, 1], [], []>} : vector<256x16xbf16>, vector<16x64xbf16>, vector<256x64xf32> -> vector<256x64xf32>
    %80 = arith.addf %74, %79 : vector<256x64xf32>
    %81 = vector.shape_cast %80 : vector<256x64xf32> to vector<8x32x64xf32>
    %c0_20 = arith.constant 0 : index
    %c0_21 = arith.constant 0 : index
    %c0_22 = arith.constant 0 : index
    %82 = vector.load %arg5[%c0_20, %c0_21, %c0_22] : memref<8x32x64xf32, #tpu.memory_space<vmem>>, vector<8x32x64xf32>
    tpu.vector_store %arg5[%c0_20, %c0_21, %c0_22], %81 {strides = array<i32>} : memref<8x32x64xf32, #tpu.memory_space<vmem>>, vector<8x32x64xf32>,
    return
  }
  func.func @transform_0(%arg0: i32) -> (i32, i32, i32) {
    %c0_i32 = arith.constant 0 : i32
    %c0_i32_0 = arith.constant 0 : i32
    %c0_i32_1 = arith.constant 0 : i32
    return %arg0, %c0_i32, %c0_i32_0 : i32, i32, i32
  }
  func.func @transform_1(%arg0: i32) -> (i32, i32) {
    %c0_i32 = arith.constant 0 : i32
    %c0_i32_0 = arith.constant 0 : i32
    %c0_i32_1 = arith.constant 0 : i32
    return %c0_i32, %c0_i32_0 : i32, i32
  }
  func.func @transform_2(%arg0: i32) -> (i32, i32) {
    %c0_i32 = arith.constant 0 : i32
    %c0_i32_0 = arith.constant 0 : i32
    %c0_i32_1 = arith.constant 0 : i32
    return %c0_i32, %c0_i32_0 : i32, i32
  }
  func.func @transform_3(%arg0: i32) -> (i32, i32) {
    %c0_i32 = arith.constant 0 : i32
    %c0_i32_0 = arith.constant 0 : i32
    %c0_i32_1 = arith.constant 0 : i32
    return %c0_i32, %c0_i32_0 : i32, i32
  }
  func.func @transform_4(%arg0: i32) -> (i32, i32, i32) {
    %c0_i32 = arith.constant 0 : i32
    %c0_i32_0 = arith.constant 0 : i32
    %c0_i32_1 = arith.constant 0 : i32
    return %arg0, %c0_i32, %c0_i32_0 : i32, i32, i32
  }
}

</mosaic_0001>

<llo_original>
// kernel: tpu_custom_call.1
$region0: #{tpu_custom_call.1}
  #allocation0 [shape = 'u32[]', space=smem, size = 0x4, offset = 0x4, fixed_abs, tag = 'smem constant byte address 0x4 - core index']
  #allocation1 [shape = 'u32[144,128]{1,0:T(1,128)}', space=vmem, size = 0x12000, scoped, tag = 'internal scratch']
  %s0 = inlined_call_operand.hbm [shape: bf16[8,32,64], index: 0, kind: input, shape index: {}]
  %s1 = inlined_call_operand.hbm [shape: bf16[64,192], index: 1, kind: input, shape index: {}]
  %s2 = inlined_call_operand.hbm [shape: bf16[64,64], index: 2, kind: input, shape index: {}]
  %s3 = inlined_call_operand.vmem [shape: f32[1,64], index: 3, kind: input, shape index: {}]
  %s4 = inlined_call_operand.hbm [shape: f32[8,32,64], index: 4, kind: output, shape index: {}]
  %s5 = sld [smem:[#allocation0]]
  $region38: #{tpu_custom_call.1} parent=0
    _
  %s7 = ssub.s32 1, %s5
  %s8 = scalar_select 0, %s7, %s5
  $region1: #{tpu_custom_call.1} parent=0
    #allocation2 [shape = 'u8[65536]{0}', space=vmem, size = 0x10000, scoped, tag = 'input window, operand 0, single buffered']
    #allocation3 [shape = 's32[1]{0}', space=sflag, size = 0x4, scoped, tag = 'scoped memory for tpu_custom_call.1']
    #allocation4 [shape = 's32[1]{0}', space=sflag, size = 0x4, scoped, tag = 'scoped memory for tpu_custom_call.1']
    #allocation5 [shape = 'u8[32768]{0}', space=vmem, size = 0x8000, scoped, tag = 'input window, operand 1, single buffered']
    #allocation6 [shape = 's32[1]{0}', space=sflag, size = 0x4, scoped, tag = 'scoped memory for tpu_custom_call.1']
    #allocation7 [shape = 'u8[16384]{0}', space=vmem, size = 0x4000, scoped, tag = 'input window, operand 2, single buffered']
    #allocation8 [shape = 'u8[131072]{0}', space=vmem, size = 0x20000, scoped, tag = 'output window, operand 0, single buffered']
    %9 = vsyncpa [#allocation3], 0
    %10 = vsyncpa [#allocation6], 0
    %11 = vsyncpa [#allocation4], 0
    // Predicated region
    $region2: #{tpu_custom_call.1} parent=1 // pred_check
      _
    $region3: #{tpu_custom_call.1} parent=1 // pred_check_branch
      %13 = sbr.rel (0) target = $region5
    $region4: #{tpu_custom_call.1} parent=1 // pred_region
      %s15 = ssub.s32 2048, 2048
      %16 = vsyncadd [#allocation3], %s15
      %s17 = sshll.u32 [#allocation2], 4
      %s18 = int_to_ptr.vmem [resolvable:$true] %s17
      %23 = dma.hbm_to_vmem [thread:$0]  %s0, 2048, %s18, [#allocation3], 64, 64, 4
    $region5: #{tpu_custom_call.1} parent=1 // pred_fallthru
      _
    // Predicated region
    $region6: #{tpu_custom_call.1} parent=1 // pred_check
      _
    $region7: #{tpu_custom_call.1} parent=1 // pred_check_branch
      %25 = sbr.rel (0) target = $region9
    $region8: #{tpu_custom_call.1} parent=1 // pred_region
      %s27 = ssub.s32 1024, 1024
      %28 = vsyncadd [#allocation6], %s27
      %s29 = sshll.u32 [#allocation5], 4
      %s30 = int_to_ptr.vmem [resolvable:$true] %s29
      %35 = dma.hbm_to_vmem [thread:$0]  %s1, 1024, %s30, [#allocation6], 128, 128, 8
    $region9: #{tpu_custom_call.1} parent=1 // pred_fallthru
      _
    // Predicated region
    $region10: #{tpu_custom_call.1} parent=1 // pred_check
      _
    $region11: #{tpu_custom_call.1} parent=1 // pred_check_branch
      %37 = sbr.rel (0) target = $region13
    $region12: #{tpu_custom_call.1} parent=1 // pred_region
      %s39 = ssub.s32 512, 512
      %40 = vsyncadd [#allocation6], %s39
      %s41 = sshll.u32 [#allocation7], 4
      %s42 = int_to_ptr.vmem [resolvable:$true] %s41
      %47 = dma.hbm_to_vmem [thread:$0]  %s2, 512, %s42, [#allocation6], 64, 64, 4
    $region13: #{tpu_custom_call.1} parent=1 // pred_fallthru
      _
    // Predicated region
    $region14: #{tpu_custom_call.1} parent=1 // pred_check
      _
    $region15: #{tpu_custom_call.1} parent=1 // pred_check_branch
      %49 = sbr.rel (0) target = $region17
    $region16: #{tpu_custom_call.1} parent=1 // pred_region
      _
    $region17: #{tpu_custom_call.1} parent=1 // pred_fallthru
      _
    // Predicated region
    $region18: #{tpu_custom_call.1} parent=1 // pred_check
      _
    $region19: #{tpu_custom_call.1} parent=1 // pred_check_branch
      %51 = sbr.rel (0) target = $region21
    $region20: #{tpu_custom_call.1} parent=1 // pred_region
      %52 = dma.done [#allocation3], 2048
    $region21: #{tpu_custom_call.1} parent=1 // pred_fallthru
      _
    // Predicated region
    $region22: #{tpu_custom_call.1} parent=1 // pred_check
      _
    $region23: #{tpu_custom_call.1} parent=1 // pred_check_branch
      %54 = sbr.rel (0) target = $region25
    $region24: #{tpu_custom_call.1} parent=1 // pred_region
      %55 = dma.done [#allocation6], 1024
    $region25: #{tpu_custom_call.1} parent=1 // pred_fallthru
      _
    // Predicated region
    $region26: #{tpu_custom_call.1} parent=1 // pred_check
      _
    $region27: #{tpu_custom_call.1} parent=1 // pred_check_branch
      %57 = sbr.rel (0) target = $region29
    $region28: #{tpu_custom_call.1} parent=1 // pred_region
      %58 = dma.done [#allocation6], 512
    $region29: #{tpu_custom_call.1} parent=1 // pred_fallthru
      _
    %v60 = vld [vmem:[#allocation2] sm:$0xf]
    %v61 = vld [vmem:[#allocation2 + $0x4] sm:$0xf]
    %v62 = vld [vmem:[#allocation2 + $0x8] sm:$0xf]
    %v63 = vld [vmem:[#allocation2 + $0xc] sm:$0xf]
    %v64 = vld [vmem:[#allocation2 + $0x10] sm:$0xf]
    %v65 = vld [vmem:[#allocation2 + $0x14] sm:$0xf]
    %v66 = vld [vmem:[#allocation2 + $0x18] sm:$0xf]
    %v67 = vld [vmem:[#allocation2 + $0x1c] sm:$0xf]
    %v68 = vld [vmem:[#allocation2 + $0x20] sm:$0xf]
    %v69 = vld [vmem:[#allocation2 + $0x24] sm:$0xf]
    %v70 = vld [vmem:[#allocation2 + $0x28] sm:$0xf]
    %v71 = vld [vmem:[#allocation2 + $0x2c] sm:$0xf]
    %v72 = vld [vmem:[#allocation2 + $0x30] sm:$0xf]
    %v73 = vld [vmem:[#allocation2 + $0x34] sm:$0xf]
    %v74 = vld [vmem:[#allocation2 + $0x38] sm:$0xf]
    %v75 = vld [vmem:[#allocation2 + $0x3c] sm:$0xf]
    %v76 = vld [vmem:[#allocation2 + $0x40] sm:$0xf]
    %v77 = vld [vmem:[#allocation2 + $0x44] sm:$0xf]
    %v78 = vld [vmem:[#allocation2 + $0x48] sm:$0xf]
    %v79 = vld [vmem:[#allocation2 + $0x4c] sm:$0xf]
    %v80 = vld [vmem:[#allocation2 + $0x50] sm:$0xf]
    %v81 = vld [vmem:[#allocation2 + $0x54] sm:$0xf]
    %v82 = vld [vmem:[#allocation2 + $0x58] sm:$0xf]
    %v83 = vld [vmem:[#allocation2 + $0x5c] sm:$0xf]
    %v84 = vld [vmem:[#allocation2 + $0x60] sm:$0xf]
    %v85 = vld [vmem:[#allocation2 + $0x64] sm:$0xf]
    %v86 = vld [vmem:[#allocation2 + $0x68] sm:$0xf]
    %v87 = vld [vmem:[#allocation2 + $0x6c] sm:$0xf]
    %v88 = vld [vmem:[#allocation2 + $0x70] sm:$0xf]
    %v89 = vld [vmem:[#allocation2 + $0x74] sm:$0xf]
    %v90 = vld [vmem:[#allocation2 + $0x78] sm:$0xf]
    %v91 = vld [vmem:[#allocation2 + $0x7c] sm:$0xf]
    %v92 = vld [vmem:[#allocation5] sm:$0xff]
    %v93 = vld [vmem:[#allocation5 + $0x8] sm:$0xff]
    %v94 = vld [vmem:[#allocation5 + $0x10] sm:$0xff]
    %v95 = vld [vmem:[#allocation5 + $0x18] sm:$0xff]
    %v96 = vld [vmem:[#allocation5 + $0x20] sm:$0xff]
    %v97 = vld [vmem:[#allocation5 + $0x28] sm:$0xff]
    %v98 = vld [vmem:[#allocation5 + $0x30] sm:$0xff]
    %v99 = vld [vmem:[#allocation5 + $0x38] sm:$0xff]
    %v132 = vunpack.c.l.b16 %v60
    %v133 = vunpack.c.l.b16 %v61
    %v134 = vunpack.c.l.b16 %v62
    %v135 = vunpack.c.l.b16 %v63
    %v136 = vunpack.c.l.b16 %v64
    %v137 = vunpack.c.l.b16 %v65
    %v138 = vunpack.c.l.b16 %v66
    %v139 = vunpack.c.l.b16 %v67
    %v140 = vunpack.c.l.b16 %v68
    %v141 = vunpack.c.l.b16 %v69
    %v142 = vunpack.c.l.b16 %v70
    %v143 = vunpack.c.l.b16 %v71
    %v144 = vunpack.c.l.b16 %v72
    %v145 = vunpack.c.l.b16 %v73
    %v146 = vunpack.c.l.b16 %v74
    %v147 = vunpack.c.l.b16 %v75
    %v148 = vunpack.c.l.b16 %v76
    %v149 = vunpack.c.l.b16 %v77
    %v150 = vunpack.c.l.b16 %v78
    %v151 = vunpack.c.l.b16 %v79
    %v152 = vunpack.c.l.b16 %v80
    %v153 = vunpack.c.l.b16 %v81
    %v154 = vunpack.c.l.b16 %v82
    %v155 = vunpack.c.l.b16 %v83
    %v156 = vunpack.c.l.b16 %v84
    %v157 = vunpack.c.l.b16 %v85
    %v158 = vunpack.c.l.b16 %v86
    %v159 = vunpack.c.l.b16 %v87
    %v160 = vunpack.c.l.b16 %v88
    %v161 = vunpack.c.l.b16 %v89
    %v162 = vunpack.c.l.b16 %v90
    %v163 = vunpack.c.l.b16 %v91
    %v164 = vpack.c.b16 %v133, %v132
    %v165 = vpack.c.b16 %v135, %v134
    %v166 = vpack.c.b16 %v137, %v136
    %v167 = vpack.c.b16 %v139, %v138
    %v168 = vpack.c.b16 %v141, %v140
    %v169 = vpack.c.b16 %v143, %v142
    %v170 = vpack.c.b16 %v145, %v144
    %v171 = vpack.c.b16 %v147, %v146
    %v172 = vpack.c.b16 %v149, %v148
    %v173 = vpack.c.b16 %v151, %v150
    %v174 = vpack.c.b16 %v153, %v152
    %v175 = vpack.c.b16 %v155, %v154
    %v176 = vpack.c.b16 %v157, %v156
    %v177 = vpack.c.b16 %v159, %v158
    %v178 = vpack.c.b16 %v161, %v160
    %v179 = vpack.c.b16 %v163, %v162
    %v188 = vunpack.c.l.b16 %v92
    %v189 = vunpack.c.h.b16 %v92
    %v190 = vunpack.c.l.b16 %v93
    %v191 = vunpack.c.h.b16 %v93
    %v192 = vunpack.c.l.b16 %v94
    %v193 = vunpack.c.h.b16 %v94
    %v194 = vunpack.c.l.b16 %v95
    %v195 = vunpack.c.h.b16 %v95
    %v196 = vunpack.c.l.b16 %v96
    %v197 = vunpack.c.h.b16 %v96
    %v198 = vunpack.c.l.b16 %v97
    %v199 = vunpack.c.h.b16 %v97
    %v200 = vunpack.c.l.b16 %v98
    %v201 = vunpack.c.h.b16 %v98
    %v202 = vunpack.c.l.b16 %v99
    %v203 = vunpack.c.h.b16 %v99
    %v204 = vpack.c.b16 %v190, %v188
    %v205 = vpack.c.b16 %v191, %v189
    %v206 = vpack.c.b16 %v194, %v192
    %v207 = vpack.c.b16 %v195, %v193
    %v208 = vpack.c.b16 %v198, %v196
    %v209 = vpack.c.b16 %v199, %v197
    %v210 = vpack.c.b16 %v202, %v200
    %v211 = vpack.c.b16 %v203, %v201
    %vm220 = vcmask 523264
    %v222 = vsel %vm220, %v164, 0
    %v225 = vsel %vm220, %v165, 0
    %v228 = vsel %vm220, %v166, 0
    %v231 = vsel %vm220, %v167, 0
    %v234 = vsel %vm220, %v168, 0
    %v237 = vsel %vm220, %v169, 0
    %v240 = vsel %vm220, %v170, 0
    %v243 = vsel %vm220, %v171, 0
    %v246 = vsel %vm220, %v172, 0
    %v249 = vsel %vm220, %v173, 0
    %v252 = vsel %vm220, %v174, 0
    %v255 = vsel %vm220, %v175, 0
    %v258 = vsel %vm220, %v176, 0
    %v261 = vsel %vm220, %v177, 0
    %v264 = vsel %vm220, %v178, 0
    %v267 = vsel %vm220, %v179, 0
    %269 = vmatprep.subr.bf16.mxu0 0
    %270 = vmatpush1.bf16.msra.mxu0 0
    %271 = vmatprep.subr.bf16.mxu0 0
    %272 = vmatpush1.bf16.msra.mxu0 0
    %273 = vmatprep.subr.bf16.mxu0 0
    %274 = vmatpush1.bf16.msra.mxu0 0
    %275 = vmatprep.subr.bf16.mxu0 0
    %276 = vmatpush1.bf16.msra.mxu0 0
    %277 = vmatprep.subr.bf16.mxu0 %v211
    %278 = vmatpush1.bf16.msra.mxu0 %v210
    %279 = vmatprep.subr.bf16.mxu0 %v209
    %280 = vmatpush1.bf16.msra.mxu0 %v208
    %281 = vmatprep.subr.bf16.mxu0 %v207
    %282 = vmatpush1.bf16.msra.mxu0 %v206
    %283 = vmatprep.subr.bf16.mxu0 %v205
    %284 = vmatpush1.bf16.msra.mxu0 %v204
    %285 = vmatprep.subr.bf16.mxu0 0
    %286 = vmatpush2.bf16.msra.mxu0 0
    %287 = vmatprep.subr.bf16.mxu0 0
    %288 = vmatpush2.bf16.msra.mxu0 0
    %289 = vmatprep.subr.bf16.mxu0 0
    %290 = vmatpush2.bf16.msra.mxu0 0
    %291 = vmatprep.subr.bf16.mxu0 0
    %292 = vmatpush2.bf16.msra.mxu0 0
    %293 = vmatprep.subr.bf16.mxu0 0
    %294 = vmatpush2.bf16.msra.mxu0 0
    %295 = vmatprep.subr.bf16.mxu0 0
    %296 = vmatpush2.bf16.msra.mxu0 0
    %297 = vmatprep.subr.bf16.mxu0 0
    %298 = vmatpush2.bf16.msra.mxu0 0
    %299 = vmatprep.subr.bf16.mxu0 0
    %300 = vmatpush2.bf16.msra.mxu0 0
    %301 = vmatprep.mubr.bf16.mxu0 0
    %302 = vmatmul.mubr.bf16.gmra.mxu0 %v222
    %v303 = vpop.f32.mrf.mxu0
    %v304 = vadd.f32 0.0, %v303
    %v305 = vpop.f32.mrf.mxu0
    %v306 = vadd.f32 0.0, %v305
    %v307 = vpop.f32.mrf.mxu0
    %v308 = vadd.f32 0.0, %v307
    %v309 = vpop.f32.mrf.mxu0
    %v310 = vadd.f32 0.0, %v309
    %311 = vmatprep.mubr.bf16.mxu0 0
    %312 = vmatmul.mubr.bf16.gmra.mxu0 %v225
    %v313 = vpop.f32.mrf.mxu0
    %v314 = vadd.f32 0.0, %v313
    %v315 = vpop.f32.mrf.mxu0
    %v316 = vadd.f32 0.0, %v315
    %v317 = vpop.f32.mrf.mxu0
    %v318 = vadd.f32 0.0, %v317
    %v319 = vpop.f32.mrf.mxu0
    %v320 = vadd.f32 0.0, %v319
    %321 = vmatprep.mubr.bf16.mxu0 0
    %322 = vmatmul.mubr.bf16.gmra.mxu0 %v228
    %v323 = vpop.f32.mrf.mxu0
    %v324 = vadd.f32 0.0, %v323
    %v325 = vpop.f32.mrf.mxu0
    %v326 = vadd.f32 0.0, %v325
    %v327 = vpop.f32.mrf.mxu0
    %v328 = vadd.f32 0.0, %v327
    %v329 = vpop.f32.mrf.mxu0
    %v330 = vadd.f32 0.0, %v329
    %331 = vmatprep.mubr.bf16.mxu0 0
    %332 = vmatmul.mubr.bf16.gmra.mxu0 %v231
    %v333 = vpop.f32.mrf.mxu0
    %v334 = vadd.f32 0.0, %v333
    %v335 = vpop.f32.mrf.mxu0
    %v336 = vadd.f32 0.0, %v335
    %v337 = vpop.f32.mrf.mxu0
    %v338 = vadd.f32 0.0, %v337
    %v339 = vpop.f32.mrf.mxu0
    %v340 = vadd.f32 0.0, %v339
    %341 = vmatprep.mubr.bf16.mxu0 0
    %342 = vmatmul.mubr.bf16.gmra.mxu0 %v234
    %v343 = vpop.f32.mrf.mxu0
    %v344 = vadd.f32 0.0, %v343
    %v345 = vpop.f32.mrf.mxu0
    %v346 = vadd.f32 0.0, %v345
    %v347 = vpop.f32.mrf.mxu0
    %v348 = vadd.f32 0.0, %v347
    %v349 = vpop.f32.mrf.mxu0
    %v350 = vadd.f32 0.0, %v349
    %351 = vmatprep.mubr.bf16.mxu0 0
    %352 = vmatmul.mubr.bf16.gmra.mxu0 %v237
    %v353 = vpop.f32.mrf.mxu0
    %v354 = vadd.f32 0.0, %v353
    %v355 = vpop.f32.mrf.mxu0
    %v356 = vadd.f32 0.0, %v355
    %v357 = vpop.f32.mrf.mxu0
    %v358 = vadd.f32 0.0, %v357
    %v359 = vpop.f32.mrf.mxu0
    %v360 = vadd.f32 0.0, %v359
    %361 = vmatprep.mubr.bf16.mxu0 0
    %362 = vmatmul.mubr.bf16.gmra.mxu0 %v240
    %v363 = vpop.f32.mrf.mxu0
    %v364 = vadd.f32 0.0, %v363
    %v365 = vpop.f32.mrf.mxu0
    %v366 = vadd.f32 0.0, %v365
    %v367 = vpop.f32.mrf.mxu0
    %v368 = vadd.f32 0.0, %v367
    %v369 = vpop.f32.mrf.mxu0
    %v370 = vadd.f32 0.0, %v369
    %371 = vmatprep.mubr.bf16.mxu0 0
    %372 = vmatmul.mubr.bf16.gmra.mxu0 %v243
    %v373 = vpop.f32.mrf.mxu0
    %v374 = vadd.f32 0.0, %v373
    %v375 = vpop.f32.mrf.mxu0
    %v376 = vadd.f32 0.0, %v375
    %v377 = vpop.f32.mrf.mxu0
    %v378 = vadd.f32 0.0, %v377
    %v379 = vpop.f32.mrf.mxu0
    %v380 = vadd.f32 0.0, %v379
    %381 = vmatprep.mubr.bf16.mxu0 0
    %382 = vmatmul.mubr.bf16.gmra.mxu0 %v246
    %v383 = vpop.f32.mrf.mxu0
    %v384 = vadd.f32 0.0, %v383
    %v385 = vpop.f32.mrf.mxu0
    %v386 = vadd.f32 0.0, %v385
    %v387 = vpop.f32.mrf.mxu0
    %v388 = vadd.f32 0.0, %v387
    %v389 = vpop.f32.mrf.mxu0
    %v390 = vadd.f32 0.0, %v389
    %391 = vmatprep.mubr.bf16.mxu0 0
    %392 = vmatmul.mubr.bf16.gmra.mxu0 %v249
    %v393 = vpop.f32.mrf.mxu0
    %v394 = vadd.f32 0.0, %v393
    %v395 = vpop.f32.mrf.mxu0
    %v396 = vadd.f32 0.0, %v395
    %v397 = vpop.f32.mrf.mxu0
    %v398 = vadd.f32 0.0, %v397
    %v399 = vpop.f32.mrf.mxu0
    %v400 = vadd.f32 0.0, %v399
    %401 = vmatprep.mubr.bf16.mxu0 0
    %402 = vmatmul.mubr.bf16.gmra.mxu0 %v252
    %v403 = vpop.f32.mrf.mxu0
    %v404 = vadd.f32 0.0, %v403
    %v405 = vpop.f32.mrf.mxu0
    %v406 = vadd.f32 0.0, %v405
    %v407 = vpop.f32.mrf.mxu0
    %v408 = vadd.f32 0.0, %v407
    %v409 = vpop.f32.mrf.mxu0
    %v410 = vadd.f32 0.0, %v409
    %411 = vmatprep.mubr.bf16.mxu0 0
    %412 = vmatmul.mubr.bf16.gmra.mxu0 %v255
    %v413 = vpop.f32.mrf.mxu0
    %v414 = vadd.f32 0.0, %v413
    %v415 = vpop.f32.mrf.mxu0
    %v416 = vadd.f32 0.0, %v415
    %v417 = vpop.f32.mrf.mxu0
    %v418 = vadd.f32 0.0, %v417
    %v419 = vpop.f32.mrf.mxu0
    %v420 = vadd.f32 0.0, %v419
    %421 = vmatprep.mubr.bf16.mxu0 0
    %422 = vmatmul.mubr.bf16.gmra.mxu0 %v258
    %v423 = vpop.f32.mrf.mxu0
    %v424 = vadd.f32 0.0, %v423
    %v425 = vpop.f32.mrf.mxu0
    %v426 = vadd.f32 0.0, %v425
    %v427 = vpop.f32.mrf.mxu0
    %v428 = vadd.f32 0.0, %v427
    %v429 = vpop.f32.mrf.mxu0
    %v430 = vadd.f32 0.0, %v429
    %431 = vmatprep.mubr.bf16.mxu0 0
    %432 = vmatmul.mubr.bf16.gmra.mxu0 %v261
    %v433 = vpop.f32.mrf.mxu0
    %v434 = vadd.f32 0.0, %v433
    %v435 = vpop.f32.mrf.mxu0
    %v436 = vadd.f32 0.0, %v435
    %v437 = vpop.f32.mrf.mxu0
    %v438 = vadd.f32 0.0, %v437
    %v439 = vpop.f32.mrf.mxu0
    %v440 = vadd.f32 0.0, %v439
    %441 = vmatprep.mubr.bf16.mxu0 0
    %442 = vmatmul.mubr.bf16.gmra.mxu0 %v264
    %v443 = vpop.f32.mrf.mxu0
    %v444 = vadd.f32 0.0, %v443
    %v445 = vpop.f32.mrf.mxu0
    %v446 = vadd.f32 0.0, %v445
    %v447 = vpop.f32.mrf.mxu0
    %v448 = vadd.f32 0.0, %v447
    %v449 = vpop.f32.mrf.mxu0
    %v450 = vadd.f32 0.0, %v449
    %451 = vmatprep.mubr.bf16.mxu0 0
    %452 = vmatmul.mubr.bf16.gmra.mxu0 %v267
    %v453 = vpop.f32.mrf.mxu0
    %v454 = vadd.f32 0.0, %v453
    %v455 = vpop.f32.mrf.mxu0
    %v456 = vadd.f32 0.0, %v455
    %v457 = vpop.f32.mrf.mxu0
    %v458 = vadd.f32 0.0, %v457
    %v459 = vpop.f32.mrf.mxu0
    %v460 = vadd.f32 0.0, %v459
    %461 = vdwg.mxu0
    %494 = vrot.lane.b32.xlu0 %v304, 112
    %v495 = vpop.permute.xlu0 %494
    %496 = vrot.lane.b32.xlu0 %v308, 112
    %v497 = vpop.permute.xlu0 %496
    %498 = vrot.lane.b32.xlu0 %v314, 112
    %v499 = vpop.permute.xlu0 %498
    %500 = vrot.lane.b32.xlu0 %v318, 112
    %v501 = vpop.permute.xlu0 %500
    %502 = vrot.lane.b32.xlu0 %v324, 112
    %v503 = vpop.permute.xlu0 %502
    %504 = vrot.lane.b32.xlu0 %v328, 112
    %v505 = vpop.permute.xlu0 %504
    %506 = vrot.lane.b32.xlu0 %v334, 112
    %v507 = vpop.permute.xlu0 %506
    %508 = vrot.lane.b32.xlu0 %v338, 112
    %v509 = vpop.permute.xlu0 %508
    %510 = vrot.lane.b32.xlu0 %v344, 112
    %v511 = vpop.permute.xlu0 %510
    %512 = vrot.lane.b32.xlu0 %v348, 112
    %v513 = vpop.permute.xlu0 %512
    %514 = vrot.lane.b32.xlu0 %v354, 112
    %v515 = vpop.permute.xlu0 %514
    %516 = vrot.lane.b32.xlu0 %v358, 112
    %v517 = vpop.permute.xlu0 %516
    %518 = vrot.lane.b32.xlu0 %v364, 112
    %v519 = vpop.permute.xlu0 %518
    %520 = vrot.lane.b32.xlu0 %v368, 112
    %v521 = vpop.permute.xlu0 %520
    %522 = vrot.lane.b32.xlu0 %v374, 112
    %v523 = vpop.permute.xlu0 %522
    %524 = vrot.lane.b32.xlu0 %v378, 112
    %v525 = vpop.permute.xlu0 %524
    %526 = vrot.lane.b32.xlu0 %v384, 112
    %v527 = vpop.permute.xlu0 %526
    %528 = vrot.lane.b32.xlu0 %v388, 112
    %v529 = vpop.permute.xlu0 %528
    %530 = vrot.lane.b32.xlu0 %v394, 112
    %v531 = vpop.permute.xlu0 %530
    %532 = vrot.lane.b32.xlu0 %v398, 112
    %v533 = vpop.permute.xlu0 %532
    %534 = vrot.lane.b32.xlu0 %v404, 112
    %v535 = vpop.permute.xlu0 %534
    %536 = vrot.lane.b32.xlu0 %v408, 112
    %v537 = vpop.permute.xlu0 %536
    %538 = vrot.lane.b32.xlu0 %v414, 112
    %v539 = vpop.permute.xlu0 %538
    %540 = vrot.lane.b32.xlu0 %v418, 112
    %v541 = vpop.permute.xlu0 %540
    %542 = vrot.lane.b32.xlu0 %v424, 112
    %v543 = vpop.permute.xlu0 %542
    %544 = vrot.lane.b32.xlu0 %v428, 112
    %v545 = vpop.permute.xlu0 %544
    %546 = vrot.lane.b32.xlu0 %v434, 112
    %v547 = vpop.permute.xlu0 %546
    %548 = vrot.lane.b32.xlu0 %v438, 112
    %v549 = vpop.permute.xlu0 %548
    %550 = vrot.lane.b32.xlu0 %v444, 112
    %v551 = vpop.permute.xlu0 %550
    %552 = vrot.lane.b32.xlu0 %v448, 112
    %v553 = vpop.permute.xlu0 %552
    %554 = vrot.lane.b32.xlu0 %v454, 112
    %v555 = vpop.permute.xlu0 %554
    %556 = vrot.lane.b32.xlu0 %v458, 112
    %v557 = vpop.permute.xlu0 %556
    %590 = vrot.lane.b32.xlu0 %v304, 96
    %v591 = vpop.permute.xlu0 %590
    %592 = vrot.lane.b32.xlu0 %v308, 96
    %v593 = vpop.permute.xlu0 %592
    %594 = vrot.lane.b32.xlu0 %v314, 96
    %v595 = vpop.permute.xlu0 %594
    %596 = vrot.lane.b32.xlu0 %v318, 96
    %v597 = vpop.permute.xlu0 %596
    %598 = vrot.lane.b32.xlu0 %v324, 96
    %v599 = vpop.permute.xlu0 %598
    %600 = vrot.lane.b32.xlu0 %v328, 96
    %v601 = vpop.permute.xlu0 %600
    %602 = vrot.lane.b32.xlu0 %v334, 96
    %v603 = vpop.permute.xlu0 %602
    %604 = vrot.lane.b32.xlu0 %v338, 96
    %v605 = vpop.permute.xlu0 %604
    %606 = vrot.lane.b32.xlu0 %v344, 96
    %v607 = vpop.permute.xlu0 %606
    %608 = vrot.lane.b32.xlu0 %v348, 96
    %v609 = vpop.permute.xlu0 %608
    %610 = vrot.lane.b32.xlu0 %v354, 96
    %v611 = vpop.permute.xlu0 %610
    %612 = vrot.lane.b32.xlu0 %v358, 96
    %v613 = vpop.permute.xlu0 %612
    %614 = vrot.lane.b32.xlu0 %v364, 96
    %v615 = vpop.permute.xlu0 %614
    %616 = vrot.lane.b32.xlu0 %v368, 96
    %v617 = vpop.permute.xlu0 %616
    %618 = vrot.lane.b32.xlu0 %v374, 96
    %v619 = vpop.permute.xlu0 %618
    %620 = vrot.lane.b32.xlu0 %v378, 96
    %v621 = vpop.permute.xlu0 %620
    %622 = vrot.lane.b32.xlu0 %v384, 96
    %v623 = vpop.permute.xlu0 %622
    %624 = vrot.lane.b32.xlu0 %v388, 96
    %v625 = vpop.permute.xlu0 %624
    %626 = vrot.lane.b32.xlu0 %v394, 96
    %v627 = vpop.permute.xlu0 %626
    %628 = vrot.lane.b32.xlu0 %v398, 96
    %v629 = vpop.permute.xlu0 %628
    %630 = vrot.lane.b32.xlu0 %v404, 96
    %v631 = vpop.permute.xlu0 %630
    %632 = vrot.lane.b32.xlu0 %v408, 96
    %v633 = vpop.permute.xlu0 %632
    %634 = vrot.lane.b32.xlu0 %v414, 96
    %v635 = vpop.permute.xlu0 %634
    %636 = vrot.lane.b32.xlu0 %v418, 96
    %v637 = vpop.permute.xlu0 %636
    %638 = vrot.lane.b32.xlu0 %v424, 96
    %v639 = vpop.permute.xlu0 %638
    %640 = vrot.lane.b32.xlu0 %v428, 96
    %v641 = vpop.permute.xlu0 %640
    %642 = vrot.lane.b32.xlu0 %v434, 96
    %v643 = vpop.permute.xlu0 %642
    %644 = vrot.lane.b32.xlu0 %v438, 96
    %v645 = vpop.permute.xlu0 %644
    %646 = vrot.lane.b32.xlu0 %v444, 96
    %v647 = vpop.permute.xlu0 %646
    %648 = vrot.lane.b32.xlu0 %v448, 96
    %v649 = vpop.permute.xlu0 %648
    %650 = vrot.lane.b32.xlu0 %v454, 96
    %v651 = vpop.permute.xlu0 %650
    %652 = vrot.lane.b32.xlu0 %v458, 96
    %v653 = vpop.permute.xlu0 %652
    %686 = vrot.lane.b32.xlu0 %v304, 80
    %v687 = vpop.permute.xlu0 %686
    %688 = vrot.lane.b32.xlu0 %v308, 80
    %v689 = vpop.permute.xlu0 %688
    %690 = vrot.lane.b32.xlu0 %v314, 80
    %v691 = vpop.permute.xlu0 %690
    %692 = vrot.lane.b32.xlu0 %v318, 80
    %v693 = vpop.permute.xlu0 %692
    %694 = vrot.lane.b32.xlu0 %v324, 80
    %v695 = vpop.permute.xlu0 %694
    %696 = vrot.lane.b32.xlu0 %v328, 80
    %v697 = vpop.permute.xlu0 %696
    %698 = vrot.lane.b32.xlu0 %v334, 80
    %v699 = vpop.permute.xlu0 %698
    %700 = vrot.lane.b32.xlu0 %v338, 80
    %v701 = vpop.permute.xlu0 %700
    %702 = vrot.lane.b32.xlu0 %v344, 80
    %v703 = vpop.permute.xlu0 %702
    %704 = vrot.lane.b32.xlu0 %v348, 80
    %v705 = vpop.permute.xlu0 %704
    %706 = vrot.lane.b32.xlu0 %v354, 80
    %v707 = vpop.permute.xlu0 %706
    %708 = vrot.lane.b32.xlu0 %v358, 80
    %v709 = vpop.permute.xlu0 %708
    %710 = vrot.lane.b32.xlu0 %v364, 80
    %v711 = vpop.permute.xlu0 %710
    %712 = vrot.lane.b32.xlu0 %v368, 80
    %v713 = vpop.permute.xlu0 %712
    %714 = vrot.lane.b32.xlu0 %v374, 80
    %v715 = vpop.permute.xlu0 %714
    %716 = vrot.lane.b32.xlu0 %v378, 80
    %v717 = vpop.permute.xlu0 %716
    %718 = vrot.lane.b32.xlu0 %v384, 80
    %v719 = vpop.permute.xlu0 %718
    %720 = vrot.lane.b32.xlu0 %v388, 80
    %v721 = vpop.permute.xlu0 %720
    %722 = vrot.lane.b32.xlu0 %v394, 80
    %v723 = vpop.permute.xlu0 %722
    %724 = vrot.lane.b32.xlu0 %v398, 80
    %v725 = vpop.permute.xlu0 %724
    %726 = vrot.lane.b32.xlu0 %v404, 80
    %v727 = vpop.permute.xlu0 %726
    %728 = vrot.lane.b32.xlu0 %v408, 80
    %v729 = vpop.permute.xlu0 %728
    %730 = vrot.lane.b32.xlu0 %v414, 80
    %v731 = vpop.permute.xlu0 %730
    %732 = vrot.lane.b32.xlu0 %v418, 80
    %v733 = vpop.permute.xlu0 %732
    %734 = vrot.lane.b32.xlu0 %v424, 80
    %v735 = vpop.permute.xlu0 %734
    %736 = vrot.lane.b32.xlu0 %v428, 80
    %v737 = vpop.permute.xlu0 %736
    %738 = vrot.lane.b32.xlu0 %v434, 80
    %v739 = vpop.permute.xlu0 %738
    %740 = vrot.lane.b32.xlu0 %v438, 80
    %v741 = vpop.permute.xlu0 %740
    %742 = vrot.lane.b32.xlu0 %v444, 80
    %v743 = vpop.permute.xlu0 %742
    %744 = vrot.lane.b32.xlu0 %v448, 80
    %v745 = vpop.permute.xlu0 %744
    %746 = vrot.lane.b32.xlu0 %v454, 80
    %v747 = vpop.permute.xlu0 %746
    %748 = vrot.lane.b32.xlu0 %v458, 80
    %v749 = vpop.permute.xlu0 %748
    %v782 = vpack.c.bf16 %v308, %v304
    %v783 = vpack.c.bf16 %v318, %v314
    %v784 = vpack.c.bf16 %v328, %v324
    %v785 = vpack.c.bf16 %v338, %v334
    %v786 = vpack.c.bf16 %v348, %v344
    %v787 = vpack.c.bf16 %v358, %v354
    %v788 = vpack.c.bf16 %v368, %v364
    %v789 = vpack.c.bf16 %v378, %v374
    %v790 = vpack.c.bf16 %v388, %v384
    %v791 = vpack.c.bf16 %v398, %v394
    %v792 = vpack.c.bf16 %v408, %v404
    %v793 = vpack.c.bf16 %v418, %v414
    %v794 = vpack.c.bf16 %v428, %v424
    %v795 = vpack.c.bf16 %v438, %v434
    %v796 = vpack.c.bf16 %v448, %v444
    %v797 = vpack.c.bf16 %v458, %v454
    %v798 = vpack.c.bf16 %v497, %v495
    %v799 = vpack.c.bf16 %v501, %v499
    %v800 = vpack.c.bf16 %v505, %v503
    %v801 = vpack.c.bf16 %v509, %v507
    %v802 = vpack.c.bf16 %v513, %v511
    %v803 = vpack.c.bf16 %v517, %v515
    %v804 = vpack.c.bf16 %v521, %v519
    %v805 = vpack.c.bf16 %v525, %v523
    %v806 = vpack.c.bf16 %v529, %v527
    %v807 = vpack.c.bf16 %v533, %v531
    %v808 = vpack.c.bf16 %v537, %v535
    %v809 = vpack.c.bf16 %v541, %v539
    %v810 = vpack.c.bf16 %v545, %v543
    %v811 = vpack.c.bf16 %v549, %v547
    %v812 = vpack.c.bf16 %v553, %v551
    %v813 = vpack.c.bf16 %v557, %v555
    %v814 = vpack.c.bf16 %v593, %v591
    %v815 = vpack.c.bf16 %v597, %v595
    %v816 = vpack.c.bf16 %v601, %v599
    %v817 = vpack.c.bf16 %v605, %v603
    %v818 = vpack.c.bf16 %v609, %v607
    %v819 = vpack.c.bf16 %v613, %v611
    %v820 = vpack.c.bf16 %v617, %v615
    %v821 = vpack.c.bf16 %v621, %v619
    %v822 = vpack.c.bf16 %v625, %v623
    %v823 = vpack.c.bf16 %v629, %v627
    %v824 = vpack.c.bf16 %v633, %v631
    %v825 = vpack.c.bf16 %v637, %v635
    %v826 = vpack.c.bf16 %v641, %v639
    %v827 = vpack.c.bf16 %v645, %v643
    %v828 = vpack.c.bf16 %v649, %v647
    %v829 = vpack.c.bf16 %v653, %v651
    %v830 = vpack.c.bf16 %v689, %v687
    %v831 = vpack.c.bf16 %v693, %v691
    %v832 = vpack.c.bf16 %v697, %v695
    %v833 = vpack.c.bf16 %v701, %v699
    %v834 = vpack.c.bf16 %v705, %v703
    %v835 = vpack.c.bf16 %v709, %v707
    %v836 = vpack.c.bf16 %v713, %v711
    %v837 = vpack.c.bf16 %v717, %v715
    %v838 = vpack.c.bf16 %v721, %v719
    %v839 = vpack.c.bf16 %v725, %v723
    %v840 = vpack.c.bf16 %v729, %v727
    %v841 = vpack.c.bf16 %v733, %v731
    %v842 = vpack.c.bf16 %v737, %v735
    %v843 = vpack.c.bf16 %v741, %v739
    %v844 = vpack.c.bf16 %v745, %v743
    %v845 = vpack.c.bf16 %v749, %v747
    %878 = vrot.lane.b32.xlu0 %v306, 112
    %v879 = vpop.permute.xlu0 %878
    %880 = vrot.lane.b32.xlu0 %v310, 112
    %v881 = vpop.permute.xlu0 %880
    %882 = vrot.lane.b32.xlu0 %v316, 112
    %v883 = vpop.permute.xlu0 %882
    %884 = vrot.lane.b32.xlu0 %v320, 112
    %v885 = vpop.permute.xlu0 %884
    %886 = vrot.lane.b32.xlu0 %v326, 112
    %v887 = vpop.permute.xlu0 %886
    %888 = vrot.lane.b32.xlu0 %v330, 112
    %v889 = vpop.permute.xlu0 %888
    %890 = vrot.lane.b32.xlu0 %v336, 112
    %v891 = vpop.permute.xlu0 %890
    %892 = vrot.lane.b32.xlu0 %v340, 112
    %v893 = vpop.permute.xlu0 %892
    %894 = vrot.lane.b32.xlu0 %v346, 112
    %v895 = vpop.permute.xlu0 %894
    %896 = vrot.lane.b32.xlu0 %v350, 112
    %v897 = vpop.permute.xlu0 %896
    %898 = vrot.lane.b32.xlu0 %v356, 112
    %v899 = vpop.permute.xlu0 %898
    %900 = vrot.lane.b32.xlu0 %v360, 112
    %v901 = vpop.permute.xlu0 %900
    %902 = vrot.lane.b32.xlu0 %v366, 112
    %v903 = vpop.permute.xlu0 %902
    %904 = vrot.lane.b32.xlu0 %v370, 112
    %v905 = vpop.permute.xlu0 %904
    %906 = vrot.lane.b32.xlu0 %v376, 112
    %v907 = vpop.permute.xlu0 %906
    %908 = vrot.lane.b32.xlu0 %v380, 112
    %v909 = vpop.permute.xlu0 %908
    %910 = vrot.lane.b32.xlu0 %v386, 112
    %v911 = vpop.permute.xlu0 %910
    %912 = vrot.lane.b32.xlu0 %v390, 112
    %v913 = vpop.permute.xlu0 %912
    %914 = vrot.lane.b32.xlu0 %v396, 112
    %v915 = vpop.permute.xlu0 %914
    %916 = vrot.lane.b32.xlu0 %v400, 112
    %v917 = vpop.permute.xlu0 %916
    %918 = vrot.lane.b32.xlu0 %v406, 112
    %v919 = vpop.permute.xlu0 %918
    %920 = vrot.lane.b32.xlu0 %v410, 112
    %v921 = vpop.permute.xlu0 %920
    %922 = vrot.lane.b32.xlu0 %v416, 112
    %v923 = vpop.permute.xlu0 %922
    %924 = vrot.lane.b32.xlu0 %v420, 112
    %v925 = vpop.permute.xlu0 %924
    %926 = vrot.lane.b32.xlu0 %v426, 112
    %v927 = vpop.permute.xlu0 %926
    %928 = vrot.lane.b32.xlu0 %v430, 112
    %v929 = vpop.permute.xlu0 %928
    %930 = vrot.lane.b32.xlu0 %v436, 112
    %v931 = vpop.permute.xlu0 %930
    %932 = vrot.lane.b32.xlu0 %v440, 112
    %v933 = vpop.permute.xlu0 %932
    %934 = vrot.lane.b32.xlu0 %v446, 112
    %v935 = vpop.permute.xlu0 %934
    %936 = vrot.lane.b32.xlu0 %v450, 112
    %v937 = vpop.permute.xlu0 %936
    %938 = vrot.lane.b32.xlu0 %v456, 112
    %v939 = vpop.permute.xlu0 %938
    %940 = vrot.lane.b32.xlu0 %v460, 112
    %v941 = vpop.permute.xlu0 %940
    %974 = vrot.lane.b32.xlu0 %v306, 96
    %v975 = vpop.permute.xlu0 %974
    %976 = vrot.lane.b32.xlu0 %v310, 96
    %v977 = vpop.permute.xlu0 %976
    %978 = vrot.lane.b32.xlu0 %v316, 96
    %v979 = vpop.permute.xlu0 %978
    %980 = vrot.lane.b32.xlu0 %v320, 96
    %v981 = vpop.permute.xlu0 %980
    %982 = vrot.lane.b32.xlu0 %v326, 96
    %v983 = vpop.permute.xlu0 %982
    %984 = vrot.lane.b32.xlu0 %v330, 96
    %v985 = vpop.permute.xlu0 %984
    %986 = vrot.lane.b32.xlu0 %v336, 96
    %v987 = vpop.permute.xlu0 %986
    %988 = vrot.lane.b32.xlu0 %v340, 96
    %v989 = vpop.permute.xlu0 %988
    %990 = vrot.lane.b32.xlu0 %v346, 96
    %v991 = vpop.permute.xlu0 %990
    %992 = vrot.lane.b32.xlu0 %v350, 96
    %v993 = vpop.permute.xlu0 %992
    %994 = vrot.lane.b32.xlu0 %v356, 96
    %v995 = vpop.permute.xlu0 %994
    %996 = vrot.lane.b32.xlu0 %v360, 96
    %v997 = vpop.permute.xlu0 %996
    %998 = vrot.lane.b32.xlu0 %v366, 96
    %v999 = vpop.permute.xlu0 %998
    %1000 = vrot.lane.b32.xlu0 %v370, 96
    %v1001 = vpop.permute.xlu0 %1000
    %1002 = vrot.lane.b32.xlu0 %v376, 96
    %v1003 = vpop.permute.xlu0 %1002
    %1004 = vrot.lane.b32.xlu0 %v380, 96
    %v1005 = vpop.permute.xlu0 %1004
    %1006 = vrot.lane.b32.xlu0 %v386, 96
    %v1007 = vpop.permute.xlu0 %1006
    %1008 = vrot.lane.b32.xlu0 %v390, 96
    %v1009 = vpop.permute.xlu0 %1008
    %1010 = vrot.lane.b32.xlu0 %v396, 96
    %v1011 = vpop.permute.xlu0 %1010
    %1012 = vrot.lane.b32.xlu0 %v400, 96
    %v1013 = vpop.permute.xlu0 %1012
    %1014 = vrot.lane.b32.xlu0 %v406, 96
    %v1015 = vpop.permute.xlu0 %1014
    %1016 = vrot.lane.b32.xlu0 %v410, 96
    %v1017 = vpop.permute.xlu0 %1016
    %1018 = vrot.lane.b32.xlu0 %v416, 96
    %v1019 = vpop.permute.xlu0 %1018
    %1020 = vrot.lane.b32.xlu0 %v420, 96
    %v1021 = vpop.permute.xlu0 %1020
    %1022 = vrot.lane.b32.xlu0 %v426, 96
    %v1023 = vpop.permute.xlu0 %1022
    %1024 = vrot.lane.b32.xlu0 %v430, 96
    %v1025 = vpop.permute.xlu0 %1024
    %1026 = vrot.lane.b32.xlu0 %v436, 96
    %v1027 = vpop.permute.xlu0 %1026
    %1028 = vrot.lane.b32.xlu0 %v440, 96
    %v1029 = vpop.permute.xlu0 %1028
    %1030 = vrot.lane.b32.xlu0 %v446, 96
    %v1031 = vpop.permute.xlu0 %1030
    %1032 = vrot.lane.b32.xlu0 %v450, 96
    %v1033 = vpop.permute.xlu0 %1032
    %1034 = vrot.lane.b32.xlu0 %v456, 96
    %v1035 = vpop.permute.xlu0 %1034
    %1036 = vrot.lane.b32.xlu0 %v460, 96
    %v1037 = vpop.permute.xlu0 %1036
    %1070 = vrot.lane.b32.xlu0 %v306, 80
    %v1071 = vpop.permute.xlu0 %1070
    %1072 = vrot.lane.b32.xlu0 %v310, 80
    %v1073 = vpop.permute.xlu0 %1072
    %1074 = vrot.lane.b32.xlu0 %v316, 80
    %v1075 = vpop.permute.xlu0 %1074
    %1076 = vrot.lane.b32.xlu0 %v320, 80
    %v1077 = vpop.permute.xlu0 %1076
    %1078 = vrot.lane.b32.xlu0 %v326, 80
    %v1079 = vpop.permute.xlu0 %1078
    %1080 = vrot.lane.b32.xlu0 %v330, 80
    %v1081 = vpop.permute.xlu0 %1080
    %1082 = vrot.lane.b32.xlu0 %v336, 80
    %v1083 = vpop.permute.xlu0 %1082
    %1084 = vrot.lane.b32.xlu0 %v340, 80
    %v1085 = vpop.permute.xlu0 %1084
    %1086 = vrot.lane.b32.xlu0 %v346, 80
    %v1087 = vpop.permute.xlu0 %1086
    %1088 = vrot.lane.b32.xlu0 %v350, 80
    %v1089 = vpop.permute.xlu0 %1088
    %1090 = vrot.lane.b32.xlu0 %v356, 80
    %v1091 = vpop.permute.xlu0 %1090
    %1092 = vrot.lane.b32.xlu0 %v360, 80
    %v1093 = vpop.permute.xlu0 %1092
    %1094 = vrot.lane.b32.xlu0 %v366, 80
    %v1095 = vpop.permute.xlu0 %1094
    %1096 = vrot.lane.b32.xlu0 %v370, 80
    %v1097 = vpop.permute.xlu0 %1096
    %1098 = vrot.lane.b32.xlu0 %v376, 80
    %v1099 = vpop.permute.xlu0 %1098
    %1100 = vrot.lane.b32.xlu0 %v380, 80
    %v1101 = vpop.permute.xlu0 %1100
    %1102 = vrot.lane.b32.xlu0 %v386, 80
    %v1103 = vpop.permute.xlu0 %1102
    %1104 = vrot.lane.b32.xlu0 %v390, 80
    %v1105 = vpop.permute.xlu0 %1104
    %1106 = vrot.lane.b32.xlu0 %v396, 80
    %v1107 = vpop.permute.xlu0 %1106
    %1108 = vrot.lane.b32.xlu0 %v400, 80
    %v1109 = vpop.permute.xlu0 %1108
    %1110 = vrot.lane.b32.xlu0 %v406, 80
    %v1111 = vpop.permute.xlu0 %1110
    %1112 = vrot.lane.b32.xlu0 %v410, 80
    %v1113 = vpop.permute.xlu0 %1112
    %1114 = vrot.lane.b32.xlu0 %v416, 80
    %v1115 = vpop.permute.xlu0 %1114
    %1116 = vrot.lane.b32.xlu0 %v420, 80
    %v1117 = vpop.permute.xlu0 %1116
    %1118 = vrot.lane.b32.xlu0 %v426, 80
    %v1119 = vpop.permute.xlu0 %1118
    %1120 = vrot.lane.b32.xlu0 %v430, 80
    %v1121 = vpop.permute.xlu0 %1120
    %1122 = vrot.lane.b32.xlu0 %v436, 80
    %v1123 = vpop.permute.xlu0 %1122
    %1124 = vrot.lane.b32.xlu0 %v440, 80
    %v1125 = vpop.permute.xlu0 %1124
    %1126 = vrot.lane.b32.xlu0 %v446, 80
    %v1127 = vpop.permute.xlu0 %1126
    %1128 = vrot.lane.b32.xlu0 %v450, 80
    %v1129 = vpop.permute.xlu0 %1128
    %1130 = vrot.lane.b32.xlu0 %v456, 80
    %v1131 = vpop.permute.xlu0 %1130
    %1132 = vrot.lane.b32.xlu0 %v460, 80
    %v1133 = vpop.permute.xlu0 %1132
    %v1166 = vpack.c.bf16 %v310, %v306
    %v1167 = vpack.c.bf16 %v320, %v316
    %v1168 = vpack.c.bf16 %v330, %v326
    %v1169 = vpack.c.bf16 %v340, %v336
    %v1170 = vpack.c.bf16 %v350, %v346
    %v1171 = vpack.c.bf16 %v360, %v356
    %v1172 = vpack.c.bf16 %v370, %v366
    %v1173 = vpack.c.bf16 %v380, %v376
    %v1174 = vpack.c.bf16 %v390, %v386
    %v1175 = vpack.c.bf16 %v400, %v396
    %v1176 = vpack.c.bf16 %v410, %v406
    %v1177 = vpack.c.bf16 %v420, %v416
    %v1178 = vpack.c.bf16 %v430, %v426
    %v1179 = vpack.c.bf16 %v440, %v436
    %v1180 = vpack.c.bf16 %v450, %v446
    %v1181 = vpack.c.bf16 %v460, %v456
    %v1182 = vpack.c.bf16 %v881, %v879
    %v1183 = vpack.c.bf16 %v885, %v883
    %v1184 = vpack.c.bf16 %v889, %v887
    %v1185 = vpack.c.bf16 %v893, %v891
    %v1186 = vpack.c.bf16 %v897, %v895
    %v1187 = vpack.c.bf16 %v901, %v899
    %v1188 = vpack.c.bf16 %v905, %v903
    %v1189 = vpack.c.bf16 %v909, %v907
    %v1190 = vpack.c.bf16 %v913, %v911
    %v1191 = vpack.c.bf16 %v917, %v915
    %v1192 = vpack.c.bf16 %v921, %v919
    %v1193 = vpack.c.bf16 %v925, %v923
    %v1194 = vpack.c.bf16 %v929, %v927
    %v1195 = vpack.c.bf16 %v933, %v931
    %v1196 = vpack.c.bf16 %v937, %v935
    %v1197 = vpack.c.bf16 %v941, %v939
    %v1198 = vpack.c.bf16 %v977, %v975
    %v1199 = vpack.c.bf16 %v981, %v979
    %v1200 = vpack.c.bf16 %v985, %v983
    %v1201 = vpack.c.bf16 %v989, %v987
    %v1202 = vpack.c.bf16 %v993, %v991
    %v1203 = vpack.c.bf16 %v997, %v995
    %v1204 = vpack.c.bf16 %v1001, %v999
    %v1205 = vpack.c.bf16 %v1005, %v1003
    %v1206 = vpack.c.bf16 %v1009, %v1007
    %v1207 = vpack.c.bf16 %v1013, %v1011
    %v1208 = vpack.c.bf16 %v1017, %v1015
    %v1209 = vpack.c.bf16 %v1021, %v1019
    %v1210 = vpack.c.bf16 %v1025, %v1023
    %v1211 = vpack.c.bf16 %v1029, %v1027
    %v1212 = vpack.c.bf16 %v1033, %v1031
    %v1213 = vpack.c.bf16 %v1037, %v1035
    %v1214 = vpack.c.bf16 %v1073, %v1071
    %v1215 = vpack.c.bf16 %v1077, %v1075
    %v1216 = vpack.c.bf16 %v1081, %v1079
    %v1217 = vpack.c.bf16 %v1085, %v1083
    %v1218 = vpack.c.bf16 %v1089, %v1087
    %v1219 = vpack.c.bf16 %v1093, %v1091
    %v1220 = vpack.c.bf16 %v1097, %v1095
    %v1221 = vpack.c.bf16 %v1101, %v1099
    %v1222 = vpack.c.bf16 %v1105, %v1103
    %v1223 = vpack.c.bf16 %v1109, %v1107
    %v1224 = vpack.c.bf16 %v1113, %v1111
    %v1225 = vpack.c.bf16 %v1117, %v1115
    %v1226 = vpack.c.bf16 %v1121, %v1119
    %v1227 = vpack.c.bf16 %v1125, %v1123
    %v1228 = vpack.c.bf16 %v1129, %v1127
    %v1229 = vpack.c.bf16 %v1133, %v1131
    %v1230 = vlaneseq
    %v1231 = vshrl.u32 %v1230, 7
    %v1232 = vadd.s32 %v1231, 8
    %v1233 = vadd.s32 %v1231, 16
    %v1234 = vadd.s32 %v1231, 24
    %v1235 = vlaneseq
    %v1236 = vand.u32 %v1235, 127
    %vm1237 = vcmp.le.s32.totalorder %v1236, %v1231
    %vm1238 = vcmp.le.s32.totalorder %v1236, %v1232
    %vm1239 = vcmp.le.s32.totalorder %v1236, %v1233
    %vm1240 = vcmp.le.s32.totalorder %v1236, %v1234
    %1243 = vrot.lane.b32.xlu0 %v782, 64
    %v1244 = vpop.permute.xlu0 %1243
    %1245 = vrot.lane.b32.xlu0 %v783, 64
    %v1246 = vpop.permute.xlu0 %1245
    %vm1247 = vcmask 130048
    %v1249 = vsel %vm1247, %v1244, 0
    %v1252 = vsel %vm1247, %v1246, 0
    %v1255 = vsel %vm1247, %v782, 0
    %v1258 = vsel %vm1247, %v783, 0
    %1260 = vmatprep.subr.bf16.mxu0 0
    %1261 = vmatpush1.bf16.xpose.msra.mxu0 0
    %1262 = vmatprep.subr.bf16.mxu0 0
    %1263 = vmatpush1.bf16.xpose.msra.mxu0 0
    %1264 = vmatprep.subr.bf16.mxu0 0
    %1265 = vmatpush1.bf16.xpose.msra.mxu0 0
    %1266 = vmatprep.subr.bf16.mxu0 0
    %1267 = vmatpush1.bf16.xpose.msra.mxu0 0
    %1268 = vmatprep.subr.bf16.mxu0 0
    %1269 = vmatpush1.bf16.xpose.msra.mxu0 0
    %1270 = vmatprep.subr.bf16.mxu0 0
    %1271 = vmatpush1.bf16.xpose.msra.mxu0 0
    %1272 = vmatprep.subr.bf16.mxu0 0
    %1273 = vmatpush1.bf16.xpose.msra.mxu0 %v1258
    %1274 = vmatprep.subr.bf16.mxu0 0
    %1275 = vmatpush1.bf16.xpose.msra.mxu0 %v1255
    %1276 = vmatprep.subr.bf16.mxu0 0
    %1277 = vmatpush2.bf16.xpose.msra.mxu0 0
    %1278 = vmatprep.subr.bf16.mxu0 0
    %1279 = vmatpush2.bf16.xpose.msra.mxu0 0
    %1280 = vmatprep.subr.bf16.mxu0 0
    %1281 = vmatpush2.bf16.xpose.msra.mxu0 0
    %1282 = vmatprep.subr.bf16.mxu0 0
    %1283 = vmatpush2.bf16.xpose.msra.mxu0 0
    %1284 = vmatprep.subr.bf16.mxu0 0
    %1285 = vmatpush2.bf16.xpose.msra.mxu0 0
    %1286 = vmatprep.subr.bf16.mxu0 0
    %1287 = vmatpush2.bf16.xpose.msra.mxu0 0
    %1288 = vmatprep.subr.bf16.mxu0 0
    %1289 = vmatpush2.bf16.xpose.msra.mxu0 0
    %1290 = vmatprep.subr.bf16.mxu0 0
    %1291 = vmatpush2.bf16.xpose.msra.mxu0 0
    %1292 = vmatprep.mubr.bf16.mxu0 0
    %1293 = vmatmul.mubr.bf16.gmra.mxu0 %v1249
    %v1294 = vpop.f32.mrf.mxu0
    %v1295 = vadd.f32 0.0, %v1294
    %v1296 = vpop.f32.mrf.mxu0
    %v1297 = vpop.f32.mrf.mxu0
    %v1298 = vadd.f32 0.0, %v1297
    %v1299 = vpop.f32.mrf.mxu0
    %1300 = vmatprep.mubr.bf16.mxu0 0
    %1301 = vmatmul.mubr.bf16.gmra.mxu0 %v1252
    %v1302 = vpop.f32.mrf.mxu0
    %v1303 = vadd.f32 0.0, %v1302
    %v1304 = vpop.f32.mrf.mxu0
    %v1305 = vpop.f32.mrf.mxu0
    %v1306 = vadd.f32 0.0, %v1305
    %v1307 = vpop.f32.mrf.mxu0
    %1308 = vdwg.mxu0
    %1311 = vrot.lane.b32.xlu0 %v784, 64
    %v1312 = vpop.permute.xlu0 %1311
    %1313 = vrot.lane.b32.xlu0 %v785, 64
    %v1314 = vpop.permute.xlu0 %1313
    %v1316 = vsel %vm1247, %v1312, 0
    %v1319 = vsel %vm1247, %v1314, 0
    %v1322 = vsel %vm1247, %v784, 0
    %v1325 = vsel %vm1247, %v785, 0
    %1327 = vmatprep.subr.bf16.mxu0 0
    %1328 = vmatpush1.bf16.xpose.msra.mxu0 0
    %1329 = vmatprep.subr.bf16.mxu0 0
    %1330 = vmatpush1.bf16.xpose.msra.mxu0 0
    %1331 = vmatprep.subr.bf16.mxu0 0
    %1332 = vmatpush1.bf16.xpose.msra.mxu0 0
    %1333 = vmatprep.subr.bf16.mxu0 0
    %1334 = vmatpush1.bf16.xpose.msra.mxu0 0
    %1335 = vmatprep.subr.bf16.mxu0 0
    %1336 = vmatpush1.bf16.xpose.msra.mxu0 0
    %1337 = vmatprep.subr.bf16.mxu0 0
    %1338 = vmatpush1.bf16.xpose.msra.mxu0 0
    %1339 = vmatprep.subr.bf16.mxu0 0
    %1340 = vmatpush1.bf16.xpose.msra.mxu0 %v1325
    %1341 = vmatprep.subr.bf16.mxu0 0
    %1342 = vmatpush1.bf16.xpose.msra.mxu0 %v1322
    %1343 = vmatprep.subr.bf16.mxu0 0
    %1344 = vmatpush2.bf16.xpose.msra.mxu0 0
    %1345 = vmatprep.subr.bf16.mxu0 0
    %1346 = vmatpush2.bf16.xpose.msra.mxu0 0
    %1347 = vmatprep.subr.bf16.mxu0 0
    %1348 = vmatpush2.bf16.xpose.msra.mxu0 0
    %1349 = vmatprep.subr.bf16.mxu0 0
    %1350 = vmatpush2.bf16.xpose.msra.mxu0 0
    %1351 = vmatprep.subr.bf16.mxu0 0
    %1352 = vmatpush2.bf16.xpose.msra.mxu0 0
    %1353 = vmatprep.subr.bf16.mxu0 0
    %1354 = vmatpush2.bf16.xpose.msra.mxu0 0
    %1355 = vmatprep.subr.bf16.mxu0 0
    %1356 = vmatpush2.bf16.xpose.msra.mxu0 0
    %1357 = vmatprep.subr.bf16.mxu0 0
    %1358 = vmatpush2.bf16.xpose.msra.mxu0 0
    %1359 = vmatprep.mubr.bf16.mxu0 0
    %1360 = vmatmul.mubr.bf16.gmra.mxu0 %v1316
    %v1361 = vpop.f32.mrf.mxu0
    %v1362 = vadd.f32 0.0, %v1361
    %v1363 = vpop.f32.mrf.mxu0
    %v1364 = vpop.f32.mrf.mxu0
    %v1365 = vadd.f32 0.0, %v1364
    %v1366 = vpop.f32.mrf.mxu0
    %1367 = vmatprep.mubr.bf16.mxu0 0
    %1368 = vmatmul.mubr.bf16.gmra.mxu0 %v1319
    %v1369 = vpop.f32.mrf.mxu0
    %v1370 = vadd.f32 0.0, %v1369
    %v1371 = vpop.f32.mrf.mxu0
    %v1372 = vpop.f32.mrf.mxu0
    %v1373 = vadd.f32 0.0, %v1372
    %v1374 = vpop.f32.mrf.mxu0
    %1375 = vdwg.mxu0
    %1378 = vrot.lane.b32.xlu0 %v786, 64
    %v1379 = vpop.permute.xlu0 %1378
    %1380 = vrot.lane.b32.xlu0 %v787, 64
    %v1381 = vpop.permute.xlu0 %1380
    %v1383 = vsel %vm1247, %v1379, 0
    %v1386 = vsel %vm1247, %v1381, 0
    %v1389 = vsel %vm1247, %v786, 0
    %v1392 = vsel %vm1247, %v787, 0
    %1394 = vmatprep.subr.bf16.mxu0 0
    %1395 = vmatpush1.bf16.xpose.msra.mxu0 0
    %1396 = vmatprep.subr.bf16.mxu0 0
    %1397 = vmatpush1.bf16.xpose.msra.mxu0 0
    %1398 = vmatprep.subr.bf16.mxu0 0
    %1399 = vmatpush1.bf16.xpose.msra.mxu0 0
    %1400 = vmatprep.subr.bf16.mxu0 0
    %1401 = vmatpush1.bf16.xpose.msra.mxu0 0
    %1402 = vmatprep.subr.bf16.mxu0 0
    %1403 = vmatpush1.bf16.xpose.msra.mxu0 0
    %1404 = vmatprep.subr.bf16.mxu0 0
    %1405 = vmatpush1.bf16.xpose.msra.mxu0 0
    %1406 = vmatprep.subr.bf16.mxu0 0
    %1407 = vmatpush1.bf16.xpose.msra.mxu0 %v1392
    %1408 = vmatprep.subr.bf16.mxu0 0
    %1409 = vmatpush1.bf16.xpose.msra.mxu0 %v1389
    %1410 = vmatprep.subr.bf16.mxu0 0
    %1411 = vmatpush2.bf16.xpose.msra.mxu0 0
    %1412 = vmatprep.subr.bf16.mxu0 0
    %1413 = vmatpush2.bf16.xpose.msra.mxu0 0
    %1414 = vmatprep.subr.bf16.mxu0 0
    %1415 = vmatpush2.bf16.xpose.msra.mxu0 0
    %1416 = vmatprep.subr.bf16.mxu0 0
    %1417 = vmatpush2.bf16.xpose.msra.mxu0 0
    %1418 = vmatprep.subr.bf16.mxu0 0
    %1419 = vmatpush2.bf16.xpose.msra.mxu0 0
    %1420 = vmatprep.subr.bf16.mxu0 0
    %1421 = vmatpush2.bf16.xpose.msra.mxu0 0
    %1422 = vmatprep.subr.bf16.mxu0 0
    %1423 = vmatpush2.bf16.xpose.msra.mxu0 0
    %1424 = vmatprep.subr.bf16.mxu0 0
    %1425 = vmatpush2.bf16.xpose.msra.mxu0 0
    %1426 = vmatprep.mubr.bf16.mxu0 0
    %1427 = vmatmul.mubr.bf16.gmra.mxu0 %v1383
    %v1428 = vpop.f32.mrf.mxu0
    %v1429 = vadd.f32 0.0, %v1428
    %v1430 = vpop.f32.mrf.mxu0
    %v1431 = vpop.f32.mrf.mxu0
    %v1432 = vadd.f32 0.0, %v1431
    %v1433 = vpop.f32.mrf.mxu0
    %1434 = vmatprep.mubr.bf16.mxu0 0
    %1435 = vmatmul.mubr.bf16.gmra.mxu0 %v1386
    %v1436 = vpop.f32.mrf.mxu0
    %v1437 = vadd.f32 0.0, %v1436
    %v1438 = vpop.f32.mrf.mxu0
    %v1439 = vpop.f32.mrf.mxu0
    %v1440 = vadd.f32 0.0, %v1439
    %v1441 = vpop.f32.mrf.mxu0
    %1442 = vdwg.mxu0
    %1445 = vrot.lane.b32.xlu0 %v788, 64
    %v1446 = vpop.permute.xlu0 %1445
    %1447 = vrot.lane.b32.xlu0 %v789, 64
    %v1448 = vpop.permute.xlu0 %1447
    %v1450 = vsel %vm1247, %v1446, 0
    %v1453 = vsel %vm1247, %v1448, 0
    %v1456 = vsel %vm1247, %v788, 0
    %v1459 = vsel %vm1247, %v789, 0
    %1461 = vmatprep.subr.bf16.mxu0 0
    %1462 = vmatpush1.bf16.xpose.msra.mxu0 0
    %1463 = vmatprep.subr.bf16.mxu0 0
    %1464 = vmatpush1.bf16.xpose.msra.mxu0 0
    %1465 = vmatprep.subr.bf16.mxu0 0
    %1466 = vmatpush1.bf16.xpose.msra.mxu0 0
    %1467 = vmatprep.subr.bf16.mxu0 0
    %1468 = vmatpush1.bf16.xpose.msra.mxu0 0
    %1469 = vmatprep.subr.bf16.mxu0 0
    %1470 = vmatpush1.bf16.xpose.msra.mxu0 0
    %1471 = vmatprep.subr.bf16.mxu0 0
    %1472 = vmatpush1.bf16.xpose.msra.mxu0 0
    %1473 = vmatprep.subr.bf16.mxu0 0
    %1474 = vmatpush1.bf16.xpose.msra.mxu0 %v1459
    %1475 = vmatprep.subr.bf16.mxu0 0
    %1476 = vmatpush1.bf16.xpose.msra.mxu0 %v1456
    %1477 = vmatprep.subr.bf16.mxu0 0
    %1478 = vmatpush2.bf16.xpose.msra.mxu0 0
    %1479 = vmatprep.subr.bf16.mxu0 0
    %1480 = vmatpush2.bf16.xpose.msra.mxu0 0
    %1481 = vmatprep.subr.bf16.mxu0 0
    %1482 = vmatpush2.bf16.xpose.msra.mxu0 0
    %1483 = vmatprep.subr.bf16.mxu0 0
    %1484 = vmatpush2.bf16.xpose.msra.mxu0 0
    %1485 = vmatprep.subr.bf16.mxu0 0
    %1486 = vmatpush2.bf16.xpose.msra.mxu0 0
    %1487 = vmatprep.subr.bf16.mxu0 0
    %1488 = vmatpush2.bf16.xpose.msra.mxu0 0
    %1489 = vmatprep.subr.bf16.mxu0 0
    %1490 = vmatpush2.bf16.xpose.msra.mxu0 0
    %1491 = vmatprep.subr.bf16.mxu0 0
    %1492 = vmatpush2.bf16.xpose.msra.mxu0 0
    %1493 = vmatprep.mubr.bf16.mxu0 0
    %1494 = vmatmul.mubr.bf16.gmra.mxu0 %v1450
    %v1495 = vpop.f32.mrf.mxu0
    %v1496 = vadd.f32 0.0, %v1495
    %v1497 = vpop.f32.mrf.mxu0
    %v1498 = vpop.f32.mrf.mxu0
    %v1499 = vadd.f32 0.0, %v1498
    %v1500 = vpop.f32.mrf.mxu0
    %1501 = vmatprep.mubr.bf16.mxu0 0
    %1502 = vmatmul.mubr.bf16.gmra.mxu0 %v1453
    %v1503 = vpop.f32.mrf.mxu0
    %v1504 = vadd.f32 0.0, %v1503
    %v1505 = vpop.f32.mrf.mxu0
    %v1506 = vpop.f32.mrf.mxu0
    %v1507 = vadd.f32 0.0, %v1506
    %v1508 = vpop.f32.mrf.mxu0
    %1509 = vdwg.mxu0
    %1512 = vrot.lane.b32.xlu0 %v790, 64
    %v1513 = vpop.permute.xlu0 %1512
    %1514 = vrot.lane.b32.xlu0 %v791, 64
    %v1515 = vpop.permute.xlu0 %1514
    %v1517 = vsel %vm1247, %v1513, 0
    %v1520 = vsel %vm1247, %v1515, 0
    %v1523 = vsel %vm1247, %v790, 0
    %v1526 = vsel %vm1247, %v791, 0
    %1528 = vmatprep.subr.bf16.mxu0 0
    %1529 = vmatpush1.bf16.xpose.msra.mxu0 0
    %1530 = vmatprep.subr.bf16.mxu0 0
    %1531 = vmatpush1.bf16.xpose.msra.mxu0 0
    %1532 = vmatprep.subr.bf16.mxu0 0
    %1533 = vmatpush1.bf16.xpose.msra.mxu0 0
    %1534 = vmatprep.subr.bf16.mxu0 0
    %1535 = vmatpush1.bf16.xpose.msra.mxu0 0
    %1536 = vmatprep.subr.bf16.mxu0 0
    %1537 = vmatpush1.bf16.xpose.msra.mxu0 0
    %1538 = vmatprep.subr.bf16.mxu0 0
    %1539 = vmatpush1.bf16.xpose.msra.mxu0 0
    %1540 = vmatprep.subr.bf16.mxu0 0
    %1541 = vmatpush1.bf16.xpose.msra.mxu0 %v1526
    %1542 = vmatprep.subr.bf16.mxu0 0
    %1543 = vmatpush1.bf16.xpose.msra.mxu0 %v1523
    %1544 = vmatprep.subr.bf16.mxu0 0
    %1545 = vmatpush2.bf16.xpose.msra.mxu0 0
    %1546 = vmatprep.subr.bf16.mxu0 0
    %1547 = vmatpush2.bf16.xpose.msra.mxu0 0
    %1548 = vmatprep.subr.bf16.mxu0 0
    %1549 = vmatpush2.bf16.xpose.msra.mxu0 0
    %1550 = vmatprep.subr.bf16.mxu0 0
    %1551 = vmatpush2.bf16.xpose.msra.mxu0 0
    %1552 = vmatprep.subr.bf16.mxu0 0
    %1553 = vmatpush2.bf16.xpose.msra.mxu0 0
    %1554 = vmatprep.subr.bf16.mxu0 0
    %1555 = vmatpush2.bf16.xpose.msra.mxu0 0
    %1556 = vmatprep.subr.bf16.mxu0 0
    %1557 = vmatpush2.bf16.xpose.msra.mxu0 0
    %1558 = vmatprep.subr.bf16.mxu0 0
    %1559 = vmatpush2.bf16.xpose.msra.mxu0 0
    %1560 = vmatprep.mubr.bf16.mxu0 0
    %1561 = vmatmul.mubr.bf16.gmra.mxu0 %v1517
    %v1562 = vpop.f32.mrf.mxu0
    %v1563 = vadd.f32 0.0, %v1562
    %v1564 = vpop.f32.mrf.mxu0
    %v1565 = vpop.f32.mrf.mxu0
    %v1566 = vadd.f32 0.0, %v1565
    %v1567 = vpop.f32.mrf.mxu0
    %1568 = vmatprep.mubr.bf16.mxu0 0
    %1569 = vmatmul.mubr.bf16.gmra.mxu0 %v1520
    %v1570 = vpop.f32.mrf.mxu0
    %v1571 = vadd.f32 0.0, %v1570
    %v1572 = vpop.f32.mrf.mxu0
    %v1573 = vpop.f32.mrf.mxu0
    %v1574 = vadd.f32 0.0, %v1573
    %v1575 = vpop.f32.mrf.mxu0
    %1576 = vdwg.mxu0
    %1579 = vrot.lane.b32.xlu0 %v792, 64
    %v1580 = vpop.permute.xlu0 %1579
    %1581 = vrot.lane.b32.xlu0 %v793, 64
    %v1582 = vpop.permute.xlu0 %1581
    %v1584 = vsel %vm1247, %v1580, 0
    %v1587 = vsel %vm1247, %v1582, 0
    %v1590 = vsel %vm1247, %v792, 0
    %v1593 = vsel %vm1247, %v793, 0
    %1595 = vmatprep.subr.bf16.mxu0 0
    %1596 = vmatpush1.bf16.xpose.msra.mxu0 0
    %1597 = vmatprep.subr.bf16.mxu0 0
    %1598 = vmatpush1.bf16.xpose.msra.mxu0 0
    %1599 = vmatprep.subr.bf16.mxu0 0
    %1600 = vmatpush1.bf16.xpose.msra.mxu0 0
    %1601 = vmatprep.subr.bf16.mxu0 0
    %1602 = vmatpush1.bf16.xpose.msra.mxu0 0
    %1603 = vmatprep.subr.bf16.mxu0 0
    %1604 = vmatpush1.bf16.xpose.msra.mxu0 0
    %1605 = vmatprep.subr.bf16.mxu0 0
    %1606 = vmatpush1.bf16.xpose.msra.mxu0 0
    %1607 = vmatprep.subr.bf16.mxu0 0
    %1608 = vmatpush1.bf16.xpose.msra.mxu0 %v1593
    %1609 = vmatprep.subr.bf16.mxu0 0
    %1610 = vmatpush1.bf16.xpose.msra.mxu0 %v1590
    %1611 = vmatprep.subr.bf16.mxu0 0
    %1612 = vmatpush2.bf16.xpose.msra.mxu0 0
    %1613 = vmatprep.subr.bf16.mxu0 0
    %1614 = vmatpush2.bf16.xpose.msra.mxu0 0
    %1615 = vmatprep.subr.bf16.mxu0 0
    %1616 = vmatpush2.bf16.xpose.msra.mxu0 0
    %1617 = vmatprep.subr.bf16.mxu0 0
    %1618 = vmatpush2.bf16.xpose.msra.mxu0 0
    %1619 = vmatprep.subr.bf16.mxu0 0
    %1620 = vmatpush2.bf16.xpose.msra.mxu0 0
    %1621 = vmatprep.subr.bf16.mxu0 0
    %1622 = vmatpush2.bf16.xpose.msra.mxu0 0
    %1623 = vmatprep.subr.bf16.mxu0 0
    %1624 = vmatpush2.bf16.xpose.msra.mxu0 0
    %1625 = vmatprep.subr.bf16.mxu0 0
    %1626 = vmatpush2.bf16.xpose.msra.mxu0 0
    %1627 = vmatprep.mubr.bf16.mxu0 0
    %1628 = vmatmul.mubr.bf16.gmra.mxu0 %v1584
    %v1629 = vpop.f32.mrf.mxu0
    %v1630 = vadd.f32 0.0, %v1629
    %v1631 = vpop.f32.mrf.mxu0
    %v1632 = vpop.f32.mrf.mxu0
    %v1633 = vadd.f32 0.0, %v1632
    %v1634 = vpop.f32.mrf.mxu0
    %1635 = vmatprep.mubr.bf16.mxu0 0
    %1636 = vmatmul.mubr.bf16.gmra.mxu0 %v1587
    %v1637 = vpop.f32.mrf.mxu0
    %v1638 = vadd.f32 0.0, %v1637
    %v1639 = vpop.f32.mrf.mxu0
    %v1640 = vpop.f32.mrf.mxu0
    %v1641 = vadd.f32 0.0, %v1640
    %v1642 = vpop.f32.mrf.mxu0
    %1643 = vdwg.mxu0
    %1646 = vrot.lane.b32.xlu0 %v794, 64
    %v1647 = vpop.permute.xlu0 %1646
    %1648 = vrot.lane.b32.xlu0 %v795, 64
    %v1649 = vpop.permute.xlu0 %1648
    %v1651 = vsel %vm1247, %v1647, 0
    %v1654 = vsel %vm1247, %v1649, 0
    %v1657 = vsel %vm1247, %v794, 0
    %v1660 = vsel %vm1247, %v795, 0
    %1662 = vmatprep.subr.bf16.mxu0 0
    %1663 = vmatpush1.bf16.xpose.msra.mxu0 0
    %1664 = vmatprep.subr.bf16.mxu0 0
    %1665 = vmatpush1.bf16.xpose.msra.mxu0 0
    %1666 = vmatprep.subr.bf16.mxu0 0
    %1667 = vmatpush1.bf16.xpose.msra.mxu0 0
    %1668 = vmatprep.subr.bf16.mxu0 0
    %1669 = vmatpush1.bf16.xpose.msra.mxu0 0
    %1670 = vmatprep.subr.bf16.mxu0 0
    %1671 = vmatpush1.bf16.xpose.msra.mxu0 0
    %1672 = vmatprep.subr.bf16.mxu0 0
    %1673 = vmatpush1.bf16.xpose.msra.mxu0 0
    %1674 = vmatprep.subr.bf16.mxu0 0
    %1675 = vmatpush1.bf16.xpose.msra.mxu0 %v1660
    %1676 = vmatprep.subr.bf16.mxu0 0
    %1677 = vmatpush1.bf16.xpose.msra.mxu0 %v1657
    %1678 = vmatprep.subr.bf16.mxu0 0
    %1679 = vmatpush2.bf16.xpose.msra.mxu0 0
    %1680 = vmatprep.subr.bf16.mxu0 0
    %1681 = vmatpush2.bf16.xpose.msra.mxu0 0
    %1682 = vmatprep.subr.bf16.mxu0 0
    %1683 = vmatpush2.bf16.xpose.msra.mxu0 0
    %1684 = vmatprep.subr.bf16.mxu0 0
    %1685 = vmatpush2.bf16.xpose.msra.mxu0 0
    %1686 = vmatprep.subr.bf16.mxu0 0
    %1687 = vmatpush2.bf16.xpose.msra.mxu0 0
    %1688 = vmatprep.subr.bf16.mxu0 0
    %1689 = vmatpush2.bf16.xpose.msra.mxu0 0
    %1690 = vmatprep.subr.bf16.mxu0 0
    %1691 = vmatpush2.bf16.xpose.msra.mxu0 0
    %1692 = vmatprep.subr.bf16.mxu0 0
    %1693 = vmatpush2.bf16.xpose.msra.mxu0 0
    %1694 = vmatprep.mubr.bf16.mxu0 0
    %1695 = vmatmul.mubr.bf16.gmra.mxu0 %v1651
    %v1696 = vpop.f32.mrf.mxu0
    %v1697 = vadd.f32 0.0, %v1696
    %v1698 = vpop.f32.mrf.mxu0
    %v1699 = vpop.f32.mrf.mxu0
    %v1700 = vadd.f32 0.0, %v1699
    %v1701 = vpop.f32.mrf.mxu0
    %1702 = vmatprep.mubr.bf16.mxu0 0
    %1703 = vmatmul.mubr.bf16.gmra.mxu0 %v1654
    %v1704 = vpop.f32.mrf.mxu0
    %v1705 = vadd.f32 0.0, %v1704
    %v1706 = vpop.f32.mrf.mxu0
    %v1707 = vpop.f32.mrf.mxu0
    %v1708 = vadd.f32 0.0, %v1707
    %v1709 = vpop.f32.mrf.mxu0
    %1710 = vdwg.mxu0
    %1713 = vrot.lane.b32.xlu0 %v796, 64
    %v1714 = vpop.permute.xlu0 %1713
    %1715 = vrot.lane.b32.xlu0 %v797, 64
    %v1716 = vpop.permute.xlu0 %1715
    %v1718 = vsel %vm1247, %v1714, 0
    %v1721 = vsel %vm1247, %v1716, 0
    %v1724 = vsel %vm1247, %v796, 0
    %v1727 = vsel %vm1247, %v797, 0
    %1729 = vmatprep.subr.bf16.mxu0 0
    %1730 = vmatpush1.bf16.xpose.msra.mxu0 0
    %1731 = vmatprep.subr.bf16.mxu0 0
    %1732 = vmatpush1.bf16.xpose.msra.mxu0 0
    %1733 = vmatprep.subr.bf16.mxu0 0
    %1734 = vmatpush1.bf16.xpose.msra.mxu0 0
    %1735 = vmatprep.subr.bf16.mxu0 0
    %1736 = vmatpush1.bf16.xpose.msra.mxu0 0
    %1737 = vmatprep.subr.bf16.mxu0 0
    %1738 = vmatpush1.bf16.xpose.msra.mxu0 0
    %1739 = vmatprep.subr.bf16.mxu0 0
    %1740 = vmatpush1.bf16.xpose.msra.mxu0 0
    %1741 = vmatprep.subr.bf16.mxu0 0
    %1742 = vmatpush1.bf16.xpose.msra.mxu0 %v1727
    %1743 = vmatprep.subr.bf16.mxu0 0
    %1744 = vmatpush1.bf16.xpose.msra.mxu0 %v1724
    %1745 = vmatprep.subr.bf16.mxu0 0
    %1746 = vmatpush2.bf16.xpose.msra.mxu0 0
    %1747 = vmatprep.subr.bf16.mxu0 0
    %1748 = vmatpush2.bf16.xpose.msra.mxu0 0
    %1749 = vmatprep.subr.bf16.mxu0 0
    %1750 = vmatpush2.bf16.xpose.msra.mxu0 0
    %1751 = vmatprep.subr.bf16.mxu0 0
    %1752 = vmatpush2.bf16.xpose.msra.mxu0 0
    %1753 = vmatprep.subr.bf16.mxu0 0
    %1754 = vmatpush2.bf16.xpose.msra.mxu0 0
    %1755 = vmatprep.subr.bf16.mxu0 0
    %1756 = vmatpush2.bf16.xpose.msra.mxu0 0
    %1757 = vmatprep.subr.bf16.mxu0 0
    %1758 = vmatpush2.bf16.xpose.msra.mxu0 0
    %1759 = vmatprep.subr.bf16.mxu0 0
    %1760 = vmatpush2.bf16.xpose.msra.mxu0 0
    %1761 = vmatprep.mubr.bf16.mxu0 0
    %1762 = vmatmul.mubr.bf16.gmra.mxu0 %v1718
    %v1763 = vpop.f32.mrf.mxu0
    %v1764 = vadd.f32 0.0, %v1763
    %v1765 = vpop.f32.mrf.mxu0
    %v1766 = vpop.f32.mrf.mxu0
    %v1767 = vadd.f32 0.0, %v1766
    %v1768 = vpop.f32.mrf.mxu0
    %1769 = vmatprep.mubr.bf16.mxu0 0
    %1770 = vmatmul.mubr.bf16.gmra.mxu0 %v1721
    %v1771 = vpop.f32.mrf.mxu0
    %v1772 = vadd.f32 0.0, %v1771
    %v1773 = vpop.f32.mrf.mxu0
    %v1774 = vpop.f32.mrf.mxu0
    %v1775 = vadd.f32 0.0, %v1774
    %v1776 = vpop.f32.mrf.mxu0
    %1777 = vdwg.mxu0
    %1780 = vrot.lane.b32.xlu0 %v798, 64
    %v1781 = vpop.permute.xlu0 %1780
    %1782 = vrot.lane.b32.xlu0 %v799, 64
    %v1783 = vpop.permute.xlu0 %1782
    %v1785 = vsel %vm1247, %v1781, 0
    %v1788 = vsel %vm1247, %v1783, 0
    %v1791 = vsel %vm1247, %v798, 0
    %v1794 = vsel %vm1247, %v799, 0
    %1796 = vmatprep.subr.bf16.mxu0 0
    %1797 = vmatpush1.bf16.xpose.msra.mxu0 0
    %1798 = vmatprep.subr.bf16.mxu0 0
    %1799 = vmatpush1.bf16.xpose.msra.mxu0 0
    %1800 = vmatprep.subr.bf16.mxu0 0
    %1801 = vmatpush1.bf16.xpose.msra.mxu0 0
    %1802 = vmatprep.subr.bf16.mxu0 0
    %1803 = vmatpush1.bf16.xpose.msra.mxu0 0
    %1804 = vmatprep.subr.bf16.mxu0 0
    %1805 = vmatpush1.bf16.xpose.msra.mxu0 0
    %1806 = vmatprep.subr.bf16.mxu0 0
    %1807 = vmatpush1.bf16.xpose.msra.mxu0 0
    %1808 = vmatprep.subr.bf16.mxu0 0
    %1809 = vmatpush1.bf16.xpose.msra.mxu0 %v1794
    %1810 = vmatprep.subr.bf16.mxu0 0
    %1811 = vmatpush1.bf16.xpose.msra.mxu0 %v1791
    %1812 = vmatprep.subr.bf16.mxu0 0
    %1813 = vmatpush2.bf16.xpose.msra.mxu0 0
    %1814 = vmatprep.subr.bf16.mxu0 0
    %1815 = vmatpush2.bf16.xpose.msra.mxu0 0
    %1816 = vmatprep.subr.bf16.mxu0 0
    %1817 = vmatpush2.bf16.xpose.msra.mxu0 0
    %1818 = vmatprep.subr.bf16.mxu0 0
    %1819 = vmatpush2.bf16.xpose.msra.mxu0 0
    %1820 = vmatprep.subr.bf16.mxu0 0
    %1821 = vmatpush2.bf16.xpose.msra.mxu0 0
    %1822 = vmatprep.subr.bf16.mxu0 0
    %1823 = vmatpush2.bf16.xpose.msra.mxu0 0
    %1824 = vmatprep.subr.bf16.mxu0 0
    %1825 = vmatpush2.bf16.xpose.msra.mxu0 0
    %1826 = vmatprep.subr.bf16.mxu0 0
    %1827 = vmatpush2.bf16.xpose.msra.mxu0 0
    %1828 = vmatprep.mubr.bf16.mxu0 0
    %1829 = vmatmul.mubr.bf16.gmra.mxu0 %v1785
    %v1830 = vpop.f32.mrf.mxu0
    %v1831 = vadd.f32 0.0, %v1830
    %v1832 = vpop.f32.mrf.mxu0
    %v1833 = vpop.f32.mrf.mxu0
    %v1834 = vadd.f32 0.0, %v1833
    %v1835 = vpop.f32.mrf.mxu0
    %1836 = vmatprep.mubr.bf16.mxu0 0
    %1837 = vmatmul.mubr.bf16.gmra.mxu0 %v1788
    %v1838 = vpop.f32.mrf.mxu0
    %v1839 = vadd.f32 0.0, %v1838
    %v1840 = vpop.f32.mrf.mxu0
    %v1841 = vpop.f32.mrf.mxu0
    %v1842 = vadd.f32 0.0, %v1841
    %v1843 = vpop.f32.mrf.mxu0
    %1844 = vdwg.mxu0
    %1847 = vrot.lane.b32.xlu0 %v800, 64
    %v1848 = vpop.permute.xlu0 %1847
    %1849 = vrot.lane.b32.xlu0 %v801, 64
    %v1850 = vpop.permute.xlu0 %1849
    %v1852 = vsel %vm1247, %v1848, 0
    %v1855 = vsel %vm1247, %v1850, 0
    %v1858 = vsel %vm1247, %v800, 0
    %v1861 = vsel %vm1247, %v801, 0
    %1863 = vmatprep.subr.bf16.mxu0 0
    %1864 = vmatpush1.bf16.xpose.msra.mxu0 0
    %1865 = vmatprep.subr.bf16.mxu0 0
    %1866 = vmatpush1.bf16.xpose.msra.mxu0 0
    %1867 = vmatprep.subr.bf16.mxu0 0
    %1868 = vmatpush1.bf16.xpose.msra.mxu0 0
    %1869 = vmatprep.subr.bf16.mxu0 0
    %1870 = vmatpush1.bf16.xpose.msra.mxu0 0
    %1871 = vmatprep.subr.bf16.mxu0 0
    %1872 = vmatpush1.bf16.xpose.msra.mxu0 0
    %1873 = vmatprep.subr.bf16.mxu0 0
    %1874 = vmatpush1.bf16.xpose.msra.mxu0 0
    %1875 = vmatprep.subr.bf16.mxu0 0
    %1876 = vmatpush1.bf16.xpose.msra.mxu0 %v1861
    %1877 = vmatprep.subr.bf16.mxu0 0
    %1878 = vmatpush1.bf16.xpose.msra.mxu0 %v1858
    %1879 = vmatprep.subr.bf16.mxu0 0
    %1880 = vmatpush2.bf16.xpose.msra.mxu0 0
    %1881 = vmatprep.subr.bf16.mxu0 0
    %1882 = vmatpush2.bf16.xpose.msra.mxu0 0
    %1883 = vmatprep.subr.bf16.mxu0 0
    %1884 = vmatpush2.bf16.xpose.msra.mxu0 0
    %1885 = vmatprep.subr.bf16.mxu0 0
    %1886 = vmatpush2.bf16.xpose.msra.mxu0 0
    %1887 = vmatprep.subr.bf16.mxu0 0
    %1888 = vmatpush2.bf16.xpose.msra.mxu0 0
    %1889 = vmatprep.subr.bf16.mxu0 0
    %1890 = vmatpush2.bf16.xpose.msra.mxu0 0
    %1891 = vmatprep.subr.bf16.mxu0 0
    %1892 = vmatpush2.bf16.xpose.msra.mxu0 0
    %1893 = vmatprep.subr.bf16.mxu0 0
    %1894 = vmatpush2.bf16.xpose.msra.mxu0 0
    %1895 = vmatprep.mubr.bf16.mxu0 0
    %1896 = vmatmul.mubr.bf16.gmra.mxu0 %v1852
    %v1897 = vpop.f32.mrf.mxu0
    %v1898 = vadd.f32 0.0, %v1897
    %v1899 = vpop.f32.mrf.mxu0
    %v1900 = vpop.f32.mrf.mxu0
    %v1901 = vadd.f32 0.0, %v1900
    %v1902 = vpop.f32.mrf.mxu0
    %1903 = vmatprep.mubr.bf16.mxu0 0
    %1904 = vmatmul.mubr.bf16.gmra.mxu0 %v1855
    %v1905 = vpop.f32.mrf.mxu0
    %v1906 = vadd.f32 0.0, %v1905
    %v1907 = vpop.f32.mrf.mxu0
    %v1908 = vpop.f32.mrf.mxu0
    %v1909 = vadd.f32 0.0, %v1908
    %v1910 = vpop.f32.mrf.mxu0
    %1911 = vdwg.mxu0
    %1914 = vrot.lane.b32.xlu0 %v802, 64
    %v1915 = vpop.permute.xlu0 %1914
    %1916 = vrot.lane.b32.xlu0 %v803, 64
    %v1917 = vpop.permute.xlu0 %1916
    %v1919 = vsel %vm1247, %v1915, 0
    %v1922 = vsel %vm1247, %v1917, 0
    %v1925 = vsel %vm1247, %v802, 0
    %v1928 = vsel %vm1247, %v803, 0
    %1930 = vmatprep.subr.bf16.mxu0 0
    %1931 = vmatpush1.bf16.xpose.msra.mxu0 0
    %1932 = vmatprep.subr.bf16.mxu0 0
    %1933 = vmatpush1.bf16.xpose.msra.mxu0 0
    %1934 = vmatprep.subr.bf16.mxu0 0
    %1935 = vmatpush1.bf16.xpose.msra.mxu0 0
    %1936 = vmatprep.subr.bf16.mxu0 0
    %1937 = vmatpush1.bf16.xpose.msra.mxu0 0
    %1938 = vmatprep.subr.bf16.mxu0 0
    %1939 = vmatpush1.bf16.xpose.msra.mxu0 0
    %1940 = vmatprep.subr.bf16.mxu0 0
    %1941 = vmatpush1.bf16.xpose.msra.mxu0 0
    %1942 = vmatprep.subr.bf16.mxu0 0
    %1943 = vmatpush1.bf16.xpose.msra.mxu0 %v1928
    %1944 = vmatprep.subr.bf16.mxu0 0
    %1945 = vmatpush1.bf16.xpose.msra.mxu0 %v1925
    %1946 = vmatprep.subr.bf16.mxu0 0
    %1947 = vmatpush2.bf16.xpose.msra.mxu0 0
    %1948 = vmatprep.subr.bf16.mxu0 0
    %1949 = vmatpush2.bf16.xpose.msra.mxu0 0
    %1950 = vmatprep.subr.bf16.mxu0 0
    %1951 = vmatpush2.bf16.xpose.msra.mxu0 0
    %1952 = vmatprep.subr.bf16.mxu0 0
    %1953 = vmatpush2.bf16.xpose.msra.mxu0 0
    %1954 = vmatprep.subr.bf16.mxu0 0
    %1955 = vmatpush2.bf16.xpose.msra.mxu0 0
    %1956 = vmatprep.subr.bf16.mxu0 0
    %1957 = vmatpush2.bf16.xpose.msra.mxu0 0
    %1958 = vmatprep.subr.bf16.mxu0 0
    %1959 = vmatpush2.bf16.xpose.msra.mxu0 0
    %1960 = vmatprep.subr.bf16.mxu0 0
    %1961 = vmatpush2.bf16.xpose.msra.mxu0 0
    %1962 = vmatprep.mubr.bf16.mxu0 0
    %1963 = vmatmul.mubr.bf16.gmra.mxu0 %v1919
    %v1964 = vpop.f32.mrf.mxu0
    %v1965 = vadd.f32 0.0, %v1964
    %v1966 = vpop.f32.mrf.mxu0
    %v1967 = vpop.f32.mrf.mxu0
    %v1968 = vadd.f32 0.0, %v1967
    %v1969 = vpop.f32.mrf.mxu0
    %1970 = vmatprep.mubr.bf16.mxu0 0
    %1971 = vmatmul.mubr.bf16.gmra.mxu0 %v1922
    %v1972 = vpop.f32.mrf.mxu0
    %v1973 = vadd.f32 0.0, %v1972
    %v1974 = vpop.f32.mrf.mxu0
    %v1975 = vpop.f32.mrf.mxu0
    %v1976 = vadd.f32 0.0, %v1975
    %v1977 = vpop.f32.mrf.mxu0
    %1978 = vdwg.mxu0
    %1981 = vrot.lane.b32.xlu0 %v804, 64
    %v1982 = vpop.permute.xlu0 %1981
    %1983 = vrot.lane.b32.xlu0 %v805, 64
    %v1984 = vpop.permute.xlu0 %1983
    %v1986 = vsel %vm1247, %v1982, 0
    %v1989 = vsel %vm1247, %v1984, 0
    %v1992 = vsel %vm1247, %v804, 0
    %v1995 = vsel %vm1247, %v805, 0
    %1997 = vmatprep.subr.bf16.mxu0 0
    %1998 = vmatpush1.bf16.xpose.msra.mxu0 0
    %1999 = vmatprep.subr.bf16.mxu0 0
    %2000 = vmatpush1.bf16.xpose.msra.mxu0 0
    %2001 = vmatprep.subr.bf16.mxu0 0
    %2002 = vmatpush1.bf16.xpose.msra.mxu0 0
    %2003 = vmatprep.subr.bf16.mxu0 0
    %2004 = vmatpush1.bf16.xpose.msra.mxu0 0
    %2005 = vmatprep.subr.bf16.mxu0 0
    %2006 = vmatpush1.bf16.xpose.msra.mxu0 0
    %2007 = vmatprep.subr.bf16.mxu0 0
    %2008 = vmatpush1.bf16.xpose.msra.mxu0 0
    %2009 = vmatprep.subr.bf16.mxu0 0
    %2010 = vmatpush1.bf16.xpose.msra.mxu0 %v1995
    %2011 = vmatprep.subr.bf16.mxu0 0
    %2012 = vmatpush1.bf16.xpose.msra.mxu0 %v1992
    %2013 = vmatprep.subr.bf16.mxu0 0
    %2014 = vmatpush2.bf16.xpose.msra.mxu0 0
    %2015 = vmatprep.subr.bf16.mxu0 0
    %2016 = vmatpush2.bf16.xpose.msra.mxu0 0
    %2017 = vmatprep.subr.bf16.mxu0 0
    %2018 = vmatpush2.bf16.xpose.msra.mxu0 0
    %2019 = vmatprep.subr.bf16.mxu0 0
    %2020 = vmatpush2.bf16.xpose.msra.mxu0 0
    %2021 = vmatprep.subr.bf16.mxu0 0
    %2022 = vmatpush2.bf16.xpose.msra.mxu0 0
    %2023 = vmatprep.subr.bf16.mxu0 0
    %2024 = vmatpush2.bf16.xpose.msra.mxu0 0
    %2025 = vmatprep.subr.bf16.mxu0 0
    %2026 = vmatpush2.bf16.xpose.msra.mxu0 0
    %2027 = vmatprep.subr.bf16.mxu0 0
    %2028 = vmatpush2.bf16.xpose.msra.mxu0 0
    %2029 = vmatprep.mubr.bf16.mxu0 0
    %2030 = vmatmul.mubr.bf16.gmra.mxu0 %v1986
    %v2031 = vpop.f32.mrf.mxu0
    %v2032 = vadd.f32 0.0, %v2031
    %v2033 = vpop.f32.mrf.mxu0
    %v2034 = vpop.f32.mrf.mxu0
    %v2035 = vadd.f32 0.0, %v2034
    %v2036 = vpop.f32.mrf.mxu0
    %2037 = vmatprep.mubr.bf16.mxu0 0
    %2038 = vmatmul.mubr.bf16.gmra.mxu0 %v1989
    %v2039 = vpop.f32.mrf.mxu0
    %v2040 = vadd.f32 0.0, %v2039
    %v2041 = vpop.f32.mrf.mxu0
    %v2042 = vpop.f32.mrf.mxu0
    %v2043 = vadd.f32 0.0, %v2042
    %v2044 = vpop.f32.mrf.mxu0
    %2045 = vdwg.mxu0
    %2048 = vrot.lane.b32.xlu0 %v806, 64
    %v2049 = vpop.permute.xlu0 %2048
    %2050 = vrot.lane.b32.xlu0 %v807, 64
    %v2051 = vpop.permute.xlu0 %2050
    %v2053 = vsel %vm1247, %v2049, 0
    %v2056 = vsel %vm1247, %v2051, 0
    %v2059 = vsel %vm1247, %v806, 0
    %v2062 = vsel %vm1247, %v807, 0
    %2064 = vmatprep.subr.bf16.mxu0 0
    %2065 = vmatpush1.bf16.xpose.msra.mxu0 0
    %2066 = vmatprep.subr.bf16.mxu0 0
    %2067 = vmatpush1.bf16.xpose.msra.mxu0 0
    %2068 = vmatprep.subr.bf16.mxu0 0
    %2069 = vmatpush1.bf16.xpose.msra.mxu0 0
    %2070 = vmatprep.subr.bf16.mxu0 0
    %2071 = vmatpush1.bf16.xpose.msra.mxu0 0
    %2072 = vmatprep.subr.bf16.mxu0 0
    %2073 = vmatpush1.bf16.xpose.msra.mxu0 0
    %2074 = vmatprep.subr.bf16.mxu0 0
    %2075 = vmatpush1.bf16.xpose.msra.mxu0 0
    %2076 = vmatprep.subr.bf16.mxu0 0
    %2077 = vmatpush1.bf16.xpose.msra.mxu0 %v2062
    %2078 = vmatprep.subr.bf16.mxu0 0
    %2079 = vmatpush1.bf16.xpose.msra.mxu0 %v2059
    %2080 = vmatprep.subr.bf16.mxu0 0
    %2081 = vmatpush2.bf16.xpose.msra.mxu0 0
    %2082 = vmatprep.subr.bf16.mxu0 0
    %2083 = vmatpush2.bf16.xpose.msra.mxu0 0
    %2084 = vmatprep.subr.bf16.mxu0 0
    %2085 = vmatpush2.bf16.xpose.msra.mxu0 0
    %2086 = vmatprep.subr.bf16.mxu0 0
    %2087 = vmatpush2.bf16.xpose.msra.mxu0 0
    %2088 = vmatprep.subr.bf16.mxu0 0
    %2089 = vmatpush2.bf16.xpose.msra.mxu0 0
    %2090 = vmatprep.subr.bf16.mxu0 0
    %2091 = vmatpush2.bf16.xpose.msra.mxu0 0
    %2092 = vmatprep.subr.bf16.mxu0 0
    %2093 = vmatpush2.bf16.xpose.msra.mxu0 0
    %2094 = vmatprep.subr.bf16.mxu0 0
    %2095 = vmatpush2.bf16.xpose.msra.mxu0 0
    %2096 = vmatprep.mubr.bf16.mxu0 0
    %2097 = vmatmul.mubr.bf16.gmra.mxu0 %v2053
    %v2098 = vpop.f32.mrf.mxu0
    %v2099 = vadd.f32 0.0, %v2098
    %v2100 = vpop.f32.mrf.mxu0
    %v2101 = vpop.f32.mrf.mxu0
    %v2102 = vadd.f32 0.0, %v2101
    %v2103 = vpop.f32.mrf.mxu0
    %2104 = vmatprep.mubr.bf16.mxu0 0
    %2105 = vmatmul.mubr.bf16.gmra.mxu0 %v2056
    %v2106 = vpop.f32.mrf.mxu0
    %v2107 = vadd.f32 0.0, %v2106
    %v2108 = vpop.f32.mrf.mxu0
    %v2109 = vpop.f32.mrf.mxu0
    %v2110 = vadd.f32 0.0, %v2109
    %v2111 = vpop.f32.mrf.mxu0
    %2112 = vdwg.mxu0
    %2115 = vrot.lane.b32.xlu0 %v808, 64
    %v2116 = vpop.permute.xlu0 %2115
    %2117 = vrot.lane.b32.xlu0 %v809, 64
    %v2118 = vpop.permute.xlu0 %2117
    %v2120 = vsel %vm1247, %v2116, 0
    %v2123 = vsel %vm1247, %v2118, 0
    %v2126 = vsel %vm1247, %v808, 0
    %v2129 = vsel %vm1247, %v809, 0
    %2131 = vmatprep.subr.bf16.mxu0 0
    %2132 = vmatpush1.bf16.xpose.msra.mxu0 0
    %2133 = vmatprep.subr.bf16.mxu0 0
    %2134 = vmatpush1.bf16.xpose.msra.mxu0 0
    %2135 = vmatprep.subr.bf16.mxu0 0
    %2136 = vmatpush1.bf16.xpose.msra.mxu0 0
    %2137 = vmatprep.subr.bf16.mxu0 0
    %2138 = vmatpush1.bf16.xpose.msra.mxu0 0
    %2139 = vmatprep.subr.bf16.mxu0 0
    %2140 = vmatpush1.bf16.xpose.msra.mxu0 0
    %2141 = vmatprep.subr.bf16.mxu0 0
    %2142 = vmatpush1.bf16.xpose.msra.mxu0 0
    %2143 = vmatprep.subr.bf16.mxu0 0
    %2144 = vmatpush1.bf16.xpose.msra.mxu0 %v2129
    %2145 = vmatprep.subr.bf16.mxu0 0
    %2146 = vmatpush1.bf16.xpose.msra.mxu0 %v2126
    %2147 = vmatprep.subr.bf16.mxu0 0
    %2148 = vmatpush2.bf16.xpose.msra.mxu0 0
    %2149 = vmatprep.subr.bf16.mxu0 0
    %2150 = vmatpush2.bf16.xpose.msra.mxu0 0
    %2151 = vmatprep.subr.bf16.mxu0 0
    %2152 = vmatpush2.bf16.xpose.msra.mxu0 0
    %2153 = vmatprep.subr.bf16.mxu0 0
    %2154 = vmatpush2.bf16.xpose.msra.mxu0 0
    %2155 = vmatprep.subr.bf16.mxu0 0
    %2156 = vmatpush2.bf16.xpose.msra.mxu0 0
    %2157 = vmatprep.subr.bf16.mxu0 0
    %2158 = vmatpush2.bf16.xpose.msra.mxu0 0
    %2159 = vmatprep.subr.bf16.mxu0 0
    %2160 = vmatpush2.bf16.xpose.msra.mxu0 0
    %2161 = vmatprep.subr.bf16.mxu0 0
    %2162 = vmatpush2.bf16.xpose.msra.mxu0 0
    %2163 = vmatprep.mubr.bf16.mxu0 0
    %2164 = vmatmul.mubr.bf16.gmra.mxu0 %v2120
    %v2165 = vpop.f32.mrf.mxu0
    %v2166 = vadd.f32 0.0, %v2165
    %v2167 = vpop.f32.mrf.mxu0
    %v2168 = vpop.f32.mrf.mxu0
    %v2169 = vadd.f32 0.0, %v2168
    %v2170 = vpop.f32.mrf.mxu0
    %2171 = vmatprep.mubr.bf16.mxu0 0
    %2172 = vmatmul.mubr.bf16.gmra.mxu0 %v2123
    %v2173 = vpop.f32.mrf.mxu0
    %v2174 = vadd.f32 0.0, %v2173
    %v2175 = vpop.f32.mrf.mxu0
    %v2176 = vpop.f32.mrf.mxu0
    %v2177 = vadd.f32 0.0, %v2176
    %v2178 = vpop.f32.mrf.mxu0
    %2179 = vdwg.mxu0
    %2182 = vrot.lane.b32.xlu0 %v810, 64
    %v2183 = vpop.permute.xlu0 %2182
    %2184 = vrot.lane.b32.xlu0 %v811, 64
    %v2185 = vpop.permute.xlu0 %2184
    %v2187 = vsel %vm1247, %v2183, 0
    %v2190 = vsel %vm1247, %v2185, 0
    %v2193 = vsel %vm1247, %v810, 0
    %v2196 = vsel %vm1247, %v811, 0
    %2198 = vmatprep.subr.bf16.mxu0 0
    %2199 = vmatpush1.bf16.xpose.msra.mxu0 0
    %2200 = vmatprep.subr.bf16.mxu0 0
    %2201 = vmatpush1.bf16.xpose.msra.mxu0 0
    %2202 = vmatprep.subr.bf16.mxu0 0
    %2203 = vmatpush1.bf16.xpose.msra.mxu0 0
    %2204 = vmatprep.subr.bf16.mxu0 0
    %2205 = vmatpush1.bf16.xpose.msra.mxu0 0
    %2206 = vmatprep.subr.bf16.mxu0 0
    %2207 = vmatpush1.bf16.xpose.msra.mxu0 0
    %2208 = vmatprep.subr.bf16.mxu0 0
    %2209 = vmatpush1.bf16.xpose.msra.mxu0 0
    %2210 = vmatprep.subr.bf16.mxu0 0
    %2211 = vmatpush1.bf16.xpose.msra.mxu0 %v2196
    %2212 = vmatprep.subr.bf16.mxu0 0
    %2213 = vmatpush1.bf16.xpose.msra.mxu0 %v2193
    %2214 = vmatprep.subr.bf16.mxu0 0
    %2215 = vmatpush2.bf16.xpose.msra.mxu0 0
    %2216 = vmatprep.subr.bf16.mxu0 0
    %2217 = vmatpush2.bf16.xpose.msra.mxu0 0
    %2218 = vmatprep.subr.bf16.mxu0 0
    %2219 = vmatpush2.bf16.xpose.msra.mxu0 0
    %2220 = vmatprep.subr.bf16.mxu0 0
    %2221 = vmatpush2.bf16.xpose.msra.mxu0 0
    %2222 = vmatprep.subr.bf16.mxu0 0
    %2223 = vmatpush2.bf16.xpose.msra.mxu0 0
    %2224 = vmatprep.subr.bf16.mxu0 0
    %2225 = vmatpush2.bf16.xpose.msra.mxu0 0
    %2226 = vmatprep.subr.bf16.mxu0 0
    %2227 = vmatpush2.bf16.xpose.msra.mxu0 0
    %2228 = vmatprep.subr.bf16.mxu0 0
    %2229 = vmatpush2.bf16.xpose.msra.mxu0 0
    %2230 = vmatprep.mubr.bf16.mxu0 0
    %2231 = vmatmul.mubr.bf16.gmra.mxu0 %v2187
    %v2232 = vpop.f32.mrf.mxu0
    %v2233 = vadd.f32 0.0, %v2232
    %v2234 = vpop.f32.mrf.mxu0
    %v2235 = vpop.f32.mrf.mxu0
    %v2236 = vadd.f32 0.0, %v2235
    %v2237 = vpop.f32.mrf.mxu0
    %2238 = vmatprep.mubr.bf16.mxu0 0
    %2239 = vmatmul.mubr.bf16.gmra.mxu0 %v2190
    %v2240 = vpop.f32.mrf.mxu0
    %v2241 = vadd.f32 0.0, %v2240
    %v2242 = vpop.f32.mrf.mxu0
    %v2243 = vpop.f32.mrf.mxu0
    %v2244 = vadd.f32 0.0, %v2243
    %v2245 = vpop.f32.mrf.mxu0
    %2246 = vdwg.mxu0
    %2249 = vrot.lane.b32.xlu0 %v812, 64
    %v2250 = vpop.permute.xlu0 %2249
    %2251 = vrot.lane.b32.xlu0 %v813, 64
    %v2252 = vpop.permute.xlu0 %2251
    %v2254 = vsel %vm1247, %v2250, 0
    %v2257 = vsel %vm1247, %v2252, 0
    %v2260 = vsel %vm1247, %v812, 0
    %v2263 = vsel %vm1247, %v813, 0
    %2265 = vmatprep.subr.bf16.mxu0 0
    %2266 = vmatpush1.bf16.xpose.msra.mxu0 0
    %2267 = vmatprep.subr.bf16.mxu0 0
    %2268 = vmatpush1.bf16.xpose.msra.mxu0 0
    %2269 = vmatprep.subr.bf16.mxu0 0
    %2270 = vmatpush1.bf16.xpose.msra.mxu0 0
    %2271 = vmatprep.subr.bf16.mxu0 0
    %2272 = vmatpush1.bf16.xpose.msra.mxu0 0
    %2273 = vmatprep.subr.bf16.mxu0 0
    %2274 = vmatpush1.bf16.xpose.msra.mxu0 0
    %2275 = vmatprep.subr.bf16.mxu0 0
    %2276 = vmatpush1.bf16.xpose.msra.mxu0 0
    %2277 = vmatprep.subr.bf16.mxu0 0
    %2278 = vmatpush1.bf16.xpose.msra.mxu0 %v2263
    %2279 = vmatprep.subr.bf16.mxu0 0
    %2280 = vmatpush1.bf16.xpose.msra.mxu0 %v2260
    %2281 = vmatprep.subr.bf16.mxu0 0
    %2282 = vmatpush2.bf16.xpose.msra.mxu0 0
    %2283 = vmatprep.subr.bf16.mxu0 0
    %2284 = vmatpush2.bf16.xpose.msra.mxu0 0
    %2285 = vmatprep.subr.bf16.mxu0 0
    %2286 = vmatpush2.bf16.xpose.msra.mxu0 0
    %2287 = vmatprep.subr.bf16.mxu0 0
    %2288 = vmatpush2.bf16.xpose.msra.mxu0 0
    %2289 = vmatprep.subr.bf16.mxu0 0
    %2290 = vmatpush2.bf16.xpose.msra.mxu0 0
    %2291 = vmatprep.subr.bf16.mxu0 0
    %2292 = vmatpush2.bf16.xpose.msra.mxu0 0
    %2293 = vmatprep.subr.bf16.mxu0 0
    %2294 = vmatpush2.bf16.xpose.msra.mxu0 0
    %2295 = vmatprep.subr.bf16.mxu0 0
    %2296 = vmatpush2.bf16.xpose.msra.mxu0 0
    %2297 = vmatprep.mubr.bf16.mxu0 0
    %2298 = vmatmul.mubr.bf16.gmra.mxu0 %v2254
    %v2299 = vpop.f32.mrf.mxu0
    %v2300 = vadd.f32 0.0, %v2299
    %v2301 = vpop.f32.mrf.mxu0
    %v2302 = vpop.f32.mrf.mxu0
    %v2303 = vadd.f32 0.0, %v2302
    %v2304 = vpop.f32.mrf.mxu0
    %2305 = vmatprep.mubr.bf16.mxu0 0
    %2306 = vmatmul.mubr.bf16.gmra.mxu0 %v2257
    %v2307 = vpop.f32.mrf.mxu0
    %v2308 = vadd.f32 0.0, %v2307
    %v2309 = vpop.f32.mrf.mxu0
    %v2310 = vpop.f32.mrf.mxu0
    %v2311 = vadd.f32 0.0, %v2310
    %v2312 = vpop.f32.mrf.mxu0
    %2313 = vdwg.mxu0
    %2316 = vrot.lane.b32.xlu0 %v814, 64
    %v2317 = vpop.permute.xlu0 %2316
    %2318 = vrot.lane.b32.xlu0 %v815, 64
    %v2319 = vpop.permute.xlu0 %2318
    %v2321 = vsel %vm1247, %v2317, 0
    %v2324 = vsel %vm1247, %v2319, 0
    %v2327 = vsel %vm1247, %v814, 0
    %v2330 = vsel %vm1247, %v815, 0
    %2332 = vmatprep.subr.bf16.mxu0 0
    %2333 = vmatpush1.bf16.xpose.msra.mxu0 0
    %2334 = vmatprep.subr.bf16.mxu0 0
    %2335 = vmatpush1.bf16.xpose.msra.mxu0 0
    %2336 = vmatprep.subr.bf16.mxu0 0
    %2337 = vmatpush1.bf16.xpose.msra.mxu0 0
    %2338 = vmatprep.subr.bf16.mxu0 0
    %2339 = vmatpush1.bf16.xpose.msra.mxu0 0
    %2340 = vmatprep.subr.bf16.mxu0 0
    %2341 = vmatpush1.bf16.xpose.msra.mxu0 0
    %2342 = vmatprep.subr.bf16.mxu0 0
    %2343 = vmatpush1.bf16.xpose.msra.mxu0 0
    %2344 = vmatprep.subr.bf16.mxu0 0
    %2345 = vmatpush1.bf16.xpose.msra.mxu0 %v2330
    %2346 = vmatprep.subr.bf16.mxu0 0
    %2347 = vmatpush1.bf16.xpose.msra.mxu0 %v2327
    %2348 = vmatprep.subr.bf16.mxu0 0
    %2349 = vmatpush2.bf16.xpose.msra.mxu0 0
    %2350 = vmatprep.subr.bf16.mxu0 0
    %2351 = vmatpush2.bf16.xpose.msra.mxu0 0
    %2352 = vmatprep.subr.bf16.mxu0 0
    %2353 = vmatpush2.bf16.xpose.msra.mxu0 0
    %2354 = vmatprep.subr.bf16.mxu0 0
    %2355 = vmatpush2.bf16.xpose.msra.mxu0 0
    %2356 = vmatprep.subr.bf16.mxu0 0
    %2357 = vmatpush2.bf16.xpose.msra.mxu0 0
    %2358 = vmatprep.subr.bf16.mxu0 0
    %2359 = vmatpush2.bf16.xpose.msra.mxu0 0
    %2360 = vmatprep.subr.bf16.mxu0 0
    %2361 = vmatpush2.bf16.xpose.msra.mxu0 0
    %2362 = vmatprep.subr.bf16.mxu0 0
    %2363 = vmatpush2.bf16.xpose.msra.mxu0 0
    %2364 = vmatprep.mubr.bf16.mxu0 0
    %2365 = vmatmul.mubr.bf16.gmra.mxu0 %v2321
    %v2366 = vpop.f32.mrf.mxu0
    %v2367 = vadd.f32 0.0, %v2366
    %v2368 = vpop.f32.mrf.mxu0
    %v2369 = vpop.f32.mrf.mxu0
    %v2370 = vadd.f32 0.0, %v2369
    %v2371 = vpop.f32.mrf.mxu0
    %2372 = vmatprep.mubr.bf16.mxu0 0
    %2373 = vmatmul.mubr.bf16.gmra.mxu0 %v2324
    %v2374 = vpop.f32.mrf.mxu0
    %v2375 = vadd.f32 0.0, %v2374
    %v2376 = vpop.f32.mrf.mxu0
    %v2377 = vpop.f32.mrf.mxu0
    %v2378 = vadd.f32 0.0, %v2377
    %v2379 = vpop.f32.mrf.mxu0
    %2380 = vdwg.mxu0
    %2383 = vrot.lane.b32.xlu0 %v816, 64
    %v2384 = vpop.permute.xlu0 %2383
    %2385 = vrot.lane.b32.xlu0 %v817, 64
    %v2386 = vpop.permute.xlu0 %2385
    %v2388 = vsel %vm1247, %v2384, 0
    %v2391 = vsel %vm1247, %v2386, 0
    %v2394 = vsel %vm1247, %v816, 0
    %v2397 = vsel %vm1247, %v817, 0
    %2399 = vmatprep.subr.bf16.mxu0 0
    %2400 = vmatpush1.bf16.xpose.msra.mxu0 0
    %2401 = vmatprep.subr.bf16.mxu0 0
    %2402 = vmatpush1.bf16.xpose.msra.mxu0 0
    %2403 = vmatprep.subr.bf16.mxu0 0
    %2404 = vmatpush1.bf16.xpose.msra.mxu0 0
    %2405 = vmatprep.subr.bf16.mxu0 0
    %2406 = vmatpush1.bf16.xpose.msra.mxu0 0
    %2407 = vmatprep.subr.bf16.mxu0 0
    %2408 = vmatpush1.bf16.xpose.msra.mxu0 0
    %2409 = vmatprep.subr.bf16.mxu0 0
    %2410 = vmatpush1.bf16.xpose.msra.mxu0 0
    %2411 = vmatprep.subr.bf16.mxu0 0
    %2412 = vmatpush1.bf16.xpose.msra.mxu0 %v2397
    %2413 = vmatprep.subr.bf16.mxu0 0
    %2414 = vmatpush1.bf16.xpose.msra.mxu0 %v2394
    %2415 = vmatprep.subr.bf16.mxu0 0
    %2416 = vmatpush2.bf16.xpose.msra.mxu0 0
    %2417 = vmatprep.subr.bf16.mxu0 0
    %2418 = vmatpush2.bf16.xpose.msra.mxu0 0
    %2419 = vmatprep.subr.bf16.mxu0 0
    %2420 = vmatpush2.bf16.xpose.msra.mxu0 0
    %2421 = vmatprep.subr.bf16.mxu0 0
    %2422 = vmatpush2.bf16.xpose.msra.mxu0 0
    %2423 = vmatprep.subr.bf16.mxu0 0
    %2424 = vmatpush2.bf16.xpose.msra.mxu0 0
    %2425 = vmatprep.subr.bf16.mxu0 0
    %2426 = vmatpush2.bf16.xpose.msra.mxu0 0
    %2427 = vmatprep.subr.bf16.mxu0 0
    %2428 = vmatpush2.bf16.xpose.msra.mxu0 0
    %2429 = vmatprep.subr.bf16.mxu0 0
    %2430 = vmatpush2.bf16.xpose.msra.mxu0 0
    %2431 = vmatprep.mubr.bf16.mxu0 0
    %2432 = vmatmul.mubr.bf16.gmra.mxu0 %v2388
    %v2433 = vpop.f32.mrf.mxu0
    %v2434 = vadd.f32 0.0, %v2433
    %v2435 = vpop.f32.mrf.mxu0
    %v2436 = vpop.f32.mrf.mxu0
    %v2437 = vadd.f32 0.0, %v2436
    %v2438 = vpop.f32.mrf.mxu0
    %2439 = vmatprep.mubr.bf16.mxu0 0
    %2440 = vmatmul.mubr.bf16.gmra.mxu0 %v2391
    %v2441 = vpop.f32.mrf.mxu0
    %v2442 = vadd.f32 0.0, %v2441
    %v2443 = vpop.f32.mrf.mxu0
    %v2444 = vpop.f32.mrf.mxu0
    %v2445 = vadd.f32 0.0, %v2444
    %v2446 = vpop.f32.mrf.mxu0
    %2447 = vdwg.mxu0
    %2450 = vrot.lane.b32.xlu0 %v818, 64
    %v2451 = vpop.permute.xlu0 %2450
    %2452 = vrot.lane.b32.xlu0 %v819, 64
    %v2453 = vpop.permute.xlu0 %2452
    %v2455 = vsel %vm1247, %v2451, 0
    %v2458 = vsel %vm1247, %v2453, 0
    %v2461 = vsel %vm1247, %v818, 0
    %v2464 = vsel %vm1247, %v819, 0
    %2466 = vmatprep.subr.bf16.mxu0 0
    %2467 = vmatpush1.bf16.xpose.msra.mxu0 0
    %2468 = vmatprep.subr.bf16.mxu0 0
    %2469 = vmatpush1.bf16.xpose.msra.mxu0 0
    %2470 = vmatprep.subr.bf16.mxu0 0
    %2471 = vmatpush1.bf16.xpose.msra.mxu0 0
    %2472 = vmatprep.subr.bf16.mxu0 0
    %2473 = vmatpush1.bf16.xpose.msra.mxu0 0
    %2474 = vmatprep.subr.bf16.mxu0 0
    %2475 = vmatpush1.bf16.xpose.msra.mxu0 0
    %2476 = vmatprep.subr.bf16.mxu0 0
    %2477 = vmatpush1.bf16.xpose.msra.mxu0 0
    %2478 = vmatprep.subr.bf16.mxu0 0
    %2479 = vmatpush1.bf16.xpose.msra.mxu0 %v2464
    %2480 = vmatprep.subr.bf16.mxu0 0
    %2481 = vmatpush1.bf16.xpose.msra.mxu0 %v2461
    %2482 = vmatprep.subr.bf16.mxu0 0
    %2483 = vmatpush2.bf16.xpose.msra.mxu0 0
    %2484 = vmatprep.subr.bf16.mxu0 0
    %2485 = vmatpush2.bf16.xpose.msra.mxu0 0
    %2486 = vmatprep.subr.bf16.mxu0 0
    %2487 = vmatpush2.bf16.xpose.msra.mxu0 0
    %2488 = vmatprep.subr.bf16.mxu0 0
    %2489 = vmatpush2.bf16.xpose.msra.mxu0 0
    %2490 = vmatprep.subr.bf16.mxu0 0
    %2491 = vmatpush2.bf16.xpose.msra.mxu0 0
    %2492 = vmatprep.subr.bf16.mxu0 0
    %2493 = vmatpush2.bf16.xpose.msra.mxu0 0
    %2494 = vmatprep.subr.bf16.mxu0 0
    %2495 = vmatpush2.bf16.xpose.msra.mxu0 0
    %2496 = vmatprep.subr.bf16.mxu0 0
    %2497 = vmatpush2.bf16.xpose.msra.mxu0 0
    %2498 = vmatprep.mubr.bf16.mxu0 0
    %2499 = vmatmul.mubr.bf16.gmra.mxu0 %v2455
    %v2500 = vpop.f32.mrf.mxu0
    %v2501 = vadd.f32 0.0, %v2500
    %v2502 = vpop.f32.mrf.mxu0
    %v2503 = vpop.f32.mrf.mxu0
    %v2504 = vadd.f32 0.0, %v2503
    %v2505 = vpop.f32.mrf.mxu0
    %2506 = vmatprep.mubr.bf16.mxu0 0
    %2507 = vmatmul.mubr.bf16.gmra.mxu0 %v2458
    %v2508 = vpop.f32.mrf.mxu0
    %v2509 = vadd.f32 0.0, %v2508
    %v2510 = vpop.f32.mrf.mxu0
    %v2511 = vpop.f32.mrf.mxu0
    %v2512 = vadd.f32 0.0, %v2511
    %v2513 = vpop.f32.mrf.mxu0
    %2514 = vdwg.mxu0
    %2517 = vrot.lane.b32.xlu0 %v820, 64
    %v2518 = vpop.permute.xlu0 %2517
    %2519 = vrot.lane.b32.xlu0 %v821, 64
    %v2520 = vpop.permute.xlu0 %2519
    %v2522 = vsel %vm1247, %v2518, 0
    %v2525 = vsel %vm1247, %v2520, 0
    %v2528 = vsel %vm1247, %v820, 0
    %v2531 = vsel %vm1247, %v821, 0
    %2533 = vmatprep.subr.bf16.mxu0 0
    %2534 = vmatpush1.bf16.xpose.msra.mxu0 0
    %2535 = vmatprep.subr.bf16.mxu0 0
    %2536 = vmatpush1.bf16.xpose.msra.mxu0 0
    %2537 = vmatprep.subr.bf16.mxu0 0
    %2538 = vmatpush1.bf16.xpose.msra.mxu0 0
    %2539 = vmatprep.subr.bf16.mxu0 0
    %2540 = vmatpush1.bf16.xpose.msra.mxu0 0
    %2541 = vmatprep.subr.bf16.mxu0 0
    %2542 = vmatpush1.bf16.xpose.msra.mxu0 0
    %2543 = vmatprep.subr.bf16.mxu0 0
    %2544 = vmatpush1.bf16.xpose.msra.mxu0 0
    %2545 = vmatprep.subr.bf16.mxu0 0
    %2546 = vmatpush1.bf16.xpose.msra.mxu0 %v2531
    %2547 = vmatprep.subr.bf16.mxu0 0
    %2548 = vmatpush1.bf16.xpose.msra.mxu0 %v2528
    %2549 = vmatprep.subr.bf16.mxu0 0
    %2550 = vmatpush2.bf16.xpose.msra.mxu0 0
    %2551 = vmatprep.subr.bf16.mxu0 0
    %2552 = vmatpush2.bf16.xpose.msra.mxu0 0
    %2553 = vmatprep.subr.bf16.mxu0 0
    %2554 = vmatpush2.bf16.xpose.msra.mxu0 0
    %2555 = vmatprep.subr.bf16.mxu0 0
    %2556 = vmatpush2.bf16.xpose.msra.mxu0 0
    %2557 = vmatprep.subr.bf16.mxu0 0
    %2558 = vmatpush2.bf16.xpose.msra.mxu0 0
    %2559 = vmatprep.subr.bf16.mxu0 0
    %2560 = vmatpush2.bf16.xpose.msra.mxu0 0
    %2561 = vmatprep.subr.bf16.mxu0 0
    %2562 = vmatpush2.bf16.xpose.msra.mxu0 0
    %2563 = vmatprep.subr.bf16.mxu0 0
    %2564 = vmatpush2.bf16.xpose.msra.mxu0 0
    %2565 = vmatprep.mubr.bf16.mxu0 0
    %2566 = vmatmul.mubr.bf16.gmra.mxu0 %v2522
    %v2567 = vpop.f32.mrf.mxu0
    %v2568 = vadd.f32 0.0, %v2567
    %v2569 = vpop.f32.mrf.mxu0
    %v2570 = vpop.f32.mrf.mxu0
    %v2571 = vadd.f32 0.0, %v2570
    %v2572 = vpop.f32.mrf.mxu0
    %2573 = vmatprep.mubr.bf16.mxu0 0
    %2574 = vmatmul.mubr.bf16.gmra.mxu0 %v2525
    %v2575 = vpop.f32.mrf.mxu0
    %v2576 = vadd.f32 0.0, %v2575
    %v2577 = vpop.f32.mrf.mxu0
    %v2578 = vpop.f32.mrf.mxu0
    %v2579 = vadd.f32 0.0, %v2578
    %v2580 = vpop.f32.mrf.mxu0
    %2581 = vdwg.mxu0
    %2584 = vrot.lane.b32.xlu0 %v822, 64
    %v2585 = vpop.permute.xlu0 %2584
    %2586 = vrot.lane.b32.xlu0 %v823, 64
    %v2587 = vpop.permute.xlu0 %2586
    %v2589 = vsel %vm1247, %v2585, 0
    %v2592 = vsel %vm1247, %v2587, 0
    %v2595 = vsel %vm1247, %v822, 0
    %v2598 = vsel %vm1247, %v823, 0
    %2600 = vmatprep.subr.bf16.mxu0 0
    %2601 = vmatpush1.bf16.xpose.msra.mxu0 0
    %2602 = vmatprep.subr.bf16.mxu0 0
    %2603 = vmatpush1.bf16.xpose.msra.mxu0 0
    %2604 = vmatprep.subr.bf16.mxu0 0
    %2605 = vmatpush1.bf16.xpose.msra.mxu0 0
    %2606 = vmatprep.subr.bf16.mxu0 0
    %2607 = vmatpush1.bf16.xpose.msra.mxu0 0
    %2608 = vmatprep.subr.bf16.mxu0 0
    %2609 = vmatpush1.bf16.xpose.msra.mxu0 0
    %2610 = vmatprep.subr.bf16.mxu0 0
    %2611 = vmatpush1.bf16.xpose.msra.mxu0 0
    %2612 = vmatprep.subr.bf16.mxu0 0
    %2613 = vmatpush1.bf16.xpose.msra.mxu0 %v2598
    %2614 = vmatprep.subr.bf16.mxu0 0
    %2615 = vmatpush1.bf16.xpose.msra.mxu0 %v2595
    %2616 = vmatprep.subr.bf16.mxu0 0
    %2617 = vmatpush2.bf16.xpose.msra.mxu0 0
    %2618 = vmatprep.subr.bf16.mxu0 0
    %2619 = vmatpush2.bf16.xpose.msra.mxu0 0
    %2620 = vmatprep.subr.bf16.mxu0 0
    %2621 = vmatpush2.bf16.xpose.msra.mxu0 0
    %2622 = vmatprep.subr.bf16.mxu0 0
    %2623 = vmatpush2.bf16.xpose.msra.mxu0 0
    %2624 = vmatprep.subr.bf16.mxu0 0
    %2625 = vmatpush2.bf16.xpose.msra.mxu0 0
    %2626 = vmatprep.subr.bf16.mxu0 0
    %2627 = vmatpush2.bf16.xpose.msra.mxu0 0
    %2628 = vmatprep.subr.bf16.mxu0 0
    %2629 = vmatpush2.bf16.xpose.msra.mxu0 0
    %2630 = vmatprep.subr.bf16.mxu0 0
    %2631 = vmatpush2.bf16.xpose.msra.mxu0 0
    %2632 = vmatprep.mubr.bf16.mxu0 0
    %2633 = vmatmul.mubr.bf16.gmra.mxu0 %v2589
    %v2634 = vpop.f32.mrf.mxu0
    %v2635 = vadd.f32 0.0, %v2634
    %v2636 = vpop.f32.mrf.mxu0
    %v2637 = vpop.f32.mrf.mxu0
    %v2638 = vadd.f32 0.0, %v2637
    %v2639 = vpop.f32.mrf.mxu0
    %2640 = vmatprep.mubr.bf16.mxu0 0
    %2641 = vmatmul.mubr.bf16.gmra.mxu0 %v2592
    %v2642 = vpop.f32.mrf.mxu0
    %v2643 = vadd.f32 0.0, %v2642
    %v2644 = vpop.f32.mrf.mxu0
    %v2645 = vpop.f32.mrf.mxu0
    %v2646 = vadd.f32 0.0, %v2645
    %v2647 = vpop.f32.mrf.mxu0
    %2648 = vdwg.mxu0
    %2651 = vrot.lane.b32.xlu0 %v824, 64
    %v2652 = vpop.permute.xlu0 %2651
    %2653 = vrot.lane.b32.xlu0 %v825, 64
    %v2654 = vpop.permute.xlu0 %2653
    %v2656 = vsel %vm1247, %v2652, 0
    %v2659 = vsel %vm1247, %v2654, 0
    %v2662 = vsel %vm1247, %v824, 0
    %v2665 = vsel %vm1247, %v825, 0
    %2667 = vmatprep.subr.bf16.mxu0 0
    %2668 = vmatpush1.bf16.xpose.msra.mxu0 0
    %2669 = vmatprep.subr.bf16.mxu0 0
    %2670 = vmatpush1.bf16.xpose.msra.mxu0 0
    %2671 = vmatprep.subr.bf16.mxu0 0
    %2672 = vmatpush1.bf16.xpose.msra.mxu0 0
    %2673 = vmatprep.subr.bf16.mxu0 0
    %2674 = vmatpush1.bf16.xpose.msra.mxu0 0
    %2675 = vmatprep.subr.bf16.mxu0 0
    %2676 = vmatpush1.bf16.xpose.msra.mxu0 0
    %2677 = vmatprep.subr.bf16.mxu0 0
    %2678 = vmatpush1.bf16.xpose.msra.mxu0 0
    %2679 = vmatprep.subr.bf16.mxu0 0
    %2680 = vmatpush1.bf16.xpose.msra.mxu0 %v2665
    %2681 = vmatprep.subr.bf16.mxu0 0
    %2682 = vmatpush1.bf16.xpose.msra.mxu0 %v2662
    %2683 = vmatprep.subr.bf16.mxu0 0
    %2684 = vmatpush2.bf16.xpose.msra.mxu0 0
    %2685 = vmatprep.subr.bf16.mxu0 0
    %2686 = vmatpush2.bf16.xpose.msra.mxu0 0
    %2687 = vmatprep.subr.bf16.mxu0 0
    %2688 = vmatpush2.bf16.xpose.msra.mxu0 0
    %2689 = vmatprep.subr.bf16.mxu0 0
    %2690 = vmatpush2.bf16.xpose.msra.mxu0 0
    %2691 = vmatprep.subr.bf16.mxu0 0
    %2692 = vmatpush2.bf16.xpose.msra.mxu0 0
    %2693 = vmatprep.subr.bf16.mxu0 0
    %2694 = vmatpush2.bf16.xpose.msra.mxu0 0
    %2695 = vmatprep.subr.bf16.mxu0 0
    %2696 = vmatpush2.bf16.xpose.msra.mxu0 0
    %2697 = vmatprep.subr.bf16.mxu0 0
    %2698 = vmatpush2.bf16.xpose.msra.mxu0 0
    %2699 = vmatprep.mubr.bf16.mxu0 0
    %2700 = vmatmul.mubr.bf16.gmra.mxu0 %v2656
    %v2701 = vpop.f32.mrf.mxu0
    %v2702 = vadd.f32 0.0, %v2701
    %v2703 = vpop.f32.mrf.mxu0
    %v2704 = vpop.f32.mrf.mxu0
    %v2705 = vadd.f32 0.0, %v2704
    %v2706 = vpop.f32.mrf.mxu0
    %2707 = vmatprep.mubr.bf16.mxu0 0
    %2708 = vmatmul.mubr.bf16.gmra.mxu0 %v2659
    %v2709 = vpop.f32.mrf.mxu0
    %v2710 = vadd.f32 0.0, %v2709
    %v2711 = vpop.f32.mrf.mxu0
    %v2712 = vpop.f32.mrf.mxu0
    %v2713 = vadd.f32 0.0, %v2712
    %v2714 = vpop.f32.mrf.mxu0
    %2715 = vdwg.mxu0
    %2718 = vrot.lane.b32.xlu0 %v826, 64
    %v2719 = vpop.permute.xlu0 %2718
    %2720 = vrot.lane.b32.xlu0 %v827, 64
    %v2721 = vpop.permute.xlu0 %2720
    %v2723 = vsel %vm1247, %v2719, 0
    %v2726 = vsel %vm1247, %v2721, 0
    %v2729 = vsel %vm1247, %v826, 0
    %v2732 = vsel %vm1247, %v827, 0
    %2734 = vmatprep.subr.bf16.mxu0 0
    %2735 = vmatpush1.bf16.xpose.msra.mxu0 0
    %2736 = vmatprep.subr.bf16.mxu0 0
    %2737 = vmatpush1.bf16.xpose.msra.mxu0 0
    %2738 = vmatprep.subr.bf16.mxu0 0
    %2739 = vmatpush1.bf16.xpose.msra.mxu0 0
    %2740 = vmatprep.subr.bf16.mxu0 0
    %2741 = vmatpush1.bf16.xpose.msra.mxu0 0
    %2742 = vmatprep.subr.bf16.mxu0 0
    %2743 = vmatpush1.bf16.xpose.msra.mxu0 0
    %2744 = vmatprep.subr.bf16.mxu0 0
    %2745 = vmatpush1.bf16.xpose.msra.mxu0 0
    %2746 = vmatprep.subr.bf16.mxu0 0
    %2747 = vmatpush1.bf16.xpose.msra.mxu0 %v2732
    %2748 = vmatprep.subr.bf16.mxu0 0
    %2749 = vmatpush1.bf16.xpose.msra.mxu0 %v2729
    %2750 = vmatprep.subr.bf16.mxu0 0
    %2751 = vmatpush2.bf16.xpose.msra.mxu0 0
    %2752 = vmatprep.subr.bf16.mxu0 0
    %2753 = vmatpush2.bf16.xpose.msra.mxu0 0
    %2754 = vmatprep.subr.bf16.mxu0 0
    %2755 = vmatpush2.bf16.xpose.msra.mxu0 0
    %2756 = vmatprep.subr.bf16.mxu0 0
    %2757 = vmatpush2.bf16.xpose.msra.mxu0 0
    %2758 = vmatprep.subr.bf16.mxu0 0
    %2759 = vmatpush2.bf16.xpose.msra.mxu0 0
    %2760 = vmatprep.subr.bf16.mxu0 0
    %2761 = vmatpush2.bf16.xpose.msra.mxu0 0
    %2762 = vmatprep.subr.bf16.mxu0 0
    %2763 = vmatpush2.bf16.xpose.msra.mxu0 0
    %2764 = vmatprep.subr.bf16.mxu0 0
    %2765 = vmatpush2.bf16.xpose.msra.mxu0 0
    %2766 = vmatprep.mubr.bf16.mxu0 0
    %2767 = vmatmul.mubr.bf16.gmra.mxu0 %v2723
    %v2768 = vpop.f32.mrf.mxu0
    %v2769 = vadd.f32 0.0, %v2768
    %v2770 = vpop.f32.mrf.mxu0
    %v2771 = vpop.f32.mrf.mxu0
    %v2772 = vadd.f32 0.0, %v2771
    %v2773 = vpop.f32.mrf.mxu0
    %2774 = vmatprep.mubr.bf16.mxu0 0
    %2775 = vmatmul.mubr.bf16.gmra.mxu0 %v2726
    %v2776 = vpop.f32.mrf.mxu0
    %v2777 = vadd.f32 0.0, %v2776
    %v2778 = vpop.f32.mrf.mxu0
    %v2779 = vpop.f32.mrf.mxu0
    %v2780 = vadd.f32 0.0, %v2779
    %v2781 = vpop.f32.mrf.mxu0
    %2782 = vdwg.mxu0
    %2785 = vrot.lane.b32.xlu0 %v828, 64
    %v2786 = vpop.permute.xlu0 %2785
    %2787 = vrot.lane.b32.xlu0 %v829, 64
    %v2788 = vpop.permute.xlu0 %2787
    %v2790 = vsel %vm1247, %v2786, 0
    %v2793 = vsel %vm1247, %v2788, 0
    %v2796 = vsel %vm1247, %v828, 0
    %v2799 = vsel %vm1247, %v829, 0
    %2801 = vmatprep.subr.bf16.mxu0 0
    %2802 = vmatpush1.bf16.xpose.msra.mxu0 0
    %2803 = vmatprep.subr.bf16.mxu0 0
    %2804 = vmatpush1.bf16.xpose.msra.mxu0 0
    %2805 = vmatprep.subr.bf16.mxu0 0
    %2806 = vmatpush1.bf16.xpose.msra.mxu0 0
    %2807 = vmatprep.subr.bf16.mxu0 0
    %2808 = vmatpush1.bf16.xpose.msra.mxu0 0
    %2809 = vmatprep.subr.bf16.mxu0 0
    %2810 = vmatpush1.bf16.xpose.msra.mxu0 0
    %2811 = vmatprep.subr.bf16.mxu0 0
    %2812 = vmatpush1.bf16.xpose.msra.mxu0 0
    %2813 = vmatprep.subr.bf16.mxu0 0
    %2814 = vmatpush1.bf16.xpose.msra.mxu0 %v2799
    %2815 = vmatprep.subr.bf16.mxu0 0
    %2816 = vmatpush1.bf16.xpose.msra.mxu0 %v2796
    %2817 = vmatprep.subr.bf16.mxu0 0
    %2818 = vmatpush2.bf16.xpose.msra.mxu0 0
    %2819 = vmatprep.subr.bf16.mxu0 0
    %2820 = vmatpush2.bf16.xpose.msra.mxu0 0
    %2821 = vmatprep.subr.bf16.mxu0 0
    %2822 = vmatpush2.bf16.xpose.msra.mxu0 0
    %2823 = vmatprep.subr.bf16.mxu0 0
    %2824 = vmatpush2.bf16.xpose.msra.mxu0 0
    %2825 = vmatprep.subr.bf16.mxu0 0
    %2826 = vmatpush2.bf16.xpose.msra.mxu0 0
    %2827 = vmatprep.subr.bf16.mxu0 0
    %2828 = vmatpush2.bf16.xpose.msra.mxu0 0
    %2829 = vmatprep.subr.bf16.mxu0 0
    %2830 = vmatpush2.bf16.xpose.msra.mxu0 0
    %2831 = vmatprep.subr.bf16.mxu0 0
    %2832 = vmatpush2.bf16.xpose.msra.mxu0 0
    %2833 = vmatprep.mubr.bf16.mxu0 0
    %2834 = vmatmul.mubr.bf16.gmra.mxu0 %v2790
    %v2835 = vpop.f32.mrf.mxu0
    %v2836 = vadd.f32 0.0, %v2835
    %v2837 = vpop.f32.mrf.mxu0
    %v2838 = vpop.f32.mrf.mxu0
    %v2839 = vadd.f32 0.0, %v2838
    %v2840 = vpop.f32.mrf.mxu0
    %2841 = vmatprep.mubr.bf16.mxu0 0
    %2842 = vmatmul.mubr.bf16.gmra.mxu0 %v2793
    %v2843 = vpop.f32.mrf.mxu0
    %v2844 = vadd.f32 0.0, %v2843
    %v2845 = vpop.f32.mrf.mxu0
    %v2846 = vpop.f32.mrf.mxu0
    %v2847 = vadd.f32 0.0, %v2846
    %v2848 = vpop.f32.mrf.mxu0
    %2849 = vdwg.mxu0
    %2852 = vrot.lane.b32.xlu0 %v830, 64
    %v2853 = vpop.permute.xlu0 %2852
    %2854 = vrot.lane.b32.xlu0 %v831, 64
    %v2855 = vpop.permute.xlu0 %2854
    %v2857 = vsel %vm1247, %v2853, 0
    %v2860 = vsel %vm1247, %v2855, 0
    %v2863 = vsel %vm1247, %v830, 0
    %v2866 = vsel %vm1247, %v831, 0
    %2868 = vmatprep.subr.bf16.mxu0 0
    %2869 = vmatpush1.bf16.xpose.msra.mxu0 0
    %2870 = vmatprep.subr.bf16.mxu0 0
    %2871 = vmatpush1.bf16.xpose.msra.mxu0 0
    %2872 = vmatprep.subr.bf16.mxu0 0
    %2873 = vmatpush1.bf16.xpose.msra.mxu0 0
    %2874 = vmatprep.subr.bf16.mxu0 0
    %2875 = vmatpush1.bf16.xpose.msra.mxu0 0
    %2876 = vmatprep.subr.bf16.mxu0 0
    %2877 = vmatpush1.bf16.xpose.msra.mxu0 0
    %2878 = vmatprep.subr.bf16.mxu0 0
    %2879 = vmatpush1.bf16.xpose.msra.mxu0 0
    %2880 = vmatprep.subr.bf16.mxu0 0
    %2881 = vmatpush1.bf16.xpose.msra.mxu0 %v2866
    %2882 = vmatprep.subr.bf16.mxu0 0
    %2883 = vmatpush1.bf16.xpose.msra.mxu0 %v2863
    %2884 = vmatprep.subr.bf16.mxu0 0
    %2885 = vmatpush2.bf16.xpose.msra.mxu0 0
    %2886 = vmatprep.subr.bf16.mxu0 0
    %2887 = vmatpush2.bf16.xpose.msra.mxu0 0
    %2888 = vmatprep.subr.bf16.mxu0 0
    %2889 = vmatpush2.bf16.xpose.msra.mxu0 0
    %2890 = vmatprep.subr.bf16.mxu0 0
    %2891 = vmatpush2.bf16.xpose.msra.mxu0 0
    %2892 = vmatprep.subr.bf16.mxu0 0
    %2893 = vmatpush2.bf16.xpose.msra.mxu0 0
    %2894 = vmatprep.subr.bf16.mxu0 0
    %2895 = vmatpush2.bf16.xpose.msra.mxu0 0
    %2896 = vmatprep.subr.bf16.mxu0 0
    %2897 = vmatpush2.bf16.xpose.msra.mxu0 0
    %2898 = vmatprep.subr.bf16.mxu0 0
    %2899 = vmatpush2.bf16.xpose.msra.mxu0 0
    %2900 = vmatprep.mubr.bf16.mxu0 0
    %2901 = vmatmul.mubr.bf16.gmra.mxu0 %v2857
    %v2902 = vpop.f32.mrf.mxu0
    %v2903 = vadd.f32 0.0, %v2902
    %v2904 = vpop.f32.mrf.mxu0
    %v2905 = vpop.f32.mrf.mxu0
    %v2906 = vadd.f32 0.0, %v2905
    %v2907 = vpop.f32.mrf.mxu0
    %2908 = vmatprep.mubr.bf16.mxu0 0
    %2909 = vmatmul.mubr.bf16.gmra.mxu0 %v2860
    %v2910 = vpop.f32.mrf.mxu0
    %v2911 = vadd.f32 0.0, %v2910
    %v2912 = vpop.f32.mrf.mxu0
    %v2913 = vpop.f32.mrf.mxu0
    %v2914 = vadd.f32 0.0, %v2913
    %v2915 = vpop.f32.mrf.mxu0
    %2916 = vdwg.mxu0
    %2919 = vrot.lane.b32.xlu0 %v832, 64
    %v2920 = vpop.permute.xlu0 %2919
    %2921 = vrot.lane.b32.xlu0 %v833, 64
    %v2922 = vpop.permute.xlu0 %2921
    %v2924 = vsel %vm1247, %v2920, 0
    %v2927 = vsel %vm1247, %v2922, 0
    %v2930 = vsel %vm1247, %v832, 0
    %v2933 = vsel %vm1247, %v833, 0
    %2935 = vmatprep.subr.bf16.mxu0 0
    %2936 = vmatpush1.bf16.xpose.msra.mxu0 0
    %2937 = vmatprep.subr.bf16.mxu0 0
    %2938 = vmatpush1.bf16.xpose.msra.mxu0 0
    %2939 = vmatprep.subr.bf16.mxu0 0
    %2940 = vmatpush1.bf16.xpose.msra.mxu0 0
    %2941 = vmatprep.subr.bf16.mxu0 0
    %2942 = vmatpush1.bf16.xpose.msra.mxu0 0
    %2943 = vmatprep.subr.bf16.mxu0 0
    %2944 = vmatpush1.bf16.xpose.msra.mxu0 0
    %2945 = vmatprep.subr.bf16.mxu0 0
    %2946 = vmatpush1.bf16.xpose.msra.mxu0 0
    %2947 = vmatprep.subr.bf16.mxu0 0
    %2948 = vmatpush1.bf16.xpose.msra.mxu0 %v2933
    %2949 = vmatprep.subr.bf16.mxu0 0
    %2950 = vmatpush1.bf16.xpose.msra.mxu0 %v2930
    %2951 = vmatprep.subr.bf16.mxu0 0
    %2952 = vmatpush2.bf16.xpose.msra.mxu0 0
    %2953 = vmatprep.subr.bf16.mxu0 0
    %2954 = vmatpush2.bf16.xpose.msra.mxu0 0
    %2955 = vmatprep.subr.bf16.mxu0 0
    %2956 = vmatpush2.bf16.xpose.msra.mxu0 0
    %2957 = vmatprep.subr.bf16.mxu0 0
    %2958 = vmatpush2.bf16.xpose.msra.mxu0 0
    %2959 = vmatprep.subr.bf16.mxu0 0
    %2960 = vmatpush2.bf16.xpose.msra.mxu0 0
    %2961 = vmatprep.subr.bf16.mxu0 0
    %2962 = vmatpush2.bf16.xpose.msra.mxu0 0
    %2963 = vmatprep.subr.bf16.mxu0 0
    %2964 = vmatpush2.bf16.xpose.msra.mxu0 0
    %2965 = vmatprep.subr.bf16.mxu0 0
    %2966 = vmatpush2.bf16.xpose.msra.mxu0 0
    %2967 = vmatprep.mubr.bf16.mxu0 0
    %2968 = vmatmul.mubr.bf16.gmra.mxu0 %v2924
    %v2969 = vpop.f32.mrf.mxu0
    %v2970 = vadd.f32 0.0, %v2969
    %v2971 = vpop.f32.mrf.mxu0
    %v2972 = vpop.f32.mrf.mxu0
    %v2973 = vadd.f32 0.0, %v2972
    %v2974 = vpop.f32.mrf.mxu0
    %2975 = vmatprep.mubr.bf16.mxu0 0
    %2976 = vmatmul.mubr.bf16.gmra.mxu0 %v2927
    %v2977 = vpop.f32.mrf.mxu0
    %v2978 = vadd.f32 0.0, %v2977
    %v2979 = vpop.f32.mrf.mxu0
    %v2980 = vpop.f32.mrf.mxu0
    %v2981 = vadd.f32 0.0, %v2980
    %v2982 = vpop.f32.mrf.mxu0
    %2983 = vdwg.mxu0
    %2986 = vrot.lane.b32.xlu0 %v834, 64
    %v2987 = vpop.permute.xlu0 %2986
    %2988 = vrot.lane.b32.xlu0 %v835, 64
    %v2989 = vpop.permute.xlu0 %2988
    %v2991 = vsel %vm1247, %v2987, 0
    %v2994 = vsel %vm1247, %v2989, 0
    %v2997 = vsel %vm1247, %v834, 0
    %v3000 = vsel %vm1247, %v835, 0
    %3002 = vmatprep.subr.bf16.mxu0 0
    %3003 = vmatpush1.bf16.xpose.msra.mxu0 0
    %3004 = vmatprep.subr.bf16.mxu0 0
    %3005 = vmatpush1.bf16.xpose.msra.mxu0 0
    %3006 = vmatprep.subr.bf16.mxu0 0
    %3007 = vmatpush1.bf16.xpose.msra.mxu0 0
    %3008 = vmatprep.subr.bf16.mxu0 0
    %3009 = vmatpush1.bf16.xpose.msra.mxu0 0
    %3010 = vmatprep.subr.bf16.mxu0 0
    %3011 = vmatpush1.bf16.xpose.msra.mxu0 0
    %3012 = vmatprep.subr.bf16.mxu0 0
    %3013 = vmatpush1.bf16.xpose.msra.mxu0 0
    %3014 = vmatprep.subr.bf16.mxu0 0
    %3015 = vmatpush1.bf16.xpose.msra.mxu0 %v3000
    %3016 = vmatprep.subr.bf16.mxu0 0
    %3017 = vmatpush1.bf16.xpose.msra.mxu0 %v2997
    %3018 = vmatprep.subr.bf16.mxu0 0
    %3019 = vmatpush2.bf16.xpose.msra.mxu0 0
    %3020 = vmatprep.subr.bf16.mxu0 0
    %3021 = vmatpush2.bf16.xpose.msra.mxu0 0
    %3022 = vmatprep.subr.bf16.mxu0 0
    %3023 = vmatpush2.bf16.xpose.msra.mxu0 0
    %3024 = vmatprep.subr.bf16.mxu0 0
    %3025 = vmatpush2.bf16.xpose.msra.mxu0 0
    %3026 = vmatprep.subr.bf16.mxu0 0
    %3027 = vmatpush2.bf16.xpose.msra.mxu0 0
    %3028 = vmatprep.subr.bf16.mxu0 0
    %3029 = vmatpush2.bf16.xpose.msra.mxu0 0
    %3030 = vmatprep.subr.bf16.mxu0 0
    %3031 = vmatpush2.bf16.xpose.msra.mxu0 0
    %3032 = vmatprep.subr.bf16.mxu0 0
    %3033 = vmatpush2.bf16.xpose.msra.mxu0 0
    %3034 = vmatprep.mubr.bf16.mxu0 0
    %3035 = vmatmul.mubr.bf16.gmra.mxu0 %v2991
    %v3036 = vpop.f32.mrf.mxu0
    %v3037 = vadd.f32 0.0, %v3036
    %v3038 = vpop.f32.mrf.mxu0
    %v3039 = vpop.f32.mrf.mxu0
    %v3040 = vadd.f32 0.0, %v3039
    %v3041 = vpop.f32.mrf.mxu0
    %3042 = vmatprep.mubr.bf16.mxu0 0
    %3043 = vmatmul.mubr.bf16.gmra.mxu0 %v2994
    %v3044 = vpop.f32.mrf.mxu0
    %v3045 = vadd.f32 0.0, %v3044
    %v3046 = vpop.f32.mrf.mxu0
    %v3047 = vpop.f32.mrf.mxu0
    %v3048 = vadd.f32 0.0, %v3047
    %v3049 = vpop.f32.mrf.mxu0
    %3050 = vdwg.mxu0
    %3053 = vrot.lane.b32.xlu0 %v836, 64
    %v3054 = vpop.permute.xlu0 %3053
    %3055 = vrot.lane.b32.xlu0 %v837, 64
    %v3056 = vpop.permute.xlu0 %3055
    %v3058 = vsel %vm1247, %v3054, 0
    %v3061 = vsel %vm1247, %v3056, 0
    %v3064 = vsel %vm1247, %v836, 0
    %v3067 = vsel %vm1247, %v837, 0
    %3069 = vmatprep.subr.bf16.mxu0 0
    %3070 = vmatpush1.bf16.xpose.msra.mxu0 0
    %3071 = vmatprep.subr.bf16.mxu0 0
    %3072 = vmatpush1.bf16.xpose.msra.mxu0 0
    %3073 = vmatprep.subr.bf16.mxu0 0
    %3074 = vmatpush1.bf16.xpose.msra.mxu0 0
    %3075 = vmatprep.subr.bf16.mxu0 0
    %3076 = vmatpush1.bf16.xpose.msra.mxu0 0
    %3077 = vmatprep.subr.bf16.mxu0 0
    %3078 = vmatpush1.bf16.xpose.msra.mxu0 0
    %3079 = vmatprep.subr.bf16.mxu0 0
    %3080 = vmatpush1.bf16.xpose.msra.mxu0 0
    %3081 = vmatprep.subr.bf16.mxu0 0
    %3082 = vmatpush1.bf16.xpose.msra.mxu0 %v3067
    %3083 = vmatprep.subr.bf16.mxu0 0
    %3084 = vmatpush1.bf16.xpose.msra.mxu0 %v3064
    %3085 = vmatprep.subr.bf16.mxu0 0
    %3086 = vmatpush2.bf16.xpose.msra.mxu0 0
    %3087 = vmatprep.subr.bf16.mxu0 0
    %3088 = vmatpush2.bf16.xpose.msra.mxu0 0
    %3089 = vmatprep.subr.bf16.mxu0 0
    %3090 = vmatpush2.bf16.xpose.msra.mxu0 0
    %3091 = vmatprep.subr.bf16.mxu0 0
    %3092 = vmatpush2.bf16.xpose.msra.mxu0 0
    %3093 = vmatprep.subr.bf16.mxu0 0
    %3094 = vmatpush2.bf16.xpose.msra.mxu0 0
    %3095 = vmatprep.subr.bf16.mxu0 0
    %3096 = vmatpush2.bf16.xpose.msra.mxu0 0
    %3097 = vmatprep.subr.bf16.mxu0 0
    %3098 = vmatpush2.bf16.xpose.msra.mxu0 0
    %3099 = vmatprep.subr.bf16.mxu0 0
    %3100 = vmatpush2.bf16.xpose.msra.mxu0 0
    %3101 = vmatprep.mubr.bf16.mxu0 0
    %3102 = vmatmul.mubr.bf16.gmra.mxu0 %v3058
    %v3103 = vpop.f32.mrf.mxu0
    %v3104 = vadd.f32 0.0, %v3103
    %v3105 = vpop.f32.mrf.mxu0
    %v3106 = vpop.f32.mrf.mxu0
    %v3107 = vadd.f32 0.0, %v3106
    %v3108 = vpop.f32.mrf.mxu0
    %3109 = vmatprep.mubr.bf16.mxu0 0
    %3110 = vmatmul.mubr.bf16.gmra.mxu0 %v3061
    %v3111 = vpop.f32.mrf.mxu0
    %v3112 = vadd.f32 0.0, %v3111
    %v3113 = vpop.f32.mrf.mxu0
    %v3114 = vpop.f32.mrf.mxu0
    %v3115 = vadd.f32 0.0, %v3114
    %v3116 = vpop.f32.mrf.mxu0
    %3117 = vdwg.mxu0
    %3120 = vrot.lane.b32.xlu0 %v838, 64
    %v3121 = vpop.permute.xlu0 %3120
    %3122 = vrot.lane.b32.xlu0 %v839, 64
    %v3123 = vpop.permute.xlu0 %3122
    %v3125 = vsel %vm1247, %v3121, 0
    %v3128 = vsel %vm1247, %v3123, 0
    %v3131 = vsel %vm1247, %v838, 0
    %v3134 = vsel %vm1247, %v839, 0
    %3136 = vmatprep.subr.bf16.mxu0 0
    %3137 = vmatpush1.bf16.xpose.msra.mxu0 0
    %3138 = vmatprep.subr.bf16.mxu0 0
    %3139 = vmatpush1.bf16.xpose.msra.mxu0 0
    %3140 = vmatprep.subr.bf16.mxu0 0
    %3141 = vmatpush1.bf16.xpose.msra.mxu0 0
    %3142 = vmatprep.subr.bf16.mxu0 0
    %3143 = vmatpush1.bf16.xpose.msra.mxu0 0
    %3144 = vmatprep.subr.bf16.mxu0 0
    %3145 = vmatpush1.bf16.xpose.msra.mxu0 0
    %3146 = vmatprep.subr.bf16.mxu0 0
    %3147 = vmatpush1.bf16.xpose.msra.mxu0 0
    %3148 = vmatprep.subr.bf16.mxu0 0
    %3149 = vmatpush1.bf16.xpose.msra.mxu0 %v3134
    %3150 = vmatprep.subr.bf16.mxu0 0
    %3151 = vmatpush1.bf16.xpose.msra.mxu0 %v3131
    %3152 = vmatprep.subr.bf16.mxu0 0
    %3153 = vmatpush2.bf16.xpose.msra.mxu0 0
    %3154 = vmatprep.subr.bf16.mxu0 0
    %3155 = vmatpush2.bf16.xpose.msra.mxu0 0
    %3156 = vmatprep.subr.bf16.mxu0 0
    %3157 = vmatpush2.bf16.xpose.msra.mxu0 0
    %3158 = vmatprep.subr.bf16.mxu0 0
    %3159 = vmatpush2.bf16.xpose.msra.mxu0 0
    %3160 = vmatprep.subr.bf16.mxu0 0
    %3161 = vmatpush2.bf16.xpose.msra.mxu0 0
    %3162 = vmatprep.subr.bf16.mxu0 0
    %3163 = vmatpush2.bf16.xpose.msra.mxu0 0
    %3164 = vmatprep.subr.bf16.mxu0 0
    %3165 = vmatpush2.bf16.xpose.msra.mxu0 0
    %3166 = vmatprep.subr.bf16.mxu0 0
    %3167 = vmatpush2.bf16.xpose.msra.mxu0 0
    %3168 = vmatprep.mubr.bf16.mxu0 0
    %3169 = vmatmul.mubr.bf16.gmra.mxu0 %v3125
    %v3170 = vpop.f32.mrf.mxu0
    %v3171 = vadd.f32 0.0, %v3170
    %v3172 = vpop.f32.mrf.mxu0
    %v3173 = vpop.f32.mrf.mxu0
    %v3174 = vadd.f32 0.0, %v3173
    %v3175 = vpop.f32.mrf.mxu0
    %3176 = vmatprep.mubr.bf16.mxu0 0
    %3177 = vmatmul.mubr.bf16.gmra.mxu0 %v3128
    %v3178 = vpop.f32.mrf.mxu0
    %v3179 = vadd.f32 0.0, %v3178
    %v3180 = vpop.f32.mrf.mxu0
    %v3181 = vpop.f32.mrf.mxu0
    %v3182 = vadd.f32 0.0, %v3181
    %v3183 = vpop.f32.mrf.mxu0
    %3184 = vdwg.mxu0
    %3187 = vrot.lane.b32.xlu0 %v840, 64
    %v3188 = vpop.permute.xlu0 %3187
    %3189 = vrot.lane.b32.xlu0 %v841, 64
    %v3190 = vpop.permute.xlu0 %3189
    %v3192 = vsel %vm1247, %v3188, 0
    %v3195 = vsel %vm1247, %v3190, 0
    %v3198 = vsel %vm1247, %v840, 0
    %v3201 = vsel %vm1247, %v841, 0
    %3203 = vmatprep.subr.bf16.mxu0 0
    %3204 = vmatpush1.bf16.xpose.msra.mxu0 0
    %3205 = vmatprep.subr.bf16.mxu0 0
    %3206 = vmatpush1.bf16.xpose.msra.mxu0 0
    %3207 = vmatprep.subr.bf16.mxu0 0
    %3208 = vmatpush1.bf16.xpose.msra.mxu0 0
    %3209 = vmatprep.subr.bf16.mxu0 0
    %3210 = vmatpush1.bf16.xpose.msra.mxu0 0
    %3211 = vmatprep.subr.bf16.mxu0 0
    %3212 = vmatpush1.bf16.xpose.msra.mxu0 0
    %3213 = vmatprep.subr.bf16.mxu0 0
    %3214 = vmatpush1.bf16.xpose.msra.mxu0 0
    %3215 = vmatprep.subr.bf16.mxu0 0
    %3216 = vmatpush1.bf16.xpose.msra.mxu0 %v3201
    %3217 = vmatprep.subr.bf16.mxu0 0
    %3218 = vmatpush1.bf16.xpose.msra.mxu0 %v3198
    %3219 = vmatprep.subr.bf16.mxu0 0
    %3220 = vmatpush2.bf16.xpose.msra.mxu0 0
    %3221 = vmatprep.subr.bf16.mxu0 0
    %3222 = vmatpush2.bf16.xpose.msra.mxu0 0
    %3223 = vmatprep.subr.bf16.mxu0 0
    %3224 = vmatpush2.bf16.xpose.msra.mxu0 0
    %3225 = vmatprep.subr.bf16.mxu0 0
    %3226 = vmatpush2.bf16.xpose.msra.mxu0 0
    %3227 = vmatprep.subr.bf16.mxu0 0
    %3228 = vmatpush2.bf16.xpose.msra.mxu0 0
    %3229 = vmatprep.subr.bf16.mxu0 0
    %3230 = vmatpush2.bf16.xpose.msra.mxu0 0
    %3231 = vmatprep.subr.bf16.mxu0 0
    %3232 = vmatpush2.bf16.xpose.msra.mxu0 0
    %3233 = vmatprep.subr.bf16.mxu0 0
    %3234 = vmatpush2.bf16.xpose.msra.mxu0 0
    %3235 = vmatprep.mubr.bf16.mxu0 0
    %3236 = vmatmul.mubr.bf16.gmra.mxu0 %v3192
    %v3237 = vpop.f32.mrf.mxu0
    %v3238 = vadd.f32 0.0, %v3237
    %v3239 = vpop.f32.mrf.mxu0
    %v3240 = vpop.f32.mrf.mxu0
    %v3241 = vadd.f32 0.0, %v3240
    %v3242 = vpop.f32.mrf.mxu0
    %3243 = vmatprep.mubr.bf16.mxu0 0
    %3244 = vmatmul.mubr.bf16.gmra.mxu0 %v3195
    %v3245 = vpop.f32.mrf.mxu0
    %v3246 = vadd.f32 0.0, %v3245
    %v3247 = vpop.f32.mrf.mxu0
    %v3248 = vpop.f32.mrf.mxu0
    %v3249 = vadd.f32 0.0, %v3248
    %v3250 = vpop.f32.mrf.mxu0
    %3251 = vdwg.mxu0
    %3254 = vrot.lane.b32.xlu0 %v842, 64
    %v3255 = vpop.permute.xlu0 %3254
    %3256 = vrot.lane.b32.xlu0 %v843, 64
    %v3257 = vpop.permute.xlu0 %3256
    %v3259 = vsel %vm1247, %v3255, 0
    %v3262 = vsel %vm1247, %v3257, 0
    %v3265 = vsel %vm1247, %v842, 0
    %v3268 = vsel %vm1247, %v843, 0
    %3270 = vmatprep.subr.bf16.mxu0 0
    %3271 = vmatpush1.bf16.xpose.msra.mxu0 0
    %3272 = vmatprep.subr.bf16.mxu0 0
    %3273 = vmatpush1.bf16.xpose.msra.mxu0 0
    %3274 = vmatprep.subr.bf16.mxu0 0
    %3275 = vmatpush1.bf16.xpose.msra.mxu0 0
    %3276 = vmatprep.subr.bf16.mxu0 0
    %3277 = vmatpush1.bf16.xpose.msra.mxu0 0
    %3278 = vmatprep.subr.bf16.mxu0 0
    %3279 = vmatpush1.bf16.xpose.msra.mxu0 0
    %3280 = vmatprep.subr.bf16.mxu0 0
    %3281 = vmatpush1.bf16.xpose.msra.mxu0 0
    %3282 = vmatprep.subr.bf16.mxu0 0
    %3283 = vmatpush1.bf16.xpose.msra.mxu0 %v3268
    %3284 = vmatprep.subr.bf16.mxu0 0
    %3285 = vmatpush1.bf16.xpose.msra.mxu0 %v3265
    %3286 = vmatprep.subr.bf16.mxu0 0
    %3287 = vmatpush2.bf16.xpose.msra.mxu0 0
    %3288 = vmatprep.subr.bf16.mxu0 0
    %3289 = vmatpush2.bf16.xpose.msra.mxu0 0
    %3290 = vmatprep.subr.bf16.mxu0 0
    %3291 = vmatpush2.bf16.xpose.msra.mxu0 0
    %3292 = vmatprep.subr.bf16.mxu0 0
    %3293 = vmatpush2.bf16.xpose.msra.mxu0 0
    %3294 = vmatprep.subr.bf16.mxu0 0
    %3295 = vmatpush2.bf16.xpose.msra.mxu0 0
    %3296 = vmatprep.subr.bf16.mxu0 0
    %3297 = vmatpush2.bf16.xpose.msra.mxu0 0
    %3298 = vmatprep.subr.bf16.mxu0 0
    %3299 = vmatpush2.bf16.xpose.msra.mxu0 0
    %3300 = vmatprep.subr.bf16.mxu0 0
    %3301 = vmatpush2.bf16.xpose.msra.mxu0 0
    %3302 = vmatprep.mubr.bf16.mxu0 0
    %3303 = vmatmul.mubr.bf16.gmra.mxu0 %v3259
    %v3304 = vpop.f32.mrf.mxu0
    %v3305 = vadd.f32 0.0, %v3304
    %v3306 = vpop.f32.mrf.mxu0
    %v3307 = vpop.f32.mrf.mxu0
    %v3308 = vadd.f32 0.0, %v3307
    %v3309 = vpop.f32.mrf.mxu0
    %3310 = vmatprep.mubr.bf16.mxu0 0
    %3311 = vmatmul.mubr.bf16.gmra.mxu0 %v3262
    %v3312 = vpop.f32.mrf.mxu0
    %v3313 = vadd.f32 0.0, %v3312
    %v3314 = vpop.f32.mrf.mxu0
    %v3315 = vpop.f32.mrf.mxu0
    %v3316 = vadd.f32 0.0, %v3315
    %v3317 = vpop.f32.mrf.mxu0
    %3318 = vdwg.mxu0
    %3321 = vrot.lane.b32.xlu0 %v844, 64
    %v3322 = vpop.permute.xlu0 %3321
    %3323 = vrot.lane.b32.xlu0 %v845, 64
    %v3324 = vpop.permute.xlu0 %3323
    %v3326 = vsel %vm1247, %v3322, 0
    %v3329 = vsel %vm1247, %v3324, 0
    %v3332 = vsel %vm1247, %v844, 0
    %v3335 = vsel %vm1247, %v845, 0
    %3337 = vmatprep.subr.bf16.mxu0 0
    %3338 = vmatpush1.bf16.xpose.msra.mxu0 0
    %3339 = vmatprep.subr.bf16.mxu0 0
    %3340 = vmatpush1.bf16.xpose.msra.mxu0 0
    %3341 = vmatprep.subr.bf16.mxu0 0
    %3342 = vmatpush1.bf16.xpose.msra.mxu0 0
    %3343 = vmatprep.subr.bf16.mxu0 0
    %3344 = vmatpush1.bf16.xpose.msra.mxu0 0
    %3345 = vmatprep.subr.bf16.mxu0 0
    %3346 = vmatpush1.bf16.xpose.msra.mxu0 0
    %3347 = vmatprep.subr.bf16.mxu0 0
    %3348 = vmatpush1.bf16.xpose.msra.mxu0 0
    %3349 = vmatprep.subr.bf16.mxu0 0
    %3350 = vmatpush1.bf16.xpose.msra.mxu0 %v3335
    %3351 = vmatprep.subr.bf16.mxu0 0
    %3352 = vmatpush1.bf16.xpose.msra.mxu0 %v3332
    %3353 = vmatprep.subr.bf16.mxu0 0
    %3354 = vmatpush2.bf16.xpose.msra.mxu0 0
    %3355 = vmatprep.subr.bf16.mxu0 0
    %3356 = vmatpush2.bf16.xpose.msra.mxu0 0
    %3357 = vmatprep.subr.bf16.mxu0 0
    %3358 = vmatpush2.bf16.xpose.msra.mxu0 0
    %3359 = vmatprep.subr.bf16.mxu0 0
    %3360 = vmatpush2.bf16.xpose.msra.mxu0 0
    %3361 = vmatprep.subr.bf16.mxu0 0
    %3362 = vmatpush2.bf16.xpose.msra.mxu0 0
    %3363 = vmatprep.subr.bf16.mxu0 0
    %3364 = vmatpush2.bf16.xpose.msra.mxu0 0
    %3365 = vmatprep.subr.bf16.mxu0 0
    %3366 = vmatpush2.bf16.xpose.msra.mxu0 0
    %3367 = vmatprep.subr.bf16.mxu0 0
    %3368 = vmatpush2.bf16.xpose.msra.mxu0 0
    %3369 = vmatprep.mubr.bf16.mxu0 0
    %3370 = vmatmul.mubr.bf16.gmra.mxu0 %v3326
    %v3371 = vpop.f32.mrf.mxu0
    %v3372 = vadd.f32 0.0, %v3371
    %v3373 = vpop.f32.mrf.mxu0
    %v3374 = vpop.f32.mrf.mxu0
    %v3375 = vadd.f32 0.0, %v3374
    %v3376 = vpop.f32.mrf.mxu0
    %3377 = vmatprep.mubr.bf16.mxu0 0
    %3378 = vmatmul.mubr.bf16.gmra.mxu0 %v3329
    %v3379 = vpop.f32.mrf.mxu0
    %v3380 = vadd.f32 0.0, %v3379
    %v3381 = vpop.f32.mrf.mxu0
    %v3382 = vpop.f32.mrf.mxu0
    %v3383 = vadd.f32 0.0, %v3382
    %v3384 = vpop.f32.mrf.mxu0
    %3385 = vdwg.mxu0
    %v3386 = vsel %vm1237, 1, 0
    %v3387 = vsel %vm1238, 1, 0
    %v3388 = vsel %vm1239, 1, 0
    %v3389 = vsel %vm1240, 1, 0
    %vm3390 = vcmp.eq.s32.totalorder %v3386, 1
    %vm3391 = vcmp.eq.s32.totalorder %v3387, 1
    %vm3392 = vcmp.eq.s32.totalorder %v3388, 1
    %vm3393 = vcmp.eq.s32.totalorder %v3389, 1
    %v3394 = vsel %vm3390, %v1295, -inf
    %v3395 = vsel %vm3391, %v1298, -inf
    %v3396 = vsel %vm3392, %v1303, -inf
    %v3397 = vsel %vm3393, %v1306, -inf
    %v3398 = vsel %vm3390, %v1362, -inf
    %v3399 = vsel %vm3391, %v1365, -inf
    %v3400 = vsel %vm3392, %v1370, -inf
    %v3401 = vsel %vm3393, %v1373, -inf
    %v3402 = vsel %vm3390, %v1429, -inf
    %v3403 = vsel %vm3391, %v1432, -inf
    %v3404 = vsel %vm3392, %v1437, -inf
    %v3405 = vsel %vm3393, %v1440, -inf
    %v3406 = vsel %vm3390, %v1496, -inf
    %v3407 = vsel %vm3391, %v1499, -inf
    %v3408 = vsel %vm3392, %v1504, -inf
    %v3409 = vsel %vm3393, %v1507, -inf
    %v3410 = vsel %vm3390, %v1563, -inf
    %v3411 = vsel %vm3391, %v1566, -inf
    %v3412 = vsel %vm3392, %v1571, -inf
    %v3413 = vsel %vm3393, %v1574, -inf
    %v3414 = vsel %vm3390, %v1630, -inf
    %v3415 = vsel %vm3391, %v1633, -inf
    %v3416 = vsel %vm3392, %v1638, -inf
    %v3417 = vsel %vm3393, %v1641, -inf
    %v3418 = vsel %vm3390, %v1697, -inf
    %v3419 = vsel %vm3391, %v1700, -inf
    %v3420 = vsel %vm3392, %v1705, -inf
    %v3421 = vsel %vm3393, %v1708, -inf
    %v3422 = vsel %vm3390, %v1764, -inf
    %v3423 = vsel %vm3391, %v1767, -inf
    %v3424 = vsel %vm3392, %v1772, -inf
    %v3425 = vsel %vm3393, %v1775, -inf
    %v3426 = vsel %vm3390, %v1831, -inf
    %v3427 = vsel %vm3391, %v1834, -inf
    %v3428 = vsel %vm3392, %v1839, -inf
    %v3429 = vsel %vm3393, %v1842, -inf
    %v3430 = vsel %vm3390, %v1898, -inf
    %v3431 = vsel %vm3391, %v1901, -inf
    %v3432 = vsel %vm3392, %v1906, -inf
    %v3433 = vsel %vm3393, %v1909, -inf
    %v3434 = vsel %vm3390, %v1965, -inf
    %v3435 = vsel %vm3391, %v1968, -inf
    %v3436 = vsel %vm3392, %v1973, -inf
    %v3437 = vsel %vm3393, %v1976, -inf
    %v3438 = vsel %vm3390, %v2032, -inf
    %v3439 = vsel %vm3391, %v2035, -inf
    %v3440 = vsel %vm3392, %v2040, -inf
    %v3441 = vsel %vm3393, %v2043, -inf
    %v3442 = vsel %vm3390, %v2099, -inf
    %v3443 = vsel %vm3391, %v2102, -inf
    %v3444 = vsel %vm3392, %v2107, -inf
    %v3445 = vsel %vm3393, %v2110, -inf
    %v3446 = vsel %vm3390, %v2166, -inf
    %v3447 = vsel %vm3391, %v2169, -inf
    %v3448 = vsel %vm3392, %v2174, -inf
    %v3449 = vsel %vm3393, %v2177, -inf
    %v3450 = vsel %vm3390, %v2233, -inf
    %v3451 = vsel %vm3391, %v2236, -inf
    %v3452 = vsel %vm3392, %v2241, -inf
    %v3453 = vsel %vm3393, %v2244, -inf
    %v3454 = vsel %vm3390, %v2300, -inf
    %v3455 = vsel %vm3391, %v2303, -inf
    %v3456 = vsel %vm3392, %v2308, -inf
    %v3457 = vsel %vm3393, %v2311, -inf
    %v3458 = vsel %vm3390, %v2367, -inf
    %v3459 = vsel %vm3391, %v2370, -inf
    %v3460 = vsel %vm3392, %v2375, -inf
    %v3461 = vsel %vm3393, %v2378, -inf
    %v3462 = vsel %vm3390, %v2434, -inf
    %v3463 = vsel %vm3391, %v2437, -inf
    %v3464 = vsel %vm3392, %v2442, -inf
    %v3465 = vsel %vm3393, %v2445, -inf
    %v3466 = vsel %vm3390, %v2501, -inf
    %v3467 = vsel %vm3391, %v2504, -inf
    %v3468 = vsel %vm3392, %v2509, -inf
    %v3469 = vsel %vm3393, %v2512, -inf
    %v3470 = vsel %vm3390, %v2568, -inf
    %v3471 = vsel %vm3391, %v2571, -inf
    %v3472 = vsel %vm3392, %v2576, -inf
    %v3473 = vsel %vm3393, %v2579, -inf
    %v3474 = vsel %vm3390, %v2635, -inf
    %v3475 = vsel %vm3391, %v2638, -inf
    %v3476 = vsel %vm3392, %v2643, -inf
    %v3477 = vsel %vm3393, %v2646, -inf
    %v3478 = vsel %vm3390, %v2702, -inf
    %v3479 = vsel %vm3391, %v2705, -inf
    %v3480 = vsel %vm3392, %v2710, -inf
    %v3481 = vsel %vm3393, %v2713, -inf
    %v3482 = vsel %vm3390, %v2769, -inf
    %v3483 = vsel %vm3391, %v2772, -inf
    %v3484 = vsel %vm3392, %v2777, -inf
    %v3485 = vsel %vm3393, %v2780, -inf
    %v3486 = vsel %vm3390, %v2836, -inf
    %v3487 = vsel %vm3391, %v2839, -inf
    %v3488 = vsel %vm3392, %v2844, -inf
    %v3489 = vsel %vm3393, %v2847, -inf
    %v3490 = vsel %vm3390, %v2903, -inf
    %v3491 = vsel %vm3391, %v2906, -inf
    %v3492 = vsel %vm3392, %v2911, -inf
    %v3493 = vsel %vm3393, %v2914, -inf
    %v3494 = vsel %vm3390, %v2970, -inf
    %v3495 = vsel %vm3391, %v2973, -inf
    %v3496 = vsel %vm3392, %v2978, -inf
    %v3497 = vsel %vm3393, %v2981, -inf
    %v3498 = vsel %vm3390, %v3037, -inf
    %v3499 = vsel %vm3391, %v3040, -inf
    %v3500 = vsel %vm3392, %v3045, -inf
    %v3501 = vsel %vm3393, %v3048, -inf
    %v3502 = vsel %vm3390, %v3104, -inf
    %v3503 = vsel %vm3391, %v3107, -inf
    %v3504 = vsel %vm3392, %v3112, -inf
    %v3505 = vsel %vm3393, %v3115, -inf
    %v3506 = vsel %vm3390, %v3171, -inf
    %v3507 = vsel %vm3391, %v3174, -inf
    %v3508 = vsel %vm3392, %v3179, -inf
    %v3509 = vsel %vm3393, %v3182, -inf
    %v3510 = vsel %vm3390, %v3238, -inf
    %v3511 = vsel %vm3391, %v3241, -inf
    %v3512 = vsel %vm3392, %v3246, -inf
    %v3513 = vsel %vm3393, %v3249, -inf
    %v3514 = vsel %vm3390, %v3305, -inf
    %v3515 = vsel %vm3391, %v3308, -inf
    %v3516 = vsel %vm3392, %v3313, -inf
    %v3517 = vsel %vm3393, %v3316, -inf
    %v3518 = vsel %vm3390, %v3372, -inf
    %v3519 = vsel %vm3391, %v3375, -inf
    %v3520 = vsel %vm3392, %v3380, -inf
    %v3521 = vsel %vm3393, %v3383, -inf
    %vm3522 = vcmask 261120
    %v3523 = vsel %vm3522, %v3394, -inf
    %3524 = vmax.xlane.f32.xlu0 %v3523
    %v3525 = vpop.xlane.xlu0 %3524
    %v3526 = vsel %vm3522, %v3395, -inf
    %3527 = vmax.xlane.f32.xlu0 %v3526
    %v3528 = vpop.xlane.xlu0 %3527
    %v3529 = vsel %vm3522, %v3396, -inf
    %3530 = vmax.xlane.f32.xlu0 %v3529
    %v3531 = vpop.xlane.xlu0 %3530
    %v3532 = vsel %vm3522, %v3397, -inf
    %3533 = vmax.xlane.f32.xlu0 %v3532
    %v3534 = vpop.xlane.xlu0 %3533
    %v3535 = vsel %vm3522, %v3398, -inf
    %3536 = vmax.xlane.f32.xlu0 %v3535
    %v3537 = vpop.xlane.xlu0 %3536
    %v3538 = vsel %vm3522, %v3399, -inf
    %3539 = vmax.xlane.f32.xlu0 %v3538
    %v3540 = vpop.xlane.xlu0 %3539
    %v3541 = vsel %vm3522, %v3400, -inf
    %3542 = vmax.xlane.f32.xlu0 %v3541
    %v3543 = vpop.xlane.xlu0 %3542
    %v3544 = vsel %vm3522, %v3401, -inf
    %3545 = vmax.xlane.f32.xlu0 %v3544
    %v3546 = vpop.xlane.xlu0 %3545
    %v3547 = vsel %vm3522, %v3402, -inf
    %3548 = vmax.xlane.f32.xlu0 %v3547
    %v3549 = vpop.xlane.xlu0 %3548
    %v3550 = vsel %vm3522, %v3403, -inf
    %3551 = vmax.xlane.f32.xlu0 %v3550
    %v3552 = vpop.xlane.xlu0 %3551
    %v3553 = vsel %vm3522, %v3404, -inf
    %3554 = vmax.xlane.f32.xlu0 %v3553
    %v3555 = vpop.xlane.xlu0 %3554
    %v3556 = vsel %vm3522, %v3405, -inf
    %3557 = vmax.xlane.f32.xlu0 %v3556
    %v3558 = vpop.xlane.xlu0 %3557
    %v3559 = vsel %vm3522, %v3406, -inf
    %3560 = vmax.xlane.f32.xlu0 %v3559
    %v3561 = vpop.xlane.xlu0 %3560
    %v3562 = vsel %vm3522, %v3407, -inf
    %3563 = vmax.xlane.f32.xlu0 %v3562
    %v3564 = vpop.xlane.xlu0 %3563
    %v3565 = vsel %vm3522, %v3408, -inf
    %3566 = vmax.xlane.f32.xlu0 %v3565
    %v3567 = vpop.xlane.xlu0 %3566
    %v3568 = vsel %vm3522, %v3409, -inf
    %3569 = vmax.xlane.f32.xlu0 %v3568
    %v3570 = vpop.xlane.xlu0 %3569
    %v3571 = vsel %vm3522, %v3410, -inf
    %3572 = vmax.xlane.f32.xlu0 %v3571
    %v3573 = vpop.xlane.xlu0 %3572
    %v3574 = vsel %vm3522, %v3411, -inf
    %3575 = vmax.xlane.f32.xlu0 %v3574
    %v3576 = vpop.xlane.xlu0 %3575
    %v3577 = vsel %vm3522, %v3412, -inf
    %3578 = vmax.xlane.f32.xlu0 %v3577
    %v3579 = vpop.xlane.xlu0 %3578
    %v3580 = vsel %vm3522, %v3413, -inf
    %3581 = vmax.xlane.f32.xlu0 %v3580
    %v3582 = vpop.xlane.xlu0 %3581
    %v3583 = vsel %vm3522, %v3414, -inf
    %3584 = vmax.xlane.f32.xlu0 %v3583
    %v3585 = vpop.xlane.xlu0 %3584
    %v3586 = vsel %vm3522, %v3415, -inf
    %3587 = vmax.xlane.f32.xlu0 %v3586
    %v3588 = vpop.xlane.xlu0 %3587
    %v3589 = vsel %vm3522, %v3416, -inf
    %3590 = vmax.xlane.f32.xlu0 %v3589
    %v3591 = vpop.xlane.xlu0 %3590
    %v3592 = vsel %vm3522, %v3417, -inf
    %3593 = vmax.xlane.f32.xlu0 %v3592
    %v3594 = vpop.xlane.xlu0 %3593
    %v3595 = vsel %vm3522, %v3418, -inf
    %3596 = vmax.xlane.f32.xlu0 %v3595
    %v3597 = vpop.xlane.xlu0 %3596
    %v3598 = vsel %vm3522, %v3419, -inf
    %3599 = vmax.xlane.f32.xlu0 %v3598
    %v3600 = vpop.xlane.xlu0 %3599
    %v3601 = vsel %vm3522, %v3420, -inf
    %3602 = vmax.xlane.f32.xlu0 %v3601
    %v3603 = vpop.xlane.xlu0 %3602
    %v3604 = vsel %vm3522, %v3421, -inf
    %3605 = vmax.xlane.f32.xlu0 %v3604
    %v3606 = vpop.xlane.xlu0 %3605
    %v3607 = vsel %vm3522, %v3422, -inf
    %3608 = vmax.xlane.f32.xlu0 %v3607
    %v3609 = vpop.xlane.xlu0 %3608
    %v3610 = vsel %vm3522, %v3423, -inf
    %3611 = vmax.xlane.f32.xlu0 %v3610
    %v3612 = vpop.xlane.xlu0 %3611
    %v3613 = vsel %vm3522, %v3424, -inf
    %3614 = vmax.xlane.f32.xlu0 %v3613
    %v3615 = vpop.xlane.xlu0 %3614
    %v3616 = vsel %vm3522, %v3425, -inf
    %3617 = vmax.xlane.f32.xlu0 %v3616
    %v3618 = vpop.xlane.xlu0 %3617
    %v3619 = vsel %vm3522, %v3426, -inf
    %3620 = vmax.xlane.f32.xlu0 %v3619
    %v3621 = vpop.xlane.xlu0 %3620
    %v3622 = vsel %vm3522, %v3427, -inf
    %3623 = vmax.xlane.f32.xlu0 %v3622
    %v3624 = vpop.xlane.xlu0 %3623
    %v3625 = vsel %vm3522, %v3428, -inf
    %3626 = vmax.xlane.f32.xlu0 %v3625
    %v3627 = vpop.xlane.xlu0 %3626
    %v3628 = vsel %vm3522, %v3429, -inf
    %3629 = vmax.xlane.f32.xlu0 %v3628
    %v3630 = vpop.xlane.xlu0 %3629
    %v3631 = vsel %vm3522, %v3430, -inf
    %3632 = vmax.xlane.f32.xlu0 %v3631
    %v3633 = vpop.xlane.xlu0 %3632
    %v3634 = vsel %vm3522, %v3431, -inf
    %3635 = vmax.xlane.f32.xlu0 %v3634
    %v3636 = vpop.xlane.xlu0 %3635
    %v3637 = vsel %vm3522, %v3432, -inf
    %3638 = vmax.xlane.f32.xlu0 %v3637
    %v3639 = vpop.xlane.xlu0 %3638
    %v3640 = vsel %vm3522, %v3433, -inf
    %3641 = vmax.xlane.f32.xlu0 %v3640
    %v3642 = vpop.xlane.xlu0 %3641
    %v3643 = vsel %vm3522, %v3434, -inf
    %3644 = vmax.xlane.f32.xlu0 %v3643
    %v3645 = vpop.xlane.xlu0 %3644
    %v3646 = vsel %vm3522, %v3435, -inf
    %3647 = vmax.xlane.f32.xlu0 %v3646
    %v3648 = vpop.xlane.xlu0 %3647
    %v3649 = vsel %vm3522, %v3436, -inf
    %3650 = vmax.xlane.f32.xlu0 %v3649
    %v3651 = vpop.xlane.xlu0 %3650
    %v3652 = vsel %vm3522, %v3437, -inf
    %3653 = vmax.xlane.f32.xlu0 %v3652
    %v3654 = vpop.xlane.xlu0 %3653
    %v3655 = vsel %vm3522, %v3438, -inf
    %3656 = vmax.xlane.f32.xlu0 %v3655
    %v3657 = vpop.xlane.xlu0 %3656
    %v3658 = vsel %vm3522, %v3439, -inf
    %3659 = vmax.xlane.f32.xlu0 %v3658
    %v3660 = vpop.xlane.xlu0 %3659
    %v3661 = vsel %vm3522, %v3440, -inf
    %3662 = vmax.xlane.f32.xlu0 %v3661
    %v3663 = vpop.xlane.xlu0 %3662
    %v3664 = vsel %vm3522, %v3441, -inf
    %3665 = vmax.xlane.f32.xlu0 %v3664
    %v3666 = vpop.xlane.xlu0 %3665
    %v3667 = vsel %vm3522, %v3442, -inf
    %3668 = vmax.xlane.f32.xlu0 %v3667
    %v3669 = vpop.xlane.xlu0 %3668
    %v3670 = vsel %vm3522, %v3443, -inf
    %3671 = vmax.xlane.f32.xlu0 %v3670
    %v3672 = vpop.xlane.xlu0 %3671
    %v3673 = vsel %vm3522, %v3444, -inf
    %3674 = vmax.xlane.f32.xlu0 %v3673
    %v3675 = vpop.xlane.xlu0 %3674
    %v3676 = vsel %vm3522, %v3445, -inf
    %3677 = vmax.xlane.f32.xlu0 %v3676
    %v3678 = vpop.xlane.xlu0 %3677
    %v3679 = vsel %vm3522, %v3446, -inf
    %3680 = vmax.xlane.f32.xlu0 %v3679
    %v3681 = vpop.xlane.xlu0 %3680
    %v3682 = vsel %vm3522, %v3447, -inf
    %3683 = vmax.xlane.f32.xlu0 %v3682
    %v3684 = vpop.xlane.xlu0 %3683
    %v3685 = vsel %vm3522, %v3448, -inf
    %3686 = vmax.xlane.f32.xlu0 %v3685
    %v3687 = vpop.xlane.xlu0 %3686
    %v3688 = vsel %vm3522, %v3449, -inf
    %3689 = vmax.xlane.f32.xlu0 %v3688
    %v3690 = vpop.xlane.xlu0 %3689
    %v3691 = vsel %vm3522, %v3450, -inf
    %3692 = vmax.xlane.f32.xlu0 %v3691
    %v3693 = vpop.xlane.xlu0 %3692
    %v3694 = vsel %vm3522, %v3451, -inf
    %3695 = vmax.xlane.f32.xlu0 %v3694
    %v3696 = vpop.xlane.xlu0 %3695
    %v3697 = vsel %vm3522, %v3452, -inf
    %3698 = vmax.xlane.f32.xlu0 %v3697
    %v3699 = vpop.xlane.xlu0 %3698
    %v3700 = vsel %vm3522, %v3453, -inf
    %3701 = vmax.xlane.f32.xlu0 %v3700
    %v3702 = vpop.xlane.xlu0 %3701
    %v3703 = vsel %vm3522, %v3454, -inf
    %3704 = vmax.xlane.f32.xlu0 %v3703
    %v3705 = vpop.xlane.xlu0 %3704
    %v3706 = vsel %vm3522, %v3455, -inf
    %3707 = vmax.xlane.f32.xlu0 %v3706
    %v3708 = vpop.xlane.xlu0 %3707
    %v3709 = vsel %vm3522, %v3456, -inf
    %3710 = vmax.xlane.f32.xlu0 %v3709
    %v3711 = vpop.xlane.xlu0 %3710
    %v3712 = vsel %vm3522, %v3457, -inf
    %3713 = vmax.xlane.f32.xlu0 %v3712
    %v3714 = vpop.xlane.xlu0 %3713
    %v3715 = vsel %vm3522, %v3458, -inf
    %3716 = vmax.xlane.f32.xlu0 %v3715
    %v3717 = vpop.xlane.xlu0 %3716
    %v3718 = vsel %vm3522, %v3459, -inf
    %3719 = vmax.xlane.f32.xlu0 %v3718
    %v3720 = vpop.xlane.xlu0 %3719
    %v3721 = vsel %vm3522, %v3460, -inf
    %3722 = vmax.xlane.f32.xlu0 %v3721
    %v3723 = vpop.xlane.xlu0 %3722
    %v3724 = vsel %vm3522, %v3461, -inf
    %3725 = vmax.xlane.f32.xlu0 %v3724
    %v3726 = vpop.xlane.xlu0 %3725
    %v3727 = vsel %vm3522, %v3462, -inf
    %3728 = vmax.xlane.f32.xlu0 %v3727
    %v3729 = vpop.xlane.xlu0 %3728
    %v3730 = vsel %vm3522, %v3463, -inf
    %3731 = vmax.xlane.f32.xlu0 %v3730
    %v3732 = vpop.xlane.xlu0 %3731
    %v3733 = vsel %vm3522, %v3464, -inf
    %3734 = vmax.xlane.f32.xlu0 %v3733
    %v3735 = vpop.xlane.xlu0 %3734
    %v3736 = vsel %vm3522, %v3465, -inf
    %3737 = vmax.xlane.f32.xlu0 %v3736
    %v3738 = vpop.xlane.xlu0 %3737
    %v3739 = vsel %vm3522, %v3466, -inf
    %3740 = vmax.xlane.f32.xlu0 %v3739
    %v3741 = vpop.xlane.xlu0 %3740
    %v3742 = vsel %vm3522, %v3467, -inf
    %3743 = vmax.xlane.f32.xlu0 %v3742
    %v3744 = vpop.xlane.xlu0 %3743
    %v3745 = vsel %vm3522, %v3468, -inf
    %3746 = vmax.xlane.f32.xlu0 %v3745
    %v3747 = vpop.xlane.xlu0 %3746
    %v3748 = vsel %vm3522, %v3469, -inf
    %3749 = vmax.xlane.f32.xlu0 %v3748
    %v3750 = vpop.xlane.xlu0 %3749
    %v3751 = vsel %vm3522, %v3470, -inf
    %3752 = vmax.xlane.f32.xlu0 %v3751
    %v3753 = vpop.xlane.xlu0 %3752
    %v3754 = vsel %vm3522, %v3471, -inf
    %3755 = vmax.xlane.f32.xlu0 %v3754
    %v3756 = vpop.xlane.xlu0 %3755
    %v3757 = vsel %vm3522, %v3472, -inf
    %3758 = vmax.xlane.f32.xlu0 %v3757
    %v3759 = vpop.xlane.xlu0 %3758
    %v3760 = vsel %vm3522, %v3473, -inf
    %3761 = vmax.xlane.f32.xlu0 %v3760
    %v3762 = vpop.xlane.xlu0 %3761
    %v3763 = vsel %vm3522, %v3474, -inf
    %3764 = vmax.xlane.f32.xlu0 %v3763
    %v3765 = vpop.xlane.xlu0 %3764
    %v3766 = vsel %vm3522, %v3475, -inf
    %3767 = vmax.xlane.f32.xlu0 %v3766
    %v3768 = vpop.xlane.xlu0 %3767
    %v3769 = vsel %vm3522, %v3476, -inf
    %3770 = vmax.xlane.f32.xlu0 %v3769
    %v3771 = vpop.xlane.xlu0 %3770
    %v3772 = vsel %vm3522, %v3477, -inf
    %3773 = vmax.xlane.f32.xlu0 %v3772
    %v3774 = vpop.xlane.xlu0 %3773
    %v3775 = vsel %vm3522, %v3478, -inf
    %3776 = vmax.xlane.f32.xlu0 %v3775
    %v3777 = vpop.xlane.xlu0 %3776
    %v3778 = vsel %vm3522, %v3479, -inf
    %3779 = vmax.xlane.f32.xlu0 %v3778
    %v3780 = vpop.xlane.xlu0 %3779
    %v3781 = vsel %vm3522, %v3480, -inf
    %3782 = vmax.xlane.f32.xlu0 %v3781
    %v3783 = vpop.xlane.xlu0 %3782
    %v3784 = vsel %vm3522, %v3481, -inf
    %3785 = vmax.xlane.f32.xlu0 %v3784
    %v3786 = vpop.xlane.xlu0 %3785
    %v3787 = vsel %vm3522, %v3482, -inf
    %3788 = vmax.xlane.f32.xlu0 %v3787
    %v3789 = vpop.xlane.xlu0 %3788
    %v3790 = vsel %vm3522, %v3483, -inf
    %3791 = vmax.xlane.f32.xlu0 %v3790
    %v3792 = vpop.xlane.xlu0 %3791
    %v3793 = vsel %vm3522, %v3484, -inf
    %3794 = vmax.xlane.f32.xlu0 %v3793
    %v3795 = vpop.xlane.xlu0 %3794
    %v3796 = vsel %vm3522, %v3485, -inf
    %3797 = vmax.xlane.f32.xlu0 %v3796
    %v3798 = vpop.xlane.xlu0 %3797
    %v3799 = vsel %vm3522, %v3486, -inf
    %3800 = vmax.xlane.f32.xlu0 %v3799
    %v3801 = vpop.xlane.xlu0 %3800
    %v3802 = vsel %vm3522, %v3487, -inf
    %3803 = vmax.xlane.f32.xlu0 %v3802
    %v3804 = vpop.xlane.xlu0 %3803
    %v3805 = vsel %vm3522, %v3488, -inf
    %3806 = vmax.xlane.f32.xlu0 %v3805
    %v3807 = vpop.xlane.xlu0 %3806
    %v3808 = vsel %vm3522, %v3489, -inf
    %3809 = vmax.xlane.f32.xlu0 %v3808
    %v3810 = vpop.xlane.xlu0 %3809
    %v3811 = vsel %vm3522, %v3490, -inf
    %3812 = vmax.xlane.f32.xlu0 %v3811
    %v3813 = vpop.xlane.xlu0 %3812
    %v3814 = vsel %vm3522, %v3491, -inf
    %3815 = vmax.xlane.f32.xlu0 %v3814
    %v3816 = vpop.xlane.xlu0 %3815
    %v3817 = vsel %vm3522, %v3492, -inf
    %3818 = vmax.xlane.f32.xlu0 %v3817
    %v3819 = vpop.xlane.xlu0 %3818
    %v3820 = vsel %vm3522, %v3493, -inf
    %3821 = vmax.xlane.f32.xlu0 %v3820
    %v3822 = vpop.xlane.xlu0 %3821
    %v3823 = vsel %vm3522, %v3494, -inf
    %3824 = vmax.xlane.f32.xlu0 %v3823
    %v3825 = vpop.xlane.xlu0 %3824
    %v3826 = vsel %vm3522, %v3495, -inf
    %3827 = vmax.xlane.f32.xlu0 %v3826
    %v3828 = vpop.xlane.xlu0 %3827
    %v3829 = vsel %vm3522, %v3496, -inf
    %3830 = vmax.xlane.f32.xlu0 %v3829
    %v3831 = vpop.xlane.xlu0 %3830
    %v3832 = vsel %vm3522, %v3497, -inf
    %3833 = vmax.xlane.f32.xlu0 %v3832
    %v3834 = vpop.xlane.xlu0 %3833
    %v3835 = vsel %vm3522, %v3498, -inf
    %3836 = vmax.xlane.f32.xlu0 %v3835
    %v3837 = vpop.xlane.xlu0 %3836
    %v3838 = vsel %vm3522, %v3499, -inf
    %3839 = vmax.xlane.f32.xlu0 %v3838
    %v3840 = vpop.xlane.xlu0 %3839
    %v3841 = vsel %vm3522, %v3500, -inf
    %3842 = vmax.xlane.f32.xlu0 %v3841
    %v3843 = vpop.xlane.xlu0 %3842
    %v3844 = vsel %vm3522, %v3501, -inf
    %3845 = vmax.xlane.f32.xlu0 %v3844
    %v3846 = vpop.xlane.xlu0 %3845
    %v3847 = vsel %vm3522, %v3502, -inf
    %3848 = vmax.xlane.f32.xlu0 %v3847
    %v3849 = vpop.xlane.xlu0 %3848
    %v3850 = vsel %vm3522, %v3503, -inf
    %3851 = vmax.xlane.f32.xlu0 %v3850
    %v3852 = vpop.xlane.xlu0 %3851
    %v3853 = vsel %vm3522, %v3504, -inf
    %3854 = vmax.xlane.f32.xlu0 %v3853
    %v3855 = vpop.xlane.xlu0 %3854
    %v3856 = vsel %vm3522, %v3505, -inf
    %3857 = vmax.xlane.f32.xlu0 %v3856
    %v3858 = vpop.xlane.xlu0 %3857
    %v3859 = vsel %vm3522, %v3506, -inf
    %3860 = vmax.xlane.f32.xlu0 %v3859
    %v3861 = vpop.xlane.xlu0 %3860
    %v3862 = vsel %vm3522, %v3507, -inf
    %3863 = vmax.xlane.f32.xlu0 %v3862
    %v3864 = vpop.xlane.xlu0 %3863
    %v3865 = vsel %vm3522, %v3508, -inf
    %3866 = vmax.xlane.f32.xlu0 %v3865
    %v3867 = vpop.xlane.xlu0 %3866
    %v3868 = vsel %vm3522, %v3509, -inf
    %3869 = vmax.xlane.f32.xlu0 %v3868
    %v3870 = vpop.xlane.xlu0 %3869
    %v3871 = vsel %vm3522, %v3510, -inf
    %3872 = vmax.xlane.f32.xlu0 %v3871
    %v3873 = vpop.xlane.xlu0 %3872
    %v3874 = vsel %vm3522, %v3511, -inf
    %3875 = vmax.xlane.f32.xlu0 %v3874
    %v3876 = vpop.xlane.xlu0 %3875
    %v3877 = vsel %vm3522, %v3512, -inf
    %3878 = vmax.xlane.f32.xlu0 %v3877
    %v3879 = vpop.xlane.xlu0 %3878
    %v3880 = vsel %vm3522, %v3513, -inf
    %3881 = vmax.xlane.f32.xlu0 %v3880
    %v3882 = vpop.xlane.xlu0 %3881
    %v3883 = vsel %vm3522, %v3514, -inf
    %3884 = vmax.xlane.f32.xlu0 %v3883
    %v3885 = vpop.xlane.xlu0 %3884
    %v3886 = vsel %vm3522, %v3515, -inf
    %3887 = vmax.xlane.f32.xlu0 %v3886
    %v3888 = vpop.xlane.xlu0 %3887
    %v3889 = vsel %vm3522, %v3516, -inf
    %3890 = vmax.xlane.f32.xlu0 %v3889
    %v3891 = vpop.xlane.xlu0 %3890
    %v3892 = vsel %vm3522, %v3517, -inf
    %3893 = vmax.xlane.f32.xlu0 %v3892
    %v3894 = vpop.xlane.xlu0 %3893
    %v3895 = vsel %vm3522, %v3518, -inf
    %3896 = vmax.xlane.f32.xlu0 %v3895
    %v3897 = vpop.xlane.xlu0 %3896
    %v3898 = vsel %vm3522, %v3519, -inf
    %3899 = vmax.xlane.f32.xlu0 %v3898
    %v3900 = vpop.xlane.xlu0 %3899
    %v3901 = vsel %vm3522, %v3520, -inf
    %3902 = vmax.xlane.f32.xlu0 %v3901
    %v3903 = vpop.xlane.xlu0 %3902
    %v3904 = vsel %vm3522, %v3521, -inf
    %3905 = vmax.xlane.f32.xlu0 %v3904
    %v3906 = vpop.xlane.xlu0 %3905
    %v3907 = vsub.f32 %v3394, %v3525
    %v3908 = vsub.f32 %v3395, %v3528
    %v3909 = vsub.f32 %v3396, %v3531
    %v3910 = vsub.f32 %v3397, %v3534
    %v3911 = vsub.f32 %v3398, %v3537
    %v3912 = vsub.f32 %v3399, %v3540
    %v3913 = vsub.f32 %v3400, %v3543
    %v3914 = vsub.f32 %v3401, %v3546
    %v3915 = vsub.f32 %v3402, %v3549
    %v3916 = vsub.f32 %v3403, %v3552
    %v3917 = vsub.f32 %v3404, %v3555
    %v3918 = vsub.f32 %v3405, %v3558
    %v3919 = vsub.f32 %v3406, %v3561
    %v3920 = vsub.f32 %v3407, %v3564
    %v3921 = vsub.f32 %v3408, %v3567
    %v3922 = vsub.f32 %v3409, %v3570
    %v3923 = vsub.f32 %v3410, %v3573
    %v3924 = vsub.f32 %v3411, %v3576
    %v3925 = vsub.f32 %v3412, %v3579
    %v3926 = vsub.f32 %v3413, %v3582
    %v3927 = vsub.f32 %v3414, %v3585
    %v3928 = vsub.f32 %v3415, %v3588
    %v3929 = vsub.f32 %v3416, %v3591
    %v3930 = vsub.f32 %v3417, %v3594
    %v3931 = vsub.f32 %v3418, %v3597
    %v3932 = vsub.f32 %v3419, %v3600
    %v3933 = vsub.f32 %v3420, %v3603
    %v3934 = vsub.f32 %v3421, %v3606
    %v3935 = vsub.f32 %v3422, %v3609
    %v3936 = vsub.f32 %v3423, %v3612
    %v3937 = vsub.f32 %v3424, %v3615
    %v3938 = vsub.f32 %v3425, %v3618
    %v3939 = vsub.f32 %v3426, %v3621
    %v3940 = vsub.f32 %v3427, %v3624
    %v3941 = vsub.f32 %v3428, %v3627
    %v3942 = vsub.f32 %v3429, %v3630
    %v3943 = vsub.f32 %v3430, %v3633
    %v3944 = vsub.f32 %v3431, %v3636
    %v3945 = vsub.f32 %v3432, %v3639
    %v3946 = vsub.f32 %v3433, %v3642
    %v3947 = vsub.f32 %v3434, %v3645
    %v3948 = vsub.f32 %v3435, %v3648
    %v3949 = vsub.f32 %v3436, %v3651
    %v3950 = vsub.f32 %v3437, %v3654
    %v3951 = vsub.f32 %v3438, %v3657
    %v3952 = vsub.f32 %v3439, %v3660
    %v3953 = vsub.f32 %v3440, %v3663
    %v3954 = vsub.f32 %v3441, %v3666
    %v3955 = vsub.f32 %v3442, %v3669
    %v3956 = vsub.f32 %v3443, %v3672
    %v3957 = vsub.f32 %v3444, %v3675
    %v3958 = vsub.f32 %v3445, %v3678
    %v3959 = vsub.f32 %v3446, %v3681
    %v3960 = vsub.f32 %v3447, %v3684
    %v3961 = vsub.f32 %v3448, %v3687
    %v3962 = vsub.f32 %v3449, %v3690
    %v3963 = vsub.f32 %v3450, %v3693
    %v3964 = vsub.f32 %v3451, %v3696
    %v3965 = vsub.f32 %v3452, %v3699
    %v3966 = vsub.f32 %v3453, %v3702
    %v3967 = vsub.f32 %v3454, %v3705
    %v3968 = vsub.f32 %v3455, %v3708
    %v3969 = vsub.f32 %v3456, %v3711
    %v3970 = vsub.f32 %v3457, %v3714
    %v3971 = vsub.f32 %v3458, %v3717
    %v3972 = vsub.f32 %v3459, %v3720
    %v3973 = vsub.f32 %v3460, %v3723
    %v3974 = vsub.f32 %v3461, %v3726
    %v3975 = vsub.f32 %v3462, %v3729
    %v3976 = vsub.f32 %v3463, %v3732
    %v3977 = vsub.f32 %v3464, %v3735
    %v3978 = vsub.f32 %v3465, %v3738
    %v3979 = vsub.f32 %v3466, %v3741
    %v3980 = vsub.f32 %v3467, %v3744
    %v3981 = vsub.f32 %v3468, %v3747
    %v3982 = vsub.f32 %v3469, %v3750
    %v3983 = vsub.f32 %v3470, %v3753
    %v3984 = vsub.f32 %v3471, %v3756
    %v3985 = vsub.f32 %v3472, %v3759
    %v3986 = vsub.f32 %v3473, %v3762
    %v3987 = vsub.f32 %v3474, %v3765
    %v3988 = vsub.f32 %v3475, %v3768
    %v3989 = vsub.f32 %v3476, %v3771
    %v3990 = vsub.f32 %v3477, %v3774
    %v3991 = vsub.f32 %v3478, %v3777
    %v3992 = vsub.f32 %v3479, %v3780
    %v3993 = vsub.f32 %v3480, %v3783
    %v3994 = vsub.f32 %v3481, %v3786
    %v3995 = vsub.f32 %v3482, %v3789
    %v3996 = vsub.f32 %v3483, %v3792
    %v3997 = vsub.f32 %v3484, %v3795
    %v3998 = vsub.f32 %v3485, %v3798
    %v3999 = vsub.f32 %v3486, %v3801
    %v4000 = vsub.f32 %v3487, %v3804
    %v4001 = vsub.f32 %v3488, %v3807
    %v4002 = vsub.f32 %v3489, %v3810
    %v4003 = vsub.f32 %v3490, %v3813
    %v4004 = vsub.f32 %v3491, %v3816
    %v4005 = vsub.f32 %v3492, %v3819
    %v4006 = vsub.f32 %v3493, %v3822
    %v4007 = vsub.f32 %v3494, %v3825
    %v4008 = vsub.f32 %v3495, %v3828
    %v4009 = vsub.f32 %v3496, %v3831
    %v4010 = vsub.f32 %v3497, %v3834
    %v4011 = vsub.f32 %v3498, %v3837
    %v4012 = vsub.f32 %v3499, %v3840
    %v4013 = vsub.f32 %v3500, %v3843
    %v4014 = vsub.f32 %v3501, %v3846
    %v4015 = vsub.f32 %v3502, %v3849
    %v4016 = vsub.f32 %v3503, %v3852
    %v4017 = vsub.f32 %v3504, %v3855
    %v4018 = vsub.f32 %v3505, %v3858
    %v4019 = vsub.f32 %v3506, %v3861
    %v4020 = vsub.f32 %v3507, %v3864
    %v4021 = vsub.f32 %v3508, %v3867
    %v4022 = vsub.f32 %v3509, %v3870
    %v4023 = vsub.f32 %v3510, %v3873
    %v4024 = vsub.f32 %v3511, %v3876
    %v4025 = vsub.f32 %v3512, %v3879
    %v4026 = vsub.f32 %v3513, %v3882
    %v4027 = vsub.f32 %v3514, %v3885
    %v4028 = vsub.f32 %v3515, %v3888
    %v4029 = vsub.f32 %v3516, %v3891
    %v4030 = vsub.f32 %v3517, %v3894
    %v4031 = vsub.f32 %v3518, %v3897
    %v4032 = vsub.f32 %v3519, %v3900
    %v4033 = vsub.f32 %v3520, %v3903
    %v4034 = vsub.f32 %v3521, %v3906
    %v4035 = vmul.f32 %v3907, 1.442695
    %v4036 = vpow.pop %v4035
    %v4037 = vmul.f32 %v3908, 1.442695
    %v4038 = vpow.pop %v4037
    %v4039 = vmul.f32 %v3909, 1.442695
    %v4040 = vpow.pop %v4039
    %v4041 = vmul.f32 %v3910, 1.442695
    %v4042 = vpow.pop %v4041
    %v4043 = vmul.f32 %v3911, 1.442695
    %v4044 = vpow.pop %v4043
    %v4045 = vmul.f32 %v3912, 1.442695
    %v4046 = vpow.pop %v4045
    %v4047 = vmul.f32 %v3913, 1.442695
    %v4048 = vpow.pop %v4047
    %v4049 = vmul.f32 %v3914, 1.442695
    %v4050 = vpow.pop %v4049
    %v4051 = vmul.f32 %v3915, 1.442695
    %v4052 = vpow.pop %v4051
    %v4053 = vmul.f32 %v3916, 1.442695
    %v4054 = vpow.pop %v4053
    %v4055 = vmul.f32 %v3917, 1.442695
    %v4056 = vpow.pop %v4055
    %v4057 = vmul.f32 %v3918, 1.442695
    %v4058 = vpow.pop %v4057
    %v4059 = vmul.f32 %v3919, 1.442695
    %v4060 = vpow.pop %v4059
    %v4061 = vmul.f32 %v3920, 1.442695
    %v4062 = vpow.pop %v4061
    %v4063 = vmul.f32 %v3921, 1.442695
    %v4064 = vpow.pop %v4063
    %v4065 = vmul.f32 %v3922, 1.442695
    %v4066 = vpow.pop %v4065
    %v4067 = vmul.f32 %v3923, 1.442695
    %v4068 = vpow.pop %v4067
    %v4069 = vmul.f32 %v3924, 1.442695
    %v4070 = vpow.pop %v4069
    %v4071 = vmul.f32 %v3925, 1.442695
    %v4072 = vpow.pop %v4071
    %v4073 = vmul.f32 %v3926, 1.442695
    %v4074 = vpow.pop %v4073
    %v4075 = vmul.f32 %v3927, 1.442695
    %v4076 = vpow.pop %v4075
    %v4077 = vmul.f32 %v3928, 1.442695
    %v4078 = vpow.pop %v4077
    %v4079 = vmul.f32 %v3929, 1.442695
    %v4080 = vpow.pop %v4079
    %v4081 = vmul.f32 %v3930, 1.442695
    %v4082 = vpow.pop %v4081
    %v4083 = vmul.f32 %v3931, 1.442695
    %v4084 = vpow.pop %v4083
    %v4085 = vmul.f32 %v3932, 1.442695
    %v4086 = vpow.pop %v4085
    %v4087 = vmul.f32 %v3933, 1.442695
    %v4088 = vpow.pop %v4087
    %v4089 = vmul.f32 %v3934, 1.442695
    %v4090 = vpow.pop %v4089
    %v4091 = vmul.f32 %v3935, 1.442695
    %v4092 = vpow.pop %v4091
    %v4093 = vmul.f32 %v3936, 1.442695
    %v4094 = vpow.pop %v4093
    %v4095 = vmul.f32 %v3937, 1.442695
    %v4096 = vpow.pop %v4095
    %v4097 = vmul.f32 %v3938, 1.442695
    %v4098 = vpow.pop %v4097
    %v4099 = vmul.f32 %v3939, 1.442695
    %v4100 = vpow.pop %v4099
    %v4101 = vmul.f32 %v3940, 1.442695
    %v4102 = vpow.pop %v4101
    %v4103 = vmul.f32 %v3941, 1.442695
    %v4104 = vpow.pop %v4103
    %v4105 = vmul.f32 %v3942, 1.442695
    %v4106 = vpow.pop %v4105
    %v4107 = vmul.f32 %v3943, 1.442695
    %v4108 = vpow.pop %v4107
    %v4109 = vmul.f32 %v3944, 1.442695
    %v4110 = vpow.pop %v4109
    %v4111 = vmul.f32 %v3945, 1.442695
    %v4112 = vpow.pop %v4111
    %v4113 = vmul.f32 %v3946, 1.442695
    %v4114 = vpow.pop %v4113
    %v4115 = vmul.f32 %v3947, 1.442695
    %v4116 = vpow.pop %v4115
    %v4117 = vmul.f32 %v3948, 1.442695
    %v4118 = vpow.pop %v4117
    %v4119 = vmul.f32 %v3949, 1.442695
    %v4120 = vpow.pop %v4119
    %v4121 = vmul.f32 %v3950, 1.442695
    %v4122 = vpow.pop %v4121
    %v4123 = vmul.f32 %v3951, 1.442695
    %v4124 = vpow.pop %v4123
    %v4125 = vmul.f32 %v3952, 1.442695
    %v4126 = vpow.pop %v4125
    %v4127 = vmul.f32 %v3953, 1.442695
    %v4128 = vpow.pop %v4127
    %v4129 = vmul.f32 %v3954, 1.442695
    %v4130 = vpow.pop %v4129
    %v4131 = vmul.f32 %v3955, 1.442695
    %v4132 = vpow.pop %v4131
    %v4133 = vmul.f32 %v3956, 1.442695
    %v4134 = vpow.pop %v4133
    %v4135 = vmul.f32 %v3957, 1.442695
    %v4136 = vpow.pop %v4135
    %v4137 = vmul.f32 %v3958, 1.442695
    %v4138 = vpow.pop %v4137
    %v4139 = vmul.f32 %v3959, 1.442695
    %v4140 = vpow.pop %v4139
    %v4141 = vmul.f32 %v3960, 1.442695
    %v4142 = vpow.pop %v4141
    %v4143 = vmul.f32 %v3961, 1.442695
    %v4144 = vpow.pop %v4143
    %v4145 = vmul.f32 %v3962, 1.442695
    %v4146 = vpow.pop %v4145
    %v4147 = vmul.f32 %v3963, 1.442695
    %v4148 = vpow.pop %v4147
    %v4149 = vmul.f32 %v3964, 1.442695
    %v4150 = vpow.pop %v4149
    %v4151 = vmul.f32 %v3965, 1.442695
    %v4152 = vpow.pop %v4151
    %v4153 = vmul.f32 %v3966, 1.442695
    %v4154 = vpow.pop %v4153
    %v4155 = vmul.f32 %v3967, 1.442695
    %v4156 = vpow.pop %v4155
    %v4157 = vmul.f32 %v3968, 1.442695
    %v4158 = vpow.pop %v4157
    %v4159 = vmul.f32 %v3969, 1.442695
    %v4160 = vpow.pop %v4159
    %v4161 = vmul.f32 %v3970, 1.442695
    %v4162 = vpow.pop %v4161
    %v4163 = vmul.f32 %v3971, 1.442695
    %v4164 = vpow.pop %v4163
    %v4165 = vmul.f32 %v3972, 1.442695
    %v4166 = vpow.pop %v4165
    %v4167 = vmul.f32 %v3973, 1.442695
    %v4168 = vpow.pop %v4167
    %v4169 = vmul.f32 %v3974, 1.442695
    %v4170 = vpow.pop %v4169
    %v4171 = vmul.f32 %v3975, 1.442695
    %v4172 = vpow.pop %v4171
    %v4173 = vmul.f32 %v3976, 1.442695
    %v4174 = vpow.pop %v4173
    %v4175 = vmul.f32 %v3977, 1.442695
    %v4176 = vpow.pop %v4175
    %v4177 = vmul.f32 %v3978, 1.442695
    %v4178 = vpow.pop %v4177
    %v4179 = vmul.f32 %v3979, 1.442695
    %v4180 = vpow.pop %v4179
    %v4181 = vmul.f32 %v3980, 1.442695
    %v4182 = vpow.pop %v4181
    %v4183 = vmul.f32 %v3981, 1.442695
    %v4184 = vpow.pop %v4183
    %v4185 = vmul.f32 %v3982, 1.442695
    %v4186 = vpow.pop %v4185
    %v4187 = vmul.f32 %v3983, 1.442695
    %v4188 = vpow.pop %v4187
    %v4189 = vmul.f32 %v3984, 1.442695
    %v4190 = vpow.pop %v4189
    %v4191 = vmul.f32 %v3985, 1.442695
    %v4192 = vpow.pop %v4191
    %v4193 = vmul.f32 %v3986, 1.442695
    %v4194 = vpow.pop %v4193
    %v4195 = vmul.f32 %v3987, 1.442695
    %v4196 = vpow.pop %v4195
    %v4197 = vmul.f32 %v3988, 1.442695
    %v4198 = vpow.pop %v4197
    %v4199 = vmul.f32 %v3989, 1.442695
    %v4200 = vpow.pop %v4199
    %v4201 = vmul.f32 %v3990, 1.442695
    %v4202 = vpow.pop %v4201
    %v4203 = vmul.f32 %v3991, 1.442695
    %v4204 = vpow.pop %v4203
    %v4205 = vmul.f32 %v3992, 1.442695
    %v4206 = vpow.pop %v4205
    %v4207 = vmul.f32 %v3993, 1.442695
    %v4208 = vpow.pop %v4207
    %v4209 = vmul.f32 %v3994, 1.442695
    %v4210 = vpow.pop %v4209
    %v4211 = vmul.f32 %v3995, 1.442695
    %v4212 = vpow.pop %v4211
    %v4213 = vmul.f32 %v3996, 1.442695
    %v4214 = vpow.pop %v4213
    %v4215 = vmul.f32 %v3997, 1.442695
    %v4216 = vpow.pop %v4215
    %v4217 = vmul.f32 %v3998, 1.442695
    %v4218 = vpow.pop %v4217
    %v4219 = vmul.f32 %v3999, 1.442695
    %v4220 = vpow.pop %v4219
    %v4221 = vmul.f32 %v4000, 1.442695
    %v4222 = vpow.pop %v4221
    %v4223 = vmul.f32 %v4001, 1.442695
    %v4224 = vpow.pop %v4223
    %v4225 = vmul.f32 %v4002, 1.442695
    %v4226 = vpow.pop %v4225
    %v4227 = vmul.f32 %v4003, 1.442695
    %v4228 = vpow.pop %v4227
    %v4229 = vmul.f32 %v4004, 1.442695
    %v4230 = vpow.pop %v4229
    %v4231 = vmul.f32 %v4005, 1.442695
    %v4232 = vpow.pop %v4231
    %v4233 = vmul.f32 %v4006, 1.442695
    %v4234 = vpow.pop %v4233
    %v4235 = vmul.f32 %v4007, 1.442695
    %v4236 = vpow.pop %v4235
    %v4237 = vmul.f32 %v4008, 1.442695
    %v4238 = vpow.pop %v4237
    %v4239 = vmul.f32 %v4009, 1.442695
    %v4240 = vpow.pop %v4239
    %v4241 = vmul.f32 %v4010, 1.442695
    %v4242 = vpow.pop %v4241
    %v4243 = vmul.f32 %v4011, 1.442695
    %v4244 = vpow.pop %v4243
    %v4245 = vmul.f32 %v4012, 1.442695
    %v4246 = vpow.pop %v4245
    %v4247 = vmul.f32 %v4013, 1.442695
    %v4248 = vpow.pop %v4247
    %v4249 = vmul.f32 %v4014, 1.442695
    %v4250 = vpow.pop %v4249
    %v4251 = vmul.f32 %v4015, 1.442695
    %v4252 = vpow.pop %v4251
    %v4253 = vmul.f32 %v4016, 1.442695
    %v4254 = vpow.pop %v4253
    %v4255 = vmul.f32 %v4017, 1.442695
    %v4256 = vpow.pop %v4255
    %v4257 = vmul.f32 %v4018, 1.442695
    %v4258 = vpow.pop %v4257
    %v4259 = vmul.f32 %v4019, 1.442695
    %v4260 = vpow.pop %v4259
    %v4261 = vmul.f32 %v4020, 1.442695
    %v4262 = vpow.pop %v4261
    %v4263 = vmul.f32 %v4021, 1.442695
    %v4264 = vpow.pop %v4263
    %v4265 = vmul.f32 %v4022, 1.442695
    %v4266 = vpow.pop %v4265
    %v4267 = vmul.f32 %v4023, 1.442695
    %v4268 = vpow.pop %v4267
    %v4269 = vmul.f32 %v4024, 1.442695
    %v4270 = vpow.pop %v4269
    %v4271 = vmul.f32 %v4025, 1.442695
    %v4272 = vpow.pop %v4271
    %v4273 = vmul.f32 %v4026, 1.442695
    %v4274 = vpow.pop %v4273
    %v4275 = vmul.f32 %v4027, 1.442695
    %v4276 = vpow.pop %v4275
    %v4277 = vmul.f32 %v4028, 1.442695
    %v4278 = vpow.pop %v4277
    %v4279 = vmul.f32 %v4029, 1.442695
    %v4280 = vpow.pop %v4279
    %v4281 = vmul.f32 %v4030, 1.442695
    %v4282 = vpow.pop %v4281
    %v4283 = vmul.f32 %v4031, 1.442695
    %v4284 = vpow.pop %v4283
    %v4285 = vmul.f32 %v4032, 1.442695
    %v4286 = vpow.pop %v4285
    %v4287 = vmul.f32 %v4033, 1.442695
    %v4288 = vpow.pop %v4287
    %v4289 = vmul.f32 %v4034, 1.442695
    %v4290 = vpow.pop %v4289
    %v4291 = vsel %vm3522, %v4036, 0.0
    %4292 = vadd.xlane.f32.xlu0 %v4291
    %v4293 = vpop.xlane.xlu0 %4292
    %v4294 = vsel %vm3522, %v4038, 0.0
    %4295 = vadd.xlane.f32.xlu0 %v4294
    %v4296 = vpop.xlane.xlu0 %4295
    %v4297 = vsel %vm3522, %v4040, 0.0
    %4298 = vadd.xlane.f32.xlu0 %v4297
    %v4299 = vpop.xlane.xlu0 %4298
    %v4300 = vsel %vm3522, %v4042, 0.0
    %4301 = vadd.xlane.f32.xlu0 %v4300
    %v4302 = vpop.xlane.xlu0 %4301
    %v4303 = vsel %vm3522, %v4044, 0.0
    %4304 = vadd.xlane.f32.xlu0 %v4303
    %v4305 = vpop.xlane.xlu0 %4304
    %v4306 = vsel %vm3522, %v4046, 0.0
    %4307 = vadd.xlane.f32.xlu0 %v4306
    %v4308 = vpop.xlane.xlu0 %4307
    %v4309 = vsel %vm3522, %v4048, 0.0
    %4310 = vadd.xlane.f32.xlu0 %v4309
    %v4311 = vpop.xlane.xlu0 %4310
    %v4312 = vsel %vm3522, %v4050, 0.0
    %4313 = vadd.xlane.f32.xlu0 %v4312
    %v4314 = vpop.xlane.xlu0 %4313
    %v4315 = vsel %vm3522, %v4052, 0.0
    %4316 = vadd.xlane.f32.xlu0 %v4315
    %v4317 = vpop.xlane.xlu0 %4316
    %v4318 = vsel %vm3522, %v4054, 0.0
    %4319 = vadd.xlane.f32.xlu0 %v4318
    %v4320 = vpop.xlane.xlu0 %4319
    %v4321 = vsel %vm3522, %v4056, 0.0
    %4322 = vadd.xlane.f32.xlu0 %v4321
    %v4323 = vpop.xlane.xlu0 %4322
    %v4324 = vsel %vm3522, %v4058, 0.0
    %4325 = vadd.xlane.f32.xlu0 %v4324
    %v4326 = vpop.xlane.xlu0 %4325
    %v4327 = vsel %vm3522, %v4060, 0.0
    %4328 = vadd.xlane.f32.xlu0 %v4327
    %v4329 = vpop.xlane.xlu0 %4328
    %v4330 = vsel %vm3522, %v4062, 0.0
    %4331 = vadd.xlane.f32.xlu0 %v4330
    %v4332 = vpop.xlane.xlu0 %4331
    %v4333 = vsel %vm3522, %v4064, 0.0
    %4334 = vadd.xlane.f32.xlu0 %v4333
    %v4335 = vpop.xlane.xlu0 %4334
    %v4336 = vsel %vm3522, %v4066, 0.0
    %4337 = vadd.xlane.f32.xlu0 %v4336
    %v4338 = vpop.xlane.xlu0 %4337
    %v4339 = vsel %vm3522, %v4068, 0.0
    %4340 = vadd.xlane.f32.xlu0 %v4339
    %v4341 = vpop.xlane.xlu0 %4340
    %v4342 = vsel %vm3522, %v4070, 0.0
    %4343 = vadd.xlane.f32.xlu0 %v4342
    %v4344 = vpop.xlane.xlu0 %4343
    %v4345 = vsel %vm3522, %v4072, 0.0
    %4346 = vadd.xlane.f32.xlu0 %v4345
    %v4347 = vpop.xlane.xlu0 %4346
    %v4348 = vsel %vm3522, %v4074, 0.0
    %4349 = vadd.xlane.f32.xlu0 %v4348
    %v4350 = vpop.xlane.xlu0 %4349
    %v4351 = vsel %vm3522, %v4076, 0.0
    %4352 = vadd.xlane.f32.xlu0 %v4351
    %v4353 = vpop.xlane.xlu0 %4352
    %v4354 = vsel %vm3522, %v4078, 0.0
    %4355 = vadd.xlane.f32.xlu0 %v4354
    %v4356 = vpop.xlane.xlu0 %4355
    %v4357 = vsel %vm3522, %v4080, 0.0
    %4358 = vadd.xlane.f32.xlu0 %v4357
    %v4359 = vpop.xlane.xlu0 %4358
    %v4360 = vsel %vm3522, %v4082, 0.0
    %4361 = vadd.xlane.f32.xlu0 %v4360
    %v4362 = vpop.xlane.xlu0 %4361
    %v4363 = vsel %vm3522, %v4084, 0.0
    %4364 = vadd.xlane.f32.xlu0 %v4363
    %v4365 = vpop.xlane.xlu0 %4364
    %v4366 = vsel %vm3522, %v4086, 0.0
    %4367 = vadd.xlane.f32.xlu0 %v4366
    %v4368 = vpop.xlane.xlu0 %4367
    %v4369 = vsel %vm3522, %v4088, 0.0
    %4370 = vadd.xlane.f32.xlu0 %v4369
    %v4371 = vpop.xlane.xlu0 %4370
    %v4372 = vsel %vm3522, %v4090, 0.0
    %4373 = vadd.xlane.f32.xlu0 %v4372
    %v4374 = vpop.xlane.xlu0 %4373
    %v4375 = vsel %vm3522, %v4092, 0.0
    %4376 = vadd.xlane.f32.xlu0 %v4375
    %v4377 = vpop.xlane.xlu0 %4376
    %v4378 = vsel %vm3522, %v4094, 0.0
    %4379 = vadd.xlane.f32.xlu0 %v4378
    %v4380 = vpop.xlane.xlu0 %4379
    %v4381 = vsel %vm3522, %v4096, 0.0
    %4382 = vadd.xlane.f32.xlu0 %v4381
    %v4383 = vpop.xlane.xlu0 %4382
    %v4384 = vsel %vm3522, %v4098, 0.0
    %4385 = vadd.xlane.f32.xlu0 %v4384
    %v4386 = vpop.xlane.xlu0 %4385
    %v4387 = vsel %vm3522, %v4100, 0.0
    %4388 = vadd.xlane.f32.xlu0 %v4387
    %v4389 = vpop.xlane.xlu0 %4388
    %v4390 = vsel %vm3522, %v4102, 0.0
    %4391 = vadd.xlane.f32.xlu0 %v4390
    %v4392 = vpop.xlane.xlu0 %4391
    %v4393 = vsel %vm3522, %v4104, 0.0
    %4394 = vadd.xlane.f32.xlu0 %v4393
    %v4395 = vpop.xlane.xlu0 %4394
    %v4396 = vsel %vm3522, %v4106, 0.0
    %4397 = vadd.xlane.f32.xlu0 %v4396
    %v4398 = vpop.xlane.xlu0 %4397
    %v4399 = vsel %vm3522, %v4108, 0.0
    %4400 = vadd.xlane.f32.xlu0 %v4399
    %v4401 = vpop.xlane.xlu0 %4400
    %v4402 = vsel %vm3522, %v4110, 0.0
    %4403 = vadd.xlane.f32.xlu0 %v4402
    %v4404 = vpop.xlane.xlu0 %4403
    %v4405 = vsel %vm3522, %v4112, 0.0
    %4406 = vadd.xlane.f32.xlu0 %v4405
    %v4407 = vpop.xlane.xlu0 %4406
    %v4408 = vsel %vm3522, %v4114, 0.0
    %4409 = vadd.xlane.f32.xlu0 %v4408
    %v4410 = vpop.xlane.xlu0 %4409
    %v4411 = vsel %vm3522, %v4116, 0.0
    %4412 = vadd.xlane.f32.xlu0 %v4411
    %v4413 = vpop.xlane.xlu0 %4412
    %v4414 = vsel %vm3522, %v4118, 0.0
    %4415 = vadd.xlane.f32.xlu0 %v4414
    %v4416 = vpop.xlane.xlu0 %4415
    %v4417 = vsel %vm3522, %v4120, 0.0
    %4418 = vadd.xlane.f32.xlu0 %v4417
    %v4419 = vpop.xlane.xlu0 %4418
    %v4420 = vsel %vm3522, %v4122, 0.0
    %4421 = vadd.xlane.f32.xlu0 %v4420
    %v4422 = vpop.xlane.xlu0 %4421
    %v4423 = vsel %vm3522, %v4124, 0.0
    %4424 = vadd.xlane.f32.xlu0 %v4423
    %v4425 = vpop.xlane.xlu0 %4424
    %v4426 = vsel %vm3522, %v4126, 0.0
    %4427 = vadd.xlane.f32.xlu0 %v4426
    %v4428 = vpop.xlane.xlu0 %4427
    %v4429 = vsel %vm3522, %v4128, 0.0
    %4430 = vadd.xlane.f32.xlu0 %v4429
    %v4431 = vpop.xlane.xlu0 %4430
    %v4432 = vsel %vm3522, %v4130, 0.0
    %4433 = vadd.xlane.f32.xlu0 %v4432
    %v4434 = vpop.xlane.xlu0 %4433
    %v4435 = vsel %vm3522, %v4132, 0.0
    %4436 = vadd.xlane.f32.xlu0 %v4435
    %v4437 = vpop.xlane.xlu0 %4436
    %v4438 = vsel %vm3522, %v4134, 0.0
    %4439 = vadd.xlane.f32.xlu0 %v4438
    %v4440 = vpop.xlane.xlu0 %4439
    %v4441 = vsel %vm3522, %v4136, 0.0
    %4442 = vadd.xlane.f32.xlu0 %v4441
    %v4443 = vpop.xlane.xlu0 %4442
    %v4444 = vsel %vm3522, %v4138, 0.0
    %4445 = vadd.xlane.f32.xlu0 %v4444
    %v4446 = vpop.xlane.xlu0 %4445
    %v4447 = vsel %vm3522, %v4140, 0.0
    %4448 = vadd.xlane.f32.xlu0 %v4447
    %v4449 = vpop.xlane.xlu0 %4448
    %v4450 = vsel %vm3522, %v4142, 0.0
    %4451 = vadd.xlane.f32.xlu0 %v4450
    %v4452 = vpop.xlane.xlu0 %4451
    %v4453 = vsel %vm3522, %v4144, 0.0
    %4454 = vadd.xlane.f32.xlu0 %v4453
    %v4455 = vpop.xlane.xlu0 %4454
    %v4456 = vsel %vm3522, %v4146, 0.0
    %4457 = vadd.xlane.f32.xlu0 %v4456
    %v4458 = vpop.xlane.xlu0 %4457
    %v4459 = vsel %vm3522, %v4148, 0.0
    %4460 = vadd.xlane.f32.xlu0 %v4459
    %v4461 = vpop.xlane.xlu0 %4460
    %v4462 = vsel %vm3522, %v4150, 0.0
    %4463 = vadd.xlane.f32.xlu0 %v4462
    %v4464 = vpop.xlane.xlu0 %4463
    %v4465 = vsel %vm3522, %v4152, 0.0
    %4466 = vadd.xlane.f32.xlu0 %v4465
    %v4467 = vpop.xlane.xlu0 %4466
    %v4468 = vsel %vm3522, %v4154, 0.0
    %4469 = vadd.xlane.f32.xlu0 %v4468
    %v4470 = vpop.xlane.xlu0 %4469
    %v4471 = vsel %vm3522, %v4156, 0.0
    %4472 = vadd.xlane.f32.xlu0 %v4471
    %v4473 = vpop.xlane.xlu0 %4472
    %v4474 = vsel %vm3522, %v4158, 0.0
    %4475 = vadd.xlane.f32.xlu0 %v4474
    %v4476 = vpop.xlane.xlu0 %4475
    %v4477 = vsel %vm3522, %v4160, 0.0
    %4478 = vadd.xlane.f32.xlu0 %v4477
    %v4479 = vpop.xlane.xlu0 %4478
    %v4480 = vsel %vm3522, %v4162, 0.0
    %4481 = vadd.xlane.f32.xlu0 %v4480
    %v4482 = vpop.xlane.xlu0 %4481
    %v4483 = vsel %vm3522, %v4164, 0.0
    %4484 = vadd.xlane.f32.xlu0 %v4483
    %v4485 = vpop.xlane.xlu0 %4484
    %v4486 = vsel %vm3522, %v4166, 0.0
    %4487 = vadd.xlane.f32.xlu0 %v4486
    %v4488 = vpop.xlane.xlu0 %4487
    %v4489 = vsel %vm3522, %v4168, 0.0
    %4490 = vadd.xlane.f32.xlu0 %v4489
    %v4491 = vpop.xlane.xlu0 %4490
    %v4492 = vsel %vm3522, %v4170, 0.0
    %4493 = vadd.xlane.f32.xlu0 %v4492
    %v4494 = vpop.xlane.xlu0 %4493
    %v4495 = vsel %vm3522, %v4172, 0.0
    %4496 = vadd.xlane.f32.xlu0 %v4495
    %v4497 = vpop.xlane.xlu0 %4496
    %v4498 = vsel %vm3522, %v4174, 0.0
    %4499 = vadd.xlane.f32.xlu0 %v4498
    %v4500 = vpop.xlane.xlu0 %4499
    %v4501 = vsel %vm3522, %v4176, 0.0
    %4502 = vadd.xlane.f32.xlu0 %v4501
    %v4503 = vpop.xlane.xlu0 %4502
    %v4504 = vsel %vm3522, %v4178, 0.0
    %4505 = vadd.xlane.f32.xlu0 %v4504
    %v4506 = vpop.xlane.xlu0 %4505
    %v4507 = vsel %vm3522, %v4180, 0.0
    %4508 = vadd.xlane.f32.xlu0 %v4507
    %v4509 = vpop.xlane.xlu0 %4508
    %v4510 = vsel %vm3522, %v4182, 0.0
    %4511 = vadd.xlane.f32.xlu0 %v4510
    %v4512 = vpop.xlane.xlu0 %4511
    %v4513 = vsel %vm3522, %v4184, 0.0
    %4514 = vadd.xlane.f32.xlu0 %v4513
    %v4515 = vpop.xlane.xlu0 %4514
    %v4516 = vsel %vm3522, %v4186, 0.0
    %4517 = vadd.xlane.f32.xlu0 %v4516
    %v4518 = vpop.xlane.xlu0 %4517
    %v4519 = vsel %vm3522, %v4188, 0.0
    %4520 = vadd.xlane.f32.xlu0 %v4519
    %v4521 = vpop.xlane.xlu0 %4520
    %v4522 = vsel %vm3522, %v4190, 0.0
    %4523 = vadd.xlane.f32.xlu0 %v4522
    %v4524 = vpop.xlane.xlu0 %4523
    %v4525 = vsel %vm3522, %v4192, 0.0
    %4526 = vadd.xlane.f32.xlu0 %v4525
    %v4527 = vpop.xlane.xlu0 %4526
    %v4528 = vsel %vm3522, %v4194, 0.0
    %4529 = vadd.xlane.f32.xlu0 %v4528
    %v4530 = vpop.xlane.xlu0 %4529
    %v4531 = vsel %vm3522, %v4196, 0.0
    %4532 = vadd.xlane.f32.xlu0 %v4531
    %v4533 = vpop.xlane.xlu0 %4532
    %v4534 = vsel %vm3522, %v4198, 0.0
    %4535 = vadd.xlane.f32.xlu0 %v4534
    %v4536 = vpop.xlane.xlu0 %4535
    %v4537 = vsel %vm3522, %v4200, 0.0
    %4538 = vadd.xlane.f32.xlu0 %v4537
    %v4539 = vpop.xlane.xlu0 %4538
    %v4540 = vsel %vm3522, %v4202, 0.0
    %4541 = vadd.xlane.f32.xlu0 %v4540
    %v4542 = vpop.xlane.xlu0 %4541
    %v4543 = vsel %vm3522, %v4204, 0.0
    %4544 = vadd.xlane.f32.xlu0 %v4543
    %v4545 = vpop.xlane.xlu0 %4544
    %v4546 = vsel %vm3522, %v4206, 0.0
    %4547 = vadd.xlane.f32.xlu0 %v4546
    %v4548 = vpop.xlane.xlu0 %4547
    %v4549 = vsel %vm3522, %v4208, 0.0
    %4550 = vadd.xlane.f32.xlu0 %v4549
    %v4551 = vpop.xlane.xlu0 %4550
    %v4552 = vsel %vm3522, %v4210, 0.0
    %4553 = vadd.xlane.f32.xlu0 %v4552
    %v4554 = vpop.xlane.xlu0 %4553
    %v4555 = vsel %vm3522, %v4212, 0.0
    %4556 = vadd.xlane.f32.xlu0 %v4555
    %v4557 = vpop.xlane.xlu0 %4556
    %v4558 = vsel %vm3522, %v4214, 0.0
    %4559 = vadd.xlane.f32.xlu0 %v4558
    %v4560 = vpop.xlane.xlu0 %4559
    %v4561 = vsel %vm3522, %v4216, 0.0
    %4562 = vadd.xlane.f32.xlu0 %v4561
    %v4563 = vpop.xlane.xlu0 %4562
    %v4564 = vsel %vm3522, %v4218, 0.0
    %4565 = vadd.xlane.f32.xlu0 %v4564
    %v4566 = vpop.xlane.xlu0 %4565
    %v4567 = vsel %vm3522, %v4220, 0.0
    %4568 = vadd.xlane.f32.xlu0 %v4567
    %v4569 = vpop.xlane.xlu0 %4568
    %v4570 = vsel %vm3522, %v4222, 0.0
    %4571 = vadd.xlane.f32.xlu0 %v4570
    %v4572 = vpop.xlane.xlu0 %4571
    %v4573 = vsel %vm3522, %v4224, 0.0
    %4574 = vadd.xlane.f32.xlu0 %v4573
    %v4575 = vpop.xlane.xlu0 %4574
    %v4576 = vsel %vm3522, %v4226, 0.0
    %4577 = vadd.xlane.f32.xlu0 %v4576
    %v4578 = vpop.xlane.xlu0 %4577
    %v4579 = vsel %vm3522, %v4228, 0.0
    %4580 = vadd.xlane.f32.xlu0 %v4579
    %v4581 = vpop.xlane.xlu0 %4580
    %v4582 = vsel %vm3522, %v4230, 0.0
    %4583 = vadd.xlane.f32.xlu0 %v4582
    %v4584 = vpop.xlane.xlu0 %4583
    %v4585 = vsel %vm3522, %v4232, 0.0
    %4586 = vadd.xlane.f32.xlu0 %v4585
    %v4587 = vpop.xlane.xlu0 %4586
    %v4588 = vsel %vm3522, %v4234, 0.0
    %4589 = vadd.xlane.f32.xlu0 %v4588
    %v4590 = vpop.xlane.xlu0 %4589
    %v4591 = vsel %vm3522, %v4236, 0.0
    %4592 = vadd.xlane.f32.xlu0 %v4591
    %v4593 = vpop.xlane.xlu0 %4592
    %v4594 = vsel %vm3522, %v4238, 0.0
    %4595 = vadd.xlane.f32.xlu0 %v4594
    %v4596 = vpop.xlane.xlu0 %4595
    %v4597 = vsel %vm3522, %v4240, 0.0
    %4598 = vadd.xlane.f32.xlu0 %v4597
    %v4599 = vpop.xlane.xlu0 %4598
    %v4600 = vsel %vm3522, %v4242, 0.0
    %4601 = vadd.xlane.f32.xlu0 %v4600
    %v4602 = vpop.xlane.xlu0 %4601
    %v4603 = vsel %vm3522, %v4244, 0.0
    %4604 = vadd.xlane.f32.xlu0 %v4603
    %v4605 = vpop.xlane.xlu0 %4604
    %v4606 = vsel %vm3522, %v4246, 0.0
    %4607 = vadd.xlane.f32.xlu0 %v4606
    %v4608 = vpop.xlane.xlu0 %4607
    %v4609 = vsel %vm3522, %v4248, 0.0
    %4610 = vadd.xlane.f32.xlu0 %v4609
    %v4611 = vpop.xlane.xlu0 %4610
    %v4612 = vsel %vm3522, %v4250, 0.0
    %4613 = vadd.xlane.f32.xlu0 %v4612
    %v4614 = vpop.xlane.xlu0 %4613
    %v4615 = vsel %vm3522, %v4252, 0.0
    %4616 = vadd.xlane.f32.xlu0 %v4615
    %v4617 = vpop.xlane.xlu0 %4616
    %v4618 = vsel %vm3522, %v4254, 0.0
    %4619 = vadd.xlane.f32.xlu0 %v4618
    %v4620 = vpop.xlane.xlu0 %4619
    %v4621 = vsel %vm3522, %v4256, 0.0
    %4622 = vadd.xlane.f32.xlu0 %v4621
    %v4623 = vpop.xlane.xlu0 %4622
    %v4624 = vsel %vm3522, %v4258, 0.0
    %4625 = vadd.xlane.f32.xlu0 %v4624
    %v4626 = vpop.xlane.xlu0 %4625
    %v4627 = vsel %vm3522, %v4260, 0.0
    %4628 = vadd.xlane.f32.xlu0 %v4627
    %v4629 = vpop.xlane.xlu0 %4628
    %v4630 = vsel %vm3522, %v4262, 0.0
    %4631 = vadd.xlane.f32.xlu0 %v4630
    %v4632 = vpop.xlane.xlu0 %4631
    %v4633 = vsel %vm3522, %v4264, 0.0
    %4634 = vadd.xlane.f32.xlu0 %v4633
    %v4635 = vpop.xlane.xlu0 %4634
    %v4636 = vsel %vm3522, %v4266, 0.0
    %4637 = vadd.xlane.f32.xlu0 %v4636
    %v4638 = vpop.xlane.xlu0 %4637
    %v4639 = vsel %vm3522, %v4268, 0.0
    %4640 = vadd.xlane.f32.xlu0 %v4639
    %v4641 = vpop.xlane.xlu0 %4640
    %v4642 = vsel %vm3522, %v4270, 0.0
    %4643 = vadd.xlane.f32.xlu0 %v4642
    %v4644 = vpop.xlane.xlu0 %4643
    %v4645 = vsel %vm3522, %v4272, 0.0
    %4646 = vadd.xlane.f32.xlu0 %v4645
    %v4647 = vpop.xlane.xlu0 %4646
    %v4648 = vsel %vm3522, %v4274, 0.0
    %4649 = vadd.xlane.f32.xlu0 %v4648
    %v4650 = vpop.xlane.xlu0 %4649
    %v4651 = vsel %vm3522, %v4276, 0.0
    %4652 = vadd.xlane.f32.xlu0 %v4651
    %v4653 = vpop.xlane.xlu0 %4652
    %v4654 = vsel %vm3522, %v4278, 0.0
    %4655 = vadd.xlane.f32.xlu0 %v4654
    %v4656 = vpop.xlane.xlu0 %4655
    %v4657 = vsel %vm3522, %v4280, 0.0
    %4658 = vadd.xlane.f32.xlu0 %v4657
    %v4659 = vpop.xlane.xlu0 %4658
    %v4660 = vsel %vm3522, %v4282, 0.0
    %4661 = vadd.xlane.f32.xlu0 %v4660
    %v4662 = vpop.xlane.xlu0 %4661
    %v4663 = vsel %vm3522, %v4284, 0.0
    %4664 = vadd.xlane.f32.xlu0 %v4663
    %v4665 = vpop.xlane.xlu0 %4664
    %v4666 = vsel %vm3522, %v4286, 0.0
    %4667 = vadd.xlane.f32.xlu0 %v4666
    %v4668 = vpop.xlane.xlu0 %4667
    %v4669 = vsel %vm3522, %v4288, 0.0
    %4670 = vadd.xlane.f32.xlu0 %v4669
    %v4671 = vpop.xlane.xlu0 %4670
    %v4672 = vsel %vm3522, %v4290, 0.0
    %4673 = vadd.xlane.f32.xlu0 %v4672
    %v4674 = vpop.xlane.xlu0 %4673
    %v4675 = vrcp.pop %v4293
    %v4676 = vrcp.pop %v4296
    %v4677 = vrcp.pop %v4299
    %v4678 = vrcp.pop %v4302
    %v4679 = vrcp.pop %v4305
    %v4680 = vrcp.pop %v4308
    %v4681 = vrcp.pop %v4311
    %v4682 = vrcp.pop %v4314
    %v4683 = vrcp.pop %v4317
    %v4684 = vrcp.pop %v4320
    %v4685 = vrcp.pop %v4323
    %v4686 = vrcp.pop %v4326
    %v4687 = vrcp.pop %v4329
    %v4688 = vrcp.pop %v4332
    %v4689 = vrcp.pop %v4335
    %v4690 = vrcp.pop %v4338
    %v4691 = vrcp.pop %v4341
    %v4692 = vrcp.pop %v4344
    %v4693 = vrcp.pop %v4347
    %v4694 = vrcp.pop %v4350
    %v4695 = vrcp.pop %v4353
    %v4696 = vrcp.pop %v4356
    %v4697 = vrcp.pop %v4359
    %v4698 = vrcp.pop %v4362
    %v4699 = vrcp.pop %v4365
    %v4700 = vrcp.pop %v4368
    %v4701 = vrcp.pop %v4371
    %v4702 = vrcp.pop %v4374
    %v4703 = vrcp.pop %v4377
    %v4704 = vrcp.pop %v4380
    %v4705 = vrcp.pop %v4383
    %v4706 = vrcp.pop %v4386
    %v4707 = vrcp.pop %v4389
    %v4708 = vrcp.pop %v4392
    %v4709 = vrcp.pop %v4395
    %v4710 = vrcp.pop %v4398
    %v4711 = vrcp.pop %v4401
    %v4712 = vrcp.pop %v4404
    %v4713 = vrcp.pop %v4407
    %v4714 = vrcp.pop %v4410
    %v4715 = vrcp.pop %v4413
    %v4716 = vrcp.pop %v4416
    %v4717 = vrcp.pop %v4419
    %v4718 = vrcp.pop %v4422
    %v4719 = vrcp.pop %v4425
    %v4720 = vrcp.pop %v4428
    %v4721 = vrcp.pop %v4431
    %v4722 = vrcp.pop %v4434
    %v4723 = vrcp.pop %v4437
    %v4724 = vrcp.pop %v4440
    %v4725 = vrcp.pop %v4443
    %v4726 = vrcp.pop %v4446
    %v4727 = vrcp.pop %v4449
    %v4728 = vrcp.pop %v4452
    %v4729 = vrcp.pop %v4455
    %v4730 = vrcp.pop %v4458
    %v4731 = vrcp.pop %v4461
    %v4732 = vrcp.pop %v4464
    %v4733 = vrcp.pop %v4467
    %v4734 = vrcp.pop %v4470
    %v4735 = vrcp.pop %v4473
    %v4736 = vrcp.pop %v4476
    %v4737 = vrcp.pop %v4479
    %v4738 = vrcp.pop %v4482
    %v4739 = vrcp.pop %v4485
    %v4740 = vrcp.pop %v4488
    %v4741 = vrcp.pop %v4491
    %v4742 = vrcp.pop %v4494
    %v4743 = vrcp.pop %v4497
    %v4744 = vrcp.pop %v4500
    %v4745 = vrcp.pop %v4503
    %v4746 = vrcp.pop %v4506
    %v4747 = vrcp.pop %v4509
    %v4748 = vrcp.pop %v4512
    %v4749 = vrcp.pop %v4515
    %v4750 = vrcp.pop %v4518
    %v4751 = vrcp.pop %v4521
    %v4752 = vrcp.pop %v4524
    %v4753 = vrcp.pop %v4527
    %v4754 = vrcp.pop %v4530
    %v4755 = vrcp.pop %v4533
    %v4756 = vrcp.pop %v4536
    %v4757 = vrcp.pop %v4539
    %v4758 = vrcp.pop %v4542
    %v4759 = vrcp.pop %v4545
    %v4760 = vrcp.pop %v4548
    %v4761 = vrcp.pop %v4551
    %v4762 = vrcp.pop %v4554
    %v4763 = vrcp.pop %v4557
    %v4764 = vrcp.pop %v4560
    %v4765 = vrcp.pop %v4563
    %v4766 = vrcp.pop %v4566
    %v4767 = vrcp.pop %v4569
    %v4768 = vrcp.pop %v4572
    %v4769 = vrcp.pop %v4575
    %v4770 = vrcp.pop %v4578
    %v4771 = vrcp.pop %v4581
    %v4772 = vrcp.pop %v4584
    %v4773 = vrcp.pop %v4587
    %v4774 = vrcp.pop %v4590
    %v4775 = vrcp.pop %v4593
    %v4776 = vrcp.pop %v4596
    %v4777 = vrcp.pop %v4599
    %v4778 = vrcp.pop %v4602
    %v4779 = vrcp.pop %v4605
    %v4780 = vrcp.pop %v4608
    %v4781 = vrcp.pop %v4611
    %v4782 = vrcp.pop %v4614
    %v4783 = vrcp.pop %v4617
    %v4784 = vrcp.pop %v4620
    %v4785 = vrcp.pop %v4623
    %v4786 = vrcp.pop %v4626
    %v4787 = vrcp.pop %v4629
    %v4788 = vrcp.pop %v4632
    %v4789 = vrcp.pop %v4635
    %v4790 = vrcp.pop %v4638
    %v4791 = vrcp.pop %v4641
    %v4792 = vrcp.pop %v4644
    %v4793 = vrcp.pop %v4647
    %v4794 = vrcp.pop %v4650
    %v4795 = vrcp.pop %v4653
    %v4796 = vrcp.pop %v4656
    %v4797 = vrcp.pop %v4659
    %v4798 = vrcp.pop %v4662
    %v4799 = vrcp.pop %v4665
    %v4800 = vrcp.pop %v4668
    %v4801 = vrcp.pop %v4671
    %v4802 = vrcp.pop %v4674
    %v4803 = vmul.f32 %v4036, %v4675
    %v4804 = vmul.f32 %v4038, %v4676
    %v4805 = vmul.f32 %v4040, %v4677
    %v4806 = vmul.f32 %v4042, %v4678
    %v4807 = vmul.f32 %v4044, %v4679
    %v4808 = vmul.f32 %v4046, %v4680
    %v4809 = vmul.f32 %v4048, %v4681
    %v4810 = vmul.f32 %v4050, %v4682
    %v4811 = vmul.f32 %v4052, %v4683
    %v4812 = vmul.f32 %v4054, %v4684
    %v4813 = vmul.f32 %v4056, %v4685
    %v4814 = vmul.f32 %v4058, %v4686
    %v4815 = vmul.f32 %v4060, %v4687
    %v4816 = vmul.f32 %v4062, %v4688
    %v4817 = vmul.f32 %v4064, %v4689
    %v4818 = vmul.f32 %v4066, %v4690
    %v4819 = vmul.f32 %v4068, %v4691
    %v4820 = vmul.f32 %v4070, %v4692
    %v4821 = vmul.f32 %v4072, %v4693
    %v4822 = vmul.f32 %v4074, %v4694
    %v4823 = vmul.f32 %v4076, %v4695
    %v4824 = vmul.f32 %v4078, %v4696
    %v4825 = vmul.f32 %v4080, %v4697
    %v4826 = vmul.f32 %v4082, %v4698
    %v4827 = vmul.f32 %v4084, %v4699
    %v4828 = vmul.f32 %v4086, %v4700
    %v4829 = vmul.f32 %v4088, %v4701
    %v4830 = vmul.f32 %v4090, %v4702
    %v4831 = vmul.f32 %v4092, %v4703
    %v4832 = vmul.f32 %v4094, %v4704
    %v4833 = vmul.f32 %v4096, %v4705
    %v4834 = vmul.f32 %v4098, %v4706
    %v4835 = vmul.f32 %v4100, %v4707
    %v4836 = vmul.f32 %v4102, %v4708
    %v4837 = vmul.f32 %v4104, %v4709
    %v4838 = vmul.f32 %v4106, %v4710
    %v4839 = vmul.f32 %v4108, %v4711
    %v4840 = vmul.f32 %v4110, %v4712
    %v4841 = vmul.f32 %v4112, %v4713
    %v4842 = vmul.f32 %v4114, %v4714
    %v4843 = vmul.f32 %v4116, %v4715
    %v4844 = vmul.f32 %v4118, %v4716
    %v4845 = vmul.f32 %v4120, %v4717
    %v4846 = vmul.f32 %v4122, %v4718
    %v4847 = vmul.f32 %v4124, %v4719
    %v4848 = vmul.f32 %v4126, %v4720
    %v4849 = vmul.f32 %v4128, %v4721
    %v4850 = vmul.f32 %v4130, %v4722
    %v4851 = vmul.f32 %v4132, %v4723
    %v4852 = vmul.f32 %v4134, %v4724
    %v4853 = vmul.f32 %v4136, %v4725
    %v4854 = vmul.f32 %v4138, %v4726
    %v4855 = vmul.f32 %v4140, %v4727
    %v4856 = vmul.f32 %v4142, %v4728
    %v4857 = vmul.f32 %v4144, %v4729
    %v4858 = vmul.f32 %v4146, %v4730
    %v4859 = vmul.f32 %v4148, %v4731
    %v4860 = vmul.f32 %v4150, %v4732
    %v4861 = vmul.f32 %v4152, %v4733
    %v4862 = vmul.f32 %v4154, %v4734
    %v4863 = vmul.f32 %v4156, %v4735
    %v4864 = vmul.f32 %v4158, %v4736
    %v4865 = vmul.f32 %v4160, %v4737
    %v4866 = vmul.f32 %v4162, %v4738
    %v4867 = vmul.f32 %v4164, %v4739
    %v4868 = vmul.f32 %v4166, %v4740
    %v4869 = vmul.f32 %v4168, %v4741
    %v4870 = vmul.f32 %v4170, %v4742
    %v4871 = vmul.f32 %v4172, %v4743
    %v4872 = vmul.f32 %v4174, %v4744
    %v4873 = vmul.f32 %v4176, %v4745
    %v4874 = vmul.f32 %v4178, %v4746
    %v4875 = vmul.f32 %v4180, %v4747
    %v4876 = vmul.f32 %v4182, %v4748
    %v4877 = vmul.f32 %v4184, %v4749
    %v4878 = vmul.f32 %v4186, %v4750
    %v4879 = vmul.f32 %v4188, %v4751
    %v4880 = vmul.f32 %v4190, %v4752
    %v4881 = vmul.f32 %v4192, %v4753
    %v4882 = vmul.f32 %v4194, %v4754
    %v4883 = vmul.f32 %v4196, %v4755
    %v4884 = vmul.f32 %v4198, %v4756
    %v4885 = vmul.f32 %v4200, %v4757
    %v4886 = vmul.f32 %v4202, %v4758
    %v4887 = vmul.f32 %v4204, %v4759
    %v4888 = vmul.f32 %v4206, %v4760
    %v4889 = vmul.f32 %v4208, %v4761
    %v4890 = vmul.f32 %v4210, %v4762
    %v4891 = vmul.f32 %v4212, %v4763
    %v4892 = vmul.f32 %v4214, %v4764
    %v4893 = vmul.f32 %v4216, %v4765
    %v4894 = vmul.f32 %v4218, %v4766
    %v4895 = vmul.f32 %v4220, %v4767
    %v4896 = vmul.f32 %v4222, %v4768
    %v4897 = vmul.f32 %v4224, %v4769
    %v4898 = vmul.f32 %v4226, %v4770
    %v4899 = vmul.f32 %v4228, %v4771
    %v4900 = vmul.f32 %v4230, %v4772
    %v4901 = vmul.f32 %v4232, %v4773
    %v4902 = vmul.f32 %v4234, %v4774
    %v4903 = vmul.f32 %v4236, %v4775
    %v4904 = vmul.f32 %v4238, %v4776
    %v4905 = vmul.f32 %v4240, %v4777
    %v4906 = vmul.f32 %v4242, %v4778
    %v4907 = vmul.f32 %v4244, %v4779
    %v4908 = vmul.f32 %v4246, %v4780
    %v4909 = vmul.f32 %v4248, %v4781
    %v4910 = vmul.f32 %v4250, %v4782
    %v4911 = vmul.f32 %v4252, %v4783
    %v4912 = vmul.f32 %v4254, %v4784
    %v4913 = vmul.f32 %v4256, %v4785
    %v4914 = vmul.f32 %v4258, %v4786
    %v4915 = vmul.f32 %v4260, %v4787
    %v4916 = vmul.f32 %v4262, %v4788
    %v4917 = vmul.f32 %v4264, %v4789
    %v4918 = vmul.f32 %v4266, %v4790
    %v4919 = vmul.f32 %v4268, %v4791
    %v4920 = vmul.f32 %v4270, %v4792
    %v4921 = vmul.f32 %v4272, %v4793
    %v4922 = vmul.f32 %v4274, %v4794
    %v4923 = vmul.f32 %v4276, %v4795
    %v4924 = vmul.f32 %v4278, %v4796
    %v4925 = vmul.f32 %v4280, %v4797
    %v4926 = vmul.f32 %v4282, %v4798
    %v4927 = vmul.f32 %v4284, %v4799
    %v4928 = vmul.f32 %v4286, %v4800
    %v4929 = vmul.f32 %v4288, %v4801
    %v4930 = vmul.f32 %v4290, %v4802
    %v4931 = vpack.c.bf16 %v4804, %v4803
    %v4932 = vpack.c.bf16 %v4806, %v4805
    %v4933 = vpack.c.bf16 %v4808, %v4807
    %v4934 = vpack.c.bf16 %v4810, %v4809
    %v4935 = vpack.c.bf16 %v4812, %v4811
    %v4936 = vpack.c.bf16 %v4814, %v4813
    %v4937 = vpack.c.bf16 %v4816, %v4815
    %v4938 = vpack.c.bf16 %v4818, %v4817
    %v4939 = vpack.c.bf16 %v4820, %v4819
    %v4940 = vpack.c.bf16 %v4822, %v4821
    %v4941 = vpack.c.bf16 %v4824, %v4823
    %v4942 = vpack.c.bf16 %v4826, %v4825
    %v4943 = vpack.c.bf16 %v4828, %v4827
    %v4944 = vpack.c.bf16 %v4830, %v4829
    %v4945 = vpack.c.bf16 %v4832, %v4831
    %v4946 = vpack.c.bf16 %v4834, %v4833
    %v4947 = vpack.c.bf16 %v4836, %v4835
    %v4948 = vpack.c.bf16 %v4838, %v4837
    %v4949 = vpack.c.bf16 %v4840, %v4839
    %v4950 = vpack.c.bf16 %v4842, %v4841
    %v4951 = vpack.c.bf16 %v4844, %v4843
    %v4952 = vpack.c.bf16 %v4846, %v4845
    %v4953 = vpack.c.bf16 %v4848, %v4847
    %v4954 = vpack.c.bf16 %v4850, %v4849
    %v4955 = vpack.c.bf16 %v4852, %v4851
    %v4956 = vpack.c.bf16 %v4854, %v4853
    %v4957 = vpack.c.bf16 %v4856, %v4855
    %v4958 = vpack.c.bf16 %v4858, %v4857
    %v4959 = vpack.c.bf16 %v4860, %v4859
    %v4960 = vpack.c.bf16 %v4862, %v4861
    %v4961 = vpack.c.bf16 %v4864, %v4863
    %v4962 = vpack.c.bf16 %v4866, %v4865
    %v4963 = vpack.c.bf16 %v4868, %v4867
    %v4964 = vpack.c.bf16 %v4870, %v4869
    %v4965 = vpack.c.bf16 %v4872, %v4871
    %v4966 = vpack.c.bf16 %v4874, %v4873
    %v4967 = vpack.c.bf16 %v4876, %v4875
    %v4968 = vpack.c.bf16 %v4878, %v4877
    %v4969 = vpack.c.bf16 %v4880, %v4879
    %v4970 = vpack.c.bf16 %v4882, %v4881
    %v4971 = vpack.c.bf16 %v4884, %v4883
    %v4972 = vpack.c.bf16 %v4886, %v4885
    %v4973 = vpack.c.bf16 %v4888, %v4887
    %v4974 = vpack.c.bf16 %v4890, %v4889
    %v4975 = vpack.c.bf16 %v4892, %v4891
    %v4976 = vpack.c.bf16 %v4894, %v4893
    %v4977 = vpack.c.bf16 %v4896, %v4895
    %v4978 = vpack.c.bf16 %v4898, %v4897
    %v4979 = vpack.c.bf16 %v4900, %v4899
    %v4980 = vpack.c.bf16 %v4902, %v4901
    %v4981 = vpack.c.bf16 %v4904, %v4903
    %v4982 = vpack.c.bf16 %v4906, %v4905
    %v4983 = vpack.c.bf16 %v4908, %v4907
    %v4984 = vpack.c.bf16 %v4910, %v4909
    %v4985 = vpack.c.bf16 %v4912, %v4911
    %v4986 = vpack.c.bf16 %v4914, %v4913
    %v4987 = vpack.c.bf16 %v4916, %v4915
    %v4988 = vpack.c.bf16 %v4918, %v4917
    %v4989 = vpack.c.bf16 %v4920, %v4919
    %v4990 = vpack.c.bf16 %v4922, %v4921
    %v4991 = vpack.c.bf16 %v4924, %v4923
    %v4992 = vpack.c.bf16 %v4926, %v4925
    %v4993 = vpack.c.bf16 %v4928, %v4927
    %v4994 = vpack.c.bf16 %v4930, %v4929
    %v4996 = vsel %vm3522, %v4931, 0
    %v4999 = vsel %vm3522, %v4932, 0
    %5001 = vmatprep.subr.bf16.mxu0 0
    %5002 = vmatpush1.bf16.msra.mxu0 0
    %5003 = vmatprep.subr.bf16.mxu0 0
    %5004 = vmatpush1.bf16.msra.mxu0 0
    %5005 = vmatprep.subr.bf16.mxu0 0
    %5006 = vmatpush1.bf16.msra.mxu0 0
    %5007 = vmatprep.subr.bf16.mxu0 0
    %5008 = vmatpush1.bf16.msra.mxu0 0
    %5009 = vmatprep.subr.bf16.mxu0 0
    %5010 = vmatpush1.bf16.msra.mxu0 0
    %5011 = vmatprep.subr.bf16.mxu0 0
    %5012 = vmatpush1.bf16.msra.mxu0 0
    %5013 = vmatprep.subr.bf16.mxu0 0
    %5014 = vmatpush1.bf16.msra.mxu0 %v1167
    %5015 = vmatprep.subr.bf16.mxu0 0
    %5016 = vmatpush1.bf16.msra.mxu0 %v1166
    %5017 = vmatprep.subr.bf16.mxu0 0
    %5018 = vmatpush2.bf16.msra.mxu0 0
    %5019 = vmatprep.subr.bf16.mxu0 0
    %5020 = vmatpush2.bf16.msra.mxu0 0
    %5021 = vmatprep.subr.bf16.mxu0 0
    %5022 = vmatpush2.bf16.msra.mxu0 0
    %5023 = vmatprep.subr.bf16.mxu0 0
    %5024 = vmatpush2.bf16.msra.mxu0 0
    %5025 = vmatprep.subr.bf16.mxu0 0
    %5026 = vmatpush2.bf16.msra.mxu0 0
    %5027 = vmatprep.subr.bf16.mxu0 0
    %5028 = vmatpush2.bf16.msra.mxu0 0
    %5029 = vmatprep.subr.bf16.mxu0 0
    %5030 = vmatpush2.bf16.msra.mxu0 0
    %5031 = vmatprep.subr.bf16.mxu0 0
    %5032 = vmatpush2.bf16.msra.mxu0 0
    %5033 = vmatprep.mubr.bf16.mxu0 0
    %5034 = vmatmul.mubr.bf16.gmra.mxu0 %v4996
    %v5035 = vpop.f32.mrf.mxu0
    %v5036 = vadd.f32 0.0, %v5035
    %v5037 = vpop.f32.mrf.mxu0
    %v5038 = vpop.f32.mrf.mxu0
    %v5039 = vadd.f32 0.0, %v5038
    %v5040 = vpop.f32.mrf.mxu0
    %5041 = vmatprep.mubr.bf16.mxu0 0
    %5042 = vmatmul.mubr.bf16.gmra.mxu0 %v4999
    %v5043 = vpop.f32.mrf.mxu0
    %v5044 = vadd.f32 0.0, %v5043
    %v5045 = vpop.f32.mrf.mxu0
    %v5046 = vpop.f32.mrf.mxu0
    %v5047 = vadd.f32 0.0, %v5046
    %v5048 = vpop.f32.mrf.mxu0
    %5049 = vdwg.mxu0
    %v5051 = vsel %vm3522, %v4933, 0
    %v5054 = vsel %vm3522, %v4934, 0
    %5056 = vmatprep.subr.bf16.mxu0 0
    %5057 = vmatpush1.bf16.msra.mxu0 0
    %5058 = vmatprep.subr.bf16.mxu0 0
    %5059 = vmatpush1.bf16.msra.mxu0 0
    %5060 = vmatprep.subr.bf16.mxu0 0
    %5061 = vmatpush1.bf16.msra.mxu0 0
    %5062 = vmatprep.subr.bf16.mxu0 0
    %5063 = vmatpush1.bf16.msra.mxu0 0
    %5064 = vmatprep.subr.bf16.mxu0 0
    %5065 = vmatpush1.bf16.msra.mxu0 0
    %5066 = vmatprep.subr.bf16.mxu0 0
    %5067 = vmatpush1.bf16.msra.mxu0 0
    %5068 = vmatprep.subr.bf16.mxu0 0
    %5069 = vmatpush1.bf16.msra.mxu0 %v1169
    %5070 = vmatprep.subr.bf16.mxu0 0
    %5071 = vmatpush1.bf16.msra.mxu0 %v1168
    %5072 = vmatprep.subr.bf16.mxu0 0
    %5073 = vmatpush2.bf16.msra.mxu0 0
    %5074 = vmatprep.subr.bf16.mxu0 0
    %5075 = vmatpush2.bf16.msra.mxu0 0
    %5076 = vmatprep.subr.bf16.mxu0 0
    %5077 = vmatpush2.bf16.msra.mxu0 0
    %5078 = vmatprep.subr.bf16.mxu0 0
    %5079 = vmatpush2.bf16.msra.mxu0 0
    %5080 = vmatprep.subr.bf16.mxu0 0
    %5081 = vmatpush2.bf16.msra.mxu0 0
    %5082 = vmatprep.subr.bf16.mxu0 0
    %5083 = vmatpush2.bf16.msra.mxu0 0
    %5084 = vmatprep.subr.bf16.mxu0 0
    %5085 = vmatpush2.bf16.msra.mxu0 0
    %5086 = vmatprep.subr.bf16.mxu0 0
    %5087 = vmatpush2.bf16.msra.mxu0 0
    %5088 = vmatprep.mubr.bf16.mxu0 0
    %5089 = vmatmul.mubr.bf16.gmra.mxu0 %v5051
    %v5090 = vpop.f32.mrf.mxu0
    %v5091 = vadd.f32 0.0, %v5090
    %v5092 = vpop.f32.mrf.mxu0
    %v5093 = vpop.f32.mrf.mxu0
    %v5094 = vadd.f32 0.0, %v5093
    %v5095 = vpop.f32.mrf.mxu0
    %5096 = vmatprep.mubr.bf16.mxu0 0
    %5097 = vmatmul.mubr.bf16.gmra.mxu0 %v5054
    %v5098 = vpop.f32.mrf.mxu0
    %v5099 = vadd.f32 0.0, %v5098
    %v5100 = vpop.f32.mrf.mxu0
    %v5101 = vpop.f32.mrf.mxu0
    %v5102 = vadd.f32 0.0, %v5101
    %v5103 = vpop.f32.mrf.mxu0
    %5104 = vdwg.mxu0
    %v5106 = vsel %vm3522, %v4935, 0
    %v5109 = vsel %vm3522, %v4936, 0
    %5111 = vmatprep.subr.bf16.mxu0 0
    %5112 = vmatpush1.bf16.msra.mxu0 0
    %5113 = vmatprep.subr.bf16.mxu0 0
    %5114 = vmatpush1.bf16.msra.mxu0 0
    %5115 = vmatprep.subr.bf16.mxu0 0
    %5116 = vmatpush1.bf16.msra.mxu0 0
    %5117 = vmatprep.subr.bf16.mxu0 0
    %5118 = vmatpush1.bf16.msra.mxu0 0
    %5119 = vmatprep.subr.bf16.mxu0 0
    %5120 = vmatpush1.bf16.msra.mxu0 0
    %5121 = vmatprep.subr.bf16.mxu0 0
    %5122 = vmatpush1.bf16.msra.mxu0 0
    %5123 = vmatprep.subr.bf16.mxu0 0
    %5124 = vmatpush1.bf16.msra.mxu0 %v1171
    %5125 = vmatprep.subr.bf16.mxu0 0
    %5126 = vmatpush1.bf16.msra.mxu0 %v1170
    %5127 = vmatprep.subr.bf16.mxu0 0
    %5128 = vmatpush2.bf16.msra.mxu0 0
    %5129 = vmatprep.subr.bf16.mxu0 0
    %5130 = vmatpush2.bf16.msra.mxu0 0
    %5131 = vmatprep.subr.bf16.mxu0 0
    %5132 = vmatpush2.bf16.msra.mxu0 0
    %5133 = vmatprep.subr.bf16.mxu0 0
    %5134 = vmatpush2.bf16.msra.mxu0 0
    %5135 = vmatprep.subr.bf16.mxu0 0
    %5136 = vmatpush2.bf16.msra.mxu0 0
    %5137 = vmatprep.subr.bf16.mxu0 0
    %5138 = vmatpush2.bf16.msra.mxu0 0
    %5139 = vmatprep.subr.bf16.mxu0 0
    %5140 = vmatpush2.bf16.msra.mxu0 0
    %5141 = vmatprep.subr.bf16.mxu0 0
    %5142 = vmatpush2.bf16.msra.mxu0 0
    %5143 = vmatprep.mubr.bf16.mxu0 0
    %5144 = vmatmul.mubr.bf16.gmra.mxu0 %v5106
    %v5145 = vpop.f32.mrf.mxu0
    %v5146 = vadd.f32 0.0, %v5145
    %v5147 = vpop.f32.mrf.mxu0
    %v5148 = vpop.f32.mrf.mxu0
    %v5149 = vadd.f32 0.0, %v5148
    %v5150 = vpop.f32.mrf.mxu0
    %5151 = vmatprep.mubr.bf16.mxu0 0
    %5152 = vmatmul.mubr.bf16.gmra.mxu0 %v5109
    %v5153 = vpop.f32.mrf.mxu0
    %v5154 = vadd.f32 0.0, %v5153
    %v5155 = vpop.f32.mrf.mxu0
    %v5156 = vpop.f32.mrf.mxu0
    %v5157 = vadd.f32 0.0, %v5156
    %v5158 = vpop.f32.mrf.mxu0
    %5159 = vdwg.mxu0
    %v5161 = vsel %vm3522, %v4937, 0
    %v5164 = vsel %vm3522, %v4938, 0
    %5166 = vmatprep.subr.bf16.mxu0 0
    %5167 = vmatpush1.bf16.msra.mxu0 0
    %5168 = vmatprep.subr.bf16.mxu0 0
    %5169 = vmatpush1.bf16.msra.mxu0 0
    %5170 = vmatprep.subr.bf16.mxu0 0
    %5171 = vmatpush1.bf16.msra.mxu0 0
    %5172 = vmatprep.subr.bf16.mxu0 0
    %5173 = vmatpush1.bf16.msra.mxu0 0
    %5174 = vmatprep.subr.bf16.mxu0 0
    %5175 = vmatpush1.bf16.msra.mxu0 0
    %5176 = vmatprep.subr.bf16.mxu0 0
    %5177 = vmatpush1.bf16.msra.mxu0 0
    %5178 = vmatprep.subr.bf16.mxu0 0
    %5179 = vmatpush1.bf16.msra.mxu0 %v1173
    %5180 = vmatprep.subr.bf16.mxu0 0
    %5181 = vmatpush1.bf16.msra.mxu0 %v1172
    %5182 = vmatprep.subr.bf16.mxu0 0
    %5183 = vmatpush2.bf16.msra.mxu0 0
    %5184 = vmatprep.subr.bf16.mxu0 0
    %5185 = vmatpush2.bf16.msra.mxu0 0
    %5186 = vmatprep.subr.bf16.mxu0 0
    %5187 = vmatpush2.bf16.msra.mxu0 0
    %5188 = vmatprep.subr.bf16.mxu0 0
    %5189 = vmatpush2.bf16.msra.mxu0 0
    %5190 = vmatprep.subr.bf16.mxu0 0
    %5191 = vmatpush2.bf16.msra.mxu0 0
    %5192 = vmatprep.subr.bf16.mxu0 0
    %5193 = vmatpush2.bf16.msra.mxu0 0
    %5194 = vmatprep.subr.bf16.mxu0 0
    %5195 = vmatpush2.bf16.msra.mxu0 0
    %5196 = vmatprep.subr.bf16.mxu0 0
    %5197 = vmatpush2.bf16.msra.mxu0 0
    %5198 = vmatprep.mubr.bf16.mxu0 0
    %5199 = vmatmul.mubr.bf16.gmra.mxu0 %v5161
    %v5200 = vpop.f32.mrf.mxu0
    %v5201 = vadd.f32 0.0, %v5200
    %v5202 = vpop.f32.mrf.mxu0
    %v5203 = vpop.f32.mrf.mxu0
    %v5204 = vadd.f32 0.0, %v5203
    %v5205 = vpop.f32.mrf.mxu0
    %5206 = vmatprep.mubr.bf16.mxu0 0
    %5207 = vmatmul.mubr.bf16.gmra.mxu0 %v5164
    %v5208 = vpop.f32.mrf.mxu0
    %v5209 = vadd.f32 0.0, %v5208
    %v5210 = vpop.f32.mrf.mxu0
    %v5211 = vpop.f32.mrf.mxu0
    %v5212 = vadd.f32 0.0, %v5211
    %v5213 = vpop.f32.mrf.mxu0
    %5214 = vdwg.mxu0
    %v5216 = vsel %vm3522, %v4939, 0
    %v5219 = vsel %vm3522, %v4940, 0
    %5221 = vmatprep.subr.bf16.mxu0 0
    %5222 = vmatpush1.bf16.msra.mxu0 0
    %5223 = vmatprep.subr.bf16.mxu0 0
    %5224 = vmatpush1.bf16.msra.mxu0 0
    %5225 = vmatprep.subr.bf16.mxu0 0
    %5226 = vmatpush1.bf16.msra.mxu0 0
    %5227 = vmatprep.subr.bf16.mxu0 0
    %5228 = vmatpush1.bf16.msra.mxu0 0
    %5229 = vmatprep.subr.bf16.mxu0 0
    %5230 = vmatpush1.bf16.msra.mxu0 0
    %5231 = vmatprep.subr.bf16.mxu0 0
    %5232 = vmatpush1.bf16.msra.mxu0 0
    %5233 = vmatprep.subr.bf16.mxu0 0
    %5234 = vmatpush1.bf16.msra.mxu0 %v1175
    %5235 = vmatprep.subr.bf16.mxu0 0
    %5236 = vmatpush1.bf16.msra.mxu0 %v1174
    %5237 = vmatprep.subr.bf16.mxu0 0
    %5238 = vmatpush2.bf16.msra.mxu0 0
    %5239 = vmatprep.subr.bf16.mxu0 0
    %5240 = vmatpush2.bf16.msra.mxu0 0
    %5241 = vmatprep.subr.bf16.mxu0 0
    %5242 = vmatpush2.bf16.msra.mxu0 0
    %5243 = vmatprep.subr.bf16.mxu0 0
    %5244 = vmatpush2.bf16.msra.mxu0 0
    %5245 = vmatprep.subr.bf16.mxu0 0
    %5246 = vmatpush2.bf16.msra.mxu0 0
    %5247 = vmatprep.subr.bf16.mxu0 0
    %5248 = vmatpush2.bf16.msra.mxu0 0
    %5249 = vmatprep.subr.bf16.mxu0 0
    %5250 = vmatpush2.bf16.msra.mxu0 0
    %5251 = vmatprep.subr.bf16.mxu0 0
    %5252 = vmatpush2.bf16.msra.mxu0 0
    %5253 = vmatprep.mubr.bf16.mxu0 0
    %5254 = vmatmul.mubr.bf16.gmra.mxu0 %v5216
    %v5255 = vpop.f32.mrf.mxu0
    %v5256 = vadd.f32 0.0, %v5255
    %v5257 = vpop.f32.mrf.mxu0
    %v5258 = vpop.f32.mrf.mxu0
    %v5259 = vadd.f32 0.0, %v5258
    %v5260 = vpop.f32.mrf.mxu0
    %5261 = vmatprep.mubr.bf16.mxu0 0
    %5262 = vmatmul.mubr.bf16.gmra.mxu0 %v5219
    %v5263 = vpop.f32.mrf.mxu0
    %v5264 = vadd.f32 0.0, %v5263
    %v5265 = vpop.f32.mrf.mxu0
    %v5266 = vpop.f32.mrf.mxu0
    %v5267 = vadd.f32 0.0, %v5266
    %v5268 = vpop.f32.mrf.mxu0
    %5269 = vdwg.mxu0
    %v5271 = vsel %vm3522, %v4941, 0
    %v5274 = vsel %vm3522, %v4942, 0
    %5276 = vmatprep.subr.bf16.mxu0 0
    %5277 = vmatpush1.bf16.msra.mxu0 0
    %5278 = vmatprep.subr.bf16.mxu0 0
    %5279 = vmatpush1.bf16.msra.mxu0 0
    %5280 = vmatprep.subr.bf16.mxu0 0
    %5281 = vmatpush1.bf16.msra.mxu0 0
    %5282 = vmatprep.subr.bf16.mxu0 0
    %5283 = vmatpush1.bf16.msra.mxu0 0
    %5284 = vmatprep.subr.bf16.mxu0 0
    %5285 = vmatpush1.bf16.msra.mxu0 0
    %5286 = vmatprep.subr.bf16.mxu0 0
    %5287 = vmatpush1.bf16.msra.mxu0 0
    %5288 = vmatprep.subr.bf16.mxu0 0
    %5289 = vmatpush1.bf16.msra.mxu0 %v1177
    %5290 = vmatprep.subr.bf16.mxu0 0
    %5291 = vmatpush1.bf16.msra.mxu0 %v1176
    %5292 = vmatprep.subr.bf16.mxu0 0
    %5293 = vmatpush2.bf16.msra.mxu0 0
    %5294 = vmatprep.subr.bf16.mxu0 0
    %5295 = vmatpush2.bf16.msra.mxu0 0
    %5296 = vmatprep.subr.bf16.mxu0 0
    %5297 = vmatpush2.bf16.msra.mxu0 0
    %5298 = vmatprep.subr.bf16.mxu0 0
    %5299 = vmatpush2.bf16.msra.mxu0 0
    %5300 = vmatprep.subr.bf16.mxu0 0
    %5301 = vmatpush2.bf16.msra.mxu0 0
    %5302 = vmatprep.subr.bf16.mxu0 0
    %5303 = vmatpush2.bf16.msra.mxu0 0
    %5304 = vmatprep.subr.bf16.mxu0 0
    %5305 = vmatpush2.bf16.msra.mxu0 0
    %5306 = vmatprep.subr.bf16.mxu0 0
    %5307 = vmatpush2.bf16.msra.mxu0 0
    %5308 = vmatprep.mubr.bf16.mxu0 0
    %5309 = vmatmul.mubr.bf16.gmra.mxu0 %v5271
    %v5310 = vpop.f32.mrf.mxu0
    %v5311 = vadd.f32 0.0, %v5310
    %v5312 = vpop.f32.mrf.mxu0
    %v5313 = vpop.f32.mrf.mxu0
    %v5314 = vadd.f32 0.0, %v5313
    %v5315 = vpop.f32.mrf.mxu0
    %5316 = vmatprep.mubr.bf16.mxu0 0
    %5317 = vmatmul.mubr.bf16.gmra.mxu0 %v5274
    %v5318 = vpop.f32.mrf.mxu0
    %v5319 = vadd.f32 0.0, %v5318
    %v5320 = vpop.f32.mrf.mxu0
    %v5321 = vpop.f32.mrf.mxu0
    %v5322 = vadd.f32 0.0, %v5321
    %v5323 = vpop.f32.mrf.mxu0
    %5324 = vdwg.mxu0
    %v5326 = vsel %vm3522, %v4943, 0
    %v5329 = vsel %vm3522, %v4944, 0
    %5331 = vmatprep.subr.bf16.mxu0 0
    %5332 = vmatpush1.bf16.msra.mxu0 0
    %5333 = vmatprep.subr.bf16.mxu0 0
    %5334 = vmatpush1.bf16.msra.mxu0 0
    %5335 = vmatprep.subr.bf16.mxu0 0
    %5336 = vmatpush1.bf16.msra.mxu0 0
    %5337 = vmatprep.subr.bf16.mxu0 0
    %5338 = vmatpush1.bf16.msra.mxu0 0
    %5339 = vmatprep.subr.bf16.mxu0 0
    %5340 = vmatpush1.bf16.msra.mxu0 0
    %5341 = vmatprep.subr.bf16.mxu0 0
    %5342 = vmatpush1.bf16.msra.mxu0 0
    %5343 = vmatprep.subr.bf16.mxu0 0
    %5344 = vmatpush1.bf16.msra.mxu0 %v1179
    %5345 = vmatprep.subr.bf16.mxu0 0
    %5346 = vmatpush1.bf16.msra.mxu0 %v1178
    %5347 = vmatprep.subr.bf16.mxu0 0
    %5348 = vmatpush2.bf16.msra.mxu0 0
    %5349 = vmatprep.subr.bf16.mxu0 0
    %5350 = vmatpush2.bf16.msra.mxu0 0
    %5351 = vmatprep.subr.bf16.mxu0 0
    %5352 = vmatpush2.bf16.msra.mxu0 0
    %5353 = vmatprep.subr.bf16.mxu0 0
    %5354 = vmatpush2.bf16.msra.mxu0 0
    %5355 = vmatprep.subr.bf16.mxu0 0
    %5356 = vmatpush2.bf16.msra.mxu0 0
    %5357 = vmatprep.subr.bf16.mxu0 0
    %5358 = vmatpush2.bf16.msra.mxu0 0
    %5359 = vmatprep.subr.bf16.mxu0 0
    %5360 = vmatpush2.bf16.msra.mxu0 0
    %5361 = vmatprep.subr.bf16.mxu0 0
    %5362 = vmatpush2.bf16.msra.mxu0 0
    %5363 = vmatprep.mubr.bf16.mxu0 0
    %5364 = vmatmul.mubr.bf16.gmra.mxu0 %v5326
    %v5365 = vpop.f32.mrf.mxu0
    %v5366 = vadd.f32 0.0, %v5365
    %v5367 = vpop.f32.mrf.mxu0
    %v5368 = vpop.f32.mrf.mxu0
    %v5369 = vadd.f32 0.0, %v5368
    %v5370 = vpop.f32.mrf.mxu0
    %5371 = vmatprep.mubr.bf16.mxu0 0
    %5372 = vmatmul.mubr.bf16.gmra.mxu0 %v5329
    %v5373 = vpop.f32.mrf.mxu0
    %v5374 = vadd.f32 0.0, %v5373
    %v5375 = vpop.f32.mrf.mxu0
    %v5376 = vpop.f32.mrf.mxu0
    %v5377 = vadd.f32 0.0, %v5376
    %v5378 = vpop.f32.mrf.mxu0
    %5379 = vdwg.mxu0
    %v5381 = vsel %vm3522, %v4945, 0
    %v5384 = vsel %vm3522, %v4946, 0
    %5386 = vmatprep.subr.bf16.mxu0 0
    %5387 = vmatpush1.bf16.msra.mxu0 0
    %5388 = vmatprep.subr.bf16.mxu0 0
    %5389 = vmatpush1.bf16.msra.mxu0 0
    %5390 = vmatprep.subr.bf16.mxu0 0
    %5391 = vmatpush1.bf16.msra.mxu0 0
    %5392 = vmatprep.subr.bf16.mxu0 0
    %5393 = vmatpush1.bf16.msra.mxu0 0
    %5394 = vmatprep.subr.bf16.mxu0 0
    %5395 = vmatpush1.bf16.msra.mxu0 0
    %5396 = vmatprep.subr.bf16.mxu0 0
    %5397 = vmatpush1.bf16.msra.mxu0 0
    %5398 = vmatprep.subr.bf16.mxu0 0
    %5399 = vmatpush1.bf16.msra.mxu0 %v1181
    %5400 = vmatprep.subr.bf16.mxu0 0
    %5401 = vmatpush1.bf16.msra.mxu0 %v1180
    %5402 = vmatprep.subr.bf16.mxu0 0
    %5403 = vmatpush2.bf16.msra.mxu0 0
    %5404 = vmatprep.subr.bf16.mxu0 0
    %5405 = vmatpush2.bf16.msra.mxu0 0
    %5406 = vmatprep.subr.bf16.mxu0 0
    %5407 = vmatpush2.bf16.msra.mxu0 0
    %5408 = vmatprep.subr.bf16.mxu0 0
    %5409 = vmatpush2.bf16.msra.mxu0 0
    %5410 = vmatprep.subr.bf16.mxu0 0
    %5411 = vmatpush2.bf16.msra.mxu0 0
    %5412 = vmatprep.subr.bf16.mxu0 0
    %5413 = vmatpush2.bf16.msra.mxu0 0
    %5414 = vmatprep.subr.bf16.mxu0 0
    %5415 = vmatpush2.bf16.msra.mxu0 0
    %5416 = vmatprep.subr.bf16.mxu0 0
    %5417 = vmatpush2.bf16.msra.mxu0 0
    %5418 = vmatprep.mubr.bf16.mxu0 0
    %5419 = vmatmul.mubr.bf16.gmra.mxu0 %v5381
    %v5420 = vpop.f32.mrf.mxu0
    %v5421 = vadd.f32 0.0, %v5420
    %v5422 = vpop.f32.mrf.mxu0
    %v5423 = vpop.f32.mrf.mxu0
    %v5424 = vadd.f32 0.0, %v5423
    %v5425 = vpop.f32.mrf.mxu0
    %5426 = vmatprep.mubr.bf16.mxu0 0
    %5427 = vmatmul.mubr.bf16.gmra.mxu0 %v5384
    %v5428 = vpop.f32.mrf.mxu0
    %v5429 = vadd.f32 0.0, %v5428
    %v5430 = vpop.f32.mrf.mxu0
    %v5431 = vpop.f32.mrf.mxu0
    %v5432 = vadd.f32 0.0, %v5431
    %v5433 = vpop.f32.mrf.mxu0
    %5434 = vdwg.mxu0
    %v5436 = vsel %vm3522, %v4947, 0
    %v5439 = vsel %vm3522, %v4948, 0
    %5441 = vmatprep.subr.bf16.mxu0 0
    %5442 = vmatpush1.bf16.msra.mxu0 0
    %5443 = vmatprep.subr.bf16.mxu0 0
    %5444 = vmatpush1.bf16.msra.mxu0 0
    %5445 = vmatprep.subr.bf16.mxu0 0
    %5446 = vmatpush1.bf16.msra.mxu0 0
    %5447 = vmatprep.subr.bf16.mxu0 0
    %5448 = vmatpush1.bf16.msra.mxu0 0
    %5449 = vmatprep.subr.bf16.mxu0 0
    %5450 = vmatpush1.bf16.msra.mxu0 0
    %5451 = vmatprep.subr.bf16.mxu0 0
    %5452 = vmatpush1.bf16.msra.mxu0 0
    %5453 = vmatprep.subr.bf16.mxu0 0
    %5454 = vmatpush1.bf16.msra.mxu0 %v1183
    %5455 = vmatprep.subr.bf16.mxu0 0
    %5456 = vmatpush1.bf16.msra.mxu0 %v1182
    %5457 = vmatprep.subr.bf16.mxu0 0
    %5458 = vmatpush2.bf16.msra.mxu0 0
    %5459 = vmatprep.subr.bf16.mxu0 0
    %5460 = vmatpush2.bf16.msra.mxu0 0
    %5461 = vmatprep.subr.bf16.mxu0 0
    %5462 = vmatpush2.bf16.msra.mxu0 0
    %5463 = vmatprep.subr.bf16.mxu0 0
    %5464 = vmatpush2.bf16.msra.mxu0 0
    %5465 = vmatprep.subr.bf16.mxu0 0
    %5466 = vmatpush2.bf16.msra.mxu0 0
    %5467 = vmatprep.subr.bf16.mxu0 0
    %5468 = vmatpush2.bf16.msra.mxu0 0
    %5469 = vmatprep.subr.bf16.mxu0 0
    %5470 = vmatpush2.bf16.msra.mxu0 0
    %5471 = vmatprep.subr.bf16.mxu0 0
    %5472 = vmatpush2.bf16.msra.mxu0 0
    %5473 = vmatprep.mubr.bf16.mxu0 0
    %5474 = vmatmul.mubr.bf16.gmra.mxu0 %v5436
    %v5475 = vpop.f32.mrf.mxu0
    %v5476 = vadd.f32 0.0, %v5475
    %v5477 = vpop.f32.mrf.mxu0
    %v5478 = vpop.f32.mrf.mxu0
    %v5479 = vadd.f32 0.0, %v5478
    %v5480 = vpop.f32.mrf.mxu0
    %5481 = vmatprep.mubr.bf16.mxu0 0
    %5482 = vmatmul.mubr.bf16.gmra.mxu0 %v5439
    %v5483 = vpop.f32.mrf.mxu0
    %v5484 = vadd.f32 0.0, %v5483
    %v5485 = vpop.f32.mrf.mxu0
    %v5486 = vpop.f32.mrf.mxu0
    %v5487 = vadd.f32 0.0, %v5486
    %v5488 = vpop.f32.mrf.mxu0
    %5489 = vdwg.mxu0
    %v5491 = vsel %vm3522, %v4949, 0
    %v5494 = vsel %vm3522, %v4950, 0
    %5496 = vmatprep.subr.bf16.mxu0 0
    %5497 = vmatpush1.bf16.msra.mxu0 0
    %5498 = vmatprep.subr.bf16.mxu0 0
    %5499 = vmatpush1.bf16.msra.mxu0 0
    %5500 = vmatprep.subr.bf16.mxu0 0
    %5501 = vmatpush1.bf16.msra.mxu0 0
    %5502 = vmatprep.subr.bf16.mxu0 0
    %5503 = vmatpush1.bf16.msra.mxu0 0
    %5504 = vmatprep.subr.bf16.mxu0 0
    %5505 = vmatpush1.bf16.msra.mxu0 0
    %5506 = vmatprep.subr.bf16.mxu0 0
    %5507 = vmatpush1.bf16.msra.mxu0 0
    %5508 = vmatprep.subr.bf16.mxu0 0
    %5509 = vmatpush1.bf16.msra.mxu0 %v1185
    %5510 = vmatprep.subr.bf16.mxu0 0
    %5511 = vmatpush1.bf16.msra.mxu0 %v1184
    %5512 = vmatprep.subr.bf16.mxu0 0
    %5513 = vmatpush2.bf16.msra.mxu0 0
    %5514 = vmatprep.subr.bf16.mxu0 0
    %5515 = vmatpush2.bf16.msra.mxu0 0
    %5516 = vmatprep.subr.bf16.mxu0 0
    %5517 = vmatpush2.bf16.msra.mxu0 0
    %5518 = vmatprep.subr.bf16.mxu0 0
    %5519 = vmatpush2.bf16.msra.mxu0 0
    %5520 = vmatprep.subr.bf16.mxu0 0
    %5521 = vmatpush2.bf16.msra.mxu0 0
    %5522 = vmatprep.subr.bf16.mxu0 0
    %5523 = vmatpush2.bf16.msra.mxu0 0
    %5524 = vmatprep.subr.bf16.mxu0 0
    %5525 = vmatpush2.bf16.msra.mxu0 0
    %5526 = vmatprep.subr.bf16.mxu0 0
    %5527 = vmatpush2.bf16.msra.mxu0 0
    %5528 = vmatprep.mubr.bf16.mxu0 0
    %5529 = vmatmul.mubr.bf16.gmra.mxu0 %v5491
    %v5530 = vpop.f32.mrf.mxu0
    %v5531 = vadd.f32 0.0, %v5530
    %v5532 = vpop.f32.mrf.mxu0
    %v5533 = vpop.f32.mrf.mxu0
    %v5534 = vadd.f32 0.0, %v5533
    %v5535 = vpop.f32.mrf.mxu0
    %5536 = vmatprep.mubr.bf16.mxu0 0
    %5537 = vmatmul.mubr.bf16.gmra.mxu0 %v5494
    %v5538 = vpop.f32.mrf.mxu0
    %v5539 = vadd.f32 0.0, %v5538
    %v5540 = vpop.f32.mrf.mxu0
    %v5541 = vpop.f32.mrf.mxu0
    %v5542 = vadd.f32 0.0, %v5541
    %v5543 = vpop.f32.mrf.mxu0
    %5544 = vdwg.mxu0
    %v5546 = vsel %vm3522, %v4951, 0
    %v5549 = vsel %vm3522, %v4952, 0
    %5551 = vmatprep.subr.bf16.mxu0 0
    %5552 = vmatpush1.bf16.msra.mxu0 0
    %5553 = vmatprep.subr.bf16.mxu0 0
    %5554 = vmatpush1.bf16.msra.mxu0 0
    %5555 = vmatprep.subr.bf16.mxu0 0
    %5556 = vmatpush1.bf16.msra.mxu0 0
    %5557 = vmatprep.subr.bf16.mxu0 0
    %5558 = vmatpush1.bf16.msra.mxu0 0
    %5559 = vmatprep.subr.bf16.mxu0 0
    %5560 = vmatpush1.bf16.msra.mxu0 0
    %5561 = vmatprep.subr.bf16.mxu0 0
    %5562 = vmatpush1.bf16.msra.mxu0 0
    %5563 = vmatprep.subr.bf16.mxu0 0
    %5564 = vmatpush1.bf16.msra.mxu0 %v1187
    %5565 = vmatprep.subr.bf16.mxu0 0
    %5566 = vmatpush1.bf16.msra.mxu0 %v1186
    %5567 = vmatprep.subr.bf16.mxu0 0
    %5568 = vmatpush2.bf16.msra.mxu0 0
    %5569 = vmatprep.subr.bf16.mxu0 0
    %5570 = vmatpush2.bf16.msra.mxu0 0
    %5571 = vmatprep.subr.bf16.mxu0 0
    %5572 = vmatpush2.bf16.msra.mxu0 0
    %5573 = vmatprep.subr.bf16.mxu0 0
    %5574 = vmatpush2.bf16.msra.mxu0 0
    %5575 = vmatprep.subr.bf16.mxu0 0
    %5576 = vmatpush2.bf16.msra.mxu0 0
    %5577 = vmatprep.subr.bf16.mxu0 0
    %5578 = vmatpush2.bf16.msra.mxu0 0
    %5579 = vmatprep.subr.bf16.mxu0 0
    %5580 = vmatpush2.bf16.msra.mxu0 0
    %5581 = vmatprep.subr.bf16.mxu0 0
    %5582 = vmatpush2.bf16.msra.mxu0 0
    %5583 = vmatprep.mubr.bf16.mxu0 0
    %5584 = vmatmul.mubr.bf16.gmra.mxu0 %v5546
    %v5585 = vpop.f32.mrf.mxu0
    %v5586 = vadd.f32 0.0, %v5585
    %v5587 = vpop.f32.mrf.mxu0
    %v5588 = vpop.f32.mrf.mxu0
    %v5589 = vadd.f32 0.0, %v5588
    %v5590 = vpop.f32.mrf.mxu0
    %5591 = vmatprep.mubr.bf16.mxu0 0
    %5592 = vmatmul.mubr.bf16.gmra.mxu0 %v5549
    %v5593 = vpop.f32.mrf.mxu0
    %v5594 = vadd.f32 0.0, %v5593
    %v5595 = vpop.f32.mrf.mxu0
    %v5596 = vpop.f32.mrf.mxu0
    %v5597 = vadd.f32 0.0, %v5596
    %v5598 = vpop.f32.mrf.mxu0
    %5599 = vdwg.mxu0
    %v5601 = vsel %vm3522, %v4953, 0
    %v5604 = vsel %vm3522, %v4954, 0
    %5606 = vmatprep.subr.bf16.mxu0 0
    %5607 = vmatpush1.bf16.msra.mxu0 0
    %5608 = vmatprep.subr.bf16.mxu0 0
    %5609 = vmatpush1.bf16.msra.mxu0 0
    %5610 = vmatprep.subr.bf16.mxu0 0
    %5611 = vmatpush1.bf16.msra.mxu0 0
    %5612 = vmatprep.subr.bf16.mxu0 0
    %5613 = vmatpush1.bf16.msra.mxu0 0
    %5614 = vmatprep.subr.bf16.mxu0 0
    %5615 = vmatpush1.bf16.msra.mxu0 0
    %5616 = vmatprep.subr.bf16.mxu0 0
    %5617 = vmatpush1.bf16.msra.mxu0 0
    %5618 = vmatprep.subr.bf16.mxu0 0
    %5619 = vmatpush1.bf16.msra.mxu0 %v1189
    %5620 = vmatprep.subr.bf16.mxu0 0
    %5621 = vmatpush1.bf16.msra.mxu0 %v1188
    %5622 = vmatprep.subr.bf16.mxu0 0
    %5623 = vmatpush2.bf16.msra.mxu0 0
    %5624 = vmatprep.subr.bf16.mxu0 0
    %5625 = vmatpush2.bf16.msra.mxu0 0
    %5626 = vmatprep.subr.bf16.mxu0 0
    %5627 = vmatpush2.bf16.msra.mxu0 0
    %5628 = vmatprep.subr.bf16.mxu0 0
    %5629 = vmatpush2.bf16.msra.mxu0 0
    %5630 = vmatprep.subr.bf16.mxu0 0
    %5631 = vmatpush2.bf16.msra.mxu0 0
    %5632 = vmatprep.subr.bf16.mxu0 0
    %5633 = vmatpush2.bf16.msra.mxu0 0
    %5634 = vmatprep.subr.bf16.mxu0 0
    %5635 = vmatpush2.bf16.msra.mxu0 0
    %5636 = vmatprep.subr.bf16.mxu0 0
    %5637 = vmatpush2.bf16.msra.mxu0 0
    %5638 = vmatprep.mubr.bf16.mxu0 0
    %5639 = vmatmul.mubr.bf16.gmra.mxu0 %v5601
    %v5640 = vpop.f32.mrf.mxu0
    %v5641 = vadd.f32 0.0, %v5640
    %v5642 = vpop.f32.mrf.mxu0
    %v5643 = vpop.f32.mrf.mxu0
    %v5644 = vadd.f32 0.0, %v5643
    %v5645 = vpop.f32.mrf.mxu0
    %5646 = vmatprep.mubr.bf16.mxu0 0
    %5647 = vmatmul.mubr.bf16.gmra.mxu0 %v5604
    %v5648 = vpop.f32.mrf.mxu0
    %v5649 = vadd.f32 0.0, %v5648
    %v5650 = vpop.f32.mrf.mxu0
    %v5651 = vpop.f32.mrf.mxu0
    %v5652 = vadd.f32 0.0, %v5651
    %v5653 = vpop.f32.mrf.mxu0
    %5654 = vdwg.mxu0
    %v5656 = vsel %vm3522, %v4955, 0
    %v5659 = vsel %vm3522, %v4956, 0
    %5661 = vmatprep.subr.bf16.mxu0 0
    %5662 = vmatpush1.bf16.msra.mxu0 0
    %5663 = vmatprep.subr.bf16.mxu0 0
    %5664 = vmatpush1.bf16.msra.mxu0 0
    %5665 = vmatprep.subr.bf16.mxu0 0
    %5666 = vmatpush1.bf16.msra.mxu0 0
    %5667 = vmatprep.subr.bf16.mxu0 0
    %5668 = vmatpush1.bf16.msra.mxu0 0
    %5669 = vmatprep.subr.bf16.mxu0 0
    %5670 = vmatpush1.bf16.msra.mxu0 0
    %5671 = vmatprep.subr.bf16.mxu0 0
    %5672 = vmatpush1.bf16.msra.mxu0 0
    %5673 = vmatprep.subr.bf16.mxu0 0
    %5674 = vmatpush1.bf16.msra.mxu0 %v1191
    %5675 = vmatprep.subr.bf16.mxu0 0
    %5676 = vmatpush1.bf16.msra.mxu0 %v1190
    %5677 = vmatprep.subr.bf16.mxu0 0
    %5678 = vmatpush2.bf16.msra.mxu0 0
    %5679 = vmatprep.subr.bf16.mxu0 0
    %5680 = vmatpush2.bf16.msra.mxu0 0
    %5681 = vmatprep.subr.bf16.mxu0 0
    %5682 = vmatpush2.bf16.msra.mxu0 0
    %5683 = vmatprep.subr.bf16.mxu0 0
    %5684 = vmatpush2.bf16.msra.mxu0 0
    %5685 = vmatprep.subr.bf16.mxu0 0
    %5686 = vmatpush2.bf16.msra.mxu0 0
    %5687 = vmatprep.subr.bf16.mxu0 0
    %5688 = vmatpush2.bf16.msra.mxu0 0
    %5689 = vmatprep.subr.bf16.mxu0 0
    %5690 = vmatpush2.bf16.msra.mxu0 0
    %5691 = vmatprep.subr.bf16.mxu0 0
    %5692 = vmatpush2.bf16.msra.mxu0 0
    %5693 = vmatprep.mubr.bf16.mxu0 0
    %5694 = vmatmul.mubr.bf16.gmra.mxu0 %v5656
    %v5695 = vpop.f32.mrf.mxu0
    %v5696 = vadd.f32 0.0, %v5695
    %v5697 = vpop.f32.mrf.mxu0
    %v5698 = vpop.f32.mrf.mxu0
    %v5699 = vadd.f32 0.0, %v5698
    %v5700 = vpop.f32.mrf.mxu0
    %5701 = vmatprep.mubr.bf16.mxu0 0
    %5702 = vmatmul.mubr.bf16.gmra.mxu0 %v5659
    %v5703 = vpop.f32.mrf.mxu0
    %v5704 = vadd.f32 0.0, %v5703
    %v5705 = vpop.f32.mrf.mxu0
    %v5706 = vpop.f32.mrf.mxu0
    %v5707 = vadd.f32 0.0, %v5706
    %v5708 = vpop.f32.mrf.mxu0
    %5709 = vdwg.mxu0
    %v5711 = vsel %vm3522, %v4957, 0
    %v5714 = vsel %vm3522, %v4958, 0
    %5716 = vmatprep.subr.bf16.mxu0 0
    %5717 = vmatpush1.bf16.msra.mxu0 0
    %5718 = vmatprep.subr.bf16.mxu0 0
    %5719 = vmatpush1.bf16.msra.mxu0 0
    %5720 = vmatprep.subr.bf16.mxu0 0
    %5721 = vmatpush1.bf16.msra.mxu0 0
    %5722 = vmatprep.subr.bf16.mxu0 0
    %5723 = vmatpush1.bf16.msra.mxu0 0
    %5724 = vmatprep.subr.bf16.mxu0 0
    %5725 = vmatpush1.bf16.msra.mxu0 0
    %5726 = vmatprep.subr.bf16.mxu0 0
    %5727 = vmatpush1.bf16.msra.mxu0 0
    %5728 = vmatprep.subr.bf16.mxu0 0
    %5729 = vmatpush1.bf16.msra.mxu0 %v1193
    %5730 = vmatprep.subr.bf16.mxu0 0
    %5731 = vmatpush1.bf16.msra.mxu0 %v1192
    %5732 = vmatprep.subr.bf16.mxu0 0
    %5733 = vmatpush2.bf16.msra.mxu0 0
    %5734 = vmatprep.subr.bf16.mxu0 0
    %5735 = vmatpush2.bf16.msra.mxu0 0
    %5736 = vmatprep.subr.bf16.mxu0 0
    %5737 = vmatpush2.bf16.msra.mxu0 0
    %5738 = vmatprep.subr.bf16.mxu0 0
    %5739 = vmatpush2.bf16.msra.mxu0 0
    %5740 = vmatprep.subr.bf16.mxu0 0
    %5741 = vmatpush2.bf16.msra.mxu0 0
    %5742 = vmatprep.subr.bf16.mxu0 0
    %5743 = vmatpush2.bf16.msra.mxu0 0
    %5744 = vmatprep.subr.bf16.mxu0 0
    %5745 = vmatpush2.bf16.msra.mxu0 0
    %5746 = vmatprep.subr.bf16.mxu0 0
    %5747 = vmatpush2.bf16.msra.mxu0 0
    %5748 = vmatprep.mubr.bf16.mxu0 0
    %5749 = vmatmul.mubr.bf16.gmra.mxu0 %v5711
    %v5750 = vpop.f32.mrf.mxu0
    %v5751 = vadd.f32 0.0, %v5750
    %v5752 = vpop.f32.mrf.mxu0
    %v5753 = vpop.f32.mrf.mxu0
    %v5754 = vadd.f32 0.0, %v5753
    %v5755 = vpop.f32.mrf.mxu0
    %5756 = vmatprep.mubr.bf16.mxu0 0
    %5757 = vmatmul.mubr.bf16.gmra.mxu0 %v5714
    %v5758 = vpop.f32.mrf.mxu0
    %v5759 = vadd.f32 0.0, %v5758
    %v5760 = vpop.f32.mrf.mxu0
    %v5761 = vpop.f32.mrf.mxu0
    %v5762 = vadd.f32 0.0, %v5761
    %v5763 = vpop.f32.mrf.mxu0
    %5764 = vdwg.mxu0
    %v5766 = vsel %vm3522, %v4959, 0
    %v5769 = vsel %vm3522, %v4960, 0
    %5771 = vmatprep.subr.bf16.mxu0 0
    %5772 = vmatpush1.bf16.msra.mxu0 0
    %5773 = vmatprep.subr.bf16.mxu0 0
    %5774 = vmatpush1.bf16.msra.mxu0 0
    %5775 = vmatprep.subr.bf16.mxu0 0
    %5776 = vmatpush1.bf16.msra.mxu0 0
    %5777 = vmatprep.subr.bf16.mxu0 0
    %5778 = vmatpush1.bf16.msra.mxu0 0
    %5779 = vmatprep.subr.bf16.mxu0 0
    %5780 = vmatpush1.bf16.msra.mxu0 0
    %5781 = vmatprep.subr.bf16.mxu0 0
    %5782 = vmatpush1.bf16.msra.mxu0 0
    %5783 = vmatprep.subr.bf16.mxu0 0
    %5784 = vmatpush1.bf16.msra.mxu0 %v1195
    %5785 = vmatprep.subr.bf16.mxu0 0
    %5786 = vmatpush1.bf16.msra.mxu0 %v1194
    %5787 = vmatprep.subr.bf16.mxu0 0
    %5788 = vmatpush2.bf16.msra.mxu0 0
    %5789 = vmatprep.subr.bf16.mxu0 0
    %5790 = vmatpush2.bf16.msra.mxu0 0
    %5791 = vmatprep.subr.bf16.mxu0 0
    %5792 = vmatpush2.bf16.msra.mxu0 0
    %5793 = vmatprep.subr.bf16.mxu0 0
    %5794 = vmatpush2.bf16.msra.mxu0 0
    %5795 = vmatprep.subr.bf16.mxu0 0
    %5796 = vmatpush2.bf16.msra.mxu0 0
    %5797 = vmatprep.subr.bf16.mxu0 0
    %5798 = vmatpush2.bf16.msra.mxu0 0
    %5799 = vmatprep.subr.bf16.mxu0 0
    %5800 = vmatpush2.bf16.msra.mxu0 0
    %5801 = vmatprep.subr.bf16.mxu0 0
    %5802 = vmatpush2.bf16.msra.mxu0 0
    %5803 = vmatprep.mubr.bf16.mxu0 0
    %5804 = vmatmul.mubr.bf16.gmra.mxu0 %v5766
    %v5805 = vpop.f32.mrf.mxu0
    %v5806 = vadd.f32 0.0, %v5805
    %v5807 = vpop.f32.mrf.mxu0
    %v5808 = vpop.f32.mrf.mxu0
    %v5809 = vadd.f32 0.0, %v5808
    %v5810 = vpop.f32.mrf.mxu0
    %5811 = vmatprep.mubr.bf16.mxu0 0
    %5812 = vmatmul.mubr.bf16.gmra.mxu0 %v5769
    %v5813 = vpop.f32.mrf.mxu0
    %v5814 = vadd.f32 0.0, %v5813
    %v5815 = vpop.f32.mrf.mxu0
    %v5816 = vpop.f32.mrf.mxu0
    %v5817 = vadd.f32 0.0, %v5816
    %v5818 = vpop.f32.mrf.mxu0
    %5819 = vdwg.mxu0
    %v5821 = vsel %vm3522, %v4961, 0
    %v5824 = vsel %vm3522, %v4962, 0
    %5826 = vmatprep.subr.bf16.mxu0 0
    %5827 = vmatpush1.bf16.msra.mxu0 0
    %5828 = vmatprep.subr.bf16.mxu0 0
    %5829 = vmatpush1.bf16.msra.mxu0 0
    %5830 = vmatprep.subr.bf16.mxu0 0
    %5831 = vmatpush1.bf16.msra.mxu0 0
    %5832 = vmatprep.subr.bf16.mxu0 0
    %5833 = vmatpush1.bf16.msra.mxu0 0
    %5834 = vmatprep.subr.bf16.mxu0 0
    %5835 = vmatpush1.bf16.msra.mxu0 0
    %5836 = vmatprep.subr.bf16.mxu0 0
    %5837 = vmatpush1.bf16.msra.mxu0 0
    %5838 = vmatprep.subr.bf16.mxu0 0
    %5839 = vmatpush1.bf16.msra.mxu0 %v1197
    %5840 = vmatprep.subr.bf16.mxu0 0
    %5841 = vmatpush1.bf16.msra.mxu0 %v1196
    %5842 = vmatprep.subr.bf16.mxu0 0
    %5843 = vmatpush2.bf16.msra.mxu0 0
    %5844 = vmatprep.subr.bf16.mxu0 0
    %5845 = vmatpush2.bf16.msra.mxu0 0
    %5846 = vmatprep.subr.bf16.mxu0 0
    %5847 = vmatpush2.bf16.msra.mxu0 0
    %5848 = vmatprep.subr.bf16.mxu0 0
    %5849 = vmatpush2.bf16.msra.mxu0 0
    %5850 = vmatprep.subr.bf16.mxu0 0
    %5851 = vmatpush2.bf16.msra.mxu0 0
    %5852 = vmatprep.subr.bf16.mxu0 0
    %5853 = vmatpush2.bf16.msra.mxu0 0
    %5854 = vmatprep.subr.bf16.mxu0 0
    %5855 = vmatpush2.bf16.msra.mxu0 0
    %5856 = vmatprep.subr.bf16.mxu0 0
    %5857 = vmatpush2.bf16.msra.mxu0 0
    %5858 = vmatprep.mubr.bf16.mxu0 0
    %5859 = vmatmul.mubr.bf16.gmra.mxu0 %v5821
    %v5860 = vpop.f32.mrf.mxu0
    %v5861 = vadd.f32 0.0, %v5860
    %v5862 = vpop.f32.mrf.mxu0
    %v5863 = vpop.f32.mrf.mxu0
    %v5864 = vadd.f32 0.0, %v5863
    %v5865 = vpop.f32.mrf.mxu0
    %5866 = vmatprep.mubr.bf16.mxu0 0
    %5867 = vmatmul.mubr.bf16.gmra.mxu0 %v5824
    %v5868 = vpop.f32.mrf.mxu0
    %v5869 = vadd.f32 0.0, %v5868
    %v5870 = vpop.f32.mrf.mxu0
    %v5871 = vpop.f32.mrf.mxu0
    %v5872 = vadd.f32 0.0, %v5871
    %v5873 = vpop.f32.mrf.mxu0
    %5874 = vdwg.mxu0
    %v5876 = vsel %vm3522, %v4963, 0
    %v5879 = vsel %vm3522, %v4964, 0
    %5881 = vmatprep.subr.bf16.mxu0 0
    %5882 = vmatpush1.bf16.msra.mxu0 0
    %5883 = vmatprep.subr.bf16.mxu0 0
    %5884 = vmatpush1.bf16.msra.mxu0 0
    %5885 = vmatprep.subr.bf16.mxu0 0
    %5886 = vmatpush1.bf16.msra.mxu0 0
    %5887 = vmatprep.subr.bf16.mxu0 0
    %5888 = vmatpush1.bf16.msra.mxu0 0
    %5889 = vmatprep.subr.bf16.mxu0 0
    %5890 = vmatpush1.bf16.msra.mxu0 0
    %5891 = vmatprep.subr.bf16.mxu0 0
    %5892 = vmatpush1.bf16.msra.mxu0 0
    %5893 = vmatprep.subr.bf16.mxu0 0
    %5894 = vmatpush1.bf16.msra.mxu0 %v1199
    %5895 = vmatprep.subr.bf16.mxu0 0
    %5896 = vmatpush1.bf16.msra.mxu0 %v1198
    %5897 = vmatprep.subr.bf16.mxu0 0
    %5898 = vmatpush2.bf16.msra.mxu0 0
    %5899 = vmatprep.subr.bf16.mxu0 0
    %5900 = vmatpush2.bf16.msra.mxu0 0
    %5901 = vmatprep.subr.bf16.mxu0 0
    %5902 = vmatpush2.bf16.msra.mxu0 0
    %5903 = vmatprep.subr.bf16.mxu0 0
    %5904 = vmatpush2.bf16.msra.mxu0 0
    %5905 = vmatprep.subr.bf16.mxu0 0
    %5906 = vmatpush2.bf16.msra.mxu0 0
    %5907 = vmatprep.subr.bf16.mxu0 0
    %5908 = vmatpush2.bf16.msra.mxu0 0
    %5909 = vmatprep.subr.bf16.mxu0 0
    %5910 = vmatpush2.bf16.msra.mxu0 0
    %5911 = vmatprep.subr.bf16.mxu0 0
    %5912 = vmatpush2.bf16.msra.mxu0 0
    %5913 = vmatprep.mubr.bf16.mxu0 0
    %5914 = vmatmul.mubr.bf16.gmra.mxu0 %v5876
    %v5915 = vpop.f32.mrf.mxu0
    %v5916 = vadd.f32 0.0, %v5915
    %v5917 = vpop.f32.mrf.mxu0
    %v5918 = vpop.f32.mrf.mxu0
    %v5919 = vadd.f32 0.0, %v5918
    %v5920 = vpop.f32.mrf.mxu0
    %5921 = vmatprep.mubr.bf16.mxu0 0
    %5922 = vmatmul.mubr.bf16.gmra.mxu0 %v5879
    %v5923 = vpop.f32.mrf.mxu0
    %v5924 = vadd.f32 0.0, %v5923
    %v5925 = vpop.f32.mrf.mxu0
    %v5926 = vpop.f32.mrf.mxu0
    %v5927 = vadd.f32 0.0, %v5926
    %v5928 = vpop.f32.mrf.mxu0
    %5929 = vdwg.mxu0
    %v5931 = vsel %vm3522, %v4965, 0
    %v5934 = vsel %vm3522, %v4966, 0
    %5936 = vmatprep.subr.bf16.mxu0 0
    %5937 = vmatpush1.bf16.msra.mxu0 0
    %5938 = vmatprep.subr.bf16.mxu0 0
    %5939 = vmatpush1.bf16.msra.mxu0 0
    %5940 = vmatprep.subr.bf16.mxu0 0
    %5941 = vmatpush1.bf16.msra.mxu0 0
    %5942 = vmatprep.subr.bf16.mxu0 0
    %5943 = vmatpush1.bf16.msra.mxu0 0
    %5944 = vmatprep.subr.bf16.mxu0 0
    %5945 = vmatpush1.bf16.msra.mxu0 0
    %5946 = vmatprep.subr.bf16.mxu0 0
    %5947 = vmatpush1.bf16.msra.mxu0 0
    %5948 = vmatprep.subr.bf16.mxu0 0
    %5949 = vmatpush1.bf16.msra.mxu0 %v1201
    %5950 = vmatprep.subr.bf16.mxu0 0
    %5951 = vmatpush1.bf16.msra.mxu0 %v1200
    %5952 = vmatprep.subr.bf16.mxu0 0
    %5953 = vmatpush2.bf16.msra.mxu0 0
    %5954 = vmatprep.subr.bf16.mxu0 0
    %5955 = vmatpush2.bf16.msra.mxu0 0
    %5956 = vmatprep.subr.bf16.mxu0 0
    %5957 = vmatpush2.bf16.msra.mxu0 0
    %5958 = vmatprep.subr.bf16.mxu0 0
    %5959 = vmatpush2.bf16.msra.mxu0 0
    %5960 = vmatprep.subr.bf16.mxu0 0
    %5961 = vmatpush2.bf16.msra.mxu0 0
    %5962 = vmatprep.subr.bf16.mxu0 0
    %5963 = vmatpush2.bf16.msra.mxu0 0
    %5964 = vmatprep.subr.bf16.mxu0 0
    %5965 = vmatpush2.bf16.msra.mxu0 0
    %5966 = vmatprep.subr.bf16.mxu0 0
    %5967 = vmatpush2.bf16.msra.mxu0 0
    %5968 = vmatprep.mubr.bf16.mxu0 0
    %5969 = vmatmul.mubr.bf16.gmra.mxu0 %v5931
    %v5970 = vpop.f32.mrf.mxu0
    %v5971 = vadd.f32 0.0, %v5970
    %v5972 = vpop.f32.mrf.mxu0
    %v5973 = vpop.f32.mrf.mxu0
    %v5974 = vadd.f32 0.0, %v5973
    %v5975 = vpop.f32.mrf.mxu0
    %5976 = vmatprep.mubr.bf16.mxu0 0
    %5977 = vmatmul.mubr.bf16.gmra.mxu0 %v5934
    %v5978 = vpop.f32.mrf.mxu0
    %v5979 = vadd.f32 0.0, %v5978
    %v5980 = vpop.f32.mrf.mxu0
    %v5981 = vpop.f32.mrf.mxu0
    %v5982 = vadd.f32 0.0, %v5981
    %v5983 = vpop.f32.mrf.mxu0
    %5984 = vdwg.mxu0
    %v5986 = vsel %vm3522, %v4967, 0
    %v5989 = vsel %vm3522, %v4968, 0
    %5991 = vmatprep.subr.bf16.mxu0 0
    %5992 = vmatpush1.bf16.msra.mxu0 0
    %5993 = vmatprep.subr.bf16.mxu0 0
    %5994 = vmatpush1.bf16.msra.mxu0 0
    %5995 = vmatprep.subr.bf16.mxu0 0
    %5996 = vmatpush1.bf16.msra.mxu0 0
    %5997 = vmatprep.subr.bf16.mxu0 0
    %5998 = vmatpush1.bf16.msra.mxu0 0
    %5999 = vmatprep.subr.bf16.mxu0 0
    %6000 = vmatpush1.bf16.msra.mxu0 0
    %6001 = vmatprep.subr.bf16.mxu0 0
    %6002 = vmatpush1.bf16.msra.mxu0 0
    %6003 = vmatprep.subr.bf16.mxu0 0
    %6004 = vmatpush1.bf16.msra.mxu0 %v1203
    %6005 = vmatprep.subr.bf16.mxu0 0
    %6006 = vmatpush1.bf16.msra.mxu0 %v1202
    %6007 = vmatprep.subr.bf16.mxu0 0
    %6008 = vmatpush2.bf16.msra.mxu0 0
    %6009 = vmatprep.subr.bf16.mxu0 0
    %6010 = vmatpush2.bf16.msra.mxu0 0
    %6011 = vmatprep.subr.bf16.mxu0 0
    %6012 = vmatpush2.bf16.msra.mxu0 0
    %6013 = vmatprep.subr.bf16.mxu0 0
    %6014 = vmatpush2.bf16.msra.mxu0 0
    %6015 = vmatprep.subr.bf16.mxu0 0
    %6016 = vmatpush2.bf16.msra.mxu0 0
    %6017 = vmatprep.subr.bf16.mxu0 0
    %6018 = vmatpush2.bf16.msra.mxu0 0
    %6019 = vmatprep.subr.bf16.mxu0 0
    %6020 = vmatpush2.bf16.msra.mxu0 0
    %6021 = vmatprep.subr.bf16.mxu0 0
    %6022 = vmatpush2.bf16.msra.mxu0 0
    %6023 = vmatprep.mubr.bf16.mxu0 0
    %6024 = vmatmul.mubr.bf16.gmra.mxu0 %v5986
    %v6025 = vpop.f32.mrf.mxu0
    %v6026 = vadd.f32 0.0, %v6025
    %v6027 = vpop.f32.mrf.mxu0
    %v6028 = vpop.f32.mrf.mxu0
    %v6029 = vadd.f32 0.0, %v6028
    %v6030 = vpop.f32.mrf.mxu0
    %6031 = vmatprep.mubr.bf16.mxu0 0
    %6032 = vmatmul.mubr.bf16.gmra.mxu0 %v5989
    %v6033 = vpop.f32.mrf.mxu0
    %v6034 = vadd.f32 0.0, %v6033
    %v6035 = vpop.f32.mrf.mxu0
    %v6036 = vpop.f32.mrf.mxu0
    %v6037 = vadd.f32 0.0, %v6036
    %v6038 = vpop.f32.mrf.mxu0
    %6039 = vdwg.mxu0
    %v6041 = vsel %vm3522, %v4969, 0
    %v6044 = vsel %vm3522, %v4970, 0
    %6046 = vmatprep.subr.bf16.mxu0 0
    %6047 = vmatpush1.bf16.msra.mxu0 0
    %6048 = vmatprep.subr.bf16.mxu0 0
    %6049 = vmatpush1.bf16.msra.mxu0 0
    %6050 = vmatprep.subr.bf16.mxu0 0
    %6051 = vmatpush1.bf16.msra.mxu0 0
    %6052 = vmatprep.subr.bf16.mxu0 0
    %6053 = vmatpush1.bf16.msra.mxu0 0
    %6054 = vmatprep.subr.bf16.mxu0 0
    %6055 = vmatpush1.bf16.msra.mxu0 0
    %6056 = vmatprep.subr.bf16.mxu0 0
    %6057 = vmatpush1.bf16.msra.mxu0 0
    %6058 = vmatprep.subr.bf16.mxu0 0
    %6059 = vmatpush1.bf16.msra.mxu0 %v1205
    %6060 = vmatprep.subr.bf16.mxu0 0
    %6061 = vmatpush1.bf16.msra.mxu0 %v1204
    %6062 = vmatprep.subr.bf16.mxu0 0
    %6063 = vmatpush2.bf16.msra.mxu0 0
    %6064 = vmatprep.subr.bf16.mxu0 0
    %6065 = vmatpush2.bf16.msra.mxu0 0
    %6066 = vmatprep.subr.bf16.mxu0 0
    %6067 = vmatpush2.bf16.msra.mxu0 0
    %6068 = vmatprep.subr.bf16.mxu0 0
    %6069 = vmatpush2.bf16.msra.mxu0 0
    %6070 = vmatprep.subr.bf16.mxu0 0
    %6071 = vmatpush2.bf16.msra.mxu0 0
    %6072 = vmatprep.subr.bf16.mxu0 0
    %6073 = vmatpush2.bf16.msra.mxu0 0
    %6074 = vmatprep.subr.bf16.mxu0 0
    %6075 = vmatpush2.bf16.msra.mxu0 0
    %6076 = vmatprep.subr.bf16.mxu0 0
    %6077 = vmatpush2.bf16.msra.mxu0 0
    %6078 = vmatprep.mubr.bf16.mxu0 0
    %6079 = vmatmul.mubr.bf16.gmra.mxu0 %v6041
    %v6080 = vpop.f32.mrf.mxu0
    %v6081 = vadd.f32 0.0, %v6080
    %v6082 = vpop.f32.mrf.mxu0
    %v6083 = vpop.f32.mrf.mxu0
    %v6084 = vadd.f32 0.0, %v6083
    %v6085 = vpop.f32.mrf.mxu0
    %6086 = vmatprep.mubr.bf16.mxu0 0
    %6087 = vmatmul.mubr.bf16.gmra.mxu0 %v6044
    %v6088 = vpop.f32.mrf.mxu0
    %v6089 = vadd.f32 0.0, %v6088
    %v6090 = vpop.f32.mrf.mxu0
    %v6091 = vpop.f32.mrf.mxu0
    %v6092 = vadd.f32 0.0, %v6091
    %v6093 = vpop.f32.mrf.mxu0
    %6094 = vdwg.mxu0
    %v6096 = vsel %vm3522, %v4971, 0
    %v6099 = vsel %vm3522, %v4972, 0
    %6101 = vmatprep.subr.bf16.mxu0 0
    %6102 = vmatpush1.bf16.msra.mxu0 0
    %6103 = vmatprep.subr.bf16.mxu0 0
    %6104 = vmatpush1.bf16.msra.mxu0 0
    %6105 = vmatprep.subr.bf16.mxu0 0
    %6106 = vmatpush1.bf16.msra.mxu0 0
    %6107 = vmatprep.subr.bf16.mxu0 0
    %6108 = vmatpush1.bf16.msra.mxu0 0
    %6109 = vmatprep.subr.bf16.mxu0 0
    %6110 = vmatpush1.bf16.msra.mxu0 0
    %6111 = vmatprep.subr.bf16.mxu0 0
    %6112 = vmatpush1.bf16.msra.mxu0 0
    %6113 = vmatprep.subr.bf16.mxu0 0
    %6114 = vmatpush1.bf16.msra.mxu0 %v1207
    %6115 = vmatprep.subr.bf16.mxu0 0
    %6116 = vmatpush1.bf16.msra.mxu0 %v1206
    %6117 = vmatprep.subr.bf16.mxu0 0
    %6118 = vmatpush2.bf16.msra.mxu0 0
    %6119 = vmatprep.subr.bf16.mxu0 0
    %6120 = vmatpush2.bf16.msra.mxu0 0
    %6121 = vmatprep.subr.bf16.mxu0 0
    %6122 = vmatpush2.bf16.msra.mxu0 0
    %6123 = vmatprep.subr.bf16.mxu0 0
    %6124 = vmatpush2.bf16.msra.mxu0 0
    %6125 = vmatprep.subr.bf16.mxu0 0
    %6126 = vmatpush2.bf16.msra.mxu0 0
    %6127 = vmatprep.subr.bf16.mxu0 0
    %6128 = vmatpush2.bf16.msra.mxu0 0
    %6129 = vmatprep.subr.bf16.mxu0 0
    %6130 = vmatpush2.bf16.msra.mxu0 0
    %6131 = vmatprep.subr.bf16.mxu0 0
    %6132 = vmatpush2.bf16.msra.mxu0 0
    %6133 = vmatprep.mubr.bf16.mxu0 0
    %6134 = vmatmul.mubr.bf16.gmra.mxu0 %v6096
    %v6135 = vpop.f32.mrf.mxu0
    %v6136 = vadd.f32 0.0, %v6135
    %v6137 = vpop.f32.mrf.mxu0
    %v6138 = vpop.f32.mrf.mxu0
    %v6139 = vadd.f32 0.0, %v6138
    %v6140 = vpop.f32.mrf.mxu0
    %6141 = vmatprep.mubr.bf16.mxu0 0
    %6142 = vmatmul.mubr.bf16.gmra.mxu0 %v6099
    %v6143 = vpop.f32.mrf.mxu0
    %v6144 = vadd.f32 0.0, %v6143
    %v6145 = vpop.f32.mrf.mxu0
    %v6146 = vpop.f32.mrf.mxu0
    %v6147 = vadd.f32 0.0, %v6146
    %v6148 = vpop.f32.mrf.mxu0
    %6149 = vdwg.mxu0
    %v6151 = vsel %vm3522, %v4973, 0
    %v6154 = vsel %vm3522, %v4974, 0
    %6156 = vmatprep.subr.bf16.mxu0 0
    %6157 = vmatpush1.bf16.msra.mxu0 0
    %6158 = vmatprep.subr.bf16.mxu0 0
    %6159 = vmatpush1.bf16.msra.mxu0 0
    %6160 = vmatprep.subr.bf16.mxu0 0
    %6161 = vmatpush1.bf16.msra.mxu0 0
    %6162 = vmatprep.subr.bf16.mxu0 0
    %6163 = vmatpush1.bf16.msra.mxu0 0
    %6164 = vmatprep.subr.bf16.mxu0 0
    %6165 = vmatpush1.bf16.msra.mxu0 0
    %6166 = vmatprep.subr.bf16.mxu0 0
    %6167 = vmatpush1.bf16.msra.mxu0 0
    %6168 = vmatprep.subr.bf16.mxu0 0
    %6169 = vmatpush1.bf16.msra.mxu0 %v1209
    %6170 = vmatprep.subr.bf16.mxu0 0
    %6171 = vmatpush1.bf16.msra.mxu0 %v1208
    %6172 = vmatprep.subr.bf16.mxu0 0
    %6173 = vmatpush2.bf16.msra.mxu0 0
    %6174 = vmatprep.subr.bf16.mxu0 0
    %6175 = vmatpush2.bf16.msra.mxu0 0
    %6176 = vmatprep.subr.bf16.mxu0 0
    %6177 = vmatpush2.bf16.msra.mxu0 0
    %6178 = vmatprep.subr.bf16.mxu0 0
    %6179 = vmatpush2.bf16.msra.mxu0 0
    %6180 = vmatprep.subr.bf16.mxu0 0
    %6181 = vmatpush2.bf16.msra.mxu0 0
    %6182 = vmatprep.subr.bf16.mxu0 0
    %6183 = vmatpush2.bf16.msra.mxu0 0
    %6184 = vmatprep.subr.bf16.mxu0 0
    %6185 = vmatpush2.bf16.msra.mxu0 0
    %6186 = vmatprep.subr.bf16.mxu0 0
    %6187 = vmatpush2.bf16.msra.mxu0 0
    %6188 = vmatprep.mubr.bf16.mxu0 0
    %6189 = vmatmul.mubr.bf16.gmra.mxu0 %v6151
    %v6190 = vpop.f32.mrf.mxu0
    %v6191 = vadd.f32 0.0, %v6190
    %v6192 = vpop.f32.mrf.mxu0
    %v6193 = vpop.f32.mrf.mxu0
    %v6194 = vadd.f32 0.0, %v6193
    %v6195 = vpop.f32.mrf.mxu0
    %6196 = vmatprep.mubr.bf16.mxu0 0
    %6197 = vmatmul.mubr.bf16.gmra.mxu0 %v6154
    %v6198 = vpop.f32.mrf.mxu0
    %v6199 = vadd.f32 0.0, %v6198
    %v6200 = vpop.f32.mrf.mxu0
    %v6201 = vpop.f32.mrf.mxu0
    %v6202 = vadd.f32 0.0, %v6201
    %v6203 = vpop.f32.mrf.mxu0
    %6204 = vdwg.mxu0
    %v6206 = vsel %vm3522, %v4975, 0
    %v6209 = vsel %vm3522, %v4976, 0
    %6211 = vmatprep.subr.bf16.mxu0 0
    %6212 = vmatpush1.bf16.msra.mxu0 0
    %6213 = vmatprep.subr.bf16.mxu0 0
    %6214 = vmatpush1.bf16.msra.mxu0 0
    %6215 = vmatprep.subr.bf16.mxu0 0
    %6216 = vmatpush1.bf16.msra.mxu0 0
    %6217 = vmatprep.subr.bf16.mxu0 0
    %6218 = vmatpush1.bf16.msra.mxu0 0
    %6219 = vmatprep.subr.bf16.mxu0 0
    %6220 = vmatpush1.bf16.msra.mxu0 0
    %6221 = vmatprep.subr.bf16.mxu0 0
    %6222 = vmatpush1.bf16.msra.mxu0 0
    %6223 = vmatprep.subr.bf16.mxu0 0
    %6224 = vmatpush1.bf16.msra.mxu0 %v1211
    %6225 = vmatprep.subr.bf16.mxu0 0
    %6226 = vmatpush1.bf16.msra.mxu0 %v1210
    %6227 = vmatprep.subr.bf16.mxu0 0
    %6228 = vmatpush2.bf16.msra.mxu0 0
    %6229 = vmatprep.subr.bf16.mxu0 0
    %6230 = vmatpush2.bf16.msra.mxu0 0
    %6231 = vmatprep.subr.bf16.mxu0 0
    %6232 = vmatpush2.bf16.msra.mxu0 0
    %6233 = vmatprep.subr.bf16.mxu0 0
    %6234 = vmatpush2.bf16.msra.mxu0 0
    %6235 = vmatprep.subr.bf16.mxu0 0
    %6236 = vmatpush2.bf16.msra.mxu0 0
    %6237 = vmatprep.subr.bf16.mxu0 0
    %6238 = vmatpush2.bf16.msra.mxu0 0
    %6239 = vmatprep.subr.bf16.mxu0 0
    %6240 = vmatpush2.bf16.msra.mxu0 0
    %6241 = vmatprep.subr.bf16.mxu0 0
    %6242 = vmatpush2.bf16.msra.mxu0 0
    %6243 = vmatprep.mubr.bf16.mxu0 0
    %6244 = vmatmul.mubr.bf16.gmra.mxu0 %v6206
    %v6245 = vpop.f32.mrf.mxu0
    %v6246 = vadd.f32 0.0, %v6245
    %v6247 = vpop.f32.mrf.mxu0
    %v6248 = vpop.f32.mrf.mxu0
    %v6249 = vadd.f32 0.0, %v6248
    %v6250 = vpop.f32.mrf.mxu0
    %6251 = vmatprep.mubr.bf16.mxu0 0
    %6252 = vmatmul.mubr.bf16.gmra.mxu0 %v6209
    %v6253 = vpop.f32.mrf.mxu0
    %v6254 = vadd.f32 0.0, %v6253
    %v6255 = vpop.f32.mrf.mxu0
    %v6256 = vpop.f32.mrf.mxu0
    %v6257 = vadd.f32 0.0, %v6256
    %v6258 = vpop.f32.mrf.mxu0
    %6259 = vdwg.mxu0
    %v6261 = vsel %vm3522, %v4977, 0
    %v6264 = vsel %vm3522, %v4978, 0
    %6266 = vmatprep.subr.bf16.mxu0 0
    %6267 = vmatpush1.bf16.msra.mxu0 0
    %6268 = vmatprep.subr.bf16.mxu0 0
    %6269 = vmatpush1.bf16.msra.mxu0 0
    %6270 = vmatprep.subr.bf16.mxu0 0
    %6271 = vmatpush1.bf16.msra.mxu0 0
    %6272 = vmatprep.subr.bf16.mxu0 0
    %6273 = vmatpush1.bf16.msra.mxu0 0
    %6274 = vmatprep.subr.bf16.mxu0 0
    %6275 = vmatpush1.bf16.msra.mxu0 0
    %6276 = vmatprep.subr.bf16.mxu0 0
    %6277 = vmatpush1.bf16.msra.mxu0 0
    %6278 = vmatprep.subr.bf16.mxu0 0
    %6279 = vmatpush1.bf16.msra.mxu0 %v1213
    %6280 = vmatprep.subr.bf16.mxu0 0
    %6281 = vmatpush1.bf16.msra.mxu0 %v1212
    %6282 = vmatprep.subr.bf16.mxu0 0
    %6283 = vmatpush2.bf16.msra.mxu0 0
    %6284 = vmatprep.subr.bf16.mxu0 0
    %6285 = vmatpush2.bf16.msra.mxu0 0
    %6286 = vmatprep.subr.bf16.mxu0 0
    %6287 = vmatpush2.bf16.msra.mxu0 0
    %6288 = vmatprep.subr.bf16.mxu0 0
    %6289 = vmatpush2.bf16.msra.mxu0 0
    %6290 = vmatprep.subr.bf16.mxu0 0
    %6291 = vmatpush2.bf16.msra.mxu0 0
    %6292 = vmatprep.subr.bf16.mxu0 0
    %6293 = vmatpush2.bf16.msra.mxu0 0
    %6294 = vmatprep.subr.bf16.mxu0 0
    %6295 = vmatpush2.bf16.msra.mxu0 0
    %6296 = vmatprep.subr.bf16.mxu0 0
    %6297 = vmatpush2.bf16.msra.mxu0 0
    %6298 = vmatprep.mubr.bf16.mxu0 0
    %6299 = vmatmul.mubr.bf16.gmra.mxu0 %v6261
    %v6300 = vpop.f32.mrf.mxu0
    %v6301 = vadd.f32 0.0, %v6300
    %v6302 = vpop.f32.mrf.mxu0
    %v6303 = vpop.f32.mrf.mxu0
    %v6304 = vadd.f32 0.0, %v6303
    %v6305 = vpop.f32.mrf.mxu0
    %6306 = vmatprep.mubr.bf16.mxu0 0
    %6307 = vmatmul.mubr.bf16.gmra.mxu0 %v6264
    %v6308 = vpop.f32.mrf.mxu0
    %v6309 = vadd.f32 0.0, %v6308
    %v6310 = vpop.f32.mrf.mxu0
    %v6311 = vpop.f32.mrf.mxu0
    %v6312 = vadd.f32 0.0, %v6311
    %v6313 = vpop.f32.mrf.mxu0
    %6314 = vdwg.mxu0
    %v6316 = vsel %vm3522, %v4979, 0
    %v6319 = vsel %vm3522, %v4980, 0
    %6321 = vmatprep.subr.bf16.mxu0 0
    %6322 = vmatpush1.bf16.msra.mxu0 0
    %6323 = vmatprep.subr.bf16.mxu0 0
    %6324 = vmatpush1.bf16.msra.mxu0 0
    %6325 = vmatprep.subr.bf16.mxu0 0
    %6326 = vmatpush1.bf16.msra.mxu0 0
    %6327 = vmatprep.subr.bf16.mxu0 0
    %6328 = vmatpush1.bf16.msra.mxu0 0
    %6329 = vmatprep.subr.bf16.mxu0 0
    %6330 = vmatpush1.bf16.msra.mxu0 0
    %6331 = vmatprep.subr.bf16.mxu0 0
    %6332 = vmatpush1.bf16.msra.mxu0 0
    %6333 = vmatprep.subr.bf16.mxu0 0
    %6334 = vmatpush1.bf16.msra.mxu0 %v1215
    %6335 = vmatprep.subr.bf16.mxu0 0
    %6336 = vmatpush1.bf16.msra.mxu0 %v1214
    %6337 = vmatprep.subr.bf16.mxu0 0
    %6338 = vmatpush2.bf16.msra.mxu0 0
    %6339 = vmatprep.subr.bf16.mxu0 0
    %6340 = vmatpush2.bf16.msra.mxu0 0
    %6341 = vmatprep.subr.bf16.mxu0 0
    %6342 = vmatpush2.bf16.msra.mxu0 0
    %6343 = vmatprep.subr.bf16.mxu0 0
    %6344 = vmatpush2.bf16.msra.mxu0 0
    %6345 = vmatprep.subr.bf16.mxu0 0
    %6346 = vmatpush2.bf16.msra.mxu0 0
    %6347 = vmatprep.subr.bf16.mxu0 0
    %6348 = vmatpush2.bf16.msra.mxu0 0
    %6349 = vmatprep.subr.bf16.mxu0 0
    %6350 = vmatpush2.bf16.msra.mxu0 0
    %6351 = vmatprep.subr.bf16.mxu0 0
    %6352 = vmatpush2.bf16.msra.mxu0 0
    %6353 = vmatprep.mubr.bf16.mxu0 0
    %6354 = vmatmul.mubr.bf16.gmra.mxu0 %v6316
    %v6355 = vpop.f32.mrf.mxu0
    %v6356 = vadd.f32 0.0, %v6355
    %v6357 = vpop.f32.mrf.mxu0
    %v6358 = vpop.f32.mrf.mxu0
    %v6359 = vadd.f32 0.0, %v6358
    %v6360 = vpop.f32.mrf.mxu0
    %6361 = vmatprep.mubr.bf16.mxu0 0
    %6362 = vmatmul.mubr.bf16.gmra.mxu0 %v6319
    %v6363 = vpop.f32.mrf.mxu0
    %v6364 = vadd.f32 0.0, %v6363
    %v6365 = vpop.f32.mrf.mxu0
    %v6366 = vpop.f32.mrf.mxu0
    %v6367 = vadd.f32 0.0, %v6366
    %v6368 = vpop.f32.mrf.mxu0
    %6369 = vdwg.mxu0
    %v6371 = vsel %vm3522, %v4981, 0
    %v6374 = vsel %vm3522, %v4982, 0
    %6376 = vmatprep.subr.bf16.mxu0 0
    %6377 = vmatpush1.bf16.msra.mxu0 0
    %6378 = vmatprep.subr.bf16.mxu0 0
    %6379 = vmatpush1.bf16.msra.mxu0 0
    %6380 = vmatprep.subr.bf16.mxu0 0
    %6381 = vmatpush1.bf16.msra.mxu0 0
    %6382 = vmatprep.subr.bf16.mxu0 0
    %6383 = vmatpush1.bf16.msra.mxu0 0
    %6384 = vmatprep.subr.bf16.mxu0 0
    %6385 = vmatpush1.bf16.msra.mxu0 0
    %6386 = vmatprep.subr.bf16.mxu0 0
    %6387 = vmatpush1.bf16.msra.mxu0 0
    %6388 = vmatprep.subr.bf16.mxu0 0
    %6389 = vmatpush1.bf16.msra.mxu0 %v1217
    %6390 = vmatprep.subr.bf16.mxu0 0
    %6391 = vmatpush1.bf16.msra.mxu0 %v1216
    %6392 = vmatprep.subr.bf16.mxu0 0
    %6393 = vmatpush2.bf16.msra.mxu0 0
    %6394 = vmatprep.subr.bf16.mxu0 0
    %6395 = vmatpush2.bf16.msra.mxu0 0
    %6396 = vmatprep.subr.bf16.mxu0 0
    %6397 = vmatpush2.bf16.msra.mxu0 0
    %6398 = vmatprep.subr.bf16.mxu0 0
    %6399 = vmatpush2.bf16.msra.mxu0 0
    %6400 = vmatprep.subr.bf16.mxu0 0
    %6401 = vmatpush2.bf16.msra.mxu0 0
    %6402 = vmatprep.subr.bf16.mxu0 0
    %6403 = vmatpush2.bf16.msra.mxu0 0
    %6404 = vmatprep.subr.bf16.mxu0 0
    %6405 = vmatpush2.bf16.msra.mxu0 0
    %6406 = vmatprep.subr.bf16.mxu0 0
    %6407 = vmatpush2.bf16.msra.mxu0 0
    %6408 = vmatprep.mubr.bf16.mxu0 0
    %6409 = vmatmul.mubr.bf16.gmra.mxu0 %v6371
    %v6410 = vpop.f32.mrf.mxu0
    %v6411 = vadd.f32 0.0, %v6410
    %v6412 = vpop.f32.mrf.mxu0
    %v6413 = vpop.f32.mrf.mxu0
    %v6414 = vadd.f32 0.0, %v6413
    %v6415 = vpop.f32.mrf.mxu0
    %6416 = vmatprep.mubr.bf16.mxu0 0
    %6417 = vmatmul.mubr.bf16.gmra.mxu0 %v6374
    %v6418 = vpop.f32.mrf.mxu0
    %v6419 = vadd.f32 0.0, %v6418
    %v6420 = vpop.f32.mrf.mxu0
    %v6421 = vpop.f32.mrf.mxu0
    %v6422 = vadd.f32 0.0, %v6421
    %v6423 = vpop.f32.mrf.mxu0
    %6424 = vdwg.mxu0
    %v6426 = vsel %vm3522, %v4983, 0
    %v6429 = vsel %vm3522, %v4984, 0
    %6431 = vmatprep.subr.bf16.mxu0 0
    %6432 = vmatpush1.bf16.msra.mxu0 0
    %6433 = vmatprep.subr.bf16.mxu0 0
    %6434 = vmatpush1.bf16.msra.mxu0 0
    %6435 = vmatprep.subr.bf16.mxu0 0
    %6436 = vmatpush1.bf16.msra.mxu0 0
    %6437 = vmatprep.subr.bf16.mxu0 0
    %6438 = vmatpush1.bf16.msra.mxu0 0
    %6439 = vmatprep.subr.bf16.mxu0 0
    %6440 = vmatpush1.bf16.msra.mxu0 0
    %6441 = vmatprep.subr.bf16.mxu0 0
    %6442 = vmatpush1.bf16.msra.mxu0 0
    %6443 = vmatprep.subr.bf16.mxu0 0
    %6444 = vmatpush1.bf16.msra.mxu0 %v1219
    %6445 = vmatprep.subr.bf16.mxu0 0
    %6446 = vmatpush1.bf16.msra.mxu0 %v1218
    %6447 = vmatprep.subr.bf16.mxu0 0
    %6448 = vmatpush2.bf16.msra.mxu0 0
    %6449 = vmatprep.subr.bf16.mxu0 0
    %6450 = vmatpush2.bf16.msra.mxu0 0
    %6451 = vmatprep.subr.bf16.mxu0 0
    %6452 = vmatpush2.bf16.msra.mxu0 0
    %6453 = vmatprep.subr.bf16.mxu0 0
    %6454 = vmatpush2.bf16.msra.mxu0 0
    %6455 = vmatprep.subr.bf16.mxu0 0
    %6456 = vmatpush2.bf16.msra.mxu0 0
    %6457 = vmatprep.subr.bf16.mxu0 0
    %6458 = vmatpush2.bf16.msra.mxu0 0
    %6459 = vmatprep.subr.bf16.mxu0 0
    %6460 = vmatpush2.bf16.msra.mxu0 0
    %6461 = vmatprep.subr.bf16.mxu0 0
    %6462 = vmatpush2.bf16.msra.mxu0 0
    %6463 = vmatprep.mubr.bf16.mxu0 0
    %6464 = vmatmul.mubr.bf16.gmra.mxu0 %v6426
    %v6465 = vpop.f32.mrf.mxu0
    %v6466 = vadd.f32 0.0, %v6465
    %v6467 = vpop.f32.mrf.mxu0
    %v6468 = vpop.f32.mrf.mxu0
    %v6469 = vadd.f32 0.0, %v6468
    %v6470 = vpop.f32.mrf.mxu0
    %6471 = vmatprep.mubr.bf16.mxu0 0
    %6472 = vmatmul.mubr.bf16.gmra.mxu0 %v6429
    %v6473 = vpop.f32.mrf.mxu0
    %v6474 = vadd.f32 0.0, %v6473
    %v6475 = vpop.f32.mrf.mxu0
    %v6476 = vpop.f32.mrf.mxu0
    %v6477 = vadd.f32 0.0, %v6476
    %v6478 = vpop.f32.mrf.mxu0
    %6479 = vdwg.mxu0
    %v6481 = vsel %vm3522, %v4985, 0
    %v6484 = vsel %vm3522, %v4986, 0
    %6486 = vmatprep.subr.bf16.mxu0 0
    %6487 = vmatpush1.bf16.msra.mxu0 0
    %6488 = vmatprep.subr.bf16.mxu0 0
    %6489 = vmatpush1.bf16.msra.mxu0 0
    %6490 = vmatprep.subr.bf16.mxu0 0
    %6491 = vmatpush1.bf16.msra.mxu0 0
    %6492 = vmatprep.subr.bf16.mxu0 0
    %6493 = vmatpush1.bf16.msra.mxu0 0
    %6494 = vmatprep.subr.bf16.mxu0 0
    %6495 = vmatpush1.bf16.msra.mxu0 0
    %6496 = vmatprep.subr.bf16.mxu0 0
    %6497 = vmatpush1.bf16.msra.mxu0 0
    %6498 = vmatprep.subr.bf16.mxu0 0
    %6499 = vmatpush1.bf16.msra.mxu0 %v1221
    %6500 = vmatprep.subr.bf16.mxu0 0
    %6501 = vmatpush1.bf16.msra.mxu0 %v1220
    %6502 = vmatprep.subr.bf16.mxu0 0
    %6503 = vmatpush2.bf16.msra.mxu0 0
    %6504 = vmatprep.subr.bf16.mxu0 0
    %6505 = vmatpush2.bf16.msra.mxu0 0
    %6506 = vmatprep.subr.bf16.mxu0 0
    %6507 = vmatpush2.bf16.msra.mxu0 0
    %6508 = vmatprep.subr.bf16.mxu0 0
    %6509 = vmatpush2.bf16.msra.mxu0 0
    %6510 = vmatprep.subr.bf16.mxu0 0
    %6511 = vmatpush2.bf16.msra.mxu0 0
    %6512 = vmatprep.subr.bf16.mxu0 0
    %6513 = vmatpush2.bf16.msra.mxu0 0
    %6514 = vmatprep.subr.bf16.mxu0 0
    %6515 = vmatpush2.bf16.msra.mxu0 0
    %6516 = vmatprep.subr.bf16.mxu0 0
    %6517 = vmatpush2.bf16.msra.mxu0 0
    %6518 = vmatprep.mubr.bf16.mxu0 0
    %6519 = vmatmul.mubr.bf16.gmra.mxu0 %v6481
    %v6520 = vpop.f32.mrf.mxu0
    %v6521 = vadd.f32 0.0, %v6520
    %v6522 = vpop.f32.mrf.mxu0
    %v6523 = vpop.f32.mrf.mxu0
    %v6524 = vadd.f32 0.0, %v6523
    %v6525 = vpop.f32.mrf.mxu0
    %6526 = vmatprep.mubr.bf16.mxu0 0
    %6527 = vmatmul.mubr.bf16.gmra.mxu0 %v6484
    %v6528 = vpop.f32.mrf.mxu0
    %v6529 = vadd.f32 0.0, %v6528
    %v6530 = vpop.f32.mrf.mxu0
    %v6531 = vpop.f32.mrf.mxu0
    %v6532 = vadd.f32 0.0, %v6531
    %v6533 = vpop.f32.mrf.mxu0
    %6534 = vdwg.mxu0
    %v6536 = vsel %vm3522, %v4987, 0
    %v6539 = vsel %vm3522, %v4988, 0
    %6541 = vmatprep.subr.bf16.mxu0 0
    %6542 = vmatpush1.bf16.msra.mxu0 0
    %6543 = vmatprep.subr.bf16.mxu0 0
    %6544 = vmatpush1.bf16.msra.mxu0 0
    %6545 = vmatprep.subr.bf16.mxu0 0
    %6546 = vmatpush1.bf16.msra.mxu0 0
    %6547 = vmatprep.subr.bf16.mxu0 0
    %6548 = vmatpush1.bf16.msra.mxu0 0
    %6549 = vmatprep.subr.bf16.mxu0 0
    %6550 = vmatpush1.bf16.msra.mxu0 0
    %6551 = vmatprep.subr.bf16.mxu0 0
    %6552 = vmatpush1.bf16.msra.mxu0 0
    %6553 = vmatprep.subr.bf16.mxu0 0
    %6554 = vmatpush1.bf16.msra.mxu0 %v1223
    %6555 = vmatprep.subr.bf16.mxu0 0
    %6556 = vmatpush1.bf16.msra.mxu0 %v1222
    %6557 = vmatprep.subr.bf16.mxu0 0
    %6558 = vmatpush2.bf16.msra.mxu0 0
    %6559 = vmatprep.subr.bf16.mxu0 0
    %6560 = vmatpush2.bf16.msra.mxu0 0
    %6561 = vmatprep.subr.bf16.mxu0 0
    %6562 = vmatpush2.bf16.msra.mxu0 0
    %6563 = vmatprep.subr.bf16.mxu0 0
    %6564 = vmatpush2.bf16.msra.mxu0 0
    %6565 = vmatprep.subr.bf16.mxu0 0
    %6566 = vmatpush2.bf16.msra.mxu0 0
    %6567 = vmatprep.subr.bf16.mxu0 0
    %6568 = vmatpush2.bf16.msra.mxu0 0
    %6569 = vmatprep.subr.bf16.mxu0 0
    %6570 = vmatpush2.bf16.msra.mxu0 0
    %6571 = vmatprep.subr.bf16.mxu0 0
    %6572 = vmatpush2.bf16.msra.mxu0 0
    %6573 = vmatprep.mubr.bf16.mxu0 0
    %6574 = vmatmul.mubr.bf16.gmra.mxu0 %v6536
    %v6575 = vpop.f32.mrf.mxu0
    %v6576 = vadd.f32 0.0, %v6575
    %v6577 = vpop.f32.mrf.mxu0
    %v6578 = vpop.f32.mrf.mxu0
    %v6579 = vadd.f32 0.0, %v6578
    %v6580 = vpop.f32.mrf.mxu0
    %6581 = vmatprep.mubr.bf16.mxu0 0
    %6582 = vmatmul.mubr.bf16.gmra.mxu0 %v6539
    %v6583 = vpop.f32.mrf.mxu0
    %v6584 = vadd.f32 0.0, %v6583
    %v6585 = vpop.f32.mrf.mxu0
    %v6586 = vpop.f32.mrf.mxu0
    %v6587 = vadd.f32 0.0, %v6586
    %v6588 = vpop.f32.mrf.mxu0
    %6589 = vdwg.mxu0
    %v6591 = vsel %vm3522, %v4989, 0
    %v6594 = vsel %vm3522, %v4990, 0
    %6596 = vmatprep.subr.bf16.mxu0 0
    %6597 = vmatpush1.bf16.msra.mxu0 0
    %6598 = vmatprep.subr.bf16.mxu0 0
    %6599 = vmatpush1.bf16.msra.mxu0 0
    %6600 = vmatprep.subr.bf16.mxu0 0
    %6601 = vmatpush1.bf16.msra.mxu0 0
    %6602 = vmatprep.subr.bf16.mxu0 0
    %6603 = vmatpush1.bf16.msra.mxu0 0
    %6604 = vmatprep.subr.bf16.mxu0 0
    %6605 = vmatpush1.bf16.msra.mxu0 0
    %6606 = vmatprep.subr.bf16.mxu0 0
    %6607 = vmatpush1.bf16.msra.mxu0 0
    %6608 = vmatprep.subr.bf16.mxu0 0
    %6609 = vmatpush1.bf16.msra.mxu0 %v1225
    %6610 = vmatprep.subr.bf16.mxu0 0
    %6611 = vmatpush1.bf16.msra.mxu0 %v1224
    %6612 = vmatprep.subr.bf16.mxu0 0
    %6613 = vmatpush2.bf16.msra.mxu0 0
    %6614 = vmatprep.subr.bf16.mxu0 0
    %6615 = vmatpush2.bf16.msra.mxu0 0
    %6616 = vmatprep.subr.bf16.mxu0 0
    %6617 = vmatpush2.bf16.msra.mxu0 0
    %6618 = vmatprep.subr.bf16.mxu0 0
    %6619 = vmatpush2.bf16.msra.mxu0 0
    %6620 = vmatprep.subr.bf16.mxu0 0
    %6621 = vmatpush2.bf16.msra.mxu0 0
    %6622 = vmatprep.subr.bf16.mxu0 0
    %6623 = vmatpush2.bf16.msra.mxu0 0
    %6624 = vmatprep.subr.bf16.mxu0 0
    %6625 = vmatpush2.bf16.msra.mxu0 0
    %6626 = vmatprep.subr.bf16.mxu0 0
    %6627 = vmatpush2.bf16.msra.mxu0 0
    %6628 = vmatprep.mubr.bf16.mxu0 0
    %6629 = vmatmul.mubr.bf16.gmra.mxu0 %v6591
    %v6630 = vpop.f32.mrf.mxu0
    %v6631 = vadd.f32 0.0, %v6630
    %v6632 = vpop.f32.mrf.mxu0
    %v6633 = vpop.f32.mrf.mxu0
    %v6634 = vadd.f32 0.0, %v6633
    %v6635 = vpop.f32.mrf.mxu0
    %6636 = vmatprep.mubr.bf16.mxu0 0
    %6637 = vmatmul.mubr.bf16.gmra.mxu0 %v6594
    %v6638 = vpop.f32.mrf.mxu0
    %v6639 = vadd.f32 0.0, %v6638
    %v6640 = vpop.f32.mrf.mxu0
    %v6641 = vpop.f32.mrf.mxu0
    %v6642 = vadd.f32 0.0, %v6641
    %v6643 = vpop.f32.mrf.mxu0
    %6644 = vdwg.mxu0
    %v6646 = vsel %vm3522, %v4991, 0
    %v6649 = vsel %vm3522, %v4992, 0
    %6651 = vmatprep.subr.bf16.mxu0 0
    %6652 = vmatpush1.bf16.msra.mxu0 0
    %6653 = vmatprep.subr.bf16.mxu0 0
    %6654 = vmatpush1.bf16.msra.mxu0 0
    %6655 = vmatprep.subr.bf16.mxu0 0
    %6656 = vmatpush1.bf16.msra.mxu0 0
    %6657 = vmatprep.subr.bf16.mxu0 0
    %6658 = vmatpush1.bf16.msra.mxu0 0
    %6659 = vmatprep.subr.bf16.mxu0 0
    %6660 = vmatpush1.bf16.msra.mxu0 0
    %6661 = vmatprep.subr.bf16.mxu0 0
    %6662 = vmatpush1.bf16.msra.mxu0 0
    %6663 = vmatprep.subr.bf16.mxu0 0
    %6664 = vmatpush1.bf16.msra.mxu0 %v1227
    %6665 = vmatprep.subr.bf16.mxu0 0
    %6666 = vmatpush1.bf16.msra.mxu0 %v1226
    %6667 = vmatprep.subr.bf16.mxu0 0
    %6668 = vmatpush2.bf16.msra.mxu0 0
    %6669 = vmatprep.subr.bf16.mxu0 0
    %6670 = vmatpush2.bf16.msra.mxu0 0
    %6671 = vmatprep.subr.bf16.mxu0 0
    %6672 = vmatpush2.bf16.msra.mxu0 0
    %6673 = vmatprep.subr.bf16.mxu0 0
    %6674 = vmatpush2.bf16.msra.mxu0 0
    %6675 = vmatprep.subr.bf16.mxu0 0
    %6676 = vmatpush2.bf16.msra.mxu0 0
    %6677 = vmatprep.subr.bf16.mxu0 0
    %6678 = vmatpush2.bf16.msra.mxu0 0
    %6679 = vmatprep.subr.bf16.mxu0 0
    %6680 = vmatpush2.bf16.msra.mxu0 0
    %6681 = vmatprep.subr.bf16.mxu0 0
    %6682 = vmatpush2.bf16.msra.mxu0 0
    %6683 = vmatprep.mubr.bf16.mxu0 0
    %6684 = vmatmul.mubr.bf16.gmra.mxu0 %v6646
    %v6685 = vpop.f32.mrf.mxu0
    %v6686 = vadd.f32 0.0, %v6685
    %v6687 = vpop.f32.mrf.mxu0
    %v6688 = vpop.f32.mrf.mxu0
    %v6689 = vadd.f32 0.0, %v6688
    %v6690 = vpop.f32.mrf.mxu0
    %6691 = vmatprep.mubr.bf16.mxu0 0
    %6692 = vmatmul.mubr.bf16.gmra.mxu0 %v6649
    %v6693 = vpop.f32.mrf.mxu0
    %v6694 = vadd.f32 0.0, %v6693
    %v6695 = vpop.f32.mrf.mxu0
    %v6696 = vpop.f32.mrf.mxu0
    %v6697 = vadd.f32 0.0, %v6696
    %v6698 = vpop.f32.mrf.mxu0
    %6699 = vdwg.mxu0
    %v6701 = vsel %vm3522, %v4993, 0
    %v6704 = vsel %vm3522, %v4994, 0
    %6706 = vmatprep.subr.bf16.mxu0 0
    %6707 = vmatpush1.bf16.msra.mxu0 0
    %6708 = vmatprep.subr.bf16.mxu0 0
    %6709 = vmatpush1.bf16.msra.mxu0 0
    %6710 = vmatprep.subr.bf16.mxu0 0
    %6711 = vmatpush1.bf16.msra.mxu0 0
    %6712 = vmatprep.subr.bf16.mxu0 0
    %6713 = vmatpush1.bf16.msra.mxu0 0
    %6714 = vmatprep.subr.bf16.mxu0 0
    %6715 = vmatpush1.bf16.msra.mxu0 0
    %6716 = vmatprep.subr.bf16.mxu0 0
    %6717 = vmatpush1.bf16.msra.mxu0 0
    %6718 = vmatprep.subr.bf16.mxu0 0
    %6719 = vmatpush1.bf16.msra.mxu0 %v1229
    %6720 = vmatprep.subr.bf16.mxu0 0
    %6721 = vmatpush1.bf16.msra.mxu0 %v1228
    %6722 = vmatprep.subr.bf16.mxu0 0
    %6723 = vmatpush2.bf16.msra.mxu0 0
    %6724 = vmatprep.subr.bf16.mxu0 0
    %6725 = vmatpush2.bf16.msra.mxu0 0
    %6726 = vmatprep.subr.bf16.mxu0 0
    %6727 = vmatpush2.bf16.msra.mxu0 0
    %6728 = vmatprep.subr.bf16.mxu0 0
    %6729 = vmatpush2.bf16.msra.mxu0 0
    %6730 = vmatprep.subr.bf16.mxu0 0
    %6731 = vmatpush2.bf16.msra.mxu0 0
    %6732 = vmatprep.subr.bf16.mxu0 0
    %6733 = vmatpush2.bf16.msra.mxu0 0
    %6734 = vmatprep.subr.bf16.mxu0 0
    %6735 = vmatpush2.bf16.msra.mxu0 0
    %6736 = vmatprep.subr.bf16.mxu0 0
    %6737 = vmatpush2.bf16.msra.mxu0 0
    %6738 = vmatprep.mubr.bf16.mxu0 0
    %6739 = vmatmul.mubr.bf16.gmra.mxu0 %v6701
    %v6740 = vpop.f32.mrf.mxu0
    %v6741 = vadd.f32 0.0, %v6740
    %v6742 = vpop.f32.mrf.mxu0
    %v6743 = vpop.f32.mrf.mxu0
    %v6744 = vadd.f32 0.0, %v6743
    %v6745 = vpop.f32.mrf.mxu0
    %6746 = vmatprep.mubr.bf16.mxu0 0
    %6747 = vmatmul.mubr.bf16.gmra.mxu0 %v6704
    %v6748 = vpop.f32.mrf.mxu0
    %v6749 = vadd.f32 0.0, %v6748
    %v6750 = vpop.f32.mrf.mxu0
    %v6751 = vpop.f32.mrf.mxu0
    %v6752 = vadd.f32 0.0, %v6751
    %v6753 = vpop.f32.mrf.mxu0
    %6754 = vdwg.mxu0
    %v6755 = vld [vmem:[%s3] sm:$0x1]
    %v6756 = vpack.c.bf16 %v5039, %v5036
    %v6757 = vpack.c.bf16 %v5047, %v5044
    %v6758 = vpack.c.bf16 %v5094, %v5091
    %v6759 = vpack.c.bf16 %v5102, %v5099
    %v6760 = vpack.c.bf16 %v5149, %v5146
    %v6761 = vpack.c.bf16 %v5157, %v5154
    %v6762 = vpack.c.bf16 %v5204, %v5201
    %v6763 = vpack.c.bf16 %v5212, %v5209
    %v6764 = vpack.c.bf16 %v5259, %v5256
    %v6765 = vpack.c.bf16 %v5267, %v5264
    %v6766 = vpack.c.bf16 %v5314, %v5311
    %v6767 = vpack.c.bf16 %v5322, %v5319
    %v6768 = vpack.c.bf16 %v5369, %v5366
    %v6769 = vpack.c.bf16 %v5377, %v5374
    %v6770 = vpack.c.bf16 %v5424, %v5421
    %v6771 = vpack.c.bf16 %v5432, %v5429
    %v6772 = vld [vmem:[#allocation7] sm:$0xf]
    %v6773 = vld [vmem:[#allocation7 + $0x4] sm:$0xf]
    %v6776 = vunpack.c.l.b16 %v6772
    %v6777 = vunpack.c.l.b16 %v6773
    %v6778 = vpack.c.b16 %v6777, %v6776
    %v6781 = vsel %vm1247, %v6756, 0
    %v6784 = vsel %vm1247, %v6757, 0
    %v6787 = vsel %vm1247, %v6758, 0
    %v6790 = vsel %vm1247, %v6759, 0
    %v6793 = vsel %vm1247, %v6760, 0
    %v6796 = vsel %vm1247, %v6761, 0
    %v6799 = vsel %vm1247, %v6762, 0
    %v6802 = vsel %vm1247, %v6763, 0
    %v6805 = vsel %vm1247, %v6764, 0
    %v6808 = vsel %vm1247, %v6765, 0
    %v6811 = vsel %vm1247, %v6766, 0
    %v6814 = vsel %vm1247, %v6767, 0
    %v6817 = vsel %vm1247, %v6768, 0
    %v6820 = vsel %vm1247, %v6769, 0
    %v6823 = vsel %vm1247, %v6770, 0
    %v6826 = vsel %vm1247, %v6771, 0
    %6828 = vmatprep.subr.bf16.mxu0 0
    %6829 = vmatpush1.bf16.msra.mxu0 0
    %6830 = vmatprep.subr.bf16.mxu0 0
    %6831 = vmatpush1.bf16.msra.mxu0 0
    %6832 = vmatprep.subr.bf16.mxu0 0
    %6833 = vmatpush1.bf16.msra.mxu0 0
    %6834 = vmatprep.subr.bf16.mxu0 0
    %6835 = vmatpush1.bf16.msra.mxu0 0
    %6836 = vmatprep.subr.bf16.mxu0 0
    %6837 = vmatpush1.bf16.msra.mxu0 0
    %6838 = vmatprep.subr.bf16.mxu0 0
    %6839 = vmatpush1.bf16.msra.mxu0 0
    %6840 = vmatprep.subr.bf16.mxu0 0
    %6841 = vmatpush1.bf16.msra.mxu0 0
    %6842 = vmatprep.subr.bf16.mxu0 0
    %6843 = vmatpush1.bf16.msra.mxu0 %v6778
    %6844 = vmatprep.subr.bf16.mxu0 0
    %6845 = vmatpush2.bf16.msra.mxu0 0
    %6846 = vmatprep.subr.bf16.mxu0 0
    %6847 = vmatpush2.bf16.msra.mxu0 0
    %6848 = vmatprep.subr.bf16.mxu0 0
    %6849 = vmatpush2.bf16.msra.mxu0 0
    %6850 = vmatprep.subr.bf16.mxu0 0
    %6851 = vmatpush2.bf16.msra.mxu0 0
    %6852 = vmatprep.subr.bf16.mxu0 0
    %6853 = vmatpush2.bf16.msra.mxu0 0
    %6854 = vmatprep.subr.bf16.mxu0 0
    %6855 = vmatpush2.bf16.msra.mxu0 0
    %6856 = vmatprep.subr.bf16.mxu0 0
    %6857 = vmatpush2.bf16.msra.mxu0 0
    %6858 = vmatprep.subr.bf16.mxu0 0
    %6859 = vmatpush2.bf16.msra.mxu0 0
    %6860 = vmatprep.mubr.bf16.mxu0 0
    %6861 = vmatmul.mubr.bf16.gmra.mxu0 %v6781
    %v6862 = vpop.f32.mrf.mxu0
    %v6863 = vadd.f32 0.0, %v6862
    %v6864 = vpop.f32.mrf.mxu0
    %v6865 = vpop.f32.mrf.mxu0
    %v6866 = vadd.f32 0.0, %v6865
    %v6867 = vpop.f32.mrf.mxu0
    %6868 = vmatprep.mubr.bf16.mxu0 0
    %6869 = vmatmul.mubr.bf16.gmra.mxu0 %v6784
    %v6870 = vpop.f32.mrf.mxu0
    %v6871 = vadd.f32 0.0, %v6870
    %v6872 = vpop.f32.mrf.mxu0
    %v6873 = vpop.f32.mrf.mxu0
    %v6874 = vadd.f32 0.0, %v6873
    %v6875 = vpop.f32.mrf.mxu0
    %6876 = vmatprep.mubr.bf16.mxu0 0
    %6877 = vmatmul.mubr.bf16.gmra.mxu0 %v6787
    %v6878 = vpop.f32.mrf.mxu0
    %v6879 = vadd.f32 0.0, %v6878
    %v6880 = vpop.f32.mrf.mxu0
    %v6881 = vpop.f32.mrf.mxu0
    %v6882 = vadd.f32 0.0, %v6881
    %v6883 = vpop.f32.mrf.mxu0
    %6884 = vmatprep.mubr.bf16.mxu0 0
    %6885 = vmatmul.mubr.bf16.gmra.mxu0 %v6790
    %v6886 = vpop.f32.mrf.mxu0
    %v6887 = vadd.f32 0.0, %v6886
    %v6888 = vpop.f32.mrf.mxu0
    %v6889 = vpop.f32.mrf.mxu0
    %v6890 = vadd.f32 0.0, %v6889
    %v6891 = vpop.f32.mrf.mxu0
    %6892 = vmatprep.mubr.bf16.mxu0 0
    %6893 = vmatmul.mubr.bf16.gmra.mxu0 %v6793
    %v6894 = vpop.f32.mrf.mxu0
    %v6895 = vadd.f32 0.0, %v6894
    %v6896 = vpop.f32.mrf.mxu0
    %v6897 = vpop.f32.mrf.mxu0
    %v6898 = vadd.f32 0.0, %v6897
    %v6899 = vpop.f32.mrf.mxu0
    %6900 = vmatprep.mubr.bf16.mxu0 0
    %6901 = vmatmul.mubr.bf16.gmra.mxu0 %v6796
    %v6902 = vpop.f32.mrf.mxu0
    %v6903 = vadd.f32 0.0, %v6902
    %v6904 = vpop.f32.mrf.mxu0
    %v6905 = vpop.f32.mrf.mxu0
    %v6906 = vadd.f32 0.0, %v6905
    %v6907 = vpop.f32.mrf.mxu0
    %6908 = vmatprep.mubr.bf16.mxu0 0
    %6909 = vmatmul.mubr.bf16.gmra.mxu0 %v6799
    %v6910 = vpop.f32.mrf.mxu0
    %v6911 = vadd.f32 0.0, %v6910
    %v6912 = vpop.f32.mrf.mxu0
    %v6913 = vpop.f32.mrf.mxu0
    %v6914 = vadd.f32 0.0, %v6913
    %v6915 = vpop.f32.mrf.mxu0
    %6916 = vmatprep.mubr.bf16.mxu0 0
    %6917 = vmatmul.mubr.bf16.gmra.mxu0 %v6802
    %v6918 = vpop.f32.mrf.mxu0
    %v6919 = vadd.f32 0.0, %v6918
    %v6920 = vpop.f32.mrf.mxu0
    %v6921 = vpop.f32.mrf.mxu0
    %v6922 = vadd.f32 0.0, %v6921
    %v6923 = vpop.f32.mrf.mxu0
    %6924 = vmatprep.mubr.bf16.mxu0 0
    %6925 = vmatmul.mubr.bf16.gmra.mxu0 %v6805
    %v6926 = vpop.f32.mrf.mxu0
    %v6927 = vadd.f32 0.0, %v6926
    %v6928 = vpop.f32.mrf.mxu0
    %v6929 = vpop.f32.mrf.mxu0
    %v6930 = vadd.f32 0.0, %v6929
    %v6931 = vpop.f32.mrf.mxu0
    %6932 = vmatprep.mubr.bf16.mxu0 0
    %6933 = vmatmul.mubr.bf16.gmra.mxu0 %v6808
    %v6934 = vpop.f32.mrf.mxu0
    %v6935 = vadd.f32 0.0, %v6934
    %v6936 = vpop.f32.mrf.mxu0
    %v6937 = vpop.f32.mrf.mxu0
    %v6938 = vadd.f32 0.0, %v6937
    %v6939 = vpop.f32.mrf.mxu0
    %6940 = vmatprep.mubr.bf16.mxu0 0
    %6941 = vmatmul.mubr.bf16.gmra.mxu0 %v6811
    %v6942 = vpop.f32.mrf.mxu0
    %v6943 = vadd.f32 0.0, %v6942
    %v6944 = vpop.f32.mrf.mxu0
    %v6945 = vpop.f32.mrf.mxu0
    %v6946 = vadd.f32 0.0, %v6945
    %v6947 = vpop.f32.mrf.mxu0
    %6948 = vmatprep.mubr.bf16.mxu0 0
    %6949 = vmatmul.mubr.bf16.gmra.mxu0 %v6814
    %v6950 = vpop.f32.mrf.mxu0
    %v6951 = vadd.f32 0.0, %v6950
    %v6952 = vpop.f32.mrf.mxu0
    %v6953 = vpop.f32.mrf.mxu0
    %v6954 = vadd.f32 0.0, %v6953
    %v6955 = vpop.f32.mrf.mxu0
    %6956 = vmatprep.mubr.bf16.mxu0 0
    %6957 = vmatmul.mubr.bf16.gmra.mxu0 %v6817
    %v6958 = vpop.f32.mrf.mxu0
    %v6959 = vadd.f32 0.0, %v6958
    %v6960 = vpop.f32.mrf.mxu0
    %v6961 = vpop.f32.mrf.mxu0
    %v6962 = vadd.f32 0.0, %v6961
    %v6963 = vpop.f32.mrf.mxu0
    %6964 = vmatprep.mubr.bf16.mxu0 0
    %6965 = vmatmul.mubr.bf16.gmra.mxu0 %v6820
    %v6966 = vpop.f32.mrf.mxu0
    %v6967 = vadd.f32 0.0, %v6966
    %v6968 = vpop.f32.mrf.mxu0
    %v6969 = vpop.f32.mrf.mxu0
    %v6970 = vadd.f32 0.0, %v6969
    %v6971 = vpop.f32.mrf.mxu0
    %6972 = vmatprep.mubr.bf16.mxu0 0
    %6973 = vmatmul.mubr.bf16.gmra.mxu0 %v6823
    %v6974 = vpop.f32.mrf.mxu0
    %v6975 = vadd.f32 0.0, %v6974
    %v6976 = vpop.f32.mrf.mxu0
    %v6977 = vpop.f32.mrf.mxu0
    %v6978 = vadd.f32 0.0, %v6977
    %v6979 = vpop.f32.mrf.mxu0
    %6980 = vmatprep.mubr.bf16.mxu0 0
    %6981 = vmatmul.mubr.bf16.gmra.mxu0 %v6826
    %v6982 = vpop.f32.mrf.mxu0
    %v6983 = vadd.f32 0.0, %v6982
    %v6984 = vpop.f32.mrf.mxu0
    %v6985 = vpop.f32.mrf.mxu0
    %v6986 = vadd.f32 0.0, %v6985
    %v6987 = vpop.f32.mrf.mxu0
    %6988 = vdwg.mxu0
    %v6990 = vlaneseq
    %v6991 = vshrl.u32 %v6990, 7
    %v6992 = vsub.s32 0, %v6991
    %v6993 = vrot.slane %v6755, %v6992
    %v6995 = vadd.f32 %v6993, %v6863
    %v6996 = vadd.f32 %v6993, %v6866
    %v6997 = vadd.f32 %v6993, %v6871
    %v6998 = vadd.f32 %v6993, %v6874
    %v6999 = vadd.f32 %v6993, %v6879
    %v7000 = vadd.f32 %v6993, %v6882
    %v7001 = vadd.f32 %v6993, %v6887
    %v7002 = vadd.f32 %v6993, %v6890
    %v7003 = vadd.f32 %v6993, %v6895
    %v7004 = vadd.f32 %v6993, %v6898
    %v7005 = vadd.f32 %v6993, %v6903
    %v7006 = vadd.f32 %v6993, %v6906
    %v7007 = vadd.f32 %v6993, %v6911
    %v7008 = vadd.f32 %v6993, %v6914
    %v7009 = vadd.f32 %v6993, %v6919
    %v7010 = vadd.f32 %v6993, %v6922
    %v7011 = vadd.f32 %v6993, %v6927
    %v7012 = vadd.f32 %v6993, %v6930
    %v7013 = vadd.f32 %v6993, %v6935
    %v7014 = vadd.f32 %v6993, %v6938
    %v7015 = vadd.f32 %v6993, %v6943
    %v7016 = vadd.f32 %v6993, %v6946
    %v7017 = vadd.f32 %v6993, %v6951
    %v7018 = vadd.f32 %v6993, %v6954
    %v7019 = vadd.f32 %v6993, %v6959
    %v7020 = vadd.f32 %v6993, %v6962
    %v7021 = vadd.f32 %v6993, %v6967
    %v7022 = vadd.f32 %v6993, %v6970
    %v7023 = vadd.f32 %v6993, %v6975
    %v7024 = vadd.f32 %v6993, %v6978
    %v7025 = vadd.f32 %v6993, %v6983
    %v7026 = vadd.f32 %v6993, %v6986
    %v7027 = vpack.c.bf16 %v5479, %v5476
    %v7028 = vpack.c.bf16 %v5487, %v5484
    %v7029 = vpack.c.bf16 %v5534, %v5531
    %v7030 = vpack.c.bf16 %v5542, %v5539
    %v7031 = vpack.c.bf16 %v5589, %v5586
    %v7032 = vpack.c.bf16 %v5597, %v5594
    %v7033 = vpack.c.bf16 %v5644, %v5641
    %v7034 = vpack.c.bf16 %v5652, %v5649
    %v7035 = vpack.c.bf16 %v5699, %v5696
    %v7036 = vpack.c.bf16 %v5707, %v5704
    %v7037 = vpack.c.bf16 %v5754, %v5751
    %v7038 = vpack.c.bf16 %v5762, %v5759
    %v7039 = vpack.c.bf16 %v5809, %v5806
    %v7040 = vpack.c.bf16 %v5817, %v5814
    %v7041 = vpack.c.bf16 %v5864, %v5861
    %v7042 = vpack.c.bf16 %v5872, %v5869
    %v7043 = vld [vmem:[#allocation7 + $0x8] sm:$0xf]
    %v7044 = vld [vmem:[#allocation7 + $0xc] sm:$0xf]
    %v7047 = vunpack.c.l.b16 %v7043
    %v7048 = vunpack.c.l.b16 %v7044
    %v7049 = vpack.c.b16 %v7048, %v7047
    %v7052 = vsel %vm1247, %v7027, 0
    %v7055 = vsel %vm1247, %v7028, 0
    %v7058 = vsel %vm1247, %v7029, 0
    %v7061 = vsel %vm1247, %v7030, 0
    %v7064 = vsel %vm1247, %v7031, 0
    %v7067 = vsel %vm1247, %v7032, 0
    %v7070 = vsel %vm1247, %v7033, 0
    %v7073 = vsel %vm1247, %v7034, 0
    %v7076 = vsel %vm1247, %v7035, 0
    %v7079 = vsel %vm1247, %v7036, 0
    %v7082 = vsel %vm1247, %v7037, 0
    %v7085 = vsel %vm1247, %v7038, 0
    %v7088 = vsel %vm1247, %v7039, 0
    %v7091 = vsel %vm1247, %v7040, 0
    %v7094 = vsel %vm1247, %v7041, 0
    %v7097 = vsel %vm1247, %v7042, 0
    %7099 = vmatprep.subr.bf16.mxu0 0
    %7100 = vmatpush1.bf16.msra.mxu0 0
    %7101 = vmatprep.subr.bf16.mxu0 0
    %7102 = vmatpush1.bf16.msra.mxu0 0
    %7103 = vmatprep.subr.bf16.mxu0 0
    %7104 = vmatpush1.bf16.msra.mxu0 0
    %7105 = vmatprep.subr.bf16.mxu0 0
    %7106 = vmatpush1.bf16.msra.mxu0 0
    %7107 = vmatprep.subr.bf16.mxu0 0
    %7108 = vmatpush1.bf16.msra.mxu0 0
    %7109 = vmatprep.subr.bf16.mxu0 0
    %7110 = vmatpush1.bf16.msra.mxu0 0
    %7111 = vmatprep.subr.bf16.mxu0 0
    %7112 = vmatpush1.bf16.msra.mxu0 0
    %7113 = vmatprep.subr.bf16.mxu0 0
    %7114 = vmatpush1.bf16.msra.mxu0 %v7049
    %7115 = vmatprep.subr.bf16.mxu0 0
    %7116 = vmatpush2.bf16.msra.mxu0 0
    %7117 = vmatprep.subr.bf16.mxu0 0
    %7118 = vmatpush2.bf16.msra.mxu0 0
    %7119 = vmatprep.subr.bf16.mxu0 0
    %7120 = vmatpush2.bf16.msra.mxu0 0
    %7121 = vmatprep.subr.bf16.mxu0 0
    %7122 = vmatpush2.bf16.msra.mxu0 0
    %7123 = vmatprep.subr.bf16.mxu0 0
    %7124 = vmatpush2.bf16.msra.mxu0 0
    %7125 = vmatprep.subr.bf16.mxu0 0
    %7126 = vmatpush2.bf16.msra.mxu0 0
    %7127 = vmatprep.subr.bf16.mxu0 0
    %7128 = vmatpush2.bf16.msra.mxu0 0
    %7129 = vmatprep.subr.bf16.mxu0 0
    %7130 = vmatpush2.bf16.msra.mxu0 0
    %7131 = vmatprep.mubr.bf16.mxu0 0
    %7132 = vmatmul.mubr.bf16.gmra.mxu0 %v7052
    %v7133 = vpop.f32.mrf.mxu0
    %v7134 = vadd.f32 0.0, %v7133
    %v7135 = vpop.f32.mrf.mxu0
    %v7136 = vpop.f32.mrf.mxu0
    %v7137 = vadd.f32 0.0, %v7136
    %v7138 = vpop.f32.mrf.mxu0
    %7139 = vmatprep.mubr.bf16.mxu0 0
    %7140 = vmatmul.mubr.bf16.gmra.mxu0 %v7055
    %v7141 = vpop.f32.mrf.mxu0
    %v7142 = vadd.f32 0.0, %v7141
    %v7143 = vpop.f32.mrf.mxu0
    %v7144 = vpop.f32.mrf.mxu0
    %v7145 = vadd.f32 0.0, %v7144
    %v7146 = vpop.f32.mrf.mxu0
    %7147 = vmatprep.mubr.bf16.mxu0 0
    %7148 = vmatmul.mubr.bf16.gmra.mxu0 %v7058
    %v7149 = vpop.f32.mrf.mxu0
    %v7150 = vadd.f32 0.0, %v7149
    %v7151 = vpop.f32.mrf.mxu0
    %v7152 = vpop.f32.mrf.mxu0
    %v7153 = vadd.f32 0.0, %v7152
    %v7154 = vpop.f32.mrf.mxu0
    %7155 = vmatprep.mubr.bf16.mxu0 0
    %7156 = vmatmul.mubr.bf16.gmra.mxu0 %v7061
    %v7157 = vpop.f32.mrf.mxu0
    %v7158 = vadd.f32 0.0, %v7157
    %v7159 = vpop.f32.mrf.mxu0
    %v7160 = vpop.f32.mrf.mxu0
    %v7161 = vadd.f32 0.0, %v7160
    %v7162 = vpop.f32.mrf.mxu0
    %7163 = vmatprep.mubr.bf16.mxu0 0
    %7164 = vmatmul.mubr.bf16.gmra.mxu0 %v7064
    %v7165 = vpop.f32.mrf.mxu0
    %v7166 = vadd.f32 0.0, %v7165
    %v7167 = vpop.f32.mrf.mxu0
    %v7168 = vpop.f32.mrf.mxu0
    %v7169 = vadd.f32 0.0, %v7168
    %v7170 = vpop.f32.mrf.mxu0
    %7171 = vmatprep.mubr.bf16.mxu0 0
    %7172 = vmatmul.mubr.bf16.gmra.mxu0 %v7067
    %v7173 = vpop.f32.mrf.mxu0
    %v7174 = vadd.f32 0.0, %v7173
    %v7175 = vpop.f32.mrf.mxu0
    %v7176 = vpop.f32.mrf.mxu0
    %v7177 = vadd.f32 0.0, %v7176
    %v7178 = vpop.f32.mrf.mxu0
    %7179 = vmatprep.mubr.bf16.mxu0 0
    %7180 = vmatmul.mubr.bf16.gmra.mxu0 %v7070
    %v7181 = vpop.f32.mrf.mxu0
    %v7182 = vadd.f32 0.0, %v7181
    %v7183 = vpop.f32.mrf.mxu0
    %v7184 = vpop.f32.mrf.mxu0
    %v7185 = vadd.f32 0.0, %v7184
    %v7186 = vpop.f32.mrf.mxu0
    %7187 = vmatprep.mubr.bf16.mxu0 0
    %7188 = vmatmul.mubr.bf16.gmra.mxu0 %v7073
    %v7189 = vpop.f32.mrf.mxu0
    %v7190 = vadd.f32 0.0, %v7189
    %v7191 = vpop.f32.mrf.mxu0
    %v7192 = vpop.f32.mrf.mxu0
    %v7193 = vadd.f32 0.0, %v7192
    %v7194 = vpop.f32.mrf.mxu0
    %7195 = vmatprep.mubr.bf16.mxu0 0
    %7196 = vmatmul.mubr.bf16.gmra.mxu0 %v7076
    %v7197 = vpop.f32.mrf.mxu0
    %v7198 = vadd.f32 0.0, %v7197
    %v7199 = vpop.f32.mrf.mxu0
    %v7200 = vpop.f32.mrf.mxu0
    %v7201 = vadd.f32 0.0, %v7200
    %v7202 = vpop.f32.mrf.mxu0
    %7203 = vmatprep.mubr.bf16.mxu0 0
    %7204 = vmatmul.mubr.bf16.gmra.mxu0 %v7079
    %v7205 = vpop.f32.mrf.mxu0
    %v7206 = vadd.f32 0.0, %v7205
    %v7207 = vpop.f32.mrf.mxu0
    %v7208 = vpop.f32.mrf.mxu0
    %v7209 = vadd.f32 0.0, %v7208
    %v7210 = vpop.f32.mrf.mxu0
    %7211 = vmatprep.mubr.bf16.mxu0 0
    %7212 = vmatmul.mubr.bf16.gmra.mxu0 %v7082
    %v7213 = vpop.f32.mrf.mxu0
    %v7214 = vadd.f32 0.0, %v7213
    %v7215 = vpop.f32.mrf.mxu0
    %v7216 = vpop.f32.mrf.mxu0
    %v7217 = vadd.f32 0.0, %v7216
    %v7218 = vpop.f32.mrf.mxu0
    %7219 = vmatprep.mubr.bf16.mxu0 0
    %7220 = vmatmul.mubr.bf16.gmra.mxu0 %v7085
    %v7221 = vpop.f32.mrf.mxu0
    %v7222 = vadd.f32 0.0, %v7221
    %v7223 = vpop.f32.mrf.mxu0
    %v7224 = vpop.f32.mrf.mxu0
    %v7225 = vadd.f32 0.0, %v7224
    %v7226 = vpop.f32.mrf.mxu0
    %7227 = vmatprep.mubr.bf16.mxu0 0
    %7228 = vmatmul.mubr.bf16.gmra.mxu0 %v7088
    %v7229 = vpop.f32.mrf.mxu0
    %v7230 = vadd.f32 0.0, %v7229
    %v7231 = vpop.f32.mrf.mxu0
    %v7232 = vpop.f32.mrf.mxu0
    %v7233 = vadd.f32 0.0, %v7232
    %v7234 = vpop.f32.mrf.mxu0
    %7235 = vmatprep.mubr.bf16.mxu0 0
    %7236 = vmatmul.mubr.bf16.gmra.mxu0 %v7091
    %v7237 = vpop.f32.mrf.mxu0
    %v7238 = vadd.f32 0.0, %v7237
    %v7239 = vpop.f32.mrf.mxu0
    %v7240 = vpop.f32.mrf.mxu0
    %v7241 = vadd.f32 0.0, %v7240
    %v7242 = vpop.f32.mrf.mxu0
    %7243 = vmatprep.mubr.bf16.mxu0 0
    %7244 = vmatmul.mubr.bf16.gmra.mxu0 %v7094
    %v7245 = vpop.f32.mrf.mxu0
    %v7246 = vadd.f32 0.0, %v7245
    %v7247 = vpop.f32.mrf.mxu0
    %v7248 = vpop.f32.mrf.mxu0
    %v7249 = vadd.f32 0.0, %v7248
    %v7250 = vpop.f32.mrf.mxu0
    %7251 = vmatprep.mubr.bf16.mxu0 0
    %7252 = vmatmul.mubr.bf16.gmra.mxu0 %v7097
    %v7253 = vpop.f32.mrf.mxu0
    %v7254 = vadd.f32 0.0, %v7253
    %v7255 = vpop.f32.mrf.mxu0
    %v7256 = vpop.f32.mrf.mxu0
    %v7257 = vadd.f32 0.0, %v7256
    %v7258 = vpop.f32.mrf.mxu0
    %7259 = vdwg.mxu0
    %v7260 = vadd.f32 %v6995, %v7134
    %v7261 = vadd.f32 %v6996, %v7137
    %v7262 = vadd.f32 %v6997, %v7142
    %v7263 = vadd.f32 %v6998, %v7145
    %v7264 = vadd.f32 %v6999, %v7150
    %v7265 = vadd.f32 %v7000, %v7153
    %v7266 = vadd.f32 %v7001, %v7158
    %v7267 = vadd.f32 %v7002, %v7161
    %v7268 = vadd.f32 %v7003, %v7166
    %v7269 = vadd.f32 %v7004, %v7169
    %v7270 = vadd.f32 %v7005, %v7174
    %v7271 = vadd.f32 %v7006, %v7177
    %v7272 = vadd.f32 %v7007, %v7182
    %v7273 = vadd.f32 %v7008, %v7185
    %v7274 = vadd.f32 %v7009, %v7190
    %v7275 = vadd.f32 %v7010, %v7193
    %v7276 = vadd.f32 %v7011, %v7198
    %v7277 = vadd.f32 %v7012, %v7201
    %v7278 = vadd.f32 %v7013, %v7206
    %v7279 = vadd.f32 %v7014, %v7209
    %v7280 = vadd.f32 %v7015, %v7214
    %v7281 = vadd.f32 %v7016, %v7217
    %v7282 = vadd.f32 %v7017, %v7222
    %v7283 = vadd.f32 %v7018, %v7225
    %v7284 = vadd.f32 %v7019, %v7230
    %v7285 = vadd.f32 %v7020, %v7233
    %v7286 = vadd.f32 %v7021, %v7238
    %v7287 = vadd.f32 %v7022, %v7241
    %v7288 = vadd.f32 %v7023, %v7246
    %v7289 = vadd.f32 %v7024, %v7249
    %v7290 = vadd.f32 %v7025, %v7254
    %v7291 = vadd.f32 %v7026, %v7257
    %v7292 = vpack.c.bf16 %v5919, %v5916
    %v7293 = vpack.c.bf16 %v5927, %v5924
    %v7294 = vpack.c.bf16 %v5974, %v5971
    %v7295 = vpack.c.bf16 %v5982, %v5979
    %v7296 = vpack.c.bf16 %v6029, %v6026
    %v7297 = vpack.c.bf16 %v6037, %v6034
    %v7298 = vpack.c.bf16 %v6084, %v6081
    %v7299 = vpack.c.bf16 %v6092, %v6089
    %v7300 = vpack.c.bf16 %v6139, %v6136
    %v7301 = vpack.c.bf16 %v6147, %v6144
    %v7302 = vpack.c.bf16 %v6194, %v6191
    %v7303 = vpack.c.bf16 %v6202, %v6199
    %v7304 = vpack.c.bf16 %v6249, %v6246
    %v7305 = vpack.c.bf16 %v6257, %v6254
    %v7306 = vpack.c.bf16 %v6304, %v6301
    %v7307 = vpack.c.bf16 %v6312, %v6309
    %v7308 = vld [vmem:[#allocation7 + $0x10] sm:$0xf]
    %v7309 = vld [vmem:[#allocation7 + $0x14] sm:$0xf]
    %v7312 = vunpack.c.l.b16 %v7308
    %v7313 = vunpack.c.l.b16 %v7309
    %v7314 = vpack.c.b16 %v7313, %v7312
    %v7317 = vsel %vm1247, %v7292, 0
    %v7320 = vsel %vm1247, %v7293, 0
    %v7323 = vsel %vm1247, %v7294, 0
    %v7326 = vsel %vm1247, %v7295, 0
    %v7329 = vsel %vm1247, %v7296, 0
    %v7332 = vsel %vm1247, %v7297, 0
    %v7335 = vsel %vm1247, %v7298, 0
    %v7338 = vsel %vm1247, %v7299, 0
    %v7341 = vsel %vm1247, %v7300, 0
    %v7344 = vsel %vm1247, %v7301, 0
    %v7347 = vsel %vm1247, %v7302, 0
    %v7350 = vsel %vm1247, %v7303, 0
    %v7353 = vsel %vm1247, %v7304, 0
    %v7356 = vsel %vm1247, %v7305, 0
    %v7359 = vsel %vm1247, %v7306, 0
    %v7362 = vsel %vm1247, %v7307, 0
    %7364 = vmatprep.subr.bf16.mxu0 0
    %7365 = vmatpush1.bf16.msra.mxu0 0
    %7366 = vmatprep.subr.bf16.mxu0 0
    %7367 = vmatpush1.bf16.msra.mxu0 0
    %7368 = vmatprep.subr.bf16.mxu0 0
    %7369 = vmatpush1.bf16.msra.mxu0 0
    %7370 = vmatprep.subr.bf16.mxu0 0
    %7371 = vmatpush1.bf16.msra.mxu0 0
    %7372 = vmatprep.subr.bf16.mxu0 0
    %7373 = vmatpush1.bf16.msra.mxu0 0
    %7374 = vmatprep.subr.bf16.mxu0 0
    %7375 = vmatpush1.bf16.msra.mxu0 0
    %7376 = vmatprep.subr.bf16.mxu0 0
    %7377 = vmatpush1.bf16.msra.mxu0 0
    %7378 = vmatprep.subr.bf16.mxu0 0
    %7379 = vmatpush1.bf16.msra.mxu0 %v7314
    %7380 = vmatprep.subr.bf16.mxu0 0
    %7381 = vmatpush2.bf16.msra.mxu0 0
    %7382 = vmatprep.subr.bf16.mxu0 0
    %7383 = vmatpush2.bf16.msra.mxu0 0
    %7384 = vmatprep.subr.bf16.mxu0 0
    %7385 = vmatpush2.bf16.msra.mxu0 0
    %7386 = vmatprep.subr.bf16.mxu0 0
    %7387 = vmatpush2.bf16.msra.mxu0 0
    %7388 = vmatprep.subr.bf16.mxu0 0
    %7389 = vmatpush2.bf16.msra.mxu0 0
    %7390 = vmatprep.subr.bf16.mxu0 0
    %7391 = vmatpush2.bf16.msra.mxu0 0
    %7392 = vmatprep.subr.bf16.mxu0 0
    %7393 = vmatpush2.bf16.msra.mxu0 0
    %7394 = vmatprep.subr.bf16.mxu0 0
    %7395 = vmatpush2.bf16.msra.mxu0 0
    %7396 = vmatprep.mubr.bf16.mxu0 0
    %7397 = vmatmul.mubr.bf16.gmra.mxu0 %v7317
    %v7398 = vpop.f32.mrf.mxu0
    %v7399 = vadd.f32 0.0, %v7398
    %v7400 = vpop.f32.mrf.mxu0
    %v7401 = vpop.f32.mrf.mxu0
    %v7402 = vadd.f32 0.0, %v7401
    %v7403 = vpop.f32.mrf.mxu0
    %7404 = vmatprep.mubr.bf16.mxu0 0
    %7405 = vmatmul.mubr.bf16.gmra.mxu0 %v7320
    %v7406 = vpop.f32.mrf.mxu0
    %v7407 = vadd.f32 0.0, %v7406
    %v7408 = vpop.f32.mrf.mxu0
    %v7409 = vpop.f32.mrf.mxu0
    %v7410 = vadd.f32 0.0, %v7409
    %v7411 = vpop.f32.mrf.mxu0
    %7412 = vmatprep.mubr.bf16.mxu0 0
    %7413 = vmatmul.mubr.bf16.gmra.mxu0 %v7323
    %v7414 = vpop.f32.mrf.mxu0
    %v7415 = vadd.f32 0.0, %v7414
    %v7416 = vpop.f32.mrf.mxu0
    %v7417 = vpop.f32.mrf.mxu0
    %v7418 = vadd.f32 0.0, %v7417
    %v7419 = vpop.f32.mrf.mxu0
    %7420 = vmatprep.mubr.bf16.mxu0 0
    %7421 = vmatmul.mubr.bf16.gmra.mxu0 %v7326
    %v7422 = vpop.f32.mrf.mxu0
    %v7423 = vadd.f32 0.0, %v7422
    %v7424 = vpop.f32.mrf.mxu0
    %v7425 = vpop.f32.mrf.mxu0
    %v7426 = vadd.f32 0.0, %v7425
    %v7427 = vpop.f32.mrf.mxu0
    %7428 = vmatprep.mubr.bf16.mxu0 0
    %7429 = vmatmul.mubr.bf16.gmra.mxu0 %v7329
    %v7430 = vpop.f32.mrf.mxu0
    %v7431 = vadd.f32 0.0, %v7430
    %v7432 = vpop.f32.mrf.mxu0
    %v7433 = vpop.f32.mrf.mxu0
    %v7434 = vadd.f32 0.0, %v7433
    %v7435 = vpop.f32.mrf.mxu0
    %7436 = vmatprep.mubr.bf16.mxu0 0
    %7437 = vmatmul.mubr.bf16.gmra.mxu0 %v7332
    %v7438 = vpop.f32.mrf.mxu0
    %v7439 = vadd.f32 0.0, %v7438
    %v7440 = vpop.f32.mrf.mxu0
    %v7441 = vpop.f32.mrf.mxu0
    %v7442 = vadd.f32 0.0, %v7441
    %v7443 = vpop.f32.mrf.mxu0
    %7444 = vmatprep.mubr.bf16.mxu0 0
    %7445 = vmatmul.mubr.bf16.gmra.mxu0 %v7335
    %v7446 = vpop.f32.mrf.mxu0
    %v7447 = vadd.f32 0.0, %v7446
    %v7448 = vpop.f32.mrf.mxu0
    %v7449 = vpop.f32.mrf.mxu0
    %v7450 = vadd.f32 0.0, %v7449
    %v7451 = vpop.f32.mrf.mxu0
    %7452 = vmatprep.mubr.bf16.mxu0 0
    %7453 = vmatmul.mubr.bf16.gmra.mxu0 %v7338
    %v7454 = vpop.f32.mrf.mxu0
    %v7455 = vadd.f32 0.0, %v7454
    %v7456 = vpop.f32.mrf.mxu0
    %v7457 = vpop.f32.mrf.mxu0
    %v7458 = vadd.f32 0.0, %v7457
    %v7459 = vpop.f32.mrf.mxu0
    %7460 = vmatprep.mubr.bf16.mxu0 0
    %7461 = vmatmul.mubr.bf16.gmra.mxu0 %v7341
    %v7462 = vpop.f32.mrf.mxu0
    %v7463 = vadd.f32 0.0, %v7462
    %v7464 = vpop.f32.mrf.mxu0
    %v7465 = vpop.f32.mrf.mxu0
    %v7466 = vadd.f32 0.0, %v7465
    %v7467 = vpop.f32.mrf.mxu0
    %7468 = vmatprep.mubr.bf16.mxu0 0
    %7469 = vmatmul.mubr.bf16.gmra.mxu0 %v7344
    %v7470 = vpop.f32.mrf.mxu0
    %v7471 = vadd.f32 0.0, %v7470
    %v7472 = vpop.f32.mrf.mxu0
    %v7473 = vpop.f32.mrf.mxu0
    %v7474 = vadd.f32 0.0, %v7473
    %v7475 = vpop.f32.mrf.mxu0
    %7476 = vmatprep.mubr.bf16.mxu0 0
    %7477 = vmatmul.mubr.bf16.gmra.mxu0 %v7347
    %v7478 = vpop.f32.mrf.mxu0
    %v7479 = vadd.f32 0.0, %v7478
    %v7480 = vpop.f32.mrf.mxu0
    %v7481 = vpop.f32.mrf.mxu0
    %v7482 = vadd.f32 0.0, %v7481
    %v7483 = vpop.f32.mrf.mxu0
    %7484 = vmatprep.mubr.bf16.mxu0 0
    %7485 = vmatmul.mubr.bf16.gmra.mxu0 %v7350
    %v7486 = vpop.f32.mrf.mxu0
    %v7487 = vadd.f32 0.0, %v7486
    %v7488 = vpop.f32.mrf.mxu0
    %v7489 = vpop.f32.mrf.mxu0
    %v7490 = vadd.f32 0.0, %v7489
    %v7491 = vpop.f32.mrf.mxu0
    %7492 = vmatprep.mubr.bf16.mxu0 0
    %7493 = vmatmul.mubr.bf16.gmra.mxu0 %v7353
    %v7494 = vpop.f32.mrf.mxu0
    %v7495 = vadd.f32 0.0, %v7494
    %v7496 = vpop.f32.mrf.mxu0
    %v7497 = vpop.f32.mrf.mxu0
    %v7498 = vadd.f32 0.0, %v7497
    %v7499 = vpop.f32.mrf.mxu0
    %7500 = vmatprep.mubr.bf16.mxu0 0
    %7501 = vmatmul.mubr.bf16.gmra.mxu0 %v7356
    %v7502 = vpop.f32.mrf.mxu0
    %v7503 = vadd.f32 0.0, %v7502
    %v7504 = vpop.f32.mrf.mxu0
    %v7505 = vpop.f32.mrf.mxu0
    %v7506 = vadd.f32 0.0, %v7505
    %v7507 = vpop.f32.mrf.mxu0
    %7508 = vmatprep.mubr.bf16.mxu0 0
    %7509 = vmatmul.mubr.bf16.gmra.mxu0 %v7359
    %v7510 = vpop.f32.mrf.mxu0
    %v7511 = vadd.f32 0.0, %v7510
    %v7512 = vpop.f32.mrf.mxu0
    %v7513 = vpop.f32.mrf.mxu0
    %v7514 = vadd.f32 0.0, %v7513
    %v7515 = vpop.f32.mrf.mxu0
    %7516 = vmatprep.mubr.bf16.mxu0 0
    %7517 = vmatmul.mubr.bf16.gmra.mxu0 %v7362
    %v7518 = vpop.f32.mrf.mxu0
    %v7519 = vadd.f32 0.0, %v7518
    %v7520 = vpop.f32.mrf.mxu0
    %v7521 = vpop.f32.mrf.mxu0
    %v7522 = vadd.f32 0.0, %v7521
    %v7523 = vpop.f32.mrf.mxu0
    %7524 = vdwg.mxu0
    %v7525 = vadd.f32 %v7260, %v7399
    %v7526 = vadd.f32 %v7261, %v7402
    %v7527 = vadd.f32 %v7262, %v7407
    %v7528 = vadd.f32 %v7263, %v7410
    %v7529 = vadd.f32 %v7264, %v7415
    %v7530 = vadd.f32 %v7265, %v7418
    %v7531 = vadd.f32 %v7266, %v7423
    %v7532 = vadd.f32 %v7267, %v7426
    %v7533 = vadd.f32 %v7268, %v7431
    %v7534 = vadd.f32 %v7269, %v7434
    %v7535 = vadd.f32 %v7270, %v7439
    %v7536 = vadd.f32 %v7271, %v7442
    %v7537 = vadd.f32 %v7272, %v7447
    %v7538 = vadd.f32 %v7273, %v7450
    %v7539 = vadd.f32 %v7274, %v7455
    %v7540 = vadd.f32 %v7275, %v7458
    %v7541 = vadd.f32 %v7276, %v7463
    %v7542 = vadd.f32 %v7277, %v7466
    %v7543 = vadd.f32 %v7278, %v7471
    %v7544 = vadd.f32 %v7279, %v7474
    %v7545 = vadd.f32 %v7280, %v7479
    %v7546 = vadd.f32 %v7281, %v7482
    %v7547 = vadd.f32 %v7282, %v7487
    %v7548 = vadd.f32 %v7283, %v7490
    %v7549 = vadd.f32 %v7284, %v7495
    %v7550 = vadd.f32 %v7285, %v7498
    %v7551 = vadd.f32 %v7286, %v7503
    %v7552 = vadd.f32 %v7287, %v7506
    %v7553 = vadd.f32 %v7288, %v7511
    %v7554 = vadd.f32 %v7289, %v7514
    %v7555 = vadd.f32 %v7290, %v7519
    %v7556 = vadd.f32 %v7291, %v7522
    %v7557 = vpack.c.bf16 %v6359, %v6356
    %v7558 = vpack.c.bf16 %v6367, %v6364
    %v7559 = vpack.c.bf16 %v6414, %v6411
    %v7560 = vpack.c.bf16 %v6422, %v6419
    %v7561 = vpack.c.bf16 %v6469, %v6466
    %v7562 = vpack.c.bf16 %v6477, %v6474
    %v7563 = vpack.c.bf16 %v6524, %v6521
    %v7564 = vpack.c.bf16 %v6532, %v6529
    %v7565 = vpack.c.bf16 %v6579, %v6576
    %v7566 = vpack.c.bf16 %v6587, %v6584
    %v7567 = vpack.c.bf16 %v6634, %v6631
    %v7568 = vpack.c.bf16 %v6642, %v6639
    %v7569 = vpack.c.bf16 %v6689, %v6686
    %v7570 = vpack.c.bf16 %v6697, %v6694
    %v7571 = vpack.c.bf16 %v6744, %v6741
    %v7572 = vpack.c.bf16 %v6752, %v6749
    %v7573 = vld [vmem:[#allocation7 + $0x18] sm:$0xf]
    %v7574 = vld [vmem:[#allocation7 + $0x1c] sm:$0xf]
    %v7577 = vunpack.c.l.b16 %v7573
    %v7578 = vunpack.c.l.b16 %v7574
    %v7579 = vpack.c.b16 %v7578, %v7577
    %v7582 = vsel %vm1247, %v7557, 0
    %v7585 = vsel %vm1247, %v7558, 0
    %v7588 = vsel %vm1247, %v7559, 0
    %v7591 = vsel %vm1247, %v7560, 0
    %v7594 = vsel %vm1247, %v7561, 0
    %v7597 = vsel %vm1247, %v7562, 0
    %v7600 = vsel %vm1247, %v7563, 0
    %v7603 = vsel %vm1247, %v7564, 0
    %v7606 = vsel %vm1247, %v7565, 0
    %v7609 = vsel %vm1247, %v7566, 0
    %v7612 = vsel %vm1247, %v7567, 0
    %v7615 = vsel %vm1247, %v7568, 0
    %v7618 = vsel %vm1247, %v7569, 0
    %v7621 = vsel %vm1247, %v7570, 0
    %v7624 = vsel %vm1247, %v7571, 0
    %v7627 = vsel %vm1247, %v7572, 0
    %7629 = vmatprep.subr.bf16.mxu0 0
    %7630 = vmatpush1.bf16.msra.mxu0 0
    %7631 = vmatprep.subr.bf16.mxu0 0
    %7632 = vmatpush1.bf16.msra.mxu0 0
    %7633 = vmatprep.subr.bf16.mxu0 0
    %7634 = vmatpush1.bf16.msra.mxu0 0
    %7635 = vmatprep.subr.bf16.mxu0 0
    %7636 = vmatpush1.bf16.msra.mxu0 0
    %7637 = vmatprep.subr.bf16.mxu0 0
    %7638 = vmatpush1.bf16.msra.mxu0 0
    %7639 = vmatprep.subr.bf16.mxu0 0
    %7640 = vmatpush1.bf16.msra.mxu0 0
    %7641 = vmatprep.subr.bf16.mxu0 0
    %7642 = vmatpush1.bf16.msra.mxu0 0
    %7643 = vmatprep.subr.bf16.mxu0 0
    %7644 = vmatpush1.bf16.msra.mxu0 %v7579
    %7645 = vmatprep.subr.bf16.mxu0 0
    %7646 = vmatpush2.bf16.msra.mxu0 0
    %7647 = vmatprep.subr.bf16.mxu0 0
    %7648 = vmatpush2.bf16.msra.mxu0 0
    %7649 = vmatprep.subr.bf16.mxu0 0
    %7650 = vmatpush2.bf16.msra.mxu0 0
    %7651 = vmatprep.subr.bf16.mxu0 0
    %7652 = vmatpush2.bf16.msra.mxu0 0
    %7653 = vmatprep.subr.bf16.mxu0 0
    %7654 = vmatpush2.bf16.msra.mxu0 0
    %7655 = vmatprep.subr.bf16.mxu0 0
    %7656 = vmatpush2.bf16.msra.mxu0 0
    %7657 = vmatprep.subr.bf16.mxu0 0
    %7658 = vmatpush2.bf16.msra.mxu0 0
    %7659 = vmatprep.subr.bf16.mxu0 0
    %7660 = vmatpush2.bf16.msra.mxu0 0
    %7661 = vmatprep.mubr.bf16.mxu0 0
    %7662 = vmatmul.mubr.bf16.gmra.mxu0 %v7582
    %v7663 = vpop.f32.mrf.mxu0
    %v7664 = vadd.f32 0.0, %v7663
    %v7665 = vpop.f32.mrf.mxu0
    %v7666 = vpop.f32.mrf.mxu0
    %v7667 = vadd.f32 0.0, %v7666
    %v7668 = vpop.f32.mrf.mxu0
    %7669 = vmatprep.mubr.bf16.mxu0 0
    %7670 = vmatmul.mubr.bf16.gmra.mxu0 %v7585
    %v7671 = vpop.f32.mrf.mxu0
    %v7672 = vadd.f32 0.0, %v7671
    %v7673 = vpop.f32.mrf.mxu0
    %v7674 = vpop.f32.mrf.mxu0
    %v7675 = vadd.f32 0.0, %v7674
    %v7676 = vpop.f32.mrf.mxu0
    %7677 = vmatprep.mubr.bf16.mxu0 0
    %7678 = vmatmul.mubr.bf16.gmra.mxu0 %v7588
    %v7679 = vpop.f32.mrf.mxu0
    %v7680 = vadd.f32 0.0, %v7679
    %v7681 = vpop.f32.mrf.mxu0
    %v7682 = vpop.f32.mrf.mxu0
    %v7683 = vadd.f32 0.0, %v7682
    %v7684 = vpop.f32.mrf.mxu0
    %7685 = vmatprep.mubr.bf16.mxu0 0
    %7686 = vmatmul.mubr.bf16.gmra.mxu0 %v7591
    %v7687 = vpop.f32.mrf.mxu0
    %v7688 = vadd.f32 0.0, %v7687
    %v7689 = vpop.f32.mrf.mxu0
    %v7690 = vpop.f32.mrf.mxu0
    %v7691 = vadd.f32 0.0, %v7690
    %v7692 = vpop.f32.mrf.mxu0
    %7693 = vmatprep.mubr.bf16.mxu0 0
    %7694 = vmatmul.mubr.bf16.gmra.mxu0 %v7594
    %v7695 = vpop.f32.mrf.mxu0
    %v7696 = vadd.f32 0.0, %v7695
    %v7697 = vpop.f32.mrf.mxu0
    %v7698 = vpop.f32.mrf.mxu0
    %v7699 = vadd.f32 0.0, %v7698
    %v7700 = vpop.f32.mrf.mxu0
    %7701 = vmatprep.mubr.bf16.mxu0 0
    %7702 = vmatmul.mubr.bf16.gmra.mxu0 %v7597
    %v7703 = vpop.f32.mrf.mxu0
    %v7704 = vadd.f32 0.0, %v7703
    %v7705 = vpop.f32.mrf.mxu0
    %v7706 = vpop.f32.mrf.mxu0
    %v7707 = vadd.f32 0.0, %v7706
    %v7708 = vpop.f32.mrf.mxu0
    %7709 = vmatprep.mubr.bf16.mxu0 0
    %7710 = vmatmul.mubr.bf16.gmra.mxu0 %v7600
    %v7711 = vpop.f32.mrf.mxu0
    %v7712 = vadd.f32 0.0, %v7711
    %v7713 = vpop.f32.mrf.mxu0
    %v7714 = vpop.f32.mrf.mxu0
    %v7715 = vadd.f32 0.0, %v7714
    %v7716 = vpop.f32.mrf.mxu0
    %7717 = vmatprep.mubr.bf16.mxu0 0
    %7718 = vmatmul.mubr.bf16.gmra.mxu0 %v7603
    %v7719 = vpop.f32.mrf.mxu0
    %v7720 = vadd.f32 0.0, %v7719
    %v7721 = vpop.f32.mrf.mxu0
    %v7722 = vpop.f32.mrf.mxu0
    %v7723 = vadd.f32 0.0, %v7722
    %v7724 = vpop.f32.mrf.mxu0
    %7725 = vmatprep.mubr.bf16.mxu0 0
    %7726 = vmatmul.mubr.bf16.gmra.mxu0 %v7606
    %v7727 = vpop.f32.mrf.mxu0
    %v7728 = vadd.f32 0.0, %v7727
    %v7729 = vpop.f32.mrf.mxu0
    %v7730 = vpop.f32.mrf.mxu0
    %v7731 = vadd.f32 0.0, %v7730
    %v7732 = vpop.f32.mrf.mxu0
    %7733 = vmatprep.mubr.bf16.mxu0 0
    %7734 = vmatmul.mubr.bf16.gmra.mxu0 %v7609
    %v7735 = vpop.f32.mrf.mxu0
    %v7736 = vadd.f32 0.0, %v7735
    %v7737 = vpop.f32.mrf.mxu0
    %v7738 = vpop.f32.mrf.mxu0
    %v7739 = vadd.f32 0.0, %v7738
    %v7740 = vpop.f32.mrf.mxu0
    %7741 = vmatprep.mubr.bf16.mxu0 0
    %7742 = vmatmul.mubr.bf16.gmra.mxu0 %v7612
    %v7743 = vpop.f32.mrf.mxu0
    %v7744 = vadd.f32 0.0, %v7743
    %v7745 = vpop.f32.mrf.mxu0
    %v7746 = vpop.f32.mrf.mxu0
    %v7747 = vadd.f32 0.0, %v7746
    %v7748 = vpop.f32.mrf.mxu0
    %7749 = vmatprep.mubr.bf16.mxu0 0
    %7750 = vmatmul.mubr.bf16.gmra.mxu0 %v7615
    %v7751 = vpop.f32.mrf.mxu0
    %v7752 = vadd.f32 0.0, %v7751
    %v7753 = vpop.f32.mrf.mxu0
    %v7754 = vpop.f32.mrf.mxu0
    %v7755 = vadd.f32 0.0, %v7754
    %v7756 = vpop.f32.mrf.mxu0
    %7757 = vmatprep.mubr.bf16.mxu0 0
    %7758 = vmatmul.mubr.bf16.gmra.mxu0 %v7618
    %v7759 = vpop.f32.mrf.mxu0
    %v7760 = vadd.f32 0.0, %v7759
    %v7761 = vpop.f32.mrf.mxu0
    %v7762 = vpop.f32.mrf.mxu0
    %v7763 = vadd.f32 0.0, %v7762
    %v7764 = vpop.f32.mrf.mxu0
    %7765 = vmatprep.mubr.bf16.mxu0 0
    %7766 = vmatmul.mubr.bf16.gmra.mxu0 %v7621
    %v7767 = vpop.f32.mrf.mxu0
    %v7768 = vadd.f32 0.0, %v7767
    %v7769 = vpop.f32.mrf.mxu0
    %v7770 = vpop.f32.mrf.mxu0
    %v7771 = vadd.f32 0.0, %v7770
    %v7772 = vpop.f32.mrf.mxu0
    %7773 = vmatprep.mubr.bf16.mxu0 0
    %7774 = vmatmul.mubr.bf16.gmra.mxu0 %v7624
    %v7775 = vpop.f32.mrf.mxu0
    %v7776 = vadd.f32 0.0, %v7775
    %v7777 = vpop.f32.mrf.mxu0
    %v7778 = vpop.f32.mrf.mxu0
    %v7779 = vadd.f32 0.0, %v7778
    %v7780 = vpop.f32.mrf.mxu0
    %7781 = vmatprep.mubr.bf16.mxu0 0
    %7782 = vmatmul.mubr.bf16.gmra.mxu0 %v7627
    %v7783 = vpop.f32.mrf.mxu0
    %v7784 = vadd.f32 0.0, %v7783
    %v7785 = vpop.f32.mrf.mxu0
    %v7786 = vpop.f32.mrf.mxu0
    %v7787 = vadd.f32 0.0, %v7786
    %v7788 = vpop.f32.mrf.mxu0
    %7789 = vdwg.mxu0
    %v7790 = vadd.f32 %v7525, %v7664
    %v7791 = vadd.f32 %v7526, %v7667
    %v7792 = vadd.f32 %v7527, %v7672
    %v7793 = vadd.f32 %v7528, %v7675
    %v7794 = vadd.f32 %v7529, %v7680
    %v7795 = vadd.f32 %v7530, %v7683
    %v7796 = vadd.f32 %v7531, %v7688
    %v7797 = vadd.f32 %v7532, %v7691
    %v7798 = vadd.f32 %v7533, %v7696
    %v7799 = vadd.f32 %v7534, %v7699
    %v7800 = vadd.f32 %v7535, %v7704
    %v7801 = vadd.f32 %v7536, %v7707
    %v7802 = vadd.f32 %v7537, %v7712
    %v7803 = vadd.f32 %v7538, %v7715
    %v7804 = vadd.f32 %v7539, %v7720
    %v7805 = vadd.f32 %v7540, %v7723
    %v7806 = vadd.f32 %v7541, %v7728
    %v7807 = vadd.f32 %v7542, %v7731
    %v7808 = vadd.f32 %v7543, %v7736
    %v7809 = vadd.f32 %v7544, %v7739
    %v7810 = vadd.f32 %v7545, %v7744
    %v7811 = vadd.f32 %v7546, %v7747
    %v7812 = vadd.f32 %v7547, %v7752
    %v7813 = vadd.f32 %v7548, %v7755
    %v7814 = vadd.f32 %v7549, %v7760
    %v7815 = vadd.f32 %v7550, %v7763
    %v7816 = vadd.f32 %v7551, %v7768
    %v7817 = vadd.f32 %v7552, %v7771
    %v7818 = vadd.f32 %v7553, %v7776
    %v7819 = vadd.f32 %v7554, %v7779
    %v7820 = vadd.f32 %v7555, %v7784
    %v7821 = vadd.f32 %v7556, %v7787
    %7822 = vst.msk [vmem:[#allocation8] sm:$0xff] %vm220, %v7790
    %7823 = vst.msk [vmem:[#allocation8 + $0x8] sm:$0xff] %vm220, %v7791
    %7824 = vst.msk [vmem:[#allocation8 + $0x10] sm:$0xff] %vm220, %v7792
    %7825 = vst.msk [vmem:[#allocation8 + $0x18] sm:$0xff] %vm220, %v7793
    %7826 = vst.msk [vmem:[#allocation8 + $0x20] sm:$0xff] %vm220, %v7794
    %7827 = vst.msk [vmem:[#allocation8 + $0x28] sm:$0xff] %vm220, %v7795
    %7828 = vst.msk [vmem:[#allocation8 + $0x30] sm:$0xff] %vm220, %v7796
    %7829 = vst.msk [vmem:[#allocation8 + $0x38] sm:$0xff] %vm220, %v7797
    %7830 = vst.msk [vmem:[#allocation8 + $0x40] sm:$0xff] %vm220, %v7798
    %7831 = vst.msk [vmem:[#allocation8 + $0x48] sm:$0xff] %vm220, %v7799
    %7832 = vst.msk [vmem:[#allocation8 + $0x50] sm:$0xff] %vm220, %v7800
    %7833 = vst.msk [vmem:[#allocation8 + $0x58] sm:$0xff] %vm220, %v7801
    %7834 = vst.msk [vmem:[#allocation8 + $0x60] sm:$0xff] %vm220, %v7802
    %7835 = vst.msk [vmem:[#allocation8 + $0x68] sm:$0xff] %vm220, %v7803
    %7836 = vst.msk [vmem:[#allocation8 + $0x70] sm:$0xff] %vm220, %v7804
    %7837 = vst.msk [vmem:[#allocation8 + $0x78] sm:$0xff] %vm220, %v7805
    %7838 = vst.msk [vmem:[#allocation8 + $0x80] sm:$0xff] %vm220, %v7806
    %7839 = vst.msk [vmem:[#allocation8 + $0x88] sm:$0xff] %vm220, %v7807
    %7840 = vst.msk [vmem:[#allocation8 + $0x90] sm:$0xff] %vm220, %v7808
    %7841 = vst.msk [vmem:[#allocation8 + $0x98] sm:$0xff] %vm220, %v7809
    %7842 = vst.msk [vmem:[#allocation8 + $0xa0] sm:$0xff] %vm220, %v7810
    %7843 = vst.msk [vmem:[#allocation8 + $0xa8] sm:$0xff] %vm220, %v7811
    %7844 = vst.msk [vmem:[#allocation8 + $0xb0] sm:$0xff] %vm220, %v7812
    %7845 = vst.msk [vmem:[#allocation8 + $0xb8] sm:$0xff] %vm220, %v7813
    %7846 = vst.msk [vmem:[#allocation8 + $0xc0] sm:$0xff] %vm220, %v7814
    %7847 = vst.msk [vmem:[#allocation8 + $0xc8] sm:$0xff] %vm220, %v7815
    %7848 = vst.msk [vmem:[#allocation8 + $0xd0] sm:$0xff] %vm220, %v7816
    %7849 = vst.msk [vmem:[#allocation8 + $0xd8] sm:$0xff] %vm220, %v7817
    %7850 = vst.msk [vmem:[#allocation8 + $0xe0] sm:$0xff] %vm220, %v7818
    %7851 = vst.msk [vmem:[#allocation8 + $0xe8] sm:$0xff] %vm220, %v7819
    %7852 = vst.msk [vmem:[#allocation8 + $0xf0] sm:$0xff] %vm220, %v7820
    %7853 = vst.msk [vmem:[#allocation8 + $0xf8] sm:$0xff] %vm220, %v7821
    // Predicated region
    $region30: #{tpu_custom_call.1} parent=1 // pred_check
      _
    $region31: #{tpu_custom_call.1} parent=1 // pred_check_branch
      %7855 = sbr.rel (0) target = $region33
    $region32: #{tpu_custom_call.1} parent=1 // pred_region
      %s7857 = ssub.s32 4096, 4096
      %7858 = vsyncadd [#allocation4], %s7857
      %s7859 = sshll.u32 [#allocation8], 4
      %s7860 = int_to_ptr.vmem [resolvable:$true] %s7859
      %7865 = dma.vmem_to_hbm [thread:$0]  %s7860, 4096, %s4, [#allocation4], 128, 128, 8
    $region33: #{tpu_custom_call.1} parent=1 // pred_fallthru
      _
    // Predicated region
    $region34: #{tpu_custom_call.1} parent=1 // pred_check
      _
    $region35: #{tpu_custom_call.1} parent=1 // pred_check_branch
      %7867 = sbr.rel (0) target = $region37
    $region36: #{tpu_custom_call.1} parent=1 // pred_region
      %7868 = dma.done [#allocation4], 4096
    $region37: #{tpu_custom_call.1} parent=1 // pred_fallthru
      _
    %7869 = vsyncpa [#allocation3], 1
    %7870 = vsyncpa [#allocation6], 1
    %7871 = vsyncpa [#allocation4], 1

</llo_original>
